<compile_context>
chip_gen: v6e
topology: v6e:2x2x1
jax: 0.10.0
libtpu: 0.0.40
codegen_flags: <defaults>
</compile_context>

<pallas_src>
import jax
import jax.numpy as jnp
from jax.experimental import pallas as pl
from jax.experimental.pallas import tpu as pltpu

# ---------------------------------------------------------------------------
# Sizes implied by the module (small, self-consistent choices).
# ---------------------------------------------------------------------------
BS = 2                      # batch
PH = 12                     # prediction_horizon == future_len
PAST_LEN = 8                # past_len
STATE_LEN = 6               # PEDESTRIAN state: pos(2)+vel(2)+acc(2)
PRED_LEN = 2                # pred_state_length
ENC_H = 32                  # enc_rnn_dim_future  -> features = 4*ENC_H = 128
DEC_H = 128                 # dec_rnn_dim
N_HYP = 20
MU_DIM = N_HYP * PRED_LEN   # 40
X_DIM = 64
IN_DIM = X_DIM + MU_DIM     # 104 == decoder_input_dims
FEAT = 4 * ENC_H            # 128
DT = 0.4
Y_DIM = PH * MU_DIM         # 480

# --- packed slab layouts (row offsets kept 8-aligned where it matters) -----
ENC_ROWS = 88               # encoder slab [88, 256]
#   rows  0:6   w_init_all  (cols 0:128)   [init_h | 0 | init_c | 0]
#   row   8     b_init_all  (cols 0:128)
#   row   9     b_lstm      (cols 0:256)   fused-gate order
#   rows 16:20  w_ih_blk    (cols 0:256)   block-diag input weights
#   rows 24:88  w_hh_blk    (cols 0:256)   block-diag hidden weights
GATE_W = 4 * DEC_H          # 512 : [ r+z fused | gi_n | gh_n ]
BIG_W = MU_DIM + GATE_W     # 552 : [ w_proj | folded gate weights ]
DEC_ROWS = 240 + DEC_H      # 368  decoder slab [368, 552]
#   rows  0:64  wx512   (cols 0:512)
#   row  64     b512    (cols 0:512)
#   row  65     cmu512  (cols 0:512)
#   row  66     b_proj  (cols 0:40)
#   rows 72:240 w_ms512 (cols 0:512)   rows = [mu-part | hidden-part]
#   rows 240:368 w_big  (cols 0:552)
SMALL_W = 512 + MU_DIM + STATE_LEN   # 558: [gts(480) | pad | pos40 | n_s_t0]


# ---------------------------------------------------------------------------
# Pallas kernel: whole forward pass
# ---------------------------------------------------------------------------
def _fwd_kernel(fut_ref, small_ref, enc_ref, dec_ref, pred_ref, loss_ref):
    f32 = jnp.float32
    H = ENC_H
    D = DEC_H

    # ---------------- inputs ----------------
    fut4 = fut_ref[...]                          # [PH*BS, 4] = [x_t fwd | x_t rev]
    small = small_ref[...]                       # [BS, 558]
    gts = small[:, 0:Y_DIM]                      # [BS, 480] labels tiled over hyps
    pos40 = small[:, 512:512 + MU_DIM]           # [BS, 40]  initial position tiled
    n_s_t0 = small[:, 512 + MU_DIM:SMALL_W]      # [BS, 6]

    # ---------------- bi-LSTM future encoder (fused directions) -------------
    w_init = enc_ref[0:STATE_LEN, 0:FEAT]        # [6, 128]
    b_init = enc_ref[8:9, 0:FEAT]                # [1, 128]
    b_lstm = enc_ref[9:10, 0:8 * H]              # [1, 256]
    w_ih = enc_ref[16:20, 0:8 * H]               # [4, 256]
    w_hh = enc_ref[24:ENC_ROWS, 0:8 * H]         # [64, 256]

    hcc = jnp.dot(n_s_t0, w_init, preferred_element_type=f32) + b_init
    hc = hcc[:, 0:2 * H]                         # [h_f | h_b]  (h_b starts at 0)
    cc = hcc[:, 2 * H:4 * H]                     # [c_f | c_b]

    # All per-step input projections (both directions) in ONE matmul.
    xp = jnp.dot(fut4, w_ih, preferred_element_type=f32) + b_lstm   # [24, 256]

    for t in range(PH):
        g = xp[t * BS:(t + 1) * BS, :] + jnp.dot(
            hc, w_hh, preferred_element_type=f32)
        s = jax.nn.sigmoid(g[:, 0:6 * H])        # i | f | o, both directions
        gg = jnp.tanh(g[:, 6 * H:8 * H])         # g, both directions
        cc = s[:, 2 * H:4 * H] * cc + s[:, 0:2 * H] * gg
        hc = s[:, 4 * H:6 * H] * jnp.tanh(cc)

    features = jnp.concatenate([hc, cc], axis=1)   # [BS, 128] = [h_f,h_b,c_f,c_b]
    # dropout with keep_prob = 1.0 -> identity

    # ---------------- GRU decoder (p_y_xz), proj folded into the recurrence --
    wx512 = dec_ref[0:X_DIM, 0:GATE_W]           # [64, 512]
    b512 = dec_ref[64:65, 0:GATE_W]              # [1, 512]
    cmu512 = dec_ref[65:66, 0:GATE_W]            # [1, 512]  = b_proj @ wm512
    b_proj = dec_ref[66:67, 0:MU_DIM]            # [1, 40]
    w_ms = dec_ref[72:240, 0:GATE_W]             # [168, 512] rows [mu | hidden]
    w_big = dec_ref[240:DEC_ROWS, 0:BIG_W]       # [128, 552] [w_proj | folded]

    x = features[:, 0:X_DIM]
    m0 = features[:, X_DIM:IN_DIM]
    h = features                                 # state_0

    base0 = jnp.dot(x, wx512, preferred_element_type=f32) + b512   # hoisted
    base1 = base0 + cmu512

    def gru_update(g, h_prev):
        rz = jax.nn.sigmoid(g[:, 0:2 * D])
        r = rz[:, 0:D]
        z = rz[:, D:2 * D]
        n = jnp.tanh(g[:, 2 * D:3 * D] + r * g[:, 3 * D:4 * D])
        return (1.0 - z) * n + z * h_prev

    # step 0: input_ = features[:, :104], state = features
    g0 = base0 + jnp.dot(jnp.concatenate([m0, h], axis=1), w_ms,
                         preferred_element_type=f32)
    h = gru_update(g0, h)

    mus = []
    for j in range(1, PH + 1):
        big = jnp.dot(h, w_big, preferred_element_type=f32)   # [BS, 552]
        mus.append(big[:, 0:MU_DIM] + b_proj)                  # mu_{j-1}
        if j < PH:
            h = gru_update(big[:, MU_DIM:BIG_W] + base1, h)

    # ---------------- dynamics (SingleIntegrator) + lane-dense prediction ---
    acc = jnp.zeros((BS, MU_DIM), dtype=f32)
    ys = []
    for j in range(PH):
        acc = acc + mus[j]
        ys.append(acc * DT + pos40)
    y = jnp.concatenate(ys, axis=1)              # [BS, 480]
    pred_ref[...] = y                            # one lane-dense store

    # ---------------- EWTA 'epe' loss (single batched pass) -----------------
    d2 = (y - gts) ** 2                                      # [BS, 480]
    shifted = jnp.concatenate([d2[:, 1:], jnp.zeros((BS, 1), f32)], axis=1)
    epe = jnp.sqrt(d2 + shifted + 1e-20)         # even lanes: sqrt(dx^2+dy^2)
    lane = jax.lax.broadcasted_iota(jnp.int32, (BS, Y_DIM), 1)
    epe = jnp.where((lane & 1) == 0, epe, jnp.float32(1e30))
    loss_acc = jnp.zeros((BS, 1), dtype=f32)
    for j in range(PH):                          # min over the 20 hypotheses
        loss_acc = loss_acc + jnp.min(
            epe[:, j * MU_DIM:(j + 1) * MU_DIM], axis=1, keepdims=True)
    loss_ref[...] = jnp.sum(loss_acc, axis=0, keepdims=True) * (1.0 / BS)


# ---------------------------------------------------------------------------
# Host-side packing (layout plumbing + exact algebraic weight fusion)
# ---------------------------------------------------------------------------
def _pack_params(p):
    f32 = jnp.float32
    H = ENC_H
    D = DEC_H

    def fuse_lstm_cols(w, direction):
        # w: [..., 4H] in PyTorch gate order (i, f, g, o) -> fused 256-wide
        # column order [i_f, i_b, f_f, f_b, o_f, o_b, g_f, g_b].
        i_, f_, g_, o_ = (w[..., 0:H], w[..., H:2 * H],
                          w[..., 2 * H:3 * H], w[..., 3 * H:4 * H])
        z = jnp.zeros_like(i_)
        if direction == 0:
            parts = [i_, z, f_, z, o_, z, g_, z]
        else:
            parts = [z, i_, z, f_, z, o_, z, g_]
        return jnp.concatenate(parts, axis=-1)

    w_init_all = jnp.concatenate(
        [p["w_init_h"], jnp.zeros((STATE_LEN, H), f32),
         p["w_init_c"], jnp.zeros((STATE_LEN, H), f32)], axis=1)
    b_init_all = jnp.concatenate(
        [p["b_init_h"], jnp.zeros((1, H), f32),
         p["b_init_c"], jnp.zeros((1, H), f32)], axis=1)
    w_ih_blk = jnp.concatenate(
        [fuse_lstm_cols(p["w_ih_f"], 0), fuse_lstm_cols(p["w_ih_b"], 1)], axis=0)
    w_hh_blk = jnp.concatenate(
        [fuse_lstm_cols(p["w_hh_f"], 0), fuse_lstm_cols(p["w_hh_b"], 1)], axis=0)
    b_lstm = fuse_lstm_cols(p["b_f"], 0) + fuse_lstm_cols(p["b_b"], 1)

    enc = jnp.zeros((ENC_ROWS, 8 * H), f32)
    enc = enc.at[0:STATE_LEN, 0:FEAT].set(w_init_all)
    enc = enc.at[8:9, 0:FEAT].set(b_init_all)
    enc = enc.at[9:10, :].set(b_lstm)
    enc = enc.at[16:20, :].set(w_ih_blk)
    enc = enc.at[24:ENC_ROWS, :].set(w_hh_blk)

    # ---- GRU decoder / projection: 512-wide gate layout [rz | gi_n | gh_n] --
    w_ihg = p["w_gru_ih"]    # [104, 384] columns in (r, z, n) order
    w_hhg = p["w_gru_hh"]    # [128, 384]

    def to512_in(w):         # input-side weights -> [rz | n | 0]
        return jnp.concatenate(
            [w[:, 0:2 * D], w[:, 2 * D:3 * D],
             jnp.zeros((w.shape[0], D), f32)], axis=1)

    def to512_hid(w):        # hidden-side weights -> [rz | 0 | n]
        return jnp.concatenate(
            [w[:, 0:2 * D], jnp.zeros((w.shape[0], D), f32),
             w[:, 2 * D:3 * D]], axis=1)

    wx512 = to512_in(w_ihg[0:X_DIM])                       # [64, 512]
    wm512 = to512_in(w_ihg[X_DIM:IN_DIM])                  # [40, 512]
    whh512 = to512_hid(w_hhg)                              # [128, 512]
    b512 = to512_in(p["b_gru_ih"]) + to512_hid(p["b_gru_hh"])
    w_ms512 = jnp.concatenate([wm512, whh512], axis=0)     # [168, 512]
    cmu512 = jnp.dot(p["b_proj"], wm512)                   # [1, 512]
    w_comb = jnp.dot(p["w_proj"], wm512) + whh512          # [128, 512]
    w_big = jnp.concatenate([p["w_proj"], w_comb], axis=1)  # [128, 552]

    dec = jnp.zeros((DEC_ROWS, BIG_W), f32)
    dec = dec.at[0:X_DIM, 0:GATE_W].set(wx512)
    dec = dec.at[64:65, 0:GATE_W].set(b512)
    dec = dec.at[65:66, 0:GATE_W].set(cmu512)
    dec = dec.at[66:67, 0:MU_DIM].set(p["b_proj"])
    dec = dec.at[72:240, 0:GATE_W].set(w_ms512)
    dec = dec.at[240:DEC_ROWS, 0:BIG_W].set(w_big)
    return enc, dec


def _pack_inputs(future, future_st, past, past_st):
    f32 = jnp.float32
    fwd = future_st.transpose(1, 0, 2).reshape(PH * BS, PRED_LEN)
    rev = future_st[:, ::-1, :].transpose(1, 0, 2).reshape(PH * BS, PRED_LEN)
    fut4 = jnp.concatenate([fwd, rev], axis=1).astype(f32)          # [24, 4]

    gts = jnp.tile(future[:, :, None, :], (1, 1, N_HYP, 1)).reshape(BS, Y_DIM)
    node_pos = past[:, -1, 0:2]
    pos40 = jnp.tile(node_pos, (1, N_HYP))
    n_s_t0 = past_st[:, -1, :]
    small = jnp.concatenate(
        [gts, jnp.zeros((BS, 512 - Y_DIM), f32), pos40, n_s_t0], axis=1)  # [2,558]
    return fut4, small


# ---------------------------------------------------------------------------
# Wrapper (pallas_call + output reshaping glue)
# ---------------------------------------------------------------------------
@jax.jit
def forward(future, future_st, past, past_st, params):
    fut4, small = _pack_inputs(future, future_st, past, past_st)
    enc, dec = _pack_params(params)
    vmem = pl.BlockSpec(memory_space=pltpu.MemorySpace.VMEM)
    pred, loss = pl.pallas_call(
        _fwd_kernel,
        out_shape=(
            jax.ShapeDtypeStruct((BS, Y_DIM), jnp.float32),
            jax.ShapeDtypeStruct((1, 1), jnp.float32),
        ),
        in_specs=[vmem, vmem, vmem, vmem],
        out_specs=(vmem, vmem),
    )(fut4, small, enc, dec)
    # glue: [B, T, 20*2] -> [B, 20, T, 2]  (matches torch.stack(mus, dim=2))
    prediction = pred.reshape(BS, PH, N_HYP, PRED_LEN).transpose(0, 2, 1, 3)
    return prediction, loss[0, 0]


# ---------------------------------------------------------------------------
# Deterministic parameter initialization (shapes from the module __init__)
# ---------------------------------------------------------------------------
def init_params(key):
    def w(k, shape, scale=0.1):
        return scale * jax.random.normal(k, shape, dtype=jnp.float32)

    ks = jax.random.split(key, 16)
    p = {
        # norm_fut_initial_h / norm_fut_initial_c : Linear(state_length, enc_rnn_dim_future)
        "w_init_h": w(ks[0], (STATE_LEN, ENC_H)),
        "b_init_h": w(ks[1], (1, ENC_H)),
        "w_init_c": w(ks[2], (STATE_LEN, ENC_H)),
        "b_init_c": w(ks[3], (1, ENC_H)),
        # norm_fut_encoder : bidirectional LSTM(pred_state_length -> enc_rnn_dim_future)
        "w_ih_f": w(ks[4], (PRED_LEN, 4 * ENC_H)),
        "w_hh_f": w(ks[5], (ENC_H, 4 * ENC_H)),
        "b_f": w(ks[6], (1, 4 * ENC_H)),          # b_ih + b_hh combined
        "w_ih_b": w(ks[7], (PRED_LEN, 4 * ENC_H)),
        "w_hh_b": w(ks[8], (ENC_H, 4 * ENC_H)),
        "b_b": w(ks[9], (1, 4 * ENC_H)),
        # decoder_x : GRUCell(decoder_input_dims=104, dec_rnn_dim=128)
        "w_gru_ih": w(ks[10], (IN_DIM, 3 * DEC_H)),
        "w_gru_hh": w(ks[11], (DEC_H, 3 * DEC_H)),
        "b_gru_ih": w(ks[12], (1, 3 * DEC_H)),
        "b_gru_hh": w(ks[13], (1, 3 * DEC_H)),
        # project_to_GMM_x : Linear(dec_rnn_dim, 20 * pred_state_length)
        "w_proj": w(ks[14], (DEC_H, MU_DIM)),
        "b_proj": w(ks[15], (1, MU_DIM)),
    }
    return p


# ---------------------------------------------------------------------------
# Pure-JAX reference (same math, torch-like shapes) for a sanity check
# ---------------------------------------------------------------------------
def reference_forward(future, future_st, past, past_st, p):
    node_pos = past[:, -1, 0:2]
    n_s_t0 = past_st[:, -1, :]
    h_f = n_s_t0 @ p["w_init_h"] + p["b_init_h"]
    c_f = n_s_t0 @ p["w_init_c"] + p["b_init_c"]
    h_b = jnp.zeros_like(h_f)
    c_b = jnp.zeros_like(c_f)

    def lstm(x, h, c, wih, whh, b):
        g = x @ wih + h @ whh + b
        i = jax.nn.sigmoid(g[:, :ENC_H])
        f = jax.nn.sigmoid(g[:, ENC_H:2 * ENC_H])
        gg = jnp.tanh(g[:, 2 * ENC_H:3 * ENC_H])
        o = jax.nn.sigmoid(g[:, 3 * ENC_H:])
        c = f * c + i * gg
        return o * jnp.tanh(c), c

    for t in range(PH):
        h_f, c_f = lstm(future_st[:, t], h_f, c_f, p["w_ih_f"], p["w_hh_f"], p["b_f"])
    for t in range(PH - 1, -1, -1):
        h_b, c_b = lstm(future_st[:, t], h_b, c_b, p["w_ih_b"], p["w_hh_b"], p["b_b"])
    feats = jnp.concatenate([h_f, h_b, c_f, c_b], axis=1)

    x = feats[:, :X_DIM]
    inp = feats[:, :IN_DIM]
    st = feats
    mus = []
    for _ in range(PH):
        gi = inp @ p["w_gru_ih"] + p["b_gru_ih"]
        gh = st @ p["w_gru_hh"] + p["b_gru_hh"]
        r = jax.nn.sigmoid(gi[:, :DEC_H] + gh[:, :DEC_H])
        z = jax.nn.sigmoid(gi[:, DEC_H:2 * DEC_H] + gh[:, DEC_H:2 * DEC_H])
        n = jnp.tanh(gi[:, 2 * DEC_H:] + r * gh[:, 2 * DEC_H:])
        h = (1.0 - z) * n + z * st
        mu = h @ p["w_proj"] + p["b_proj"]
        mus.append(mu.reshape(BS, N_HYP, PRED_LEN))
        inp = jnp.concatenate([x, mu], axis=1)
        st = h
    mus = jnp.stack(mus, axis=2)                                   # [BS, 20, PH, 2]
    y = jnp.cumsum(mus, axis=2) * DT + node_pos[:, None, None, :]

    gts = jnp.broadcast_to(future[:, None], y.shape)
    epe = jnp.sqrt(jnp.sum((y - gts) ** 2, axis=3) + 1e-20)
    loss = jnp.mean(jnp.sum(jnp.min(epe, axis=1), axis=1))
    return y, loss


if __name__ == "__main__":
    key = jax.random.PRNGKey(0)
    k1, k2, k3, k4, kp = jax.random.split(key, 5)
    future = jax.random.normal(k1, (BS, PH, PRED_LEN), dtype=jnp.float32)
    future_st = jax.random.normal(k2, (BS, PH, PRED_LEN), dtype=jnp.float32)
    past = jax.random.normal(k3, (BS, PAST_LEN, STATE_LEN), dtype=jnp.float32)
    past_st = jax.random.normal(k4, (BS, PAST_LEN, STATE_LEN), dtype=jnp.float32)
    params = init_params(kp)

    prediction, loss = forward(future, future_st, past, past_st, params)
    jax.block_until_ready((prediction, loss))

    pred_ref, loss_ref = reference_forward(future, future_st, past, past_st, params)
    assert prediction.shape == (BS, N_HYP, PH, PRED_LEN)
    assert jnp.allclose(prediction, pred_ref, atol=1e-2, rtol=1e-2)
    assert jnp.allclose(loss, loss_ref, atol=1e-2, rtol=1e-2)
    print("KERNEL_OK")
</pallas_src>

<mosaic_0001>
module attributes {stable_mosaic.version = 11 : i64} {
  func.func @_fwd_kernel(%arg0: memref<24x4xf32, #tpu.memory_space<vmem>>, %arg1: memref<2x558xf32, #tpu.memory_space<vmem>>, %arg2: memref<88x256xf32, #tpu.memory_space<vmem>>, %arg3: memref<368x552xf32, #tpu.memory_space<vmem>>, %arg4: memref<2x480xf32, #tpu.memory_space<vmem>>, %arg5: memref<1x1xf32, #tpu.memory_space<vmem>>) attributes {dimension_semantics = [], scalar_prefetch = 0 : i64, scratch_operands = 0 : i64, tpu.core_type = #tpu.core_type<tc>} {
    %c0 = arith.constant 0 : index
    %c0_0 = arith.constant 0 : index
    %0 = vector.load %arg0[%c0, %c0_0] : memref<24x4xf32, #tpu.memory_space<vmem>>, vector<24x4xf32>
    %c0_1 = arith.constant 0 : index
    %c0_2 = arith.constant 0 : index
    %1 = vector.load %arg1[%c0_1, %c0_2] : memref<2x558xf32, #tpu.memory_space<vmem>>, vector<2x558xf32>
    %2 = vector.extract_strided_slice %1 {offsets = [0, 0], sizes = [2, 480], strides = [1, 1]} : vector<2x558xf32> to vector<2x480xf32>
    %3 = vector.extract_strided_slice %1 {offsets = [0, 512], sizes = [2, 40], strides = [1, 1]} : vector<2x558xf32> to vector<2x40xf32>
    %4 = vector.extract_strided_slice %1 {offsets = [0, 552], sizes = [2, 6], strides = [1, 1]} : vector<2x558xf32> to vector<2x6xf32>
    %c0_3 = arith.constant 0 : index
    %c0_4 = arith.constant 0 : index
    %5 = vector.load %arg2[%c0_3, %c0_4] : memref<88x256xf32, #tpu.memory_space<vmem>>, vector<6x128xf32>
    %c8 = arith.constant 8 : index
    %c0_5 = arith.constant 0 : index
    %6 = vector.load %arg2[%c8, %c0_5] : memref<88x256xf32, #tpu.memory_space<vmem>>, vector<1x128xf32>
    %c9 = arith.constant 9 : index
    %c0_6 = arith.constant 0 : index
    %7 = vector.load %arg2[%c9, %c0_6] : memref<88x256xf32, #tpu.memory_space<vmem>>, vector<1x256xf32>
    %c16 = arith.constant 16 : index
    %c0_7 = arith.constant 0 : index
    %8 = vector.load %arg2[%c16, %c0_7] : memref<88x256xf32, #tpu.memory_space<vmem>>, vector<4x256xf32>
    %c24 = arith.constant 24 : index
    %c0_8 = arith.constant 0 : index
    %9 = vector.load %arg2[%c24, %c0_8] : memref<88x256xf32, #tpu.memory_space<vmem>>, vector<64x256xf32>
    %cst = arith.constant dense<0.000000e+00> : vector<2x128xf32>
    %10 = tpu.matmul %4, %5, %cst {dimension_numbers = #tpu.dot_dimension_numbers<[1], [0], [0], [1], [0, 0, 1, 1], [], []>} : vector<2x6xf32>, vector<6x128xf32>, vector<2x128xf32> -> vector<2x128xf32>
    %11 = vector.broadcast %6 : vector<1x128xf32> to vector<2x128xf32>
    %12 = arith.addf %10, %11 : vector<2x128xf32>
    %13 = vector.extract_strided_slice %12 {offsets = [0, 0], sizes = [2, 64], strides = [1, 1]} : vector<2x128xf32> to vector<2x64xf32>
    %14 = vector.extract_strided_slice %12 {offsets = [0, 64], sizes = [2, 64], strides = [1, 1]} : vector<2x128xf32> to vector<2x64xf32>
    %cst_9 = arith.constant dense<0.000000e+00> : vector<24x256xf32>
    %15 = tpu.matmul %0, %8, %cst_9 {dimension_numbers = #tpu.dot_dimension_numbers<[1], [0], [0], [1], [0, 0, 1, 1], [], []>} : vector<24x4xf32>, vector<4x256xf32>, vector<24x256xf32> -> vector<24x256xf32>
    %16 = vector.broadcast %7 : vector<1x256xf32> to vector<24x256xf32>
    %17 = arith.addf %15, %16 : vector<24x256xf32>
    %18 = vector.extract_strided_slice %17 {offsets = [0, 0], sizes = [2, 256], strides = [1, 1]} : vector<24x256xf32> to vector<2x256xf32>
    %cst_10 = arith.constant dense<0.000000e+00> : vector<2x256xf32>
    %19 = tpu.matmul %13, %9, %cst_10 {dimension_numbers = #tpu.dot_dimension_numbers<[1], [0], [0], [1], [0, 0, 1, 1], [], []>} : vector<2x64xf32>, vector<64x256xf32>, vector<2x256xf32> -> vector<2x256xf32>
    %20 = arith.addf %18, %19 : vector<2x256xf32>
    %21 = vector.extract_strided_slice %20 {offsets = [0, 0], sizes = [2, 192], strides = [1, 1]} : vector<2x256xf32> to vector<2x192xf32>
    %22 = arith.negf %21 : vector<2x192xf32>
    %23 = math.exp %22 : vector<2x192xf32>
    %cst_11 = arith.constant 1.000000e+00 : f32
    %24 = vector.broadcast %cst_11 : f32 to vector<2x192xf32>
    %25 = arith.addf %24, %23 : vector<2x192xf32>
    %26 = arith.divf %24, %25 : vector<2x192xf32>
    %27 = vector.extract_strided_slice %20 {offsets = [0, 192], sizes = [2, 64], strides = [1, 1]} : vector<2x256xf32> to vector<2x64xf32>
    %28 = math.tanh %27 : vector<2x64xf32>
    %29 = vector.extract_strided_slice %26 {offsets = [0, 64], sizes = [2, 64], strides = [1, 1]} : vector<2x192xf32> to vector<2x64xf32>
    %30 = arith.mulf %29, %14 : vector<2x64xf32>
    %31 = vector.extract_strided_slice %26 {offsets = [0, 0], sizes = [2, 64], strides = [1, 1]} : vector<2x192xf32> to vector<2x64xf32>
    %32 = arith.mulf %31, %28 : vector<2x64xf32>
    %33 = arith.addf %30, %32 : vector<2x64xf32>
    %34 = vector.extract_strided_slice %26 {offsets = [0, 128], sizes = [2, 64], strides = [1, 1]} : vector<2x192xf32> to vector<2x64xf32>
    %35 = math.tanh %33 : vector<2x64xf32>
    %36 = arith.mulf %34, %35 : vector<2x64xf32>
    %37 = vector.extract_strided_slice %17 {offsets = [2, 0], sizes = [2, 256], strides = [1, 1]} : vector<24x256xf32> to vector<2x256xf32>
    %cst_12 = arith.constant dense<0.000000e+00> : vector<2x256xf32>
    %38 = tpu.matmul %36, %9, %cst_12 {dimension_numbers = #tpu.dot_dimension_numbers<[1], [0], [0], [1], [0, 0, 1, 1], [], []>} : vector<2x64xf32>, vector<64x256xf32>, vector<2x256xf32> -> vector<2x256xf32>
    %39 = arith.addf %37, %38 : vector<2x256xf32>
    %40 = vector.extract_strided_slice %39 {offsets = [0, 0], sizes = [2, 192], strides = [1, 1]} : vector<2x256xf32> to vector<2x192xf32>
    %41 = arith.negf %40 : vector<2x192xf32>
    %42 = math.exp %41 : vector<2x192xf32>
    %cst_13 = arith.constant 1.000000e+00 : f32
    %43 = vector.broadcast %cst_13 : f32 to vector<2x192xf32>
    %44 = arith.addf %43, %42 : vector<2x192xf32>
    %45 = arith.divf %43, %44 : vector<2x192xf32>
    %46 = vector.extract_strided_slice %39 {offsets = [0, 192], sizes = [2, 64], strides = [1, 1]} : vector<2x256xf32> to vector<2x64xf32>
    %47 = math.tanh %46 : vector<2x64xf32>
    %48 = vector.extract_strided_slice %45 {offsets = [0, 64], sizes = [2, 64], strides = [1, 1]} : vector<2x192xf32> to vector<2x64xf32>
    %49 = arith.mulf %48, %33 : vector<2x64xf32>
    %50 = vector.extract_strided_slice %45 {offsets = [0, 0], sizes = [2, 64], strides = [1, 1]} : vector<2x192xf32> to vector<2x64xf32>
    %51 = arith.mulf %50, %47 : vector<2x64xf32>
    %52 = arith.addf %49, %51 : vector<2x64xf32>
    %53 = vector.extract_strided_slice %45 {offsets = [0, 128], sizes = [2, 64], strides = [1, 1]} : vector<2x192xf32> to vector<2x64xf32>
    %54 = math.tanh %52 : vector<2x64xf32>
    %55 = arith.mulf %53, %54 : vector<2x64xf32>
    %56 = vector.extract_strided_slice %17 {offsets = [4, 0], sizes = [2, 256], strides = [1, 1]} : vector<24x256xf32> to vector<2x256xf32>
    %cst_14 = arith.constant dense<0.000000e+00> : vector<2x256xf32>
    %57 = tpu.matmul %55, %9, %cst_14 {dimension_numbers = #tpu.dot_dimension_numbers<[1], [0], [0], [1], [0, 0, 1, 1], [], []>} : vector<2x64xf32>, vector<64x256xf32>, vector<2x256xf32> -> vector<2x256xf32>
    %58 = arith.addf %56, %57 : vector<2x256xf32>
    %59 = vector.extract_strided_slice %58 {offsets = [0, 0], sizes = [2, 192], strides = [1, 1]} : vector<2x256xf32> to vector<2x192xf32>
    %60 = arith.negf %59 : vector<2x192xf32>
    %61 = math.exp %60 : vector<2x192xf32>
    %cst_15 = arith.constant 1.000000e+00 : f32
    %62 = vector.broadcast %cst_15 : f32 to vector<2x192xf32>
    %63 = arith.addf %62, %61 : vector<2x192xf32>
    %64 = arith.divf %62, %63 : vector<2x192xf32>
    %65 = vector.extract_strided_slice %58 {offsets = [0, 192], sizes = [2, 64], strides = [1, 1]} : vector<2x256xf32> to vector<2x64xf32>
    %66 = math.tanh %65 : vector<2x64xf32>
    %67 = vector.extract_strided_slice %64 {offsets = [0, 64], sizes = [2, 64], strides = [1, 1]} : vector<2x192xf32> to vector<2x64xf32>
    %68 = arith.mulf %67, %52 : vector<2x64xf32>
    %69 = vector.extract_strided_slice %64 {offsets = [0, 0], sizes = [2, 64], strides = [1, 1]} : vector<2x192xf32> to vector<2x64xf32>
    %70 = arith.mulf %69, %66 : vector<2x64xf32>
    %71 = arith.addf %68, %70 : vector<2x64xf32>
    %72 = vector.extract_strided_slice %64 {offsets = [0, 128], sizes = [2, 64], strides = [1, 1]} : vector<2x192xf32> to vector<2x64xf32>
    %73 = math.tanh %71 : vector<2x64xf32>
    %74 = arith.mulf %72, %73 : vector<2x64xf32>
    %75 = vector.extract_strided_slice %17 {offsets = [6, 0], sizes = [2, 256], strides = [1, 1]} : vector<24x256xf32> to vector<2x256xf32>
    %cst_16 = arith.constant dense<0.000000e+00> : vector<2x256xf32>
    %76 = tpu.matmul %74, %9, %cst_16 {dimension_numbers = #tpu.dot_dimension_numbers<[1], [0], [0], [1], [0, 0, 1, 1], [], []>} : vector<2x64xf32>, vector<64x256xf32>, vector<2x256xf32> -> vector<2x256xf32>
    %77 = arith.addf %75, %76 : vector<2x256xf32>
    %78 = vector.extract_strided_slice %77 {offsets = [0, 0], sizes = [2, 192], strides = [1, 1]} : vector<2x256xf32> to vector<2x192xf32>
    %79 = arith.negf %78 : vector<2x192xf32>
    %80 = math.exp %79 : vector<2x192xf32>
    %cst_17 = arith.constant 1.000000e+00 : f32
    %81 = vector.broadcast %cst_17 : f32 to vector<2x192xf32>
    %82 = arith.addf %81, %80 : vector<2x192xf32>
    %83 = arith.divf %81, %82 : vector<2x192xf32>
    %84 = vector.extract_strided_slice %77 {offsets = [0, 192], sizes = [2, 64], strides = [1, 1]} : vector<2x256xf32> to vector<2x64xf32>
    %85 = math.tanh %84 : vector<2x64xf32>
    %86 = vector.extract_strided_slice %83 {offsets = [0, 64], sizes = [2, 64], strides = [1, 1]} : vector<2x192xf32> to vector<2x64xf32>
    %87 = arith.mulf %86, %71 : vector<2x64xf32>
    %88 = vector.extract_strided_slice %83 {offsets = [0, 0], sizes = [2, 64], strides = [1, 1]} : vector<2x192xf32> to vector<2x64xf32>
    %89 = arith.mulf %88, %85 : vector<2x64xf32>
    %90 = arith.addf %87, %89 : vector<2x64xf32>
    %91 = vector.extract_strided_slice %83 {offsets = [0, 128], sizes = [2, 64], strides = [1, 1]} : vector<2x192xf32> to vector<2x64xf32>
    %92 = math.tanh %90 : vector<2x64xf32>
    %93 = arith.mulf %91, %92 : vector<2x64xf32>
    %94 = vector.extract_strided_slice %17 {offsets = [8, 0], sizes = [2, 256], strides = [1, 1]} : vector<24x256xf32> to vector<2x256xf32>
    %cst_18 = arith.constant dense<0.000000e+00> : vector<2x256xf32>
    %95 = tpu.matmul %93, %9, %cst_18 {dimension_numbers = #tpu.dot_dimension_numbers<[1], [0], [0], [1], [0, 0, 1, 1], [], []>} : vector<2x64xf32>, vector<64x256xf32>, vector<2x256xf32> -> vector<2x256xf32>
    %96 = arith.addf %94, %95 : vector<2x256xf32>
    %97 = vector.extract_strided_slice %96 {offsets = [0, 0], sizes = [2, 192], strides = [1, 1]} : vector<2x256xf32> to vector<2x192xf32>
    %98 = arith.negf %97 : vector<2x192xf32>
    %99 = math.exp %98 : vector<2x192xf32>
    %cst_19 = arith.constant 1.000000e+00 : f32
    %100 = vector.broadcast %cst_19 : f32 to vector<2x192xf32>
    %101 = arith.addf %100, %99 : vector<2x192xf32>
    %102 = arith.divf %100, %101 : vector<2x192xf32>
    %103 = vector.extract_strided_slice %96 {offsets = [0, 192], sizes = [2, 64], strides = [1, 1]} : vector<2x256xf32> to vector<2x64xf32>
    %104 = math.tanh %103 : vector<2x64xf32>
    %105 = vector.extract_strided_slice %102 {offsets = [0, 64], sizes = [2, 64], strides = [1, 1]} : vector<2x192xf32> to vector<2x64xf32>
    %106 = arith.mulf %105, %90 : vector<2x64xf32>
    %107 = vector.extract_strided_slice %102 {offsets = [0, 0], sizes = [2, 64], strides = [1, 1]} : vector<2x192xf32> to vector<2x64xf32>
    %108 = arith.mulf %107, %104 : vector<2x64xf32>
    %109 = arith.addf %106, %108 : vector<2x64xf32>
    %110 = vector.extract_strided_slice %102 {offsets = [0, 128], sizes = [2, 64], strides = [1, 1]} : vector<2x192xf32> to vector<2x64xf32>
    %111 = math.tanh %109 : vector<2x64xf32>
    %112 = arith.mulf %110, %111 : vector<2x64xf32>
    %113 = vector.extract_strided_slice %17 {offsets = [10, 0], sizes = [2, 256], strides = [1, 1]} : vector<24x256xf32> to vector<2x256xf32>
    %cst_20 = arith.constant dense<0.000000e+00> : vector<2x256xf32>
    %114 = tpu.matmul %112, %9, %cst_20 {dimension_numbers = #tpu.dot_dimension_numbers<[1], [0], [0], [1], [0, 0, 1, 1], [], []>} : vector<2x64xf32>, vector<64x256xf32>, vector<2x256xf32> -> vector<2x256xf32>
    %115 = arith.addf %113, %114 : vector<2x256xf32>
    %116 = vector.extract_strided_slice %115 {offsets = [0, 0], sizes = [2, 192], strides = [1, 1]} : vector<2x256xf32> to vector<2x192xf32>
    %117 = arith.negf %116 : vector<2x192xf32>
    %118 = math.exp %117 : vector<2x192xf32>
    %cst_21 = arith.constant 1.000000e+00 : f32
    %119 = vector.broadcast %cst_21 : f32 to vector<2x192xf32>
    %120 = arith.addf %119, %118 : vector<2x192xf32>
    %121 = arith.divf %119, %120 : vector<2x192xf32>
    %122 = vector.extract_strided_slice %115 {offsets = [0, 192], sizes = [2, 64], strides = [1, 1]} : vector<2x256xf32> to vector<2x64xf32>
    %123 = math.tanh %122 : vector<2x64xf32>
    %124 = vector.extract_strided_slice %121 {offsets = [0, 64], sizes = [2, 64], strides = [1, 1]} : vector<2x192xf32> to vector<2x64xf32>
    %125 = arith.mulf %124, %109 : vector<2x64xf32>
    %126 = vector.extract_strided_slice %121 {offsets = [0, 0], sizes = [2, 64], strides = [1, 1]} : vector<2x192xf32> to vector<2x64xf32>
    %127 = arith.mulf %126, %123 : vector<2x64xf32>
    %128 = arith.addf %125, %127 : vector<2x64xf32>
    %129 = vector.extract_strided_slice %121 {offsets = [0, 128], sizes = [2, 64], strides = [1, 1]} : vector<2x192xf32> to vector<2x64xf32>
    %130 = math.tanh %128 : vector<2x64xf32>
    %131 = arith.mulf %129, %130 : vector<2x64xf32>
    %132 = vector.extract_strided_slice %17 {offsets = [12, 0], sizes = [2, 256], strides = [1, 1]} : vector<24x256xf32> to vector<2x256xf32>
    %cst_22 = arith.constant dense<0.000000e+00> : vector<2x256xf32>
    %133 = tpu.matmul %131, %9, %cst_22 {dimension_numbers = #tpu.dot_dimension_numbers<[1], [0], [0], [1], [0, 0, 1, 1], [], []>} : vector<2x64xf32>, vector<64x256xf32>, vector<2x256xf32> -> vector<2x256xf32>
    %134 = arith.addf %132, %133 : vector<2x256xf32>
    %135 = vector.extract_strided_slice %134 {offsets = [0, 0], sizes = [2, 192], strides = [1, 1]} : vector<2x256xf32> to vector<2x192xf32>
    %136 = arith.negf %135 : vector<2x192xf32>
    %137 = math.exp %136 : vector<2x192xf32>
    %cst_23 = arith.constant 1.000000e+00 : f32
    %138 = vector.broadcast %cst_23 : f32 to vector<2x192xf32>
    %139 = arith.addf %138, %137 : vector<2x192xf32>
    %140 = arith.divf %138, %139 : vector<2x192xf32>
    %141 = vector.extract_strided_slice %134 {offsets = [0, 192], sizes = [2, 64], strides = [1, 1]} : vector<2x256xf32> to vector<2x64xf32>
    %142 = math.tanh %141 : vector<2x64xf32>
    %143 = vector.extract_strided_slice %140 {offsets = [0, 64], sizes = [2, 64], strides = [1, 1]} : vector<2x192xf32> to vector<2x64xf32>
    %144 = arith.mulf %143, %128 : vector<2x64xf32>
    %145 = vector.extract_strided_slice %140 {offsets = [0, 0], sizes = [2, 64], strides = [1, 1]} : vector<2x192xf32> to vector<2x64xf32>
    %146 = arith.mulf %145, %142 : vector<2x64xf32>
    %147 = arith.addf %144, %146 : vector<2x64xf32>
    %148 = vector.extract_strided_slice %140 {offsets = [0, 128], sizes = [2, 64], strides = [1, 1]} : vector<2x192xf32> to vector<2x64xf32>
    %149 = math.tanh %147 : vector<2x64xf32>
    %150 = arith.mulf %148, %149 : vector<2x64xf32>
    %151 = vector.extract_strided_slice %17 {offsets = [14, 0], sizes = [2, 256], strides = [1, 1]} : vector<24x256xf32> to vector<2x256xf32>
    %cst_24 = arith.constant dense<0.000000e+00> : vector<2x256xf32>
    %152 = tpu.matmul %150, %9, %cst_24 {dimension_numbers = #tpu.dot_dimension_numbers<[1], [0], [0], [1], [0, 0, 1, 1], [], []>} : vector<2x64xf32>, vector<64x256xf32>, vector<2x256xf32> -> vector<2x256xf32>
    %153 = arith.addf %151, %152 : vector<2x256xf32>
    %154 = vector.extract_strided_slice %153 {offsets = [0, 0], sizes = [2, 192], strides = [1, 1]} : vector<2x256xf32> to vector<2x192xf32>
    %155 = arith.negf %154 : vector<2x192xf32>
    %156 = math.exp %155 : vector<2x192xf32>
    %cst_25 = arith.constant 1.000000e+00 : f32
    %157 = vector.broadcast %cst_25 : f32 to vector<2x192xf32>
    %158 = arith.addf %157, %156 : vector<2x192xf32>
    %159 = arith.divf %157, %158 : vector<2x192xf32>
    %160 = vector.extract_strided_slice %153 {offsets = [0, 192], sizes = [2, 64], strides = [1, 1]} : vector<2x256xf32> to vector<2x64xf32>
    %161 = math.tanh %160 : vector<2x64xf32>
    %162 = vector.extract_strided_slice %159 {offsets = [0, 64], sizes = [2, 64], strides = [1, 1]} : vector<2x192xf32> to vector<2x64xf32>
    %163 = arith.mulf %162, %147 : vector<2x64xf32>
    %164 = vector.extract_strided_slice %159 {offsets = [0, 0], sizes = [2, 64], strides = [1, 1]} : vector<2x192xf32> to vector<2x64xf32>
    %165 = arith.mulf %164, %161 : vector<2x64xf32>
    %166 = arith.addf %163, %165 : vector<2x64xf32>
    %167 = vector.extract_strided_slice %159 {offsets = [0, 128], sizes = [2, 64], strides = [1, 1]} : vector<2x192xf32> to vector<2x64xf32>
    %168 = math.tanh %166 : vector<2x64xf32>
    %169 = arith.mulf %167, %168 : vector<2x64xf32>
    %170 = vector.extract_strided_slice %17 {offsets = [16, 0], sizes = [2, 256], strides = [1, 1]} : vector<24x256xf32> to vector<2x256xf32>
    %cst_26 = arith.constant dense<0.000000e+00> : vector<2x256xf32>
    %171 = tpu.matmul %169, %9, %cst_26 {dimension_numbers = #tpu.dot_dimension_numbers<[1], [0], [0], [1], [0, 0, 1, 1], [], []>} : vector<2x64xf32>, vector<64x256xf32>, vector<2x256xf32> -> vector<2x256xf32>
    %172 = arith.addf %170, %171 : vector<2x256xf32>
    %173 = vector.extract_strided_slice %172 {offsets = [0, 0], sizes = [2, 192], strides = [1, 1]} : vector<2x256xf32> to vector<2x192xf32>
    %174 = arith.negf %173 : vector<2x192xf32>
    %175 = math.exp %174 : vector<2x192xf32>
    %cst_27 = arith.constant 1.000000e+00 : f32
    %176 = vector.broadcast %cst_27 : f32 to vector<2x192xf32>
    %177 = arith.addf %176, %175 : vector<2x192xf32>
    %178 = arith.divf %176, %177 : vector<2x192xf32>
    %179 = vector.extract_strided_slice %172 {offsets = [0, 192], sizes = [2, 64], strides = [1, 1]} : vector<2x256xf32> to vector<2x64xf32>
    %180 = math.tanh %179 : vector<2x64xf32>
    %181 = vector.extract_strided_slice %178 {offsets = [0, 64], sizes = [2, 64], strides = [1, 1]} : vector<2x192xf32> to vector<2x64xf32>
    %182 = arith.mulf %181, %166 : vector<2x64xf32>
    %183 = vector.extract_strided_slice %178 {offsets = [0, 0], sizes = [2, 64], strides = [1, 1]} : vector<2x192xf32> to vector<2x64xf32>
    %184 = arith.mulf %183, %180 : vector<2x64xf32>
    %185 = arith.addf %182, %184 : vector<2x64xf32>
    %186 = vector.extract_strided_slice %178 {offsets = [0, 128], sizes = [2, 64], strides = [1, 1]} : vector<2x192xf32> to vector<2x64xf32>
    %187 = math.tanh %185 : vector<2x64xf32>
    %188 = arith.mulf %186, %187 : vector<2x64xf32>
    %189 = vector.extract_strided_slice %17 {offsets = [18, 0], sizes = [2, 256], strides = [1, 1]} : vector<24x256xf32> to vector<2x256xf32>
    %cst_28 = arith.constant dense<0.000000e+00> : vector<2x256xf32>
    %190 = tpu.matmul %188, %9, %cst_28 {dimension_numbers = #tpu.dot_dimension_numbers<[1], [0], [0], [1], [0, 0, 1, 1], [], []>} : vector<2x64xf32>, vector<64x256xf32>, vector<2x256xf32> -> vector<2x256xf32>
    %191 = arith.addf %189, %190 : vector<2x256xf32>
    %192 = vector.extract_strided_slice %191 {offsets = [0, 0], sizes = [2, 192], strides = [1, 1]} : vector<2x256xf32> to vector<2x192xf32>
    %193 = arith.negf %192 : vector<2x192xf32>
    %194 = math.exp %193 : vector<2x192xf32>
    %cst_29 = arith.constant 1.000000e+00 : f32
    %195 = vector.broadcast %cst_29 : f32 to vector<2x192xf32>
    %196 = arith.addf %195, %194 : vector<2x192xf32>
    %197 = arith.divf %195, %196 : vector<2x192xf32>
    %198 = vector.extract_strided_slice %191 {offsets = [0, 192], sizes = [2, 64], strides = [1, 1]} : vector<2x256xf32> to vector<2x64xf32>
    %199 = math.tanh %198 : vector<2x64xf32>
    %200 = vector.extract_strided_slice %197 {offsets = [0, 64], sizes = [2, 64], strides = [1, 1]} : vector<2x192xf32> to vector<2x64xf32>
    %201 = arith.mulf %200, %185 : vector<2x64xf32>
    %202 = vector.extract_strided_slice %197 {offsets = [0, 0], sizes = [2, 64], strides = [1, 1]} : vector<2x192xf32> to vector<2x64xf32>
    %203 = arith.mulf %202, %199 : vector<2x64xf32>
    %204 = arith.addf %201, %203 : vector<2x64xf32>
    %205 = vector.extract_strided_slice %197 {offsets = [0, 128], sizes = [2, 64], strides = [1, 1]} : vector<2x192xf32> to vector<2x64xf32>
    %206 = math.tanh %204 : vector<2x64xf32>
    %207 = arith.mulf %205, %206 : vector<2x64xf32>
    %208 = vector.extract_strided_slice %17 {offsets = [20, 0], sizes = [2, 256], strides = [1, 1]} : vector<24x256xf32> to vector<2x256xf32>
    %cst_30 = arith.constant dense<0.000000e+00> : vector<2x256xf32>
    %209 = tpu.matmul %207, %9, %cst_30 {dimension_numbers = #tpu.dot_dimension_numbers<[1], [0], [0], [1], [0, 0, 1, 1], [], []>} : vector<2x64xf32>, vector<64x256xf32>, vector<2x256xf32> -> vector<2x256xf32>
    %210 = arith.addf %208, %209 : vector<2x256xf32>
    %211 = vector.extract_strided_slice %210 {offsets = [0, 0], sizes = [2, 192], strides = [1, 1]} : vector<2x256xf32> to vector<2x192xf32>
    %212 = arith.negf %211 : vector<2x192xf32>
    %213 = math.exp %212 : vector<2x192xf32>
    %cst_31 = arith.constant 1.000000e+00 : f32
    %214 = vector.broadcast %cst_31 : f32 to vector<2x192xf32>
    %215 = arith.addf %214, %213 : vector<2x192xf32>
    %216 = arith.divf %214, %215 : vector<2x192xf32>
    %217 = vector.extract_strided_slice %210 {offsets = [0, 192], sizes = [2, 64], strides = [1, 1]} : vector<2x256xf32> to vector<2x64xf32>
    %218 = math.tanh %217 : vector<2x64xf32>
    %219 = vector.extract_strided_slice %216 {offsets = [0, 64], sizes = [2, 64], strides = [1, 1]} : vector<2x192xf32> to vector<2x64xf32>
    %220 = arith.mulf %219, %204 : vector<2x64xf32>
    %221 = vector.extract_strided_slice %216 {offsets = [0, 0], sizes = [2, 64], strides = [1, 1]} : vector<2x192xf32> to vector<2x64xf32>
    %222 = arith.mulf %221, %218 : vector<2x64xf32>
    %223 = arith.addf %220, %222 : vector<2x64xf32>
    %224 = vector.extract_strided_slice %216 {offsets = [0, 128], sizes = [2, 64], strides = [1, 1]} : vector<2x192xf32> to vector<2x64xf32>
    %225 = math.tanh %223 : vector<2x64xf32>
    %226 = arith.mulf %224, %225 : vector<2x64xf32>
    %227 = vector.extract_strided_slice %17 {offsets = [22, 0], sizes = [2, 256], strides = [1, 1]} : vector<24x256xf32> to vector<2x256xf32>
    %cst_32 = arith.constant dense<0.000000e+00> : vector<2x256xf32>
    %228 = tpu.matmul %226, %9, %cst_32 {dimension_numbers = #tpu.dot_dimension_numbers<[1], [0], [0], [1], [0, 0, 1, 1], [], []>} : vector<2x64xf32>, vector<64x256xf32>, vector<2x256xf32> -> vector<2x256xf32>
    %229 = arith.addf %227, %228 : vector<2x256xf32>
    %230 = vector.extract_strided_slice %229 {offsets = [0, 0], sizes = [2, 192], strides = [1, 1]} : vector<2x256xf32> to vector<2x192xf32>
    %231 = arith.negf %230 : vector<2x192xf32>
    %232 = math.exp %231 : vector<2x192xf32>
    %cst_33 = arith.constant 1.000000e+00 : f32
    %233 = vector.broadcast %cst_33 : f32 to vector<2x192xf32>
    %234 = arith.addf %233, %232 : vector<2x192xf32>
    %235 = arith.divf %233, %234 : vector<2x192xf32>
    %236 = vector.extract_strided_slice %229 {offsets = [0, 192], sizes = [2, 64], strides = [1, 1]} : vector<2x256xf32> to vector<2x64xf32>
    %237 = math.tanh %236 : vector<2x64xf32>
    %238 = vector.extract_strided_slice %235 {offsets = [0, 64], sizes = [2, 64], strides = [1, 1]} : vector<2x192xf32> to vector<2x64xf32>
    %239 = arith.mulf %238, %223 : vector<2x64xf32>
    %240 = vector.extract_strided_slice %235 {offsets = [0, 0], sizes = [2, 64], strides = [1, 1]} : vector<2x192xf32> to vector<2x64xf32>
    %241 = arith.mulf %240, %237 : vector<2x64xf32>
    %242 = arith.addf %239, %241 : vector<2x64xf32>
    %243 = vector.extract_strided_slice %235 {offsets = [0, 128], sizes = [2, 64], strides = [1, 1]} : vector<2x192xf32> to vector<2x64xf32>
    %244 = math.tanh %242 : vector<2x64xf32>
    %245 = arith.mulf %243, %244 : vector<2x64xf32>
    %246 = tpu.concatenate %245, %242 in 1 : vector<2x64xf32>, vector<2x64xf32> -> vector<2x128xf32>
    %c0_34 = arith.constant 0 : index
    %c0_35 = arith.constant 0 : index
    %247 = vector.load %arg3[%c0_34, %c0_35] : memref<368x552xf32, #tpu.memory_space<vmem>>, vector<64x512xf32>
    %c64 = arith.constant 64 : index
    %c0_36 = arith.constant 0 : index
    %248 = vector.load %arg3[%c64, %c0_36] : memref<368x552xf32, #tpu.memory_space<vmem>>, vector<1x512xf32>
    %c65 = arith.constant 65 : index
    %c0_37 = arith.constant 0 : index
    %249 = vector.load %arg3[%c65, %c0_37] : memref<368x552xf32, #tpu.memory_space<vmem>>, vector<1x512xf32>
    %c66 = arith.constant 66 : index
    %c0_38 = arith.constant 0 : index
    %250 = vector.load %arg3[%c66, %c0_38] : memref<368x552xf32, #tpu.memory_space<vmem>>, vector<1x40xf32>
    %c72 = arith.constant 72 : index
    %c0_39 = arith.constant 0 : index
    %251 = vector.load %arg3[%c72, %c0_39] : memref<368x552xf32, #tpu.memory_space<vmem>>, vector<168x512xf32>
    %c240 = arith.constant 240 : index
    %c0_40 = arith.constant 0 : index
    %252 = vector.load %arg3[%c240, %c0_40] : memref<368x552xf32, #tpu.memory_space<vmem>>, vector<128x552xf32>
    %253 = vector.extract_strided_slice %246 {offsets = [0, 0], sizes = [2, 64], strides = [1, 1]} : vector<2x128xf32> to vector<2x64xf32>
    %254 = vector.extract_strided_slice %246 {offsets = [0, 64], sizes = [2, 40], strides = [1, 1]} : vector<2x128xf32> to vector<2x40xf32>
    %cst_41 = arith.constant dense<0.000000e+00> : vector<2x512xf32>
    %255 = tpu.matmul %253, %247, %cst_41 {dimension_numbers = #tpu.dot_dimension_numbers<[1], [0], [0], [1], [0, 0, 1, 1], [], []>} : vector<2x64xf32>, vector<64x512xf32>, vector<2x512xf32> -> vector<2x512xf32>
    %256 = vector.broadcast %248 : vector<1x512xf32> to vector<2x512xf32>
    %257 = arith.addf %255, %256 : vector<2x512xf32>
    %258 = vector.broadcast %249 : vector<1x512xf32> to vector<2x512xf32>
    %259 = arith.addf %257, %258 : vector<2x512xf32>
    %260 = tpu.concatenate %254, %246 in 1 : vector<2x40xf32>, vector<2x128xf32> -> vector<2x168xf32>
    %cst_42 = arith.constant dense<0.000000e+00> : vector<2x512xf32>
    %261 = tpu.matmul %260, %251, %cst_42 {dimension_numbers = #tpu.dot_dimension_numbers<[1], [0], [0], [1], [0, 0, 1, 1], [], []>} : vector<2x168xf32>, vector<168x512xf32>, vector<2x512xf32> -> vector<2x512xf32>
    %262 = arith.addf %257, %261 : vector<2x512xf32>
    %263 = vector.extract_strided_slice %262 {offsets = [0, 0], sizes = [2, 256], strides = [1, 1]} : vector<2x512xf32> to vector<2x256xf32>
    %264 = arith.negf %263 : vector<2x256xf32>
    %265 = math.exp %264 : vector<2x256xf32>
    %cst_43 = arith.constant 1.000000e+00 : f32
    %266 = vector.broadcast %cst_43 : f32 to vector<2x256xf32>
    %267 = arith.addf %266, %265 : vector<2x256xf32>
    %268 = arith.divf %266, %267 : vector<2x256xf32>
    %269 = vector.extract_strided_slice %268 {offsets = [0, 0], sizes = [2, 128], strides = [1, 1]} : vector<2x256xf32> to vector<2x128xf32>
    %270 = vector.extract_strided_slice %268 {offsets = [0, 128], sizes = [2, 128], strides = [1, 1]} : vector<2x256xf32> to vector<2x128xf32>
    %271 = vector.extract_strided_slice %262 {offsets = [0, 256], sizes = [2, 128], strides = [1, 1]} : vector<2x512xf32> to vector<2x128xf32>
    %272 = vector.extract_strided_slice %262 {offsets = [0, 384], sizes = [2, 128], strides = [1, 1]} : vector<2x512xf32> to vector<2x128xf32>
    %273 = arith.mulf %269, %272 : vector<2x128xf32>
    %274 = arith.addf %271, %273 : vector<2x128xf32>
    %275 = math.tanh %274 : vector<2x128xf32>
    %cst_44 = arith.constant 1.000000e+00 : f32
    %276 = vector.broadcast %cst_44 : f32 to vector<2x128xf32>
    %277 = arith.subf %276, %270 : vector<2x128xf32>
    %278 = arith.mulf %277, %275 : vector<2x128xf32>
    %279 = arith.mulf %270, %246 : vector<2x128xf32>
    %280 = arith.addf %278, %279 : vector<2x128xf32>
    %cst_45 = arith.constant dense<0.000000e+00> : vector<2x552xf32>
    %281 = tpu.matmul %280, %252, %cst_45 {dimension_numbers = #tpu.dot_dimension_numbers<[1], [0], [0], [1], [0, 0, 1, 1], [], []>} : vector<2x128xf32>, vector<128x552xf32>, vector<2x552xf32> -> vector<2x552xf32>
    %282 = vector.extract_strided_slice %281 {offsets = [0, 0], sizes = [2, 40], strides = [1, 1]} : vector<2x552xf32> to vector<2x40xf32>
    %283 = vector.broadcast %250 : vector<1x40xf32> to vector<2x40xf32>
    %284 = arith.addf %282, %283 : vector<2x40xf32>
    %285 = vector.extract_strided_slice %281 {offsets = [0, 40], sizes = [2, 512], strides = [1, 1]} : vector<2x552xf32> to vector<2x512xf32>
    %286 = arith.addf %285, %259 : vector<2x512xf32>
    %287 = vector.extract_strided_slice %286 {offsets = [0, 0], sizes = [2, 256], strides = [1, 1]} : vector<2x512xf32> to vector<2x256xf32>
    %288 = arith.negf %287 : vector<2x256xf32>
    %289 = math.exp %288 : vector<2x256xf32>
    %cst_46 = arith.constant 1.000000e+00 : f32
    %290 = vector.broadcast %cst_46 : f32 to vector<2x256xf32>
    %291 = arith.addf %290, %289 : vector<2x256xf32>
    %292 = arith.divf %290, %291 : vector<2x256xf32>
    %293 = vector.extract_strided_slice %292 {offsets = [0, 0], sizes = [2, 128], strides = [1, 1]} : vector<2x256xf32> to vector<2x128xf32>
    %294 = vector.extract_strided_slice %292 {offsets = [0, 128], sizes = [2, 128], strides = [1, 1]} : vector<2x256xf32> to vector<2x128xf32>
    %295 = vector.extract_strided_slice %286 {offsets = [0, 256], sizes = [2, 128], strides = [1, 1]} : vector<2x512xf32> to vector<2x128xf32>
    %296 = vector.extract_strided_slice %286 {offsets = [0, 384], sizes = [2, 128], strides = [1, 1]} : vector<2x512xf32> to vector<2x128xf32>
    %297 = arith.mulf %293, %296 : vector<2x128xf32>
    %298 = arith.addf %295, %297 : vector<2x128xf32>
    %299 = math.tanh %298 : vector<2x128xf32>
    %cst_47 = arith.constant 1.000000e+00 : f32
    %300 = vector.broadcast %cst_47 : f32 to vector<2x128xf32>
    %301 = arith.subf %300, %294 : vector<2x128xf32>
    %302 = arith.mulf %301, %299 : vector<2x128xf32>
    %303 = arith.mulf %294, %280 : vector<2x128xf32>
    %304 = arith.addf %302, %303 : vector<2x128xf32>
    %cst_48 = arith.constant dense<0.000000e+00> : vector<2x552xf32>
    %305 = tpu.matmul %304, %252, %cst_48 {dimension_numbers = #tpu.dot_dimension_numbers<[1], [0], [0], [1], [0, 0, 1, 1], [], []>} : vector<2x128xf32>, vector<128x552xf32>, vector<2x552xf32> -> vector<2x552xf32>
    %306 = vector.extract_strided_slice %305 {offsets = [0, 0], sizes = [2, 40], strides = [1, 1]} : vector<2x552xf32> to vector<2x40xf32>
    %307 = vector.broadcast %250 : vector<1x40xf32> to vector<2x40xf32>
    %308 = arith.addf %306, %307 : vector<2x40xf32>
    %309 = vector.extract_strided_slice %305 {offsets = [0, 40], sizes = [2, 512], strides = [1, 1]} : vector<2x552xf32> to vector<2x512xf32>
    %310 = arith.addf %309, %259 : vector<2x512xf32>
    %311 = vector.extract_strided_slice %310 {offsets = [0, 0], sizes = [2, 256], strides = [1, 1]} : vector<2x512xf32> to vector<2x256xf32>
    %312 = arith.negf %311 : vector<2x256xf32>
    %313 = math.exp %312 : vector<2x256xf32>
    %cst_49 = arith.constant 1.000000e+00 : f32
    %314 = vector.broadcast %cst_49 : f32 to vector<2x256xf32>
    %315 = arith.addf %314, %313 : vector<2x256xf32>
    %316 = arith.divf %314, %315 : vector<2x256xf32>
    %317 = vector.extract_strided_slice %316 {offsets = [0, 0], sizes = [2, 128], strides = [1, 1]} : vector<2x256xf32> to vector<2x128xf32>
    %318 = vector.extract_strided_slice %316 {offsets = [0, 128], sizes = [2, 128], strides = [1, 1]} : vector<2x256xf32> to vector<2x128xf32>
    %319 = vector.extract_strided_slice %310 {offsets = [0, 256], sizes = [2, 128], strides = [1, 1]} : vector<2x512xf32> to vector<2x128xf32>
    %320 = vector.extract_strided_slice %310 {offsets = [0, 384], sizes = [2, 128], strides = [1, 1]} : vector<2x512xf32> to vector<2x128xf32>
    %321 = arith.mulf %317, %320 : vector<2x128xf32>
    %322 = arith.addf %319, %321 : vector<2x128xf32>
    %323 = math.tanh %322 : vector<2x128xf32>
    %cst_50 = arith.constant 1.000000e+00 : f32
    %324 = vector.broadcast %cst_50 : f32 to vector<2x128xf32>
    %325 = arith.subf %324, %318 : vector<2x128xf32>
    %326 = arith.mulf %325, %323 : vector<2x128xf32>
    %327 = arith.mulf %318, %304 : vector<2x128xf32>
    %328 = arith.addf %326, %327 : vector<2x128xf32>
    %cst_51 = arith.constant dense<0.000000e+00> : vector<2x552xf32>
    %329 = tpu.matmul %328, %252, %cst_51 {dimension_numbers = #tpu.dot_dimension_numbers<[1], [0], [0], [1], [0, 0, 1, 1], [], []>} : vector<2x128xf32>, vector<128x552xf32>, vector<2x552xf32> -> vector<2x552xf32>
    %330 = vector.extract_strided_slice %329 {offsets = [0, 0], sizes = [2, 40], strides = [1, 1]} : vector<2x552xf32> to vector<2x40xf32>
    %331 = vector.broadcast %250 : vector<1x40xf32> to vector<2x40xf32>
    %332 = arith.addf %330, %331 : vector<2x40xf32>
    %333 = vector.extract_strided_slice %329 {offsets = [0, 40], sizes = [2, 512], strides = [1, 1]} : vector<2x552xf32> to vector<2x512xf32>
    %334 = arith.addf %333, %259 : vector<2x512xf32>
    %335 = vector.extract_strided_slice %334 {offsets = [0, 0], sizes = [2, 256], strides = [1, 1]} : vector<2x512xf32> to vector<2x256xf32>
    %336 = arith.negf %335 : vector<2x256xf32>
    %337 = math.exp %336 : vector<2x256xf32>
    %cst_52 = arith.constant 1.000000e+00 : f32
    %338 = vector.broadcast %cst_52 : f32 to vector<2x256xf32>
    %339 = arith.addf %338, %337 : vector<2x256xf32>
    %340 = arith.divf %338, %339 : vector<2x256xf32>
    %341 = vector.extract_strided_slice %340 {offsets = [0, 0], sizes = [2, 128], strides = [1, 1]} : vector<2x256xf32> to vector<2x128xf32>
    %342 = vector.extract_strided_slice %340 {offsets = [0, 128], sizes = [2, 128], strides = [1, 1]} : vector<2x256xf32> to vector<2x128xf32>
    %343 = vector.extract_strided_slice %334 {offsets = [0, 256], sizes = [2, 128], strides = [1, 1]} : vector<2x512xf32> to vector<2x128xf32>
    %344 = vector.extract_strided_slice %334 {offsets = [0, 384], sizes = [2, 128], strides = [1, 1]} : vector<2x512xf32> to vector<2x128xf32>
    %345 = arith.mulf %341, %344 : vector<2x128xf32>
    %346 = arith.addf %343, %345 : vector<2x128xf32>
    %347 = math.tanh %346 : vector<2x128xf32>
    %cst_53 = arith.constant 1.000000e+00 : f32
    %348 = vector.broadcast %cst_53 : f32 to vector<2x128xf32>
    %349 = arith.subf %348, %342 : vector<2x128xf32>
    %350 = arith.mulf %349, %347 : vector<2x128xf32>
    %351 = arith.mulf %342, %328 : vector<2x128xf32>
    %352 = arith.addf %350, %351 : vector<2x128xf32>
    %cst_54 = arith.constant dense<0.000000e+00> : vector<2x552xf32>
    %353 = tpu.matmul %352, %252, %cst_54 {dimension_numbers = #tpu.dot_dimension_numbers<[1], [0], [0], [1], [0, 0, 1, 1], [], []>} : vector<2x128xf32>, vector<128x552xf32>, vector<2x552xf32> -> vector<2x552xf32>
    %354 = vector.extract_strided_slice %353 {offsets = [0, 0], sizes = [2, 40], strides = [1, 1]} : vector<2x552xf32> to vector<2x40xf32>
    %355 = vector.broadcast %250 : vector<1x40xf32> to vector<2x40xf32>
    %356 = arith.addf %354, %355 : vector<2x40xf32>
    %357 = vector.extract_strided_slice %353 {offsets = [0, 40], sizes = [2, 512], strides = [1, 1]} : vector<2x552xf32> to vector<2x512xf32>
    %358 = arith.addf %357, %259 : vector<2x512xf32>
    %359 = vector.extract_strided_slice %358 {offsets = [0, 0], sizes = [2, 256], strides = [1, 1]} : vector<2x512xf32> to vector<2x256xf32>
    %360 = arith.negf %359 : vector<2x256xf32>
    %361 = math.exp %360 : vector<2x256xf32>
    %cst_55 = arith.constant 1.000000e+00 : f32
    %362 = vector.broadcast %cst_55 : f32 to vector<2x256xf32>
    %363 = arith.addf %362, %361 : vector<2x256xf32>
    %364 = arith.divf %362, %363 : vector<2x256xf32>
    %365 = vector.extract_strided_slice %364 {offsets = [0, 0], sizes = [2, 128], strides = [1, 1]} : vector<2x256xf32> to vector<2x128xf32>
    %366 = vector.extract_strided_slice %364 {offsets = [0, 128], sizes = [2, 128], strides = [1, 1]} : vector<2x256xf32> to vector<2x128xf32>
    %367 = vector.extract_strided_slice %358 {offsets = [0, 256], sizes = [2, 128], strides = [1, 1]} : vector<2x512xf32> to vector<2x128xf32>
    %368 = vector.extract_strided_slice %358 {offsets = [0, 384], sizes = [2, 128], strides = [1, 1]} : vector<2x512xf32> to vector<2x128xf32>
    %369 = arith.mulf %365, %368 : vector<2x128xf32>
    %370 = arith.addf %367, %369 : vector<2x128xf32>
    %371 = math.tanh %370 : vector<2x128xf32>
    %cst_56 = arith.constant 1.000000e+00 : f32
    %372 = vector.broadcast %cst_56 : f32 to vector<2x128xf32>
    %373 = arith.subf %372, %366 : vector<2x128xf32>
    %374 = arith.mulf %373, %371 : vector<2x128xf32>
    %375 = arith.mulf %366, %352 : vector<2x128xf32>
    %376 = arith.addf %374, %375 : vector<2x128xf32>
    %cst_57 = arith.constant dense<0.000000e+00> : vector<2x552xf32>
    %377 = tpu.matmul %376, %252, %cst_57 {dimension_numbers = #tpu.dot_dimension_numbers<[1], [0], [0], [1], [0, 0, 1, 1], [], []>} : vector<2x128xf32>, vector<128x552xf32>, vector<2x552xf32> -> vector<2x552xf32>
    %378 = vector.extract_strided_slice %377 {offsets = [0, 0], sizes = [2, 40], strides = [1, 1]} : vector<2x552xf32> to vector<2x40xf32>
    %379 = vector.broadcast %250 : vector<1x40xf32> to vector<2x40xf32>
    %380 = arith.addf %378, %379 : vector<2x40xf32>
    %381 = vector.extract_strided_slice %377 {offsets = [0, 40], sizes = [2, 512], strides = [1, 1]} : vector<2x552xf32> to vector<2x512xf32>
    %382 = arith.addf %381, %259 : vector<2x512xf32>
    %383 = vector.extract_strided_slice %382 {offsets = [0, 0], sizes = [2, 256], strides = [1, 1]} : vector<2x512xf32> to vector<2x256xf32>
    %384 = arith.negf %383 : vector<2x256xf32>
    %385 = math.exp %384 : vector<2x256xf32>
    %cst_58 = arith.constant 1.000000e+00 : f32
    %386 = vector.broadcast %cst_58 : f32 to vector<2x256xf32>
    %387 = arith.addf %386, %385 : vector<2x256xf32>
    %388 = arith.divf %386, %387 : vector<2x256xf32>
    %389 = vector.extract_strided_slice %388 {offsets = [0, 0], sizes = [2, 128], strides = [1, 1]} : vector<2x256xf32> to vector<2x128xf32>
    %390 = vector.extract_strided_slice %388 {offsets = [0, 128], sizes = [2, 128], strides = [1, 1]} : vector<2x256xf32> to vector<2x128xf32>
    %391 = vector.extract_strided_slice %382 {offsets = [0, 256], sizes = [2, 128], strides = [1, 1]} : vector<2x512xf32> to vector<2x128xf32>
    %392 = vector.extract_strided_slice %382 {offsets = [0, 384], sizes = [2, 128], strides = [1, 1]} : vector<2x512xf32> to vector<2x128xf32>
    %393 = arith.mulf %389, %392 : vector<2x128xf32>
    %394 = arith.addf %391, %393 : vector<2x128xf32>
    %395 = math.tanh %394 : vector<2x128xf32>
    %cst_59 = arith.constant 1.000000e+00 : f32
    %396 = vector.broadcast %cst_59 : f32 to vector<2x128xf32>
    %397 = arith.subf %396, %390 : vector<2x128xf32>
    %398 = arith.mulf %397, %395 : vector<2x128xf32>
    %399 = arith.mulf %390, %376 : vector<2x128xf32>
    %400 = arith.addf %398, %399 : vector<2x128xf32>
    %cst_60 = arith.constant dense<0.000000e+00> : vector<2x552xf32>
    %401 = tpu.matmul %400, %252, %cst_60 {dimension_numbers = #tpu.dot_dimension_numbers<[1], [0], [0], [1], [0, 0, 1, 1], [], []>} : vector<2x128xf32>, vector<128x552xf32>, vector<2x552xf32> -> vector<2x552xf32>
    %402 = vector.extract_strided_slice %401 {offsets = [0, 0], sizes = [2, 40], strides = [1, 1]} : vector<2x552xf32> to vector<2x40xf32>
    %403 = vector.broadcast %250 : vector<1x40xf32> to vector<2x40xf32>
    %404 = arith.addf %402, %403 : vector<2x40xf32>
    %405 = vector.extract_strided_slice %401 {offsets = [0, 40], sizes = [2, 512], strides = [1, 1]} : vector<2x552xf32> to vector<2x512xf32>
    %406 = arith.addf %405, %259 : vector<2x512xf32>
    %407 = vector.extract_strided_slice %406 {offsets = [0, 0], sizes = [2, 256], strides = [1, 1]} : vector<2x512xf32> to vector<2x256xf32>
    %408 = arith.negf %407 : vector<2x256xf32>
    %409 = math.exp %408 : vector<2x256xf32>
    %cst_61 = arith.constant 1.000000e+00 : f32
    %410 = vector.broadcast %cst_61 : f32 to vector<2x256xf32>
    %411 = arith.addf %410, %409 : vector<2x256xf32>
    %412 = arith.divf %410, %411 : vector<2x256xf32>
    %413 = vector.extract_strided_slice %412 {offsets = [0, 0], sizes = [2, 128], strides = [1, 1]} : vector<2x256xf32> to vector<2x128xf32>
    %414 = vector.extract_strided_slice %412 {offsets = [0, 128], sizes = [2, 128], strides = [1, 1]} : vector<2x256xf32> to vector<2x128xf32>
    %415 = vector.extract_strided_slice %406 {offsets = [0, 256], sizes = [2, 128], strides = [1, 1]} : vector<2x512xf32> to vector<2x128xf32>
    %416 = vector.extract_strided_slice %406 {offsets = [0, 384], sizes = [2, 128], strides = [1, 1]} : vector<2x512xf32> to vector<2x128xf32>
    %417 = arith.mulf %413, %416 : vector<2x128xf32>
    %418 = arith.addf %415, %417 : vector<2x128xf32>
    %419 = math.tanh %418 : vector<2x128xf32>
    %cst_62 = arith.constant 1.000000e+00 : f32
    %420 = vector.broadcast %cst_62 : f32 to vector<2x128xf32>
    %421 = arith.subf %420, %414 : vector<2x128xf32>
    %422 = arith.mulf %421, %419 : vector<2x128xf32>
    %423 = arith.mulf %414, %400 : vector<2x128xf32>
    %424 = arith.addf %422, %423 : vector<2x128xf32>
    %cst_63 = arith.constant dense<0.000000e+00> : vector<2x552xf32>
    %425 = tpu.matmul %424, %252, %cst_63 {dimension_numbers = #tpu.dot_dimension_numbers<[1], [0], [0], [1], [0, 0, 1, 1], [], []>} : vector<2x128xf32>, vector<128x552xf32>, vector<2x552xf32> -> vector<2x552xf32>
    %426 = vector.extract_strided_slice %425 {offsets = [0, 0], sizes = [2, 40], strides = [1, 1]} : vector<2x552xf32> to vector<2x40xf32>
    %427 = vector.broadcast %250 : vector<1x40xf32> to vector<2x40xf32>
    %428 = arith.addf %426, %427 : vector<2x40xf32>
    %429 = vector.extract_strided_slice %425 {offsets = [0, 40], sizes = [2, 512], strides = [1, 1]} : vector<2x552xf32> to vector<2x512xf32>
    %430 = arith.addf %429, %259 : vector<2x512xf32>
    %431 = vector.extract_strided_slice %430 {offsets = [0, 0], sizes = [2, 256], strides = [1, 1]} : vector<2x512xf32> to vector<2x256xf32>
    %432 = arith.negf %431 : vector<2x256xf32>
    %433 = math.exp %432 : vector<2x256xf32>
    %cst_64 = arith.constant 1.000000e+00 : f32
    %434 = vector.broadcast %cst_64 : f32 to vector<2x256xf32>
    %435 = arith.addf %434, %433 : vector<2x256xf32>
    %436 = arith.divf %434, %435 : vector<2x256xf32>
    %437 = vector.extract_strided_slice %436 {offsets = [0, 0], sizes = [2, 128], strides = [1, 1]} : vector<2x256xf32> to vector<2x128xf32>
    %438 = vector.extract_strided_slice %436 {offsets = [0, 128], sizes = [2, 128], strides = [1, 1]} : vector<2x256xf32> to vector<2x128xf32>
    %439 = vector.extract_strided_slice %430 {offsets = [0, 256], sizes = [2, 128], strides = [1, 1]} : vector<2x512xf32> to vector<2x128xf32>
    %440 = vector.extract_strided_slice %430 {offsets = [0, 384], sizes = [2, 128], strides = [1, 1]} : vector<2x512xf32> to vector<2x128xf32>
    %441 = arith.mulf %437, %440 : vector<2x128xf32>
    %442 = arith.addf %439, %441 : vector<2x128xf32>
    %443 = math.tanh %442 : vector<2x128xf32>
    %cst_65 = arith.constant 1.000000e+00 : f32
    %444 = vector.broadcast %cst_65 : f32 to vector<2x128xf32>
    %445 = arith.subf %444, %438 : vector<2x128xf32>
    %446 = arith.mulf %445, %443 : vector<2x128xf32>
    %447 = arith.mulf %438, %424 : vector<2x128xf32>
    %448 = arith.addf %446, %447 : vector<2x128xf32>
    %cst_66 = arith.constant dense<0.000000e+00> : vector<2x552xf32>
    %449 = tpu.matmul %448, %252, %cst_66 {dimension_numbers = #tpu.dot_dimension_numbers<[1], [0], [0], [1], [0, 0, 1, 1], [], []>} : vector<2x128xf32>, vector<128x552xf32>, vector<2x552xf32> -> vector<2x552xf32>
    %450 = vector.extract_strided_slice %449 {offsets = [0, 0], sizes = [2, 40], strides = [1, 1]} : vector<2x552xf32> to vector<2x40xf32>
    %451 = vector.broadcast %250 : vector<1x40xf32> to vector<2x40xf32>
    %452 = arith.addf %450, %451 : vector<2x40xf32>
    %453 = vector.extract_strided_slice %449 {offsets = [0, 40], sizes = [2, 512], strides = [1, 1]} : vector<2x552xf32> to vector<2x512xf32>
    %454 = arith.addf %453, %259 : vector<2x512xf32>
    %455 = vector.extract_strided_slice %454 {offsets = [0, 0], sizes = [2, 256], strides = [1, 1]} : vector<2x512xf32> to vector<2x256xf32>
    %456 = arith.negf %455 : vector<2x256xf32>
    %457 = math.exp %456 : vector<2x256xf32>
    %cst_67 = arith.constant 1.000000e+00 : f32
    %458 = vector.broadcast %cst_67 : f32 to vector<2x256xf32>
    %459 = arith.addf %458, %457 : vector<2x256xf32>
    %460 = arith.divf %458, %459 : vector<2x256xf32>
    %461 = vector.extract_strided_slice %460 {offsets = [0, 0], sizes = [2, 128], strides = [1, 1]} : vector<2x256xf32> to vector<2x128xf32>
    %462 = vector.extract_strided_slice %460 {offsets = [0, 128], sizes = [2, 128], strides = [1, 1]} : vector<2x256xf32> to vector<2x128xf32>
    %463 = vector.extract_strided_slice %454 {offsets = [0, 256], sizes = [2, 128], strides = [1, 1]} : vector<2x512xf32> to vector<2x128xf32>
    %464 = vector.extract_strided_slice %454 {offsets = [0, 384], sizes = [2, 128], strides = [1, 1]} : vector<2x512xf32> to vector<2x128xf32>
    %465 = arith.mulf %461, %464 : vector<2x128xf32>
    %466 = arith.addf %463, %465 : vector<2x128xf32>
    %467 = math.tanh %466 : vector<2x128xf32>
    %cst_68 = arith.constant 1.000000e+00 : f32
    %468 = vector.broadcast %cst_68 : f32 to vector<2x128xf32>
    %469 = arith.subf %468, %462 : vector<2x128xf32>
    %470 = arith.mulf %469, %467 : vector<2x128xf32>
    %471 = arith.mulf %462, %448 : vector<2x128xf32>
    %472 = arith.addf %470, %471 : vector<2x128xf32>
    %cst_69 = arith.constant dense<0.000000e+00> : vector<2x552xf32>
    %473 = tpu.matmul %472, %252, %cst_69 {dimension_numbers = #tpu.dot_dimension_numbers<[1], [0], [0], [1], [0, 0, 1, 1], [], []>} : vector<2x128xf32>, vector<128x552xf32>, vector<2x552xf32> -> vector<2x552xf32>
    %474 = vector.extract_strided_slice %473 {offsets = [0, 0], sizes = [2, 40], strides = [1, 1]} : vector<2x552xf32> to vector<2x40xf32>
    %475 = vector.broadcast %250 : vector<1x40xf32> to vector<2x40xf32>
    %476 = arith.addf %474, %475 : vector<2x40xf32>
    %477 = vector.extract_strided_slice %473 {offsets = [0, 40], sizes = [2, 512], strides = [1, 1]} : vector<2x552xf32> to vector<2x512xf32>
    %478 = arith.addf %477, %259 : vector<2x512xf32>
    %479 = vector.extract_strided_slice %478 {offsets = [0, 0], sizes = [2, 256], strides = [1, 1]} : vector<2x512xf32> to vector<2x256xf32>
    %480 = arith.negf %479 : vector<2x256xf32>
    %481 = math.exp %480 : vector<2x256xf32>
    %cst_70 = arith.constant 1.000000e+00 : f32
    %482 = vector.broadcast %cst_70 : f32 to vector<2x256xf32>
    %483 = arith.addf %482, %481 : vector<2x256xf32>
    %484 = arith.divf %482, %483 : vector<2x256xf32>
    %485 = vector.extract_strided_slice %484 {offsets = [0, 0], sizes = [2, 128], strides = [1, 1]} : vector<2x256xf32> to vector<2x128xf32>
    %486 = vector.extract_strided_slice %484 {offsets = [0, 128], sizes = [2, 128], strides = [1, 1]} : vector<2x256xf32> to vector<2x128xf32>
    %487 = vector.extract_strided_slice %478 {offsets = [0, 256], sizes = [2, 128], strides = [1, 1]} : vector<2x512xf32> to vector<2x128xf32>
    %488 = vector.extract_strided_slice %478 {offsets = [0, 384], sizes = [2, 128], strides = [1, 1]} : vector<2x512xf32> to vector<2x128xf32>
    %489 = arith.mulf %485, %488 : vector<2x128xf32>
    %490 = arith.addf %487, %489 : vector<2x128xf32>
    %491 = math.tanh %490 : vector<2x128xf32>
    %cst_71 = arith.constant 1.000000e+00 : f32
    %492 = vector.broadcast %cst_71 : f32 to vector<2x128xf32>
    %493 = arith.subf %492, %486 : vector<2x128xf32>
    %494 = arith.mulf %493, %491 : vector<2x128xf32>
    %495 = arith.mulf %486, %472 : vector<2x128xf32>
    %496 = arith.addf %494, %495 : vector<2x128xf32>
    %cst_72 = arith.constant dense<0.000000e+00> : vector<2x552xf32>
    %497 = tpu.matmul %496, %252, %cst_72 {dimension_numbers = #tpu.dot_dimension_numbers<[1], [0], [0], [1], [0, 0, 1, 1], [], []>} : vector<2x128xf32>, vector<128x552xf32>, vector<2x552xf32> -> vector<2x552xf32>
    %498 = vector.extract_strided_slice %497 {offsets = [0, 0], sizes = [2, 40], strides = [1, 1]} : vector<2x552xf32> to vector<2x40xf32>
    %499 = vector.broadcast %250 : vector<1x40xf32> to vector<2x40xf32>
    %500 = arith.addf %498, %499 : vector<2x40xf32>
    %501 = vector.extract_strided_slice %497 {offsets = [0, 40], sizes = [2, 512], strides = [1, 1]} : vector<2x552xf32> to vector<2x512xf32>
    %502 = arith.addf %501, %259 : vector<2x512xf32>
    %503 = vector.extract_strided_slice %502 {offsets = [0, 0], sizes = [2, 256], strides = [1, 1]} : vector<2x512xf32> to vector<2x256xf32>
    %504 = arith.negf %503 : vector<2x256xf32>
    %505 = math.exp %504 : vector<2x256xf32>
    %cst_73 = arith.constant 1.000000e+00 : f32
    %506 = vector.broadcast %cst_73 : f32 to vector<2x256xf32>
    %507 = arith.addf %506, %505 : vector<2x256xf32>
    %508 = arith.divf %506, %507 : vector<2x256xf32>
    %509 = vector.extract_strided_slice %508 {offsets = [0, 0], sizes = [2, 128], strides = [1, 1]} : vector<2x256xf32> to vector<2x128xf32>
    %510 = vector.extract_strided_slice %508 {offsets = [0, 128], sizes = [2, 128], strides = [1, 1]} : vector<2x256xf32> to vector<2x128xf32>
    %511 = vector.extract_strided_slice %502 {offsets = [0, 256], sizes = [2, 128], strides = [1, 1]} : vector<2x512xf32> to vector<2x128xf32>
    %512 = vector.extract_strided_slice %502 {offsets = [0, 384], sizes = [2, 128], strides = [1, 1]} : vector<2x512xf32> to vector<2x128xf32>
    %513 = arith.mulf %509, %512 : vector<2x128xf32>
    %514 = arith.addf %511, %513 : vector<2x128xf32>
    %515 = math.tanh %514 : vector<2x128xf32>
    %cst_74 = arith.constant 1.000000e+00 : f32
    %516 = vector.broadcast %cst_74 : f32 to vector<2x128xf32>
    %517 = arith.subf %516, %510 : vector<2x128xf32>
    %518 = arith.mulf %517, %515 : vector<2x128xf32>
    %519 = arith.mulf %510, %496 : vector<2x128xf32>
    %520 = arith.addf %518, %519 : vector<2x128xf32>
    %cst_75 = arith.constant dense<0.000000e+00> : vector<2x552xf32>
    %521 = tpu.matmul %520, %252, %cst_75 {dimension_numbers = #tpu.dot_dimension_numbers<[1], [0], [0], [1], [0, 0, 1, 1], [], []>} : vector<2x128xf32>, vector<128x552xf32>, vector<2x552xf32> -> vector<2x552xf32>
    %522 = vector.extract_strided_slice %521 {offsets = [0, 0], sizes = [2, 40], strides = [1, 1]} : vector<2x552xf32> to vector<2x40xf32>
    %523 = vector.broadcast %250 : vector<1x40xf32> to vector<2x40xf32>
    %524 = arith.addf %522, %523 : vector<2x40xf32>
    %525 = vector.extract_strided_slice %521 {offsets = [0, 40], sizes = [2, 512], strides = [1, 1]} : vector<2x552xf32> to vector<2x512xf32>
    %526 = arith.addf %525, %259 : vector<2x512xf32>
    %527 = vector.extract_strided_slice %526 {offsets = [0, 0], sizes = [2, 256], strides = [1, 1]} : vector<2x512xf32> to vector<2x256xf32>
    %528 = arith.negf %527 : vector<2x256xf32>
    %529 = math.exp %528 : vector<2x256xf32>
    %cst_76 = arith.constant 1.000000e+00 : f32
    %530 = vector.broadcast %cst_76 : f32 to vector<2x256xf32>
    %531 = arith.addf %530, %529 : vector<2x256xf32>
    %532 = arith.divf %530, %531 : vector<2x256xf32>
    %533 = vector.extract_strided_slice %532 {offsets = [0, 0], sizes = [2, 128], strides = [1, 1]} : vector<2x256xf32> to vector<2x128xf32>
    %534 = vector.extract_strided_slice %532 {offsets = [0, 128], sizes = [2, 128], strides = [1, 1]} : vector<2x256xf32> to vector<2x128xf32>
    %535 = vector.extract_strided_slice %526 {offsets = [0, 256], sizes = [2, 128], strides = [1, 1]} : vector<2x512xf32> to vector<2x128xf32>
    %536 = vector.extract_strided_slice %526 {offsets = [0, 384], sizes = [2, 128], strides = [1, 1]} : vector<2x512xf32> to vector<2x128xf32>
    %537 = arith.mulf %533, %536 : vector<2x128xf32>
    %538 = arith.addf %535, %537 : vector<2x128xf32>
    %539 = math.tanh %538 : vector<2x128xf32>
    %cst_77 = arith.constant 1.000000e+00 : f32
    %540 = vector.broadcast %cst_77 : f32 to vector<2x128xf32>
    %541 = arith.subf %540, %534 : vector<2x128xf32>
    %542 = arith.mulf %541, %539 : vector<2x128xf32>
    %543 = arith.mulf %534, %520 : vector<2x128xf32>
    %544 = arith.addf %542, %543 : vector<2x128xf32>
    %cst_78 = arith.constant dense<0.000000e+00> : vector<2x552xf32>
    %545 = tpu.matmul %544, %252, %cst_78 {dimension_numbers = #tpu.dot_dimension_numbers<[1], [0], [0], [1], [0, 0, 1, 1], [], []>} : vector<2x128xf32>, vector<128x552xf32>, vector<2x552xf32> -> vector<2x552xf32>
    %546 = vector.extract_strided_slice %545 {offsets = [0, 0], sizes = [2, 40], strides = [1, 1]} : vector<2x552xf32> to vector<2x40xf32>
    %547 = vector.broadcast %250 : vector<1x40xf32> to vector<2x40xf32>
    %548 = arith.addf %546, %547 : vector<2x40xf32>
    %cst_79 = arith.constant 0.000000e+00 : f32
    %549 = vector.broadcast %cst_79 : f32 to vector<2x40xf32>
    %550 = arith.addf %549, %284 : vector<2x40xf32>
    %cst_80 = arith.constant 4.000000e-01 : f32
    %551 = vector.broadcast %cst_80 : f32 to vector<2x40xf32>
    %552 = arith.mulf %550, %551 : vector<2x40xf32>
    %553 = arith.addf %552, %3 : vector<2x40xf32>
    %554 = arith.addf %550, %308 : vector<2x40xf32>
    %cst_81 = arith.constant 4.000000e-01 : f32
    %555 = vector.broadcast %cst_81 : f32 to vector<2x40xf32>
    %556 = arith.mulf %554, %555 : vector<2x40xf32>
    %557 = arith.addf %556, %3 : vector<2x40xf32>
    %558 = arith.addf %554, %332 : vector<2x40xf32>
    %cst_82 = arith.constant 4.000000e-01 : f32
    %559 = vector.broadcast %cst_82 : f32 to vector<2x40xf32>
    %560 = arith.mulf %558, %559 : vector<2x40xf32>
    %561 = arith.addf %560, %3 : vector<2x40xf32>
    %562 = arith.addf %558, %356 : vector<2x40xf32>
    %cst_83 = arith.constant 4.000000e-01 : f32
    %563 = vector.broadcast %cst_83 : f32 to vector<2x40xf32>
    %564 = arith.mulf %562, %563 : vector<2x40xf32>
    %565 = arith.addf %564, %3 : vector<2x40xf32>
    %566 = arith.addf %562, %380 : vector<2x40xf32>
    %cst_84 = arith.constant 4.000000e-01 : f32
    %567 = vector.broadcast %cst_84 : f32 to vector<2x40xf32>
    %568 = arith.mulf %566, %567 : vector<2x40xf32>
    %569 = arith.addf %568, %3 : vector<2x40xf32>
    %570 = arith.addf %566, %404 : vector<2x40xf32>
    %cst_85 = arith.constant 4.000000e-01 : f32
    %571 = vector.broadcast %cst_85 : f32 to vector<2x40xf32>
    %572 = arith.mulf %570, %571 : vector<2x40xf32>
    %573 = arith.addf %572, %3 : vector<2x40xf32>
    %574 = arith.addf %570, %428 : vector<2x40xf32>
    %cst_86 = arith.constant 4.000000e-01 : f32
    %575 = vector.broadcast %cst_86 : f32 to vector<2x40xf32>
    %576 = arith.mulf %574, %575 : vector<2x40xf32>
    %577 = arith.addf %576, %3 : vector<2x40xf32>
    %578 = arith.addf %574, %452 : vector<2x40xf32>
    %cst_87 = arith.constant 4.000000e-01 : f32
    %579 = vector.broadcast %cst_87 : f32 to vector<2x40xf32>
    %580 = arith.mulf %578, %579 : vector<2x40xf32>
    %581 = arith.addf %580, %3 : vector<2x40xf32>
    %582 = arith.addf %578, %476 : vector<2x40xf32>
    %cst_88 = arith.constant 4.000000e-01 : f32
    %583 = vector.broadcast %cst_88 : f32 to vector<2x40xf32>
    %584 = arith.mulf %582, %583 : vector<2x40xf32>
    %585 = arith.addf %584, %3 : vector<2x40xf32>
    %586 = arith.addf %582, %500 : vector<2x40xf32>
    %cst_89 = arith.constant 4.000000e-01 : f32
    %587 = vector.broadcast %cst_89 : f32 to vector<2x40xf32>
    %588 = arith.mulf %586, %587 : vector<2x40xf32>
    %589 = arith.addf %588, %3 : vector<2x40xf32>
    %590 = arith.addf %586, %524 : vector<2x40xf32>
    %cst_90 = arith.constant 4.000000e-01 : f32
    %591 = vector.broadcast %cst_90 : f32 to vector<2x40xf32>
    %592 = arith.mulf %590, %591 : vector<2x40xf32>
    %593 = arith.addf %592, %3 : vector<2x40xf32>
    %594 = arith.addf %590, %548 : vector<2x40xf32>
    %cst_91 = arith.constant 4.000000e-01 : f32
    %595 = vector.broadcast %cst_91 : f32 to vector<2x40xf32>
    %596 = arith.mulf %594, %595 : vector<2x40xf32>
    %597 = arith.addf %596, %3 : vector<2x40xf32>
    %598 = tpu.concatenate %553, %557, %561, %565, %569, %573, %577, %581, %585, %589, %593, %597 in 1 : vector<2x40xf32>, vector<2x40xf32>, vector<2x40xf32>, vector<2x40xf32>, vector<2x40xf32>, vector<2x40xf32>, vector<2x40xf32>, vector<2x40xf32>, vector<2x40xf32>, vector<2x40xf32>, vector<2x40xf32>, vector<2x40xf32> -> vector<2x480xf32>
    %c0_92 = arith.constant 0 : index
    %c0_93 = arith.constant 0 : index
    %599 = vector.load %arg4[%c0_92, %c0_93] : memref<2x480xf32, #tpu.memory_space<vmem>>, vector<2x480xf32>
    tpu.vector_store %arg4[%c0_92, %c0_93], %598 {strides = array<i32>} : memref<2x480xf32, #tpu.memory_space<vmem>>, vector<2x480xf32>,
    %600 = arith.subf %598, %2 : vector<2x480xf32>
    %601 = arith.mulf %600, %600 : vector<2x480xf32>
    %602 = vector.extract_strided_slice %601 {offsets = [0, 1], sizes = [2, 479], strides = [1, 1]} : vector<2x480xf32> to vector<2x479xf32>
    %cst_94 = arith.constant 0.000000e+00 : f32
    %603 = vector.broadcast %cst_94 : f32 to vector<2x1xf32>
    %604 = tpu.concatenate %602, %603 in 1 : vector<2x479xf32>, vector<2x1xf32> -> vector<2x480xf32>
    %605 = arith.addf %601, %604 : vector<2x480xf32>
    %cst_95 = arith.constant 9.99999968E-21 : f32
    %606 = vector.broadcast %cst_95 : f32 to vector<2x480xf32>
    %607 = arith.addf %605, %606 : vector<2x480xf32>
    %608 = math.sqrt %607 : vector<2x480xf32>
    %609 = tpu.iota {dimensions = array<i32: 1>} : vector<2x480xi32>
    %c1_i32 = arith.constant 1 : i32
    %610 = vector.broadcast %c1_i32 : i32 to vector<2x480xi32>
    %611 = arith.andi %609, %610 : vector<2x480xi32>
    %c0_i32 = arith.constant 0 : i32
    %612 = vector.broadcast %c0_i32 : i32 to vector<2x480xi32>
    %613 = arith.cmpi eq, %611, %612 : vector<2x480xi32>
    %cst_96 = arith.constant 1.000000e+30 : f32
    %614 = vector.broadcast %cst_96 : f32 to vector<2x480xf32>
    %615 = arith.select %613, %608, %614 : vector<2x480xi1>, vector<2x480xf32>
    %cst_97 = arith.constant 0.000000e+00 : f32
    %616 = vector.broadcast %cst_97 : f32 to vector<2x1xf32>
    %617 = vector.extract_strided_slice %615 {offsets = [0, 0], sizes = [2, 40], strides = [1, 1]} : vector<2x480xf32> to vector<2x40xf32>
    %cst_98 = arith.constant dense<0x7F800000> : vector<2xf32>
    %618 = vector.multi_reduction <minimumf>, %617, %cst_98 [1] : vector<2x40xf32> to vector<2xf32>
    %619 = vector.shape_cast %618 : vector<2xf32> to vector<2x1xf32>
    %620 = arith.addf %616, %619 : vector<2x1xf32>
    %621 = vector.extract_strided_slice %615 {offsets = [0, 40], sizes = [2, 40], strides = [1, 1]} : vector<2x480xf32> to vector<2x40xf32>
    %cst_99 = arith.constant dense<0x7F800000> : vector<2xf32>
    %622 = vector.multi_reduction <minimumf>, %621, %cst_99 [1] : vector<2x40xf32> to vector<2xf32>
    %623 = vector.shape_cast %622 : vector<2xf32> to vector<2x1xf32>
    %624 = arith.addf %620, %623 : vector<2x1xf32>
    %625 = vector.extract_strided_slice %615 {offsets = [0, 80], sizes = [2, 40], strides = [1, 1]} : vector<2x480xf32> to vector<2x40xf32>
    %cst_100 = arith.constant dense<0x7F800000> : vector<2xf32>
    %626 = vector.multi_reduction <minimumf>, %625, %cst_100 [1] : vector<2x40xf32> to vector<2xf32>
    %627 = vector.shape_cast %626 : vector<2xf32> to vector<2x1xf32>
    %628 = arith.addf %624, %627 : vector<2x1xf32>
    %629 = vector.extract_strided_slice %615 {offsets = [0, 120], sizes = [2, 40], strides = [1, 1]} : vector<2x480xf32> to vector<2x40xf32>
    %cst_101 = arith.constant dense<0x7F800000> : vector<2xf32>
    %630 = vector.multi_reduction <minimumf>, %629, %cst_101 [1] : vector<2x40xf32> to vector<2xf32>
    %631 = vector.shape_cast %630 : vector<2xf32> to vector<2x1xf32>
    %632 = arith.addf %628, %631 : vector<2x1xf32>
    %633 = vector.extract_strided_slice %615 {offsets = [0, 160], sizes = [2, 40], strides = [1, 1]} : vector<2x480xf32> to vector<2x40xf32>
    %cst_102 = arith.constant dense<0x7F800000> : vector<2xf32>
    %634 = vector.multi_reduction <minimumf>, %633, %cst_102 [1] : vector<2x40xf32> to vector<2xf32>
    %635 = vector.shape_cast %634 : vector<2xf32> to vector<2x1xf32>
    %636 = arith.addf %632, %635 : vector<2x1xf32>
    %637 = vector.extract_strided_slice %615 {offsets = [0, 200], sizes = [2, 40], strides = [1, 1]} : vector<2x480xf32> to vector<2x40xf32>
    %cst_103 = arith.constant dense<0x7F800000> : vector<2xf32>
    %638 = vector.multi_reduction <minimumf>, %637, %cst_103 [1] : vector<2x40xf32> to vector<2xf32>
    %639 = vector.shape_cast %638 : vector<2xf32> to vector<2x1xf32>
    %640 = arith.addf %636, %639 : vector<2x1xf32>
    %641 = vector.extract_strided_slice %615 {offsets = [0, 240], sizes = [2, 40], strides = [1, 1]} : vector<2x480xf32> to vector<2x40xf32>
    %cst_104 = arith.constant dense<0x7F800000> : vector<2xf32>
    %642 = vector.multi_reduction <minimumf>, %641, %cst_104 [1] : vector<2x40xf32> to vector<2xf32>
    %643 = vector.shape_cast %642 : vector<2xf32> to vector<2x1xf32>
    %644 = arith.addf %640, %643 : vector<2x1xf32>
    %645 = vector.extract_strided_slice %615 {offsets = [0, 280], sizes = [2, 40], strides = [1, 1]} : vector<2x480xf32> to vector<2x40xf32>
    %cst_105 = arith.constant dense<0x7F800000> : vector<2xf32>
    %646 = vector.multi_reduction <minimumf>, %645, %cst_105 [1] : vector<2x40xf32> to vector<2xf32>
    %647 = vector.shape_cast %646 : vector<2xf32> to vector<2x1xf32>
    %648 = arith.addf %644, %647 : vector<2x1xf32>
    %649 = vector.extract_strided_slice %615 {offsets = [0, 320], sizes = [2, 40], strides = [1, 1]} : vector<2x480xf32> to vector<2x40xf32>
    %cst_106 = arith.constant dense<0x7F800000> : vector<2xf32>
    %650 = vector.multi_reduction <minimumf>, %649, %cst_106 [1] : vector<2x40xf32> to vector<2xf32>
    %651 = vector.shape_cast %650 : vector<2xf32> to vector<2x1xf32>
    %652 = arith.addf %648, %651 : vector<2x1xf32>
    %653 = vector.extract_strided_slice %615 {offsets = [0, 360], sizes = [2, 40], strides = [1, 1]} : vector<2x480xf32> to vector<2x40xf32>
    %cst_107 = arith.constant dense<0x7F800000> : vector<2xf32>
    %654 = vector.multi_reduction <minimumf>, %653, %cst_107 [1] : vector<2x40xf32> to vector<2xf32>
    %655 = vector.shape_cast %654 : vector<2xf32> to vector<2x1xf32>
    %656 = arith.addf %652, %655 : vector<2x1xf32>
    %657 = vector.extract_strided_slice %615 {offsets = [0, 400], sizes = [2, 40], strides = [1, 1]} : vector<2x480xf32> to vector<2x40xf32>
    %cst_108 = arith.constant dense<0x7F800000> : vector<2xf32>
    %658 = vector.multi_reduction <minimumf>, %657, %cst_108 [1] : vector<2x40xf32> to vector<2xf32>
    %659 = vector.shape_cast %658 : vector<2xf32> to vector<2x1xf32>
    %660 = arith.addf %656, %659 : vector<2x1xf32>
    %661 = vector.extract_strided_slice %615 {offsets = [0, 440], sizes = [2, 40], strides = [1, 1]} : vector<2x480xf32> to vector<2x40xf32>
    %cst_109 = arith.constant dense<0x7F800000> : vector<2xf32>
    %662 = vector.multi_reduction <minimumf>, %661, %cst_109 [1] : vector<2x40xf32> to vector<2xf32>
    %663 = vector.shape_cast %662 : vector<2xf32> to vector<2x1xf32>
    %664 = arith.addf %660, %663 : vector<2x1xf32>
    %cst_110 = arith.constant dense<0.000000e+00> : vector<1xf32>
    %665 = vector.multi_reduction <add>, %664, %cst_110 [0] : vector<2x1xf32> to vector<1xf32>
    %666 = vector.shape_cast %665 : vector<1xf32> to vector<1x1xf32>
    %cst_111 = arith.constant 5.000000e-01 : f32
    %667 = vector.broadcast %cst_111 : f32 to vector<1x1xf32>
    %668 = arith.mulf %666, %667 : vector<1x1xf32>
    %c0_112 = arith.constant 0 : index
    %c0_113 = arith.constant 0 : index
    %669 = vector.load %arg5[%c0_112, %c0_113] : memref<1x1xf32, #tpu.memory_space<vmem>>, vector<1x1xf32>
    tpu.vector_store %arg5[%c0_112, %c0_113], %668 {strides = array<i32>} : memref<1x1xf32, #tpu.memory_space<vmem>>, vector<1x1xf32>,
    return
  }
}

</mosaic_0001>

<llo_original>
// kernel: tile.15
$region0: #{tile.15}
  %s0 = inlined_call_operand.vmem [shape: f32[2,20,2], index: 0, kind: input, shape index: {}]
  %s1 = inlined_call_operand.vmem [shape: f32[2,40], index: 1, kind: output, shape index: {}]
  $region1: #{tile.15} parent=0
    #allocation0 [shape = 'u8[4096]{0}', space=vmem, size = 0x1000, scoped, tag = 'scoped mem for output reshape']
    %s2 = smov 3
    %v3 = vld [vmem:[%s0] ss:$24 sm:%s2]
    %vm4 = vcmask 15360
    %5 = vst.msk [vmem:[#allocation0] sm:$0x3] %vm4, %v3
    %s6 = scalar_lea.vmem %s0, 19
    %s7 = smov 3
    %v8 = vld [vmem:[%s6] ss:$24 sm:%s7]
    %9 = vrot.lane.b32.xlu0 %v8, 38
    %v10 = vpop.permute.xlu0 %9
    %vm11 = vcmask 326960
    %12 = vst.msk [vmem:[#allocation0] sm:$0x3] %vm11, %v10
    %s13 = scalar_lea.vmem %s0, 18
    %s14 = smov 3
    %v15 = vld [vmem:[%s13] ss:$24 sm:%s14]
    %16 = vrot.lane.b32.xlu0 %v15, 36
    %v17 = vpop.permute.xlu0 %16
    %vm18 = vcmask 310560
    %19 = vst.msk [vmem:[#allocation0] sm:$0x3] %vm18, %v17
    %s20 = scalar_lea.vmem %s0, 17
    %s21 = smov 3
    %v22 = vld [vmem:[%s20] ss:$24 sm:%s21]
    %23 = vrot.lane.b32.xlu0 %v22, 34
    %v24 = vpop.permute.xlu0 %23
    %vm25 = vcmask 294160
    %26 = vst.msk [vmem:[#allocation0] sm:$0x3] %vm25, %v24
    %s27 = scalar_lea.vmem %s0, 16
    %s28 = smov 3
    %v29 = vld [vmem:[%s27] ss:$24 sm:%s28]
    %30 = vrot.lane.b32.xlu0 %v29, 32
    %v31 = vpop.permute.xlu0 %30
    %vm32 = vcmask 277760
    %33 = vst.msk [vmem:[#allocation0] sm:$0x3] %vm32, %v31
    %s34 = scalar_lea.vmem %s0, 15
    %s35 = smov 3
    %v36 = vld [vmem:[%s34] ss:$24 sm:%s35]
    %37 = vrot.lane.b32.xlu0 %v36, 30
    %v38 = vpop.permute.xlu0 %37
    %vm39 = vcmask 261360
    %40 = vst.msk [vmem:[#allocation0] sm:$0x3] %vm39, %v38
    %s41 = scalar_lea.vmem %s0, 14
    %s42 = smov 3
    %v43 = vld [vmem:[%s41] ss:$24 sm:%s42]
    %44 = vrot.lane.b32.xlu0 %v43, 28
    %v45 = vpop.permute.xlu0 %44
    %vm46 = vcmask 244960
    %47 = vst.msk [vmem:[#allocation0] sm:$0x3] %vm46, %v45
    %s48 = scalar_lea.vmem %s0, 13
    %s49 = smov 3
    %v50 = vld [vmem:[%s48] ss:$24 sm:%s49]
    %51 = vrot.lane.b32.xlu0 %v50, 26
    %v52 = vpop.permute.xlu0 %51
    %vm53 = vcmask 228560
    %54 = vst.msk [vmem:[#allocation0] sm:$0x3] %vm53, %v52
    %s55 = scalar_lea.vmem %s0, 12
    %s56 = smov 3
    %v57 = vld [vmem:[%s55] ss:$24 sm:%s56]
    %58 = vrot.lane.b32.xlu0 %v57, 24
    %v59 = vpop.permute.xlu0 %58
    %vm60 = vcmask 212160
    %61 = vst.msk [vmem:[#allocation0] sm:$0x3] %vm60, %v59
    %s62 = scalar_lea.vmem %s0, 11
    %s63 = smov 3
    %v64 = vld [vmem:[%s62] ss:$24 sm:%s63]
    %65 = vrot.lane.b32.xlu0 %v64, 22
    %v66 = vpop.permute.xlu0 %65
    %vm67 = vcmask 195760
    %68 = vst.msk [vmem:[#allocation0] sm:$0x3] %vm67, %v66
    %s69 = scalar_lea.vmem %s0, 10
    %s70 = smov 3
    %v71 = vld [vmem:[%s69] ss:$24 sm:%s70]
    %72 = vrot.lane.b32.xlu0 %v71, 20
    %v73 = vpop.permute.xlu0 %72
    %vm74 = vcmask 179360
    %75 = vst.msk [vmem:[#allocation0] sm:$0x3] %vm74, %v73
    %s76 = scalar_lea.vmem %s0, 9
    %s77 = smov 3
    %v78 = vld [vmem:[%s76] ss:$24 sm:%s77]
    %79 = vrot.lane.b32.xlu0 %v78, 18
    %v80 = vpop.permute.xlu0 %79
    %vm81 = vcmask 162960
    %82 = vst.msk [vmem:[#allocation0] sm:$0x3] %vm81, %v80
    %s83 = scalar_lea.vmem %s0, 8
    %s84 = smov 3
    %v85 = vld [vmem:[%s83] ss:$24 sm:%s84]
    %86 = vrot.lane.b32.xlu0 %v85, 16
    %v87 = vpop.permute.xlu0 %86
    %vm88 = vcmask 146560
    %89 = vst.msk [vmem:[#allocation0] sm:$0x3] %vm88, %v87
    %s90 = scalar_lea.vmem %s0, 7
    %s91 = smov 3
    %v92 = vld [vmem:[%s90] ss:$24 sm:%s91]
    %93 = vrot.lane.b32.xlu0 %v92, 14
    %v94 = vpop.permute.xlu0 %93
    %vm95 = vcmask 130160
    %96 = vst.msk [vmem:[#allocation0] sm:$0x3] %vm95, %v94
    %s97 = scalar_lea.vmem %s0, 6
    %s98 = smov 3
    %v99 = vld [vmem:[%s97] ss:$24 sm:%s98]
    %100 = vrot.lane.b32.xlu0 %v99, 12
    %v101 = vpop.permute.xlu0 %100
    %vm102 = vcmask 113760
    %103 = vst.msk [vmem:[#allocation0] sm:$0x3] %vm102, %v101
    %s104 = scalar_lea.vmem %s0, 5
    %s105 = smov 3
    %v106 = vld [vmem:[%s104] ss:$24 sm:%s105]
    %107 = vrot.lane.b32.xlu0 %v106, 10
    %v108 = vpop.permute.xlu0 %107
    %vm109 = vcmask 97360
    %110 = vst.msk [vmem:[#allocation0] sm:$0x3] %vm109, %v108
    %s111 = scalar_lea.vmem %s0, 4
    %s112 = smov 3
    %v113 = vld [vmem:[%s111] ss:$24 sm:%s112]
    %114 = vrot.lane.b32.xlu0 %v113, 8
    %v115 = vpop.permute.xlu0 %114
    %vm116 = vcmask 80960
    %117 = vst.msk [vmem:[#allocation0] sm:$0x3] %vm116, %v115
    %s118 = scalar_lea.vmem %s0, 3
    %s119 = smov 3
    %v120 = vld [vmem:[%s118] ss:$24 sm:%s119]
    %121 = vrot.lane.b32.xlu0 %v120, 6
    %v122 = vpop.permute.xlu0 %121
    %vm123 = vcmask 64560
    %124 = vst.msk [vmem:[#allocation0] sm:$0x3] %vm123, %v122
    %s125 = scalar_lea.vmem %s0, 2
    %s126 = smov 3
    %v127 = vld [vmem:[%s125] ss:$24 sm:%s126]
    %128 = vrot.lane.b32.xlu0 %v127, 4
    %v129 = vpop.permute.xlu0 %128
    %vm130 = vcmask 48160
    %131 = vst.msk [vmem:[#allocation0] sm:$0x3] %vm130, %v129
    %s132 = scalar_lea.vmem %s0, 1
    %s133 = smov 3
    %v134 = vld [vmem:[%s132] ss:$24 sm:%s133]
    %135 = vrot.lane.b32.xlu0 %v134, 2
    %v136 = vpop.permute.xlu0 %135
    %vm137 = vcmask 31760
    %138 = vst.msk [vmem:[#allocation0] sm:$0x3] %vm137, %v136
    %s140 = sshll.u32 1, 2
    %s141 = ssub.s32 %s140, 1
    %v143 = vld [vmem:[#allocation0] sm:%s141]
    %s144 = sshll.u32 1, 2
    %s145 = ssub.s32 %s144, 1
    %146 = vst [vmem:[%s1] sm:%s145] %v143

// kernel: tile.11
$region0: #{tile.11}
  %s0 = inlined_call_operand.vmem [shape: f32[2,12,20,1,1,2], index: 0, kind: input, shape index: {}]
  %s1 = inlined_call_operand.vmem [shape: f32[2,480], index: 1, kind: output, shape index: {}]
  $region1: #{tile.11} parent=0
    #allocation0 [shape = 'u8[16384]{0}', space=vmem, size = 0x4000, scoped, tag = 'scoped mem for output reshape']
    %v2 = vld [vmem:[%s0] ss:$76 sm:$0xf]
    %vm3 = vcmask 15360
    %4 = vst.msk [vmem:[#allocation0] ss:$8 sm:$0xf] %vm3, %v2
    %s5 = scalar_lea.vmem %s0, 288
    %v6 = vld [vmem:[%s5] ss:$76 sm:$0xf]
    %vm7 = vcmask 15360
    %s8 = scalar_lea.vmem [#allocation0], 1
    %9 = vst.msk [vmem:[%s8] ss:$8 sm:$0xf] %vm7, %v6
    %s10 = scalar_lea.vmem %s0, 75
    %v11 = vld [vmem:[%s10] sm:$0x1]
    %s12 = scalar_lea.vmem %s0, 575
    %s13 = smov 6
    %v14 = vld [vmem:[%s12] ss:$-212 sm:%s13]
    %vm15 = vcmask 1042433
    %v16 = vsel %vm15, %v14, %v11
    %s17 = scalar_lea.vmem %s0, 1075
    %s18 = smov 24
    %v19 = vld [vmem:[%s17] ss:$-212 sm:%s18]
    %vm20 = vcmask 1044483
    %v21 = vsel %vm20, %v19, %v16
    %s22 = scalar_lea.vmem %s0, 510
    %v23 = vld [vmem:[%s22] sm:$0x20]
    %vm24 = vcmask 1045509
    %v25 = vsel %vm24, %v23, %v21
    %26 = vrot.lane.b32.xlu0 %v25, 126
    %v27 = vpop.permute.xlu0 %26
    %vm28 = vcmask 1048560
    %29 = vst.msk [vmem:[#allocation0] sm:$0x3] %vm28, %v27
    %s30 = scalar_lea.vmem [#allocation0], 6
    %31 = vst.msk [vmem:[%s30] sm:$0xc] %vm28, %v27
    %s32 = scalar_lea.vmem [#allocation0], 12
    %33 = vst.msk [vmem:[%s32] sm:$0x30] %vm28, %v27
    %s34 = scalar_lea.vmem %s0, 74
    %v35 = vld [vmem:[%s34] sm:$0x1]
    %s36 = scalar_lea.vmem %s0, 574
    %s37 = smov 6
    %v38 = vld [vmem:[%s36] ss:$-212 sm:%s37]
    %vm39 = vcmask 1042433
    %v40 = vsel %vm39, %v38, %v35
    %s41 = scalar_lea.vmem %s0, 1074
    %s42 = smov 24
    %v43 = vld [vmem:[%s41] ss:$-212 sm:%s42]
    %vm44 = vcmask 1044483
    %v45 = vsel %vm44, %v43, %v40
    %s46 = scalar_lea.vmem %s0, 509
    %v47 = vld [vmem:[%s46] sm:$0x20]
    %vm48 = vcmask 1045509
    %v49 = vsel %vm48, %v47, %v45
    %50 = vrot.lane.b32.xlu0 %v49, 124
    %v51 = vpop.permute.xlu0 %50
    %vm52 = vcmask 1032160
    %53 = vst.msk [vmem:[#allocation0] sm:$0x3] %vm52, %v51
    %s54 = scalar_lea.vmem [#allocation0], 6
    %55 = vst.msk [vmem:[%s54] sm:$0xc] %vm52, %v51
    %s56 = scalar_lea.vmem [#allocation0], 12
    %57 = vst.msk [vmem:[%s56] sm:$0x30] %vm52, %v51
    %s58 = scalar_lea.vmem %s0, 73
    %v59 = vld [vmem:[%s58] sm:$0x1]
    %s60 = scalar_lea.vmem %s0, 573
    %s61 = smov 6
    %v62 = vld [vmem:[%s60] ss:$-212 sm:%s61]
    %vm63 = vcmask 1042433
    %v64 = vsel %vm63, %v62, %v59
    %s65 = scalar_lea.vmem %s0, 1073
    %s66 = smov 24
    %v67 = vld [vmem:[%s65] ss:$-212 sm:%s66]
    %vm68 = vcmask 1044483
    %v69 = vsel %vm68, %v67, %v64
    %s70 = scalar_lea.vmem %s0, 508
    %v71 = vld [vmem:[%s70] sm:$0x20]
    %vm72 = vcmask 1045509
    %v73 = vsel %vm72, %v71, %v69
    %74 = vrot.lane.b32.xlu0 %v73, 122
    %v75 = vpop.permute.xlu0 %74
    %vm76 = vcmask 1015760
    %77 = vst.msk [vmem:[#allocation0] sm:$0x3] %vm76, %v75
    %s78 = scalar_lea.vmem [#allocation0], 6
    %79 = vst.msk [vmem:[%s78] sm:$0xc] %vm76, %v75
    %s80 = scalar_lea.vmem [#allocation0], 12
    %81 = vst.msk [vmem:[%s80] sm:$0x30] %vm76, %v75
    %s82 = scalar_lea.vmem %s0, 72
    %v83 = vld [vmem:[%s82] sm:$0x1]
    %s84 = scalar_lea.vmem %s0, 572
    %s85 = smov 6
    %v86 = vld [vmem:[%s84] ss:$-212 sm:%s85]
    %vm87 = vcmask 1042433
    %v88 = vsel %vm87, %v86, %v83
    %s89 = scalar_lea.vmem %s0, 1072
    %s90 = smov 24
    %v91 = vld [vmem:[%s89] ss:$-212 sm:%s90]
    %vm92 = vcmask 1044483
    %v93 = vsel %vm92, %v91, %v88
    %s94 = scalar_lea.vmem %s0, 507
    %v95 = vld [vmem:[%s94] sm:$0x20]
    %vm96 = vcmask 1045509
    %v97 = vsel %vm96, %v95, %v93
    %98 = vrot.lane.b32.xlu0 %v97, 120
    %v99 = vpop.permute.xlu0 %98
    %vm100 = vcmask 999360
    %101 = vst.msk [vmem:[#allocation0] sm:$0x3] %vm100, %v99
    %s102 = scalar_lea.vmem [#allocation0], 6
    %103 = vst.msk [vmem:[%s102] sm:$0xc] %vm100, %v99
    %s104 = scalar_lea.vmem [#allocation0], 12
    %105 = vst.msk [vmem:[%s104] sm:$0x30] %vm100, %v99
    %s106 = scalar_lea.vmem %s0, 67
    %v107 = vld [vmem:[%s106] sm:$0x1]
    %s108 = scalar_lea.vmem %s0, 563
    %s109 = smov 6
    %v110 = vld [vmem:[%s108] ss:$-208 sm:%s109]
    %vm111 = vcmask 1042433
    %v112 = vsel %vm111, %v110, %v107
    %s113 = scalar_lea.vmem %s0, 1071
    %s114 = smov 24
    %v115 = vld [vmem:[%s113] ss:$-212 sm:%s114]
    %vm116 = vcmask 1044483
    %v117 = vsel %vm116, %v115, %v112
    %s118 = scalar_lea.vmem %s0, 506
    %v119 = vld [vmem:[%s118] sm:$0x20]
    %vm120 = vcmask 1045509
    %v121 = vsel %vm120, %v119, %v117
    %122 = vrot.lane.b32.xlu0 %v121, 118
    %v123 = vpop.permute.xlu0 %122
    %vm124 = vcmask 982960
    %125 = vst.msk [vmem:[#allocation0] sm:$0x3] %vm124, %v123
    %s126 = scalar_lea.vmem [#allocation0], 6
    %127 = vst.msk [vmem:[%s126] sm:$0xc] %vm124, %v123
    %s128 = scalar_lea.vmem [#allocation0], 12
    %129 = vst.msk [vmem:[%s128] sm:$0x30] %vm124, %v123
    %s130 = scalar_lea.vmem %s0, 66
    %v131 = vld [vmem:[%s130] sm:$0x1]
    %s132 = scalar_lea.vmem %s0, 562
    %s133 = smov 6
    %v134 = vld [vmem:[%s132] ss:$-208 sm:%s133]
    %vm135 = vcmask 1042433
    %v136 = vsel %vm135, %v134, %v131
    %s137 = scalar_lea.vmem %s0, 1070
    %s138 = smov 24
    %v139 = vld [vmem:[%s137] ss:$-212 sm:%s138]
    %vm140 = vcmask 1044483
    %v141 = vsel %vm140, %v139, %v136
    %s142 = scalar_lea.vmem %s0, 505
    %v143 = vld [vmem:[%s142] sm:$0x20]
    %vm144 = vcmask 1045509
    %v145 = vsel %vm144, %v143, %v141
    %146 = vrot.lane.b32.xlu0 %v145, 116
    %v147 = vpop.permute.xlu0 %146
    %vm148 = vcmask 966560
    %149 = vst.msk [vmem:[#allocation0] sm:$0x3] %vm148, %v147
    %s150 = scalar_lea.vmem [#allocation0], 6
    %151 = vst.msk [vmem:[%s150] sm:$0xc] %vm148, %v147
    %s152 = scalar_lea.vmem [#allocation0], 12
    %153 = vst.msk [vmem:[%s152] sm:$0x30] %vm148, %v147
    %s154 = scalar_lea.vmem %s0, 65
    %v155 = vld [vmem:[%s154] sm:$0x1]
    %s156 = scalar_lea.vmem %s0, 561
    %s157 = smov 6
    %v158 = vld [vmem:[%s156] ss:$-208 sm:%s157]
    %vm159 = vcmask 1042433
    %v160 = vsel %vm159, %v158, %v155
    %s161 = scalar_lea.vmem %s0, 1069
    %s162 = smov 24
    %v163 = vld [vmem:[%s161] ss:$-212 sm:%s162]
    %vm164 = vcmask 1044483
    %v165 = vsel %vm164, %v163, %v160
    %s166 = scalar_lea.vmem %s0, 504
    %v167 = vld [vmem:[%s166] sm:$0x20]
    %vm168 = vcmask 1045509
    %v169 = vsel %vm168, %v167, %v165
    %170 = vrot.lane.b32.xlu0 %v169, 114
    %v171 = vpop.permute.xlu0 %170
    %vm172 = vcmask 950160
    %173 = vst.msk [vmem:[#allocation0] sm:$0x3] %vm172, %v171
    %s174 = scalar_lea.vmem [#allocation0], 6
    %175 = vst.msk [vmem:[%s174] sm:$0xc] %vm172, %v171
    %s176 = scalar_lea.vmem [#allocation0], 12
    %177 = vst.msk [vmem:[%s176] sm:$0x30] %vm172, %v171
    %s178 = scalar_lea.vmem %s0, 64
    %v179 = vld [vmem:[%s178] sm:$0x1]
    %s180 = scalar_lea.vmem %s0, 560
    %s181 = smov 6
    %v182 = vld [vmem:[%s180] ss:$-208 sm:%s181]
    %vm183 = vcmask 1042433
    %v184 = vsel %vm183, %v182, %v179
    %s185 = scalar_lea.vmem %s0, 1068
    %s186 = smov 24
    %v187 = vld [vmem:[%s185] ss:$-212 sm:%s186]
    %vm188 = vcmask 1044483
    %v189 = vsel %vm188, %v187, %v184
    %s190 = scalar_lea.vmem %s0, 503
    %v191 = vld [vmem:[%s190] sm:$0x20]
    %vm192 = vcmask 1045509
    %v193 = vsel %vm192, %v191, %v189
    %194 = vrot.lane.b32.xlu0 %v193, 112
    %v195 = vpop.permute.xlu0 %194
    %vm196 = vcmask 933760
    %197 = vst.msk [vmem:[#allocation0] sm:$0x3] %vm196, %v195
    %s198 = scalar_lea.vmem [#allocation0], 6
    %199 = vst.msk [vmem:[%s198] sm:$0xc] %vm196, %v195
    %s200 = scalar_lea.vmem [#allocation0], 12
    %201 = vst.msk [vmem:[%s200] sm:$0x30] %vm196, %v195
    %s202 = scalar_lea.vmem %s0, 63
    %v203 = vld [vmem:[%s202] sm:$0x1]
    %s204 = scalar_lea.vmem %s0, 563
    %s205 = smov 6
    %v206 = vld [vmem:[%s204] ss:$-212 sm:%s205]
    %vm207 = vcmask 1042433
    %v208 = vsel %vm207, %v206, %v203
    %s209 = scalar_lea.vmem %s0, 1051
    %s210 = smov 24
    %v211 = vld [vmem:[%s209] ss:$-208 sm:%s210]
    %vm212 = vcmask 1044483
    %v213 = vsel %vm212, %v211, %v208
    %s214 = scalar_lea.vmem %s0, 502
    %v215 = vld [vmem:[%s214] sm:$0x20]
    %vm216 = vcmask 1045509
    %v217 = vsel %vm216, %v215, %v213
    %218 = vrot.lane.b32.xlu0 %v217, 110
    %v219 = vpop.permute.xlu0 %218
    %vm220 = vcmask 917360
    %221 = vst.msk [vmem:[#allocation0] sm:$0x3] %vm220, %v219
    %s222 = scalar_lea.vmem [#allocation0], 6
    %223 = vst.msk [vmem:[%s222] sm:$0xc] %vm220, %v219
    %s224 = scalar_lea.vmem [#allocation0], 12
    %225 = vst.msk [vmem:[%s224] sm:$0x30] %vm220, %v219
    %s226 = scalar_lea.vmem %s0, 62
    %v227 = vld [vmem:[%s226] sm:$0x1]
    %s228 = scalar_lea.vmem %s0, 562
    %s229 = smov 6
    %v230 = vld [vmem:[%s228] ss:$-212 sm:%s229]
    %vm231 = vcmask 1042433
    %v232 = vsel %vm231, %v230, %v227
    %s233 = scalar_lea.vmem %s0, 1050
    %s234 = smov 24
    %v235 = vld [vmem:[%s233] ss:$-208 sm:%s234]
    %vm236 = vcmask 1044483
    %v237 = vsel %vm236, %v235, %v232
    %s238 = scalar_lea.vmem %s0, 501
    %v239 = vld [vmem:[%s238] sm:$0x20]
    %vm240 = vcmask 1045509
    %v241 = vsel %vm240, %v239, %v237
    %242 = vrot.lane.b32.xlu0 %v241, 108
    %v243 = vpop.permute.xlu0 %242
    %vm244 = vcmask 900960
    %245 = vst.msk [vmem:[#allocation0] sm:$0x3] %vm244, %v243
    %s246 = scalar_lea.vmem [#allocation0], 6
    %247 = vst.msk [vmem:[%s246] sm:$0xc] %vm244, %v243
    %s248 = scalar_lea.vmem [#allocation0], 12
    %249 = vst.msk [vmem:[%s248] sm:$0x30] %vm244, %v243
    %s250 = scalar_lea.vmem %s0, 61
    %v251 = vld [vmem:[%s250] sm:$0x1]
    %s252 = scalar_lea.vmem %s0, 561
    %s253 = smov 6
    %v254 = vld [vmem:[%s252] ss:$-212 sm:%s253]
    %vm255 = vcmask 1042433
    %v256 = vsel %vm255, %v254, %v251
    %s257 = scalar_lea.vmem %s0, 1049
    %s258 = smov 24
    %v259 = vld [vmem:[%s257] ss:$-208 sm:%s258]
    %vm260 = vcmask 1044483
    %v261 = vsel %vm260, %v259, %v256
    %s262 = scalar_lea.vmem %s0, 500
    %v263 = vld [vmem:[%s262] sm:$0x20]
    %vm264 = vcmask 1045509
    %v265 = vsel %vm264, %v263, %v261
    %266 = vrot.lane.b32.xlu0 %v265, 106
    %v267 = vpop.permute.xlu0 %266
    %vm268 = vcmask 884560
    %269 = vst.msk [vmem:[#allocation0] sm:$0x3] %vm268, %v267
    %s270 = scalar_lea.vmem [#allocation0], 6
    %271 = vst.msk [vmem:[%s270] sm:$0xc] %vm268, %v267
    %s272 = scalar_lea.vmem [#allocation0], 12
    %273 = vst.msk [vmem:[%s272] sm:$0x30] %vm268, %v267
    %s274 = scalar_lea.vmem %s0, 60
    %v275 = vld [vmem:[%s274] sm:$0x1]
    %s276 = scalar_lea.vmem %s0, 560
    %s277 = smov 6
    %v278 = vld [vmem:[%s276] ss:$-212 sm:%s277]
    %vm279 = vcmask 1042433
    %v280 = vsel %vm279, %v278, %v275
    %s281 = scalar_lea.vmem %s0, 1048
    %s282 = smov 24
    %v283 = vld [vmem:[%s281] ss:$-208 sm:%s282]
    %vm284 = vcmask 1044483
    %v285 = vsel %vm284, %v283, %v280
    %s286 = scalar_lea.vmem %s0, 499
    %v287 = vld [vmem:[%s286] sm:$0x20]
    %vm288 = vcmask 1045509
    %v289 = vsel %vm288, %v287, %v285
    %290 = vrot.lane.b32.xlu0 %v289, 104
    %v291 = vpop.permute.xlu0 %290
    %vm292 = vcmask 868160
    %293 = vst.msk [vmem:[#allocation0] sm:$0x3] %vm292, %v291
    %s294 = scalar_lea.vmem [#allocation0], 6
    %295 = vst.msk [vmem:[%s294] sm:$0xc] %vm292, %v291
    %s296 = scalar_lea.vmem [#allocation0], 12
    %297 = vst.msk [vmem:[%s296] sm:$0x30] %vm292, %v291
    %s298 = scalar_lea.vmem %s0, 59
    %v299 = vld [vmem:[%s298] sm:$0x1]
    %s300 = scalar_lea.vmem %s0, 559
    %s301 = smov 6
    %v302 = vld [vmem:[%s300] ss:$-212 sm:%s301]
    %vm303 = vcmask 1042433
    %v304 = vsel %vm303, %v302, %v299
    %s305 = scalar_lea.vmem %s0, 1059
    %s306 = smov 24
    %v307 = vld [vmem:[%s305] ss:$-212 sm:%s306]
    %vm308 = vcmask 1044483
    %v309 = vsel %vm308, %v307, %v304
    %s310 = scalar_lea.vmem %s0, 494
    %v311 = vld [vmem:[%s310] sm:$0x20]
    %vm312 = vcmask 1045509
    %v313 = vsel %vm312, %v311, %v309
    %314 = vrot.lane.b32.xlu0 %v313, 102
    %v315 = vpop.permute.xlu0 %314
    %vm316 = vcmask 851760
    %317 = vst.msk [vmem:[#allocation0] sm:$0x3] %vm316, %v315
    %s318 = scalar_lea.vmem [#allocation0], 6
    %319 = vst.msk [vmem:[%s318] sm:$0xc] %vm316, %v315
    %s320 = scalar_lea.vmem [#allocation0], 12
    %321 = vst.msk [vmem:[%s320] sm:$0x30] %vm316, %v315
    %s322 = scalar_lea.vmem %s0, 58
    %v323 = vld [vmem:[%s322] sm:$0x1]
    %s324 = scalar_lea.vmem %s0, 558
    %s325 = smov 6
    %v326 = vld [vmem:[%s324] ss:$-212 sm:%s325]
    %vm327 = vcmask 1042433
    %v328 = vsel %vm327, %v326, %v323
    %s329 = scalar_lea.vmem %s0, 1058
    %s330 = smov 24
    %v331 = vld [vmem:[%s329] ss:$-212 sm:%s330]
    %vm332 = vcmask 1044483
    %v333 = vsel %vm332, %v331, %v328
    %s334 = scalar_lea.vmem %s0, 493
    %v335 = vld [vmem:[%s334] sm:$0x20]
    %vm336 = vcmask 1045509
    %v337 = vsel %vm336, %v335, %v333
    %338 = vrot.lane.b32.xlu0 %v337, 100
    %v339 = vpop.permute.xlu0 %338
    %vm340 = vcmask 835360
    %341 = vst.msk [vmem:[#allocation0] sm:$0x3] %vm340, %v339
    %s342 = scalar_lea.vmem [#allocation0], 6
    %343 = vst.msk [vmem:[%s342] sm:$0xc] %vm340, %v339
    %s344 = scalar_lea.vmem [#allocation0], 12
    %345 = vst.msk [vmem:[%s344] sm:$0x30] %vm340, %v339
    %s346 = scalar_lea.vmem %s0, 57
    %v347 = vld [vmem:[%s346] sm:$0x1]
    %s348 = scalar_lea.vmem %s0, 557
    %s349 = smov 6
    %v350 = vld [vmem:[%s348] ss:$-212 sm:%s349]
    %vm351 = vcmask 1042433
    %v352 = vsel %vm351, %v350, %v347
    %s353 = scalar_lea.vmem %s0, 1057
    %s354 = smov 24
    %v355 = vld [vmem:[%s353] ss:$-212 sm:%s354]
    %vm356 = vcmask 1044483
    %v357 = vsel %vm356, %v355, %v352
    %s358 = scalar_lea.vmem %s0, 492
    %v359 = vld [vmem:[%s358] sm:$0x20]
    %vm360 = vcmask 1045509
    %v361 = vsel %vm360, %v359, %v357
    %362 = vrot.lane.b32.xlu0 %v361, 98
    %v363 = vpop.permute.xlu0 %362
    %vm364 = vcmask 818960
    %365 = vst.msk [vmem:[#allocation0] sm:$0x3] %vm364, %v363
    %s366 = scalar_lea.vmem [#allocation0], 6
    %367 = vst.msk [vmem:[%s366] sm:$0xc] %vm364, %v363
    %s368 = scalar_lea.vmem [#allocation0], 12
    %369 = vst.msk [vmem:[%s368] sm:$0x30] %vm364, %v363
    %s370 = scalar_lea.vmem %s0, 56
    %v371 = vld [vmem:[%s370] sm:$0x1]
    %s372 = scalar_lea.vmem %s0, 556
    %s373 = smov 6
    %v374 = vld [vmem:[%s372] ss:$-212 sm:%s373]
    %vm375 = vcmask 1042433
    %v376 = vsel %vm375, %v374, %v371
    %s377 = scalar_lea.vmem %s0, 1056
    %s378 = smov 24
    %v379 = vld [vmem:[%s377] ss:$-212 sm:%s378]
    %vm380 = vcmask 1044483
    %v381 = vsel %vm380, %v379, %v376
    %s382 = scalar_lea.vmem %s0, 491
    %v383 = vld [vmem:[%s382] sm:$0x20]
    %vm384 = vcmask 1045509
    %v385 = vsel %vm384, %v383, %v381
    %386 = vrot.lane.b32.xlu0 %v385, 96
    %v387 = vpop.permute.xlu0 %386
    %vm388 = vcmask 802560
    %389 = vst.msk [vmem:[#allocation0] sm:$0x3] %vm388, %v387
    %s390 = scalar_lea.vmem [#allocation0], 6
    %391 = vst.msk [vmem:[%s390] sm:$0xc] %vm388, %v387
    %s392 = scalar_lea.vmem [#allocation0], 12
    %393 = vst.msk [vmem:[%s392] sm:$0x30] %vm388, %v387
    %s394 = scalar_lea.vmem %s0, 55
    %v395 = vld [vmem:[%s394] sm:$0x1]
    %s396 = scalar_lea.vmem %s0, 555
    %s397 = smov 6
    %v398 = vld [vmem:[%s396] ss:$-212 sm:%s397]
    %vm399 = vcmask 1042433
    %v400 = vsel %vm399, %v398, %v395
    %s401 = scalar_lea.vmem %s0, 1055
    %s402 = smov 24
    %v403 = vld [vmem:[%s401] ss:$-212 sm:%s402]
    %vm404 = vcmask 1044483
    %v405 = vsel %vm404, %v403, %v400
    %s406 = scalar_lea.vmem %s0, 1555
    %s407 = smov 96
    %v408 = vld [vmem:[%s406] ss:$-212 sm:%s407]
    %vm409 = vcmask 1046533
    %v410 = vsel %vm409, %v408, %v405
    %s411 = scalar_lea.vmem %s0, 564
    %v412 = vld [vmem:[%s411] sm:$0x80]
    %vm413 = vcmask 1047559
    %v414 = vsel %vm413, %v412, %v410
    %415 = vrot.lane.b32.xlu0 %v414, 94
    %v416 = vpop.permute.xlu0 %415
    %vm417 = vcmask 786160
    %418 = vst.msk [vmem:[#allocation0] sm:$0x3] %vm417, %v416
    %s419 = scalar_lea.vmem [#allocation0], 6
    %420 = vst.msk [vmem:[%s419] sm:$0xc] %vm417, %v416
    %s421 = scalar_lea.vmem [#allocation0], 12
    %422 = vst.msk [vmem:[%s421] sm:$0x30] %vm417, %v416
    %s423 = scalar_lea.vmem [#allocation0], 18
    %424 = vst.msk [vmem:[%s423] sm:$0xc0] %vm417, %v416
    %s425 = scalar_lea.vmem %s0, 54
    %v426 = vld [vmem:[%s425] sm:$0x1]
    %s427 = scalar_lea.vmem %s0, 554
    %s428 = smov 6
    %v429 = vld [vmem:[%s427] ss:$-212 sm:%s428]
    %vm430 = vcmask 1042433
    %v431 = vsel %vm430, %v429, %v426
    %s432 = scalar_lea.vmem %s0, 1054
    %s433 = smov 24
    %v434 = vld [vmem:[%s432] ss:$-212 sm:%s433]
    %vm435 = vcmask 1044483
    %v436 = vsel %vm435, %v434, %v431
    %s437 = scalar_lea.vmem %s0, 1554
    %s438 = smov 96
    %v439 = vld [vmem:[%s437] ss:$-212 sm:%s438]
    %vm440 = vcmask 1046533
    %v441 = vsel %vm440, %v439, %v436
    %s442 = scalar_lea.vmem %s0, 563
    %v443 = vld [vmem:[%s442] sm:$0x80]
    %vm444 = vcmask 1047559
    %v445 = vsel %vm444, %v443, %v441
    %446 = vrot.lane.b32.xlu0 %v445, 92
    %v447 = vpop.permute.xlu0 %446
    %vm448 = vcmask 769760
    %449 = vst.msk [vmem:[#allocation0] sm:$0x3] %vm448, %v447
    %s450 = scalar_lea.vmem [#allocation0], 6
    %451 = vst.msk [vmem:[%s450] sm:$0xc] %vm448, %v447
    %s452 = scalar_lea.vmem [#allocation0], 12
    %453 = vst.msk [vmem:[%s452] sm:$0x30] %vm448, %v447
    %s454 = scalar_lea.vmem [#allocation0], 18
    %455 = vst.msk [vmem:[%s454] sm:$0xc0] %vm448, %v447
    %s456 = scalar_lea.vmem %s0, 53
    %v457 = vld [vmem:[%s456] sm:$0x1]
    %s458 = scalar_lea.vmem %s0, 553
    %s459 = smov 6
    %v460 = vld [vmem:[%s458] ss:$-212 sm:%s459]
    %vm461 = vcmask 1042433
    %v462 = vsel %vm461, %v460, %v457
    %s463 = scalar_lea.vmem %s0, 1053
    %s464 = smov 24
    %v465 = vld [vmem:[%s463] ss:$-212 sm:%s464]
    %vm466 = vcmask 1044483
    %v467 = vsel %vm466, %v465, %v462
    %s468 = scalar_lea.vmem %s0, 1553
    %s469 = smov 96
    %v470 = vld [vmem:[%s468] ss:$-212 sm:%s469]
    %vm471 = vcmask 1046533
    %v472 = vsel %vm471, %v470, %v467
    %s473 = scalar_lea.vmem %s0, 562
    %v474 = vld [vmem:[%s473] sm:$0x80]
    %vm475 = vcmask 1047559
    %v476 = vsel %vm475, %v474, %v472
    %477 = vrot.lane.b32.xlu0 %v476, 90
    %v478 = vpop.permute.xlu0 %477
    %vm479 = vcmask 753360
    %480 = vst.msk [vmem:[#allocation0] sm:$0x3] %vm479, %v478
    %s481 = scalar_lea.vmem [#allocation0], 6
    %482 = vst.msk [vmem:[%s481] sm:$0xc] %vm479, %v478
    %s483 = scalar_lea.vmem [#allocation0], 12
    %484 = vst.msk [vmem:[%s483] sm:$0x30] %vm479, %v478
    %s485 = scalar_lea.vmem [#allocation0], 18
    %486 = vst.msk [vmem:[%s485] sm:$0xc0] %vm479, %v478
    %s487 = scalar_lea.vmem %s0, 52
    %v488 = vld [vmem:[%s487] sm:$0x1]
    %s489 = scalar_lea.vmem %s0, 552
    %s490 = smov 6
    %v491 = vld [vmem:[%s489] ss:$-212 sm:%s490]
    %vm492 = vcmask 1042433
    %v493 = vsel %vm492, %v491, %v488
    %s494 = scalar_lea.vmem %s0, 1052
    %s495 = smov 24
    %v496 = vld [vmem:[%s494] ss:$-212 sm:%s495]
    %vm497 = vcmask 1044483
    %v498 = vsel %vm497, %v496, %v493
    %s499 = scalar_lea.vmem %s0, 1552
    %s500 = smov 96
    %v501 = vld [vmem:[%s499] ss:$-212 sm:%s500]
    %vm502 = vcmask 1046533
    %v503 = vsel %vm502, %v501, %v498
    %s504 = scalar_lea.vmem %s0, 561
    %v505 = vld [vmem:[%s504] sm:$0x80]
    %vm506 = vcmask 1047559
    %v507 = vsel %vm506, %v505, %v503
    %508 = vrot.lane.b32.xlu0 %v507, 88
    %v509 = vpop.permute.xlu0 %508
    %vm510 = vcmask 736960
    %511 = vst.msk [vmem:[#allocation0] sm:$0x3] %vm510, %v509
    %s512 = scalar_lea.vmem [#allocation0], 6
    %513 = vst.msk [vmem:[%s512] sm:$0xc] %vm510, %v509
    %s514 = scalar_lea.vmem [#allocation0], 12
    %515 = vst.msk [vmem:[%s514] sm:$0x30] %vm510, %v509
    %s516 = scalar_lea.vmem [#allocation0], 18
    %517 = vst.msk [vmem:[%s516] sm:$0xc0] %vm510, %v509
    %s518 = scalar_lea.vmem %s0, 51
    %v519 = vld [vmem:[%s518] sm:$0x1]
    %s520 = scalar_lea.vmem %s0, 551
    %s521 = smov 6
    %v522 = vld [vmem:[%s520] ss:$-212 sm:%s521]
    %vm523 = vcmask 1042433
    %v524 = vsel %vm523, %v522, %v519
    %s525 = scalar_lea.vmem %s0, 1051
    %s526 = smov 24
    %v527 = vld [vmem:[%s525] ss:$-212 sm:%s526]
    %vm528 = vcmask 1044483
    %v529 = vsel %vm528, %v527, %v524
    %s530 = scalar_lea.vmem %s0, 1551
    %s531 = smov 96
    %v532 = vld [vmem:[%s530] ss:$-212 sm:%s531]
    %vm533 = vcmask 1046533
    %v534 = vsel %vm533, %v532, %v529
    %s535 = scalar_lea.vmem %s0, 560
    %v536 = vld [vmem:[%s535] sm:$0x80]
    %vm537 = vcmask 1047559
    %v538 = vsel %vm537, %v536, %v534
    %539 = vrot.lane.b32.xlu0 %v538, 86
    %v540 = vpop.permute.xlu0 %539
    %vm541 = vcmask 720560
    %542 = vst.msk [vmem:[#allocation0] sm:$0x3] %vm541, %v540
    %s543 = scalar_lea.vmem [#allocation0], 6
    %544 = vst.msk [vmem:[%s543] sm:$0xc] %vm541, %v540
    %s545 = scalar_lea.vmem [#allocation0], 12
    %546 = vst.msk [vmem:[%s545] sm:$0x30] %vm541, %v540
    %s547 = scalar_lea.vmem [#allocation0], 18
    %548 = vst.msk [vmem:[%s547] sm:$0xc0] %vm541, %v540
    %s549 = scalar_lea.vmem %s0, 50
    %v550 = vld [vmem:[%s549] sm:$0x1]
    %s551 = scalar_lea.vmem %s0, 550
    %s552 = smov 6
    %v553 = vld [vmem:[%s551] ss:$-212 sm:%s552]
    %vm554 = vcmask 1042433
    %v555 = vsel %vm554, %v553, %v550
    %s556 = scalar_lea.vmem %s0, 1050
    %s557 = smov 24
    %v558 = vld [vmem:[%s556] ss:$-212 sm:%s557]
    %vm559 = vcmask 1044483
    %v560 = vsel %vm559, %v558, %v555
    %s561 = scalar_lea.vmem %s0, 1550
    %s562 = smov 96
    %v563 = vld [vmem:[%s561] ss:$-212 sm:%s562]
    %vm564 = vcmask 1046533
    %v565 = vsel %vm564, %v563, %v560
    %s566 = scalar_lea.vmem %s0, 559
    %v567 = vld [vmem:[%s566] sm:$0x80]
    %vm568 = vcmask 1047559
    %v569 = vsel %vm568, %v567, %v565
    %570 = vrot.lane.b32.xlu0 %v569, 84
    %v571 = vpop.permute.xlu0 %570
    %vm572 = vcmask 704160
    %573 = vst.msk [vmem:[#allocation0] sm:$0x3] %vm572, %v571
    %s574 = scalar_lea.vmem [#allocation0], 6
    %575 = vst.msk [vmem:[%s574] sm:$0xc] %vm572, %v571
    %s576 = scalar_lea.vmem [#allocation0], 12
    %577 = vst.msk [vmem:[%s576] sm:$0x30] %vm572, %v571
    %s578 = scalar_lea.vmem [#allocation0], 18
    %579 = vst.msk [vmem:[%s578] sm:$0xc0] %vm572, %v571
    %s580 = scalar_lea.vmem %s0, 49
    %v581 = vld [vmem:[%s580] sm:$0x1]
    %s582 = scalar_lea.vmem %s0, 549
    %s583 = smov 6
    %v584 = vld [vmem:[%s582] ss:$-212 sm:%s583]
    %vm585 = vcmask 1042433
    %v586 = vsel %vm585, %v584, %v581
    %s587 = scalar_lea.vmem %s0, 1049
    %s588 = smov 24
    %v589 = vld [vmem:[%s587] ss:$-212 sm:%s588]
    %vm590 = vcmask 1044483
    %v591 = vsel %vm590, %v589, %v586
    %s592 = scalar_lea.vmem %s0, 1549
    %s593 = smov 96
    %v594 = vld [vmem:[%s592] ss:$-212 sm:%s593]
    %vm595 = vcmask 1046533
    %v596 = vsel %vm595, %v594, %v591
    %s597 = scalar_lea.vmem %s0, 558
    %v598 = vld [vmem:[%s597] sm:$0x80]
    %vm599 = vcmask 1047559
    %v600 = vsel %vm599, %v598, %v596
    %601 = vrot.lane.b32.xlu0 %v600, 82
    %v602 = vpop.permute.xlu0 %601
    %vm603 = vcmask 687760
    %604 = vst.msk [vmem:[#allocation0] sm:$0x3] %vm603, %v602
    %s605 = scalar_lea.vmem [#allocation0], 6
    %606 = vst.msk [vmem:[%s605] sm:$0xc] %vm603, %v602
    %s607 = scalar_lea.vmem [#allocation0], 12
    %608 = vst.msk [vmem:[%s607] sm:$0x30] %vm603, %v602
    %s609 = scalar_lea.vmem [#allocation0], 18
    %610 = vst.msk [vmem:[%s609] sm:$0xc0] %vm603, %v602
    %s611 = scalar_lea.vmem %s0, 48
    %v612 = vld [vmem:[%s611] sm:$0x1]
    %s613 = scalar_lea.vmem %s0, 548
    %s614 = smov 6
    %v615 = vld [vmem:[%s613] ss:$-212 sm:%s614]
    %vm616 = vcmask 1042433
    %v617 = vsel %vm616, %v615, %v612
    %s618 = scalar_lea.vmem %s0, 1048
    %s619 = smov 24
    %v620 = vld [vmem:[%s618] ss:$-212 sm:%s619]
    %vm621 = vcmask 1044483
    %v622 = vsel %vm621, %v620, %v617
    %s623 = scalar_lea.vmem %s0, 1548
    %s624 = smov 96
    %v625 = vld [vmem:[%s623] ss:$-212 sm:%s624]
    %vm626 = vcmask 1046533
    %v627 = vsel %vm626, %v625, %v622
    %s628 = scalar_lea.vmem %s0, 557
    %v629 = vld [vmem:[%s628] sm:$0x80]
    %vm630 = vcmask 1047559
    %v631 = vsel %vm630, %v629, %v627
    %632 = vrot.lane.b32.xlu0 %v631, 80
    %v633 = vpop.permute.xlu0 %632
    %vm634 = vcmask 671360
    %635 = vst.msk [vmem:[#allocation0] sm:$0x3] %vm634, %v633
    %s636 = scalar_lea.vmem [#allocation0], 6
    %637 = vst.msk [vmem:[%s636] sm:$0xc] %vm634, %v633
    %s638 = scalar_lea.vmem [#allocation0], 12
    %639 = vst.msk [vmem:[%s638] sm:$0x30] %vm634, %v633
    %s640 = scalar_lea.vmem [#allocation0], 18
    %641 = vst.msk [vmem:[%s640] sm:$0xc0] %vm634, %v633
    %s642 = scalar_lea.vmem %s0, 43
    %v643 = vld [vmem:[%s642] sm:$0x1]
    %s644 = scalar_lea.vmem %s0, 539
    %s645 = smov 6
    %v646 = vld [vmem:[%s644] ss:$-208 sm:%s645]
    %vm647 = vcmask 1042433
    %v648 = vsel %vm647, %v646, %v643
    %s649 = scalar_lea.vmem %s0, 1047
    %s650 = smov 24
    %v651 = vld [vmem:[%s649] ss:$-212 sm:%s650]
    %vm652 = vcmask 1044483
    %v653 = vsel %vm652, %v651, %v648
    %s654 = scalar_lea.vmem %s0, 1547
    %s655 = smov 96
    %v656 = vld [vmem:[%s654] ss:$-212 sm:%s655]
    %vm657 = vcmask 1046533
    %v658 = vsel %vm657, %v656, %v653
    %s659 = scalar_lea.vmem %s0, 556
    %v660 = vld [vmem:[%s659] sm:$0x80]
    %vm661 = vcmask 1047559
    %v662 = vsel %vm661, %v660, %v658
    %663 = vrot.lane.b32.xlu0 %v662, 78
    %v664 = vpop.permute.xlu0 %663
    %vm665 = vcmask 654960
    %666 = vst.msk [vmem:[#allocation0] sm:$0x3] %vm665, %v664
    %s667 = scalar_lea.vmem [#allocation0], 6
    %668 = vst.msk [vmem:[%s667] sm:$0xc] %vm665, %v664
    %s669 = scalar_lea.vmem [#allocation0], 12
    %670 = vst.msk [vmem:[%s669] sm:$0x30] %vm665, %v664
    %s671 = scalar_lea.vmem [#allocation0], 18
    %672 = vst.msk [vmem:[%s671] sm:$0xc0] %vm665, %v664
    %s673 = scalar_lea.vmem %s0, 42
    %v674 = vld [vmem:[%s673] sm:$0x1]
    %s675 = scalar_lea.vmem %s0, 538
    %s676 = smov 6
    %v677 = vld [vmem:[%s675] ss:$-208 sm:%s676]
    %vm678 = vcmask 1042433
    %v679 = vsel %vm678, %v677, %v674
    %s680 = scalar_lea.vmem %s0, 1046
    %s681 = smov 24
    %v682 = vld [vmem:[%s680] ss:$-212 sm:%s681]
    %vm683 = vcmask 1044483
    %v684 = vsel %vm683, %v682, %v679
    %s685 = scalar_lea.vmem %s0, 1546
    %s686 = smov 96
    %v687 = vld [vmem:[%s685] ss:$-212 sm:%s686]
    %vm688 = vcmask 1046533
    %v689 = vsel %vm688, %v687, %v684
    %s690 = scalar_lea.vmem %s0, 555
    %v691 = vld [vmem:[%s690] sm:$0x80]
    %vm692 = vcmask 1047559
    %v693 = vsel %vm692, %v691, %v689
    %694 = vrot.lane.b32.xlu0 %v693, 76
    %v695 = vpop.permute.xlu0 %694
    %vm696 = vcmask 638560
    %697 = vst.msk [vmem:[#allocation0] sm:$0x3] %vm696, %v695
    %s698 = scalar_lea.vmem [#allocation0], 6
    %699 = vst.msk [vmem:[%s698] sm:$0xc] %vm696, %v695
    %s700 = scalar_lea.vmem [#allocation0], 12
    %701 = vst.msk [vmem:[%s700] sm:$0x30] %vm696, %v695
    %s702 = scalar_lea.vmem [#allocation0], 18
    %703 = vst.msk [vmem:[%s702] sm:$0xc0] %vm696, %v695
    %s704 = scalar_lea.vmem %s0, 41
    %v705 = vld [vmem:[%s704] sm:$0x1]
    %s706 = scalar_lea.vmem %s0, 537
    %s707 = smov 6
    %v708 = vld [vmem:[%s706] ss:$-208 sm:%s707]
    %vm709 = vcmask 1042433
    %v710 = vsel %vm709, %v708, %v705
    %s711 = scalar_lea.vmem %s0, 1045
    %s712 = smov 24
    %v713 = vld [vmem:[%s711] ss:$-212 sm:%s712]
    %vm714 = vcmask 1044483
    %v715 = vsel %vm714, %v713, %v710
    %s716 = scalar_lea.vmem %s0, 1545
    %s717 = smov 96
    %v718 = vld [vmem:[%s716] ss:$-212 sm:%s717]
    %vm719 = vcmask 1046533
    %v720 = vsel %vm719, %v718, %v715
    %s721 = scalar_lea.vmem %s0, 554
    %v722 = vld [vmem:[%s721] sm:$0x80]
    %vm723 = vcmask 1047559
    %v724 = vsel %vm723, %v722, %v720
    %725 = vrot.lane.b32.xlu0 %v724, 74
    %v726 = vpop.permute.xlu0 %725
    %vm727 = vcmask 622160
    %728 = vst.msk [vmem:[#allocation0] sm:$0x3] %vm727, %v726
    %s729 = scalar_lea.vmem [#allocation0], 6
    %730 = vst.msk [vmem:[%s729] sm:$0xc] %vm727, %v726
    %s731 = scalar_lea.vmem [#allocation0], 12
    %732 = vst.msk [vmem:[%s731] sm:$0x30] %vm727, %v726
    %s733 = scalar_lea.vmem [#allocation0], 18
    %734 = vst.msk [vmem:[%s733] sm:$0xc0] %vm727, %v726
    %s735 = scalar_lea.vmem %s0, 40
    %v736 = vld [vmem:[%s735] sm:$0x1]
    %s737 = scalar_lea.vmem %s0, 536
    %s738 = smov 6
    %v739 = vld [vmem:[%s737] ss:$-208 sm:%s738]
    %vm740 = vcmask 1042433
    %v741 = vsel %vm740, %v739, %v736
    %s742 = scalar_lea.vmem %s0, 1044
    %s743 = smov 24
    %v744 = vld [vmem:[%s742] ss:$-212 sm:%s743]
    %vm745 = vcmask 1044483
    %v746 = vsel %vm745, %v744, %v741
    %s747 = scalar_lea.vmem %s0, 1544
    %s748 = smov 96
    %v749 = vld [vmem:[%s747] ss:$-212 sm:%s748]
    %vm750 = vcmask 1046533
    %v751 = vsel %vm750, %v749, %v746
    %s752 = scalar_lea.vmem %s0, 553
    %v753 = vld [vmem:[%s752] sm:$0x80]
    %vm754 = vcmask 1047559
    %v755 = vsel %vm754, %v753, %v751
    %756 = vrot.lane.b32.xlu0 %v755, 72
    %v757 = vpop.permute.xlu0 %756
    %vm758 = vcmask 605760
    %759 = vst.msk [vmem:[#allocation0] sm:$0x3] %vm758, %v757
    %s760 = scalar_lea.vmem [#allocation0], 6
    %761 = vst.msk [vmem:[%s760] sm:$0xc] %vm758, %v757
    %s762 = scalar_lea.vmem [#allocation0], 12
    %763 = vst.msk [vmem:[%s762] sm:$0x30] %vm758, %v757
    %s764 = scalar_lea.vmem [#allocation0], 18
    %765 = vst.msk [vmem:[%s764] sm:$0xc0] %vm758, %v757
    %s766 = scalar_lea.vmem %s0, 39
    %v767 = vld [vmem:[%s766] sm:$0x1]
    %s768 = scalar_lea.vmem %s0, 539
    %s769 = smov 6
    %v770 = vld [vmem:[%s768] ss:$-212 sm:%s769]
    %vm771 = vcmask 1042433
    %v772 = vsel %vm771, %v770, %v767
    %s773 = scalar_lea.vmem %s0, 1027
    %s774 = smov 24
    %v775 = vld [vmem:[%s773] ss:$-208 sm:%s774]
    %vm776 = vcmask 1044483
    %v777 = vsel %vm776, %v775, %v772
    %s778 = scalar_lea.vmem %s0, 1543
    %s779 = smov 96
    %v780 = vld [vmem:[%s778] ss:$-212 sm:%s779]
    %vm781 = vcmask 1046533
    %v782 = vsel %vm781, %v780, %v777
    %s783 = scalar_lea.vmem %s0, 552
    %v784 = vld [vmem:[%s783] sm:$0x80]
    %vm785 = vcmask 1047559
    %v786 = vsel %vm785, %v784, %v782
    %787 = vrot.lane.b32.xlu0 %v786, 70
    %v788 = vpop.permute.xlu0 %787
    %vm789 = vcmask 589360
    %790 = vst.msk [vmem:[#allocation0] sm:$0x3] %vm789, %v788
    %s791 = scalar_lea.vmem [#allocation0], 6
    %792 = vst.msk [vmem:[%s791] sm:$0xc] %vm789, %v788
    %s793 = scalar_lea.vmem [#allocation0], 12
    %794 = vst.msk [vmem:[%s793] sm:$0x30] %vm789, %v788
    %s795 = scalar_lea.vmem [#allocation0], 18
    %796 = vst.msk [vmem:[%s795] sm:$0xc0] %vm789, %v788
    %s797 = scalar_lea.vmem %s0, 38
    %v798 = vld [vmem:[%s797] sm:$0x1]
    %s799 = scalar_lea.vmem %s0, 538
    %s800 = smov 6
    %v801 = vld [vmem:[%s799] ss:$-212 sm:%s800]
    %vm802 = vcmask 1042433
    %v803 = vsel %vm802, %v801, %v798
    %s804 = scalar_lea.vmem %s0, 1026
    %s805 = smov 24
    %v806 = vld [vmem:[%s804] ss:$-208 sm:%s805]
    %vm807 = vcmask 1044483
    %v808 = vsel %vm807, %v806, %v803
    %s809 = scalar_lea.vmem %s0, 1542
    %s810 = smov 96
    %v811 = vld [vmem:[%s809] ss:$-212 sm:%s810]
    %vm812 = vcmask 1046533
    %v813 = vsel %vm812, %v811, %v808
    %s814 = scalar_lea.vmem %s0, 551
    %v815 = vld [vmem:[%s814] sm:$0x80]
    %vm816 = vcmask 1047559
    %v817 = vsel %vm816, %v815, %v813
    %818 = vrot.lane.b32.xlu0 %v817, 68
    %v819 = vpop.permute.xlu0 %818
    %vm820 = vcmask 572960
    %821 = vst.msk [vmem:[#allocation0] sm:$0x3] %vm820, %v819
    %s822 = scalar_lea.vmem [#allocation0], 6
    %823 = vst.msk [vmem:[%s822] sm:$0xc] %vm820, %v819
    %s824 = scalar_lea.vmem [#allocation0], 12
    %825 = vst.msk [vmem:[%s824] sm:$0x30] %vm820, %v819
    %s826 = scalar_lea.vmem [#allocation0], 18
    %827 = vst.msk [vmem:[%s826] sm:$0xc0] %vm820, %v819
    %s828 = scalar_lea.vmem %s0, 37
    %v829 = vld [vmem:[%s828] sm:$0x1]
    %s830 = scalar_lea.vmem %s0, 537
    %s831 = smov 6
    %v832 = vld [vmem:[%s830] ss:$-212 sm:%s831]
    %vm833 = vcmask 1042433
    %v834 = vsel %vm833, %v832, %v829
    %s835 = scalar_lea.vmem %s0, 1025
    %s836 = smov 24
    %v837 = vld [vmem:[%s835] ss:$-208 sm:%s836]
    %vm838 = vcmask 1044483
    %v839 = vsel %vm838, %v837, %v834
    %s840 = scalar_lea.vmem %s0, 1541
    %s841 = smov 96
    %v842 = vld [vmem:[%s840] ss:$-212 sm:%s841]
    %vm843 = vcmask 1046533
    %v844 = vsel %vm843, %v842, %v839
    %s845 = scalar_lea.vmem %s0, 550
    %v846 = vld [vmem:[%s845] sm:$0x80]
    %vm847 = vcmask 1047559
    %v848 = vsel %vm847, %v846, %v844
    %849 = vrot.lane.b32.xlu0 %v848, 66
    %v850 = vpop.permute.xlu0 %849
    %vm851 = vcmask 556560
    %852 = vst.msk [vmem:[#allocation0] sm:$0x3] %vm851, %v850
    %s853 = scalar_lea.vmem [#allocation0], 6
    %854 = vst.msk [vmem:[%s853] sm:$0xc] %vm851, %v850
    %s855 = scalar_lea.vmem [#allocation0], 12
    %856 = vst.msk [vmem:[%s855] sm:$0x30] %vm851, %v850
    %s857 = scalar_lea.vmem [#allocation0], 18
    %858 = vst.msk [vmem:[%s857] sm:$0xc0] %vm851, %v850
    %s859 = scalar_lea.vmem %s0, 36
    %v860 = vld [vmem:[%s859] sm:$0x1]
    %s861 = scalar_lea.vmem %s0, 536
    %s862 = smov 6
    %v863 = vld [vmem:[%s861] ss:$-212 sm:%s862]
    %vm864 = vcmask 1042433
    %v865 = vsel %vm864, %v863, %v860
    %s866 = scalar_lea.vmem %s0, 1024
    %s867 = smov 24
    %v868 = vld [vmem:[%s866] ss:$-208 sm:%s867]
    %vm869 = vcmask 1044483
    %v870 = vsel %vm869, %v868, %v865
    %s871 = scalar_lea.vmem %s0, 1540
    %s872 = smov 96
    %v873 = vld [vmem:[%s871] ss:$-212 sm:%s872]
    %vm874 = vcmask 1046533
    %v875 = vsel %vm874, %v873, %v870
    %s876 = scalar_lea.vmem %s0, 549
    %v877 = vld [vmem:[%s876] sm:$0x80]
    %vm878 = vcmask 1047559
    %v879 = vsel %vm878, %v877, %v875
    %880 = vrot.lane.b32.xlu0 %v879, 64
    %v881 = vpop.permute.xlu0 %880
    %vm882 = vcmask 540160
    %883 = vst.msk [vmem:[#allocation0] sm:$0x3] %vm882, %v881
    %s884 = scalar_lea.vmem [#allocation0], 6
    %885 = vst.msk [vmem:[%s884] sm:$0xc] %vm882, %v881
    %s886 = scalar_lea.vmem [#allocation0], 12
    %887 = vst.msk [vmem:[%s886] sm:$0x30] %vm882, %v881
    %s888 = scalar_lea.vmem [#allocation0], 18
    %889 = vst.msk [vmem:[%s888] sm:$0xc0] %vm882, %v881
    %s890 = scalar_lea.vmem %s0, 35
    %v891 = vld [vmem:[%s890] sm:$0x1]
    %s892 = scalar_lea.vmem %s0, 535
    %s893 = smov 6
    %v894 = vld [vmem:[%s892] ss:$-212 sm:%s893]
    %vm895 = vcmask 1042433
    %v896 = vsel %vm895, %v894, %v891
    %s897 = scalar_lea.vmem %s0, 1035
    %s898 = smov 24
    %v899 = vld [vmem:[%s897] ss:$-212 sm:%s898]
    %vm900 = vcmask 1044483
    %v901 = vsel %vm900, %v899, %v896
    %s902 = scalar_lea.vmem %s0, 1515
    %s903 = smov 96
    %v904 = vld [vmem:[%s902] ss:$-208 sm:%s903]
    %vm905 = vcmask 1046533
    %v906 = vsel %vm905, %v904, %v901
    %s907 = scalar_lea.vmem %s0, 548
    %v908 = vld [vmem:[%s907] sm:$0x80]
    %vm909 = vcmask 1047559
    %v910 = vsel %vm909, %v908, %v906
    %911 = vrot.lane.b32.xlu0 %v910, 62
    %v912 = vpop.permute.xlu0 %911
    %vm913 = vcmask 523760
    %914 = vst.msk [vmem:[#allocation0] sm:$0x3] %vm913, %v912
    %s915 = scalar_lea.vmem [#allocation0], 6
    %916 = vst.msk [vmem:[%s915] sm:$0xc] %vm913, %v912
    %s917 = scalar_lea.vmem [#allocation0], 12
    %918 = vst.msk [vmem:[%s917] sm:$0x30] %vm913, %v912
    %s919 = scalar_lea.vmem [#allocation0], 18
    %920 = vst.msk [vmem:[%s919] sm:$0xc0] %vm913, %v912
    %s921 = scalar_lea.vmem %s0, 34
    %v922 = vld [vmem:[%s921] sm:$0x1]
    %s923 = scalar_lea.vmem %s0, 534
    %s924 = smov 6
    %v925 = vld [vmem:[%s923] ss:$-212 sm:%s924]
    %vm926 = vcmask 1042433
    %v927 = vsel %vm926, %v925, %v922
    %s928 = scalar_lea.vmem %s0, 1034
    %s929 = smov 24
    %v930 = vld [vmem:[%s928] ss:$-212 sm:%s929]
    %vm931 = vcmask 1044483
    %v932 = vsel %vm931, %v930, %v927
    %s933 = scalar_lea.vmem %s0, 1514
    %s934 = smov 96
    %v935 = vld [vmem:[%s933] ss:$-208 sm:%s934]
    %vm936 = vcmask 1046533
    %v937 = vsel %vm936, %v935, %v932
    %s938 = scalar_lea.vmem %s0, 547
    %v939 = vld [vmem:[%s938] sm:$0x80]
    %vm940 = vcmask 1047559
    %v941 = vsel %vm940, %v939, %v937
    %942 = vrot.lane.b32.xlu0 %v941, 60
    %v943 = vpop.permute.xlu0 %942
    %vm944 = vcmask 507360
    %945 = vst.msk [vmem:[#allocation0] sm:$0x3] %vm944, %v943
    %s946 = scalar_lea.vmem [#allocation0], 6
    %947 = vst.msk [vmem:[%s946] sm:$0xc] %vm944, %v943
    %s948 = scalar_lea.vmem [#allocation0], 12
    %949 = vst.msk [vmem:[%s948] sm:$0x30] %vm944, %v943
    %s950 = scalar_lea.vmem [#allocation0], 18
    %951 = vst.msk [vmem:[%s950] sm:$0xc0] %vm944, %v943
    %s952 = scalar_lea.vmem %s0, 33
    %v953 = vld [vmem:[%s952] sm:$0x1]
    %s954 = scalar_lea.vmem %s0, 533
    %s955 = smov 6
    %v956 = vld [vmem:[%s954] ss:$-212 sm:%s955]
    %vm957 = vcmask 1042433
    %v958 = vsel %vm957, %v956, %v953
    %s959 = scalar_lea.vmem %s0, 1033
    %s960 = smov 24
    %v961 = vld [vmem:[%s959] ss:$-212 sm:%s960]
    %vm962 = vcmask 1044483
    %v963 = vsel %vm962, %v961, %v958
    %s964 = scalar_lea.vmem %s0, 1513
    %s965 = smov 96
    %v966 = vld [vmem:[%s964] ss:$-208 sm:%s965]
    %vm967 = vcmask 1046533
    %v968 = vsel %vm967, %v966, %v963
    %s969 = scalar_lea.vmem %s0, 546
    %v970 = vld [vmem:[%s969] sm:$0x80]
    %vm971 = vcmask 1047559
    %v972 = vsel %vm971, %v970, %v968
    %973 = vrot.lane.b32.xlu0 %v972, 58
    %v974 = vpop.permute.xlu0 %973
    %vm975 = vcmask 490960
    %976 = vst.msk [vmem:[#allocation0] sm:$0x3] %vm975, %v974
    %s977 = scalar_lea.vmem [#allocation0], 6
    %978 = vst.msk [vmem:[%s977] sm:$0xc] %vm975, %v974
    %s979 = scalar_lea.vmem [#allocation0], 12
    %980 = vst.msk [vmem:[%s979] sm:$0x30] %vm975, %v974
    %s981 = scalar_lea.vmem [#allocation0], 18
    %982 = vst.msk [vmem:[%s981] sm:$0xc0] %vm975, %v974
    %s983 = scalar_lea.vmem %s0, 32
    %v984 = vld [vmem:[%s983] sm:$0x1]
    %s985 = scalar_lea.vmem %s0, 532
    %s986 = smov 6
    %v987 = vld [vmem:[%s985] ss:$-212 sm:%s986]
    %vm988 = vcmask 1042433
    %v989 = vsel %vm988, %v987, %v984
    %s990 = scalar_lea.vmem %s0, 1032
    %s991 = smov 24
    %v992 = vld [vmem:[%s990] ss:$-212 sm:%s991]
    %vm993 = vcmask 1044483
    %v994 = vsel %vm993, %v992, %v989
    %s995 = scalar_lea.vmem %s0, 1512
    %s996 = smov 96
    %v997 = vld [vmem:[%s995] ss:$-208 sm:%s996]
    %vm998 = vcmask 1046533
    %v999 = vsel %vm998, %v997, %v994
    %s1000 = scalar_lea.vmem %s0, 545
    %v1001 = vld [vmem:[%s1000] sm:$0x80]
    %vm1002 = vcmask 1047559
    %v1003 = vsel %vm1002, %v1001, %v999
    %1004 = vrot.lane.b32.xlu0 %v1003, 56
    %v1005 = vpop.permute.xlu0 %1004
    %vm1006 = vcmask 474560
    %1007 = vst.msk [vmem:[#allocation0] sm:$0x3] %vm1006, %v1005
    %s1008 = scalar_lea.vmem [#allocation0], 6
    %1009 = vst.msk [vmem:[%s1008] sm:$0xc] %vm1006, %v1005
    %s1010 = scalar_lea.vmem [#allocation0], 12
    %1011 = vst.msk [vmem:[%s1010] sm:$0x30] %vm1006, %v1005
    %s1012 = scalar_lea.vmem [#allocation0], 18
    %1013 = vst.msk [vmem:[%s1012] sm:$0xc0] %vm1006, %v1005
    %s1014 = scalar_lea.vmem %s0, 31
    %v1015 = vld [vmem:[%s1014] sm:$0x1]
    %s1016 = scalar_lea.vmem %s0, 531
    %s1017 = smov 6
    %v1018 = vld [vmem:[%s1016] ss:$-212 sm:%s1017]
    %vm1019 = vcmask 1042433
    %v1020 = vsel %vm1019, %v1018, %v1015
    %s1021 = scalar_lea.vmem %s0, 1031
    %s1022 = smov 24
    %v1023 = vld [vmem:[%s1021] ss:$-212 sm:%s1022]
    %vm1024 = vcmask 1044483
    %v1025 = vsel %vm1024, %v1023, %v1020
    %s1026 = scalar_lea.vmem %s0, 1531
    %s1027 = smov 96
    %v1028 = vld [vmem:[%s1026] ss:$-212 sm:%s1027]
    %vm1029 = vcmask 1046533
    %v1030 = vsel %vm1029, %v1028, %v1025
    %s1031 = scalar_lea.vmem %s0, 540
    %v1032 = vld [vmem:[%s1031] sm:$0x80]
    %vm1033 = vcmask 1047559
    %v1034 = vsel %vm1033, %v1032, %v1030
    %1035 = vrot.lane.b32.xlu0 %v1034, 54
    %v1036 = vpop.permute.xlu0 %1035
    %vm1037 = vcmask 458160
    %1038 = vst.msk [vmem:[#allocation0] sm:$0x3] %vm1037, %v1036
    %s1039 = scalar_lea.vmem [#allocation0], 6
    %1040 = vst.msk [vmem:[%s1039] sm:$0xc] %vm1037, %v1036
    %s1041 = scalar_lea.vmem [#allocation0], 12
    %1042 = vst.msk [vmem:[%s1041] sm:$0x30] %vm1037, %v1036
    %s1043 = scalar_lea.vmem [#allocation0], 18
    %1044 = vst.msk [vmem:[%s1043] sm:$0xc0] %vm1037, %v1036
    %s1045 = scalar_lea.vmem %s0, 30
    %v1046 = vld [vmem:[%s1045] sm:$0x1]
    %s1047 = scalar_lea.vmem %s0, 530
    %s1048 = smov 6
    %v1049 = vld [vmem:[%s1047] ss:$-212 sm:%s1048]
    %vm1050 = vcmask 1042433
    %v1051 = vsel %vm1050, %v1049, %v1046
    %s1052 = scalar_lea.vmem %s0, 1030
    %s1053 = smov 24
    %v1054 = vld [vmem:[%s1052] ss:$-212 sm:%s1053]
    %vm1055 = vcmask 1044483
    %v1056 = vsel %vm1055, %v1054, %v1051
    %s1057 = scalar_lea.vmem %s0, 1530
    %s1058 = smov 96
    %v1059 = vld [vmem:[%s1057] ss:$-212 sm:%s1058]
    %vm1060 = vcmask 1046533
    %v1061 = vsel %vm1060, %v1059, %v1056
    %s1062 = scalar_lea.vmem %s0, 539
    %v1063 = vld [vmem:[%s1062] sm:$0x80]
    %vm1064 = vcmask 1047559
    %v1065 = vsel %vm1064, %v1063, %v1061
    %1066 = vrot.lane.b32.xlu0 %v1065, 52
    %v1067 = vpop.permute.xlu0 %1066
    %vm1068 = vcmask 441760
    %1069 = vst.msk [vmem:[#allocation0] sm:$0x3] %vm1068, %v1067
    %s1070 = scalar_lea.vmem [#allocation0], 6
    %1071 = vst.msk [vmem:[%s1070] sm:$0xc] %vm1068, %v1067
    %s1072 = scalar_lea.vmem [#allocation0], 12
    %1073 = vst.msk [vmem:[%s1072] sm:$0x30] %vm1068, %v1067
    %s1074 = scalar_lea.vmem [#allocation0], 18
    %1075 = vst.msk [vmem:[%s1074] sm:$0xc0] %vm1068, %v1067
    %s1076 = scalar_lea.vmem %s0, 29
    %v1077 = vld [vmem:[%s1076] sm:$0x1]
    %s1078 = scalar_lea.vmem %s0, 529
    %s1079 = smov 6
    %v1080 = vld [vmem:[%s1078] ss:$-212 sm:%s1079]
    %vm1081 = vcmask 1042433
    %v1082 = vsel %vm1081, %v1080, %v1077
    %s1083 = scalar_lea.vmem %s0, 1029
    %s1084 = smov 24
    %v1085 = vld [vmem:[%s1083] ss:$-212 sm:%s1084]
    %vm1086 = vcmask 1044483
    %v1087 = vsel %vm1086, %v1085, %v1082
    %s1088 = scalar_lea.vmem %s0, 1529
    %s1089 = smov 96
    %v1090 = vld [vmem:[%s1088] ss:$-212 sm:%s1089]
    %vm1091 = vcmask 1046533
    %v1092 = vsel %vm1091, %v1090, %v1087
    %s1093 = scalar_lea.vmem %s0, 538
    %v1094 = vld [vmem:[%s1093] sm:$0x80]
    %vm1095 = vcmask 1047559
    %v1096 = vsel %vm1095, %v1094, %v1092
    %1097 = vrot.lane.b32.xlu0 %v1096, 50
    %v1098 = vpop.permute.xlu0 %1097
    %vm1099 = vcmask 425360
    %1100 = vst.msk [vmem:[#allocation0] sm:$0x3] %vm1099, %v1098
    %s1101 = scalar_lea.vmem [#allocation0], 6
    %1102 = vst.msk [vmem:[%s1101] sm:$0xc] %vm1099, %v1098
    %s1103 = scalar_lea.vmem [#allocation0], 12
    %1104 = vst.msk [vmem:[%s1103] sm:$0x30] %vm1099, %v1098
    %s1105 = scalar_lea.vmem [#allocation0], 18
    %1106 = vst.msk [vmem:[%s1105] sm:$0xc0] %vm1099, %v1098
    %s1107 = scalar_lea.vmem %s0, 28
    %v1108 = vld [vmem:[%s1107] sm:$0x1]
    %s1109 = scalar_lea.vmem %s0, 528
    %s1110 = smov 6
    %v1111 = vld [vmem:[%s1109] ss:$-212 sm:%s1110]
    %vm1112 = vcmask 1042433
    %v1113 = vsel %vm1112, %v1111, %v1108
    %s1114 = scalar_lea.vmem %s0, 1028
    %s1115 = smov 24
    %v1116 = vld [vmem:[%s1114] ss:$-212 sm:%s1115]
    %vm1117 = vcmask 1044483
    %v1118 = vsel %vm1117, %v1116, %v1113
    %s1119 = scalar_lea.vmem %s0, 1528
    %s1120 = smov 96
    %v1121 = vld [vmem:[%s1119] ss:$-212 sm:%s1120]
    %vm1122 = vcmask 1046533
    %v1123 = vsel %vm1122, %v1121, %v1118
    %s1124 = scalar_lea.vmem %s0, 537
    %v1125 = vld [vmem:[%s1124] sm:$0x80]
    %vm1126 = vcmask 1047559
    %v1127 = vsel %vm1126, %v1125, %v1123
    %1128 = vrot.lane.b32.xlu0 %v1127, 48
    %v1129 = vpop.permute.xlu0 %1128
    %vm1130 = vcmask 408960
    %1131 = vst.msk [vmem:[#allocation0] sm:$0x3] %vm1130, %v1129
    %s1132 = scalar_lea.vmem [#allocation0], 6
    %1133 = vst.msk [vmem:[%s1132] sm:$0xc] %vm1130, %v1129
    %s1134 = scalar_lea.vmem [#allocation0], 12
    %1135 = vst.msk [vmem:[%s1134] sm:$0x30] %vm1130, %v1129
    %s1136 = scalar_lea.vmem [#allocation0], 18
    %1137 = vst.msk [vmem:[%s1136] sm:$0xc0] %vm1130, %v1129
    %s1138 = scalar_lea.vmem %s0, 27
    %v1139 = vld [vmem:[%s1138] sm:$0x1]
    %s1140 = scalar_lea.vmem %s0, 527
    %s1141 = smov 6
    %v1142 = vld [vmem:[%s1140] ss:$-212 sm:%s1141]
    %vm1143 = vcmask 1042433
    %v1144 = vsel %vm1143, %v1142, %v1139
    %s1145 = scalar_lea.vmem %s0, 1027
    %s1146 = smov 24
    %v1147 = vld [vmem:[%s1145] ss:$-212 sm:%s1146]
    %vm1148 = vcmask 1044483
    %v1149 = vsel %vm1148, %v1147, %v1144
    %s1150 = scalar_lea.vmem %s0, 1527
    %s1151 = smov 96
    %v1152 = vld [vmem:[%s1150] ss:$-212 sm:%s1151]
    %vm1153 = vcmask 1046533
    %v1154 = vsel %vm1153, %v1152, %v1149
    %s1155 = scalar_lea.vmem %s0, 536
    %v1156 = vld [vmem:[%s1155] sm:$0x80]
    %vm1157 = vcmask 1047559
    %v1158 = vsel %vm1157, %v1156, %v1154
    %1159 = vrot.lane.b32.xlu0 %v1158, 46
    %v1160 = vpop.permute.xlu0 %1159
    %vm1161 = vcmask 392560
    %1162 = vst.msk [vmem:[#allocation0] sm:$0x3] %vm1161, %v1160
    %s1163 = scalar_lea.vmem [#allocation0], 6
    %1164 = vst.msk [vmem:[%s1163] sm:$0xc] %vm1161, %v1160
    %s1165 = scalar_lea.vmem [#allocation0], 12
    %1166 = vst.msk [vmem:[%s1165] sm:$0x30] %vm1161, %v1160
    %s1167 = scalar_lea.vmem [#allocation0], 18
    %1168 = vst.msk [vmem:[%s1167] sm:$0xc0] %vm1161, %v1160
    %s1169 = scalar_lea.vmem %s0, 26
    %v1170 = vld [vmem:[%s1169] sm:$0x1]
    %s1171 = scalar_lea.vmem %s0, 526
    %s1172 = smov 6
    %v1173 = vld [vmem:[%s1171] ss:$-212 sm:%s1172]
    %vm1174 = vcmask 1042433
    %v1175 = vsel %vm1174, %v1173, %v1170
    %s1176 = scalar_lea.vmem %s0, 1026
    %s1177 = smov 24
    %v1178 = vld [vmem:[%s1176] ss:$-212 sm:%s1177]
    %vm1179 = vcmask 1044483
    %v1180 = vsel %vm1179, %v1178, %v1175
    %s1181 = scalar_lea.vmem %s0, 1526
    %s1182 = smov 96
    %v1183 = vld [vmem:[%s1181] ss:$-212 sm:%s1182]
    %vm1184 = vcmask 1046533
    %v1185 = vsel %vm1184, %v1183, %v1180
    %s1186 = scalar_lea.vmem %s0, 535
    %v1187 = vld [vmem:[%s1186] sm:$0x80]
    %vm1188 = vcmask 1047559
    %v1189 = vsel %vm1188, %v1187, %v1185
    %1190 = vrot.lane.b32.xlu0 %v1189, 44
    %v1191 = vpop.permute.xlu0 %1190
    %vm1192 = vcmask 376160
    %1193 = vst.msk [vmem:[#allocation0] sm:$0x3] %vm1192, %v1191
    %s1194 = scalar_lea.vmem [#allocation0], 6
    %1195 = vst.msk [vmem:[%s1194] sm:$0xc] %vm1192, %v1191
    %s1196 = scalar_lea.vmem [#allocation0], 12
    %1197 = vst.msk [vmem:[%s1196] sm:$0x30] %vm1192, %v1191
    %s1198 = scalar_lea.vmem [#allocation0], 18
    %1199 = vst.msk [vmem:[%s1198] sm:$0xc0] %vm1192, %v1191
    %s1200 = scalar_lea.vmem %s0, 25
    %v1201 = vld [vmem:[%s1200] sm:$0x1]
    %s1202 = scalar_lea.vmem %s0, 525
    %s1203 = smov 6
    %v1204 = vld [vmem:[%s1202] ss:$-212 sm:%s1203]
    %vm1205 = vcmask 1042433
    %v1206 = vsel %vm1205, %v1204, %v1201
    %s1207 = scalar_lea.vmem %s0, 1025
    %s1208 = smov 24
    %v1209 = vld [vmem:[%s1207] ss:$-212 sm:%s1208]
    %vm1210 = vcmask 1044483
    %v1211 = vsel %vm1210, %v1209, %v1206
    %s1212 = scalar_lea.vmem %s0, 1525
    %s1213 = smov 96
    %v1214 = vld [vmem:[%s1212] ss:$-212 sm:%s1213]
    %vm1215 = vcmask 1046533
    %v1216 = vsel %vm1215, %v1214, %v1211
    %s1217 = scalar_lea.vmem %s0, 534
    %v1218 = vld [vmem:[%s1217] sm:$0x80]
    %vm1219 = vcmask 1047559
    %v1220 = vsel %vm1219, %v1218, %v1216
    %1221 = vrot.lane.b32.xlu0 %v1220, 42
    %v1222 = vpop.permute.xlu0 %1221
    %vm1223 = vcmask 359760
    %1224 = vst.msk [vmem:[#allocation0] sm:$0x3] %vm1223, %v1222
    %s1225 = scalar_lea.vmem [#allocation0], 6
    %1226 = vst.msk [vmem:[%s1225] sm:$0xc] %vm1223, %v1222
    %s1227 = scalar_lea.vmem [#allocation0], 12
    %1228 = vst.msk [vmem:[%s1227] sm:$0x30] %vm1223, %v1222
    %s1229 = scalar_lea.vmem [#allocation0], 18
    %1230 = vst.msk [vmem:[%s1229] sm:$0xc0] %vm1223, %v1222
    %s1231 = scalar_lea.vmem %s0, 24
    %v1232 = vld [vmem:[%s1231] sm:$0x1]
    %s1233 = scalar_lea.vmem %s0, 524
    %s1234 = smov 6
    %v1235 = vld [vmem:[%s1233] ss:$-212 sm:%s1234]
    %vm1236 = vcmask 1042433
    %v1237 = vsel %vm1236, %v1235, %v1232
    %s1238 = scalar_lea.vmem %s0, 1024
    %s1239 = smov 24
    %v1240 = vld [vmem:[%s1238] ss:$-212 sm:%s1239]
    %vm1241 = vcmask 1044483
    %v1242 = vsel %vm1241, %v1240, %v1237
    %s1243 = scalar_lea.vmem %s0, 1524
    %s1244 = smov 96
    %v1245 = vld [vmem:[%s1243] ss:$-212 sm:%s1244]
    %vm1246 = vcmask 1046533
    %v1247 = vsel %vm1246, %v1245, %v1242
    %s1248 = scalar_lea.vmem %s0, 533
    %v1249 = vld [vmem:[%s1248] sm:$0x80]
    %vm1250 = vcmask 1047559
    %v1251 = vsel %vm1250, %v1249, %v1247
    %1252 = vrot.lane.b32.xlu0 %v1251, 40
    %v1253 = vpop.permute.xlu0 %1252
    %vm1254 = vcmask 343360
    %1255 = vst.msk [vmem:[#allocation0] sm:$0x3] %vm1254, %v1253
    %s1256 = scalar_lea.vmem [#allocation0], 6
    %1257 = vst.msk [vmem:[%s1256] sm:$0xc] %vm1254, %v1253
    %s1258 = scalar_lea.vmem [#allocation0], 12
    %1259 = vst.msk [vmem:[%s1258] sm:$0x30] %vm1254, %v1253
    %s1260 = scalar_lea.vmem [#allocation0], 18
    %1261 = vst.msk [vmem:[%s1260] sm:$0xc0] %vm1254, %v1253
    %s1262 = scalar_lea.vmem %s0, 19
    %v1263 = vld [vmem:[%s1262] sm:$0x1]
    %s1264 = scalar_lea.vmem %s0, 515
    %s1265 = smov 6
    %v1266 = vld [vmem:[%s1264] ss:$-208 sm:%s1265]
    %vm1267 = vcmask 1042433
    %v1268 = vsel %vm1267, %v1266, %v1263
    %s1269 = scalar_lea.vmem %s0, 1023
    %s1270 = smov 24
    %v1271 = vld [vmem:[%s1269] ss:$-212 sm:%s1270]
    %vm1272 = vcmask 1044483
    %v1273 = vsel %vm1272, %v1271, %v1268
    %s1274 = scalar_lea.vmem %s0, 1523
    %s1275 = smov 96
    %v1276 = vld [vmem:[%s1274] ss:$-212 sm:%s1275]
    %vm1277 = vcmask 1046533
    %v1278 = vsel %vm1277, %v1276, %v1273
    %s1279 = scalar_lea.vmem %s0, 532
    %v1280 = vld [vmem:[%s1279] sm:$0x80]
    %vm1281 = vcmask 1047559
    %v1282 = vsel %vm1281, %v1280, %v1278
    %1283 = vrot.lane.b32.xlu0 %v1282, 38
    %v1284 = vpop.permute.xlu0 %1283
    %vm1285 = vcmask 326960
    %1286 = vst.msk [vmem:[#allocation0] sm:$0x3] %vm1285, %v1284
    %s1287 = scalar_lea.vmem [#allocation0], 6
    %1288 = vst.msk [vmem:[%s1287] sm:$0xc] %vm1285, %v1284
    %s1289 = scalar_lea.vmem [#allocation0], 12
    %1290 = vst.msk [vmem:[%s1289] sm:$0x30] %vm1285, %v1284
    %s1291 = scalar_lea.vmem [#allocation0], 18
    %1292 = vst.msk [vmem:[%s1291] sm:$0xc0] %vm1285, %v1284
    %s1293 = scalar_lea.vmem %s0, 18
    %v1294 = vld [vmem:[%s1293] sm:$0x1]
    %s1295 = scalar_lea.vmem %s0, 514
    %s1296 = smov 6
    %v1297 = vld [vmem:[%s1295] ss:$-208 sm:%s1296]
    %vm1298 = vcmask 1042433
    %v1299 = vsel %vm1298, %v1297, %v1294
    %s1300 = scalar_lea.vmem %s0, 1022
    %s1301 = smov 24
    %v1302 = vld [vmem:[%s1300] ss:$-212 sm:%s1301]
    %vm1303 = vcmask 1044483
    %v1304 = vsel %vm1303, %v1302, %v1299
    %s1305 = scalar_lea.vmem %s0, 1522
    %s1306 = smov 96
    %v1307 = vld [vmem:[%s1305] ss:$-212 sm:%s1306]
    %vm1308 = vcmask 1046533
    %v1309 = vsel %vm1308, %v1307, %v1304
    %s1310 = scalar_lea.vmem %s0, 531
    %v1311 = vld [vmem:[%s1310] sm:$0x80]
    %vm1312 = vcmask 1047559
    %v1313 = vsel %vm1312, %v1311, %v1309
    %1314 = vrot.lane.b32.xlu0 %v1313, 36
    %v1315 = vpop.permute.xlu0 %1314
    %vm1316 = vcmask 310560
    %1317 = vst.msk [vmem:[#allocation0] sm:$0x3] %vm1316, %v1315
    %s1318 = scalar_lea.vmem [#allocation0], 6
    %1319 = vst.msk [vmem:[%s1318] sm:$0xc] %vm1316, %v1315
    %s1320 = scalar_lea.vmem [#allocation0], 12
    %1321 = vst.msk [vmem:[%s1320] sm:$0x30] %vm1316, %v1315
    %s1322 = scalar_lea.vmem [#allocation0], 18
    %1323 = vst.msk [vmem:[%s1322] sm:$0xc0] %vm1316, %v1315
    %s1324 = scalar_lea.vmem %s0, 17
    %v1325 = vld [vmem:[%s1324] sm:$0x1]
    %s1326 = scalar_lea.vmem %s0, 513
    %s1327 = smov 6
    %v1328 = vld [vmem:[%s1326] ss:$-208 sm:%s1327]
    %vm1329 = vcmask 1042433
    %v1330 = vsel %vm1329, %v1328, %v1325
    %s1331 = scalar_lea.vmem %s0, 1021
    %s1332 = smov 24
    %v1333 = vld [vmem:[%s1331] ss:$-212 sm:%s1332]
    %vm1334 = vcmask 1044483
    %v1335 = vsel %vm1334, %v1333, %v1330
    %s1336 = scalar_lea.vmem %s0, 1521
    %s1337 = smov 96
    %v1338 = vld [vmem:[%s1336] ss:$-212 sm:%s1337]
    %vm1339 = vcmask 1046533
    %v1340 = vsel %vm1339, %v1338, %v1335
    %s1341 = scalar_lea.vmem %s0, 530
    %v1342 = vld [vmem:[%s1341] sm:$0x80]
    %vm1343 = vcmask 1047559
    %v1344 = vsel %vm1343, %v1342, %v1340
    %1345 = vrot.lane.b32.xlu0 %v1344, 34
    %v1346 = vpop.permute.xlu0 %1345
    %vm1347 = vcmask 294160
    %1348 = vst.msk [vmem:[#allocation0] sm:$0x3] %vm1347, %v1346
    %s1349 = scalar_lea.vmem [#allocation0], 6
    %1350 = vst.msk [vmem:[%s1349] sm:$0xc] %vm1347, %v1346
    %s1351 = scalar_lea.vmem [#allocation0], 12
    %1352 = vst.msk [vmem:[%s1351] sm:$0x30] %vm1347, %v1346
    %s1353 = scalar_lea.vmem [#allocation0], 18
    %1354 = vst.msk [vmem:[%s1353] sm:$0xc0] %vm1347, %v1346
    %s1355 = scalar_lea.vmem %s0, 16
    %v1356 = vld [vmem:[%s1355] sm:$0x1]
    %s1357 = scalar_lea.vmem %s0, 512
    %s1358 = smov 6
    %v1359 = vld [vmem:[%s1357] ss:$-208 sm:%s1358]
    %vm1360 = vcmask 1042433
    %v1361 = vsel %vm1360, %v1359, %v1356
    %s1362 = scalar_lea.vmem %s0, 1020
    %s1363 = smov 24
    %v1364 = vld [vmem:[%s1362] ss:$-212 sm:%s1363]
    %vm1365 = vcmask 1044483
    %v1366 = vsel %vm1365, %v1364, %v1361
    %s1367 = scalar_lea.vmem %s0, 1520
    %s1368 = smov 96
    %v1369 = vld [vmem:[%s1367] ss:$-212 sm:%s1368]
    %vm1370 = vcmask 1046533
    %v1371 = vsel %vm1370, %v1369, %v1366
    %s1372 = scalar_lea.vmem %s0, 529
    %v1373 = vld [vmem:[%s1372] sm:$0x80]
    %vm1374 = vcmask 1047559
    %v1375 = vsel %vm1374, %v1373, %v1371
    %1376 = vrot.lane.b32.xlu0 %v1375, 32
    %v1377 = vpop.permute.xlu0 %1376
    %vm1378 = vcmask 277760
    %1379 = vst.msk [vmem:[#allocation0] sm:$0x3] %vm1378, %v1377
    %s1380 = scalar_lea.vmem [#allocation0], 6
    %1381 = vst.msk [vmem:[%s1380] sm:$0xc] %vm1378, %v1377
    %s1382 = scalar_lea.vmem [#allocation0], 12
    %1383 = vst.msk [vmem:[%s1382] sm:$0x30] %vm1378, %v1377
    %s1384 = scalar_lea.vmem [#allocation0], 18
    %1385 = vst.msk [vmem:[%s1384] sm:$0xc0] %vm1378, %v1377
    %s1386 = scalar_lea.vmem %s0, 15
    %v1387 = vld [vmem:[%s1386] sm:$0x1]
    %s1388 = scalar_lea.vmem %s0, 515
    %s1389 = smov 6
    %v1390 = vld [vmem:[%s1388] ss:$-212 sm:%s1389]
    %vm1391 = vcmask 1042433
    %v1392 = vsel %vm1391, %v1390, %v1387
    %s1393 = scalar_lea.vmem %s0, 1003
    %s1394 = smov 24
    %v1395 = vld [vmem:[%s1393] ss:$-208 sm:%s1394]
    %vm1396 = vcmask 1044483
    %v1397 = vsel %vm1396, %v1395, %v1392
    %s1398 = scalar_lea.vmem %s0, 1519
    %s1399 = smov 96
    %v1400 = vld [vmem:[%s1398] ss:$-212 sm:%s1399]
    %vm1401 = vcmask 1046533
    %v1402 = vsel %vm1401, %v1400, %v1397
    %s1403 = scalar_lea.vmem %s0, 528
    %v1404 = vld [vmem:[%s1403] sm:$0x80]
    %vm1405 = vcmask 1047559
    %v1406 = vsel %vm1405, %v1404, %v1402
    %1407 = vrot.lane.b32.xlu0 %v1406, 30
    %v1408 = vpop.permute.xlu0 %1407
    %vm1409 = vcmask 261360
    %1410 = vst.msk [vmem:[#allocation0] sm:$0x3] %vm1409, %v1408
    %s1411 = scalar_lea.vmem [#allocation0], 6
    %1412 = vst.msk [vmem:[%s1411] sm:$0xc] %vm1409, %v1408
    %s1413 = scalar_lea.vmem [#allocation0], 12
    %1414 = vst.msk [vmem:[%s1413] sm:$0x30] %vm1409, %v1408
    %s1415 = scalar_lea.vmem [#allocation0], 18
    %1416 = vst.msk [vmem:[%s1415] sm:$0xc0] %vm1409, %v1408
    %s1417 = scalar_lea.vmem %s0, 14
    %v1418 = vld [vmem:[%s1417] sm:$0x1]
    %s1419 = scalar_lea.vmem %s0, 514
    %s1420 = smov 6
    %v1421 = vld [vmem:[%s1419] ss:$-212 sm:%s1420]
    %vm1422 = vcmask 1042433
    %v1423 = vsel %vm1422, %v1421, %v1418
    %s1424 = scalar_lea.vmem %s0, 1002
    %s1425 = smov 24
    %v1426 = vld [vmem:[%s1424] ss:$-208 sm:%s1425]
    %vm1427 = vcmask 1044483
    %v1428 = vsel %vm1427, %v1426, %v1423
    %s1429 = scalar_lea.vmem %s0, 1518
    %s1430 = smov 96
    %v1431 = vld [vmem:[%s1429] ss:$-212 sm:%s1430]
    %vm1432 = vcmask 1046533
    %v1433 = vsel %vm1432, %v1431, %v1428
    %s1434 = scalar_lea.vmem %s0, 527
    %v1435 = vld [vmem:[%s1434] sm:$0x80]
    %vm1436 = vcmask 1047559
    %v1437 = vsel %vm1436, %v1435, %v1433
    %1438 = vrot.lane.b32.xlu0 %v1437, 28
    %v1439 = vpop.permute.xlu0 %1438
    %vm1440 = vcmask 244960
    %1441 = vst.msk [vmem:[#allocation0] sm:$0x3] %vm1440, %v1439
    %s1442 = scalar_lea.vmem [#allocation0], 6
    %1443 = vst.msk [vmem:[%s1442] sm:$0xc] %vm1440, %v1439
    %s1444 = scalar_lea.vmem [#allocation0], 12
    %1445 = vst.msk [vmem:[%s1444] sm:$0x30] %vm1440, %v1439
    %s1446 = scalar_lea.vmem [#allocation0], 18
    %1447 = vst.msk [vmem:[%s1446] sm:$0xc0] %vm1440, %v1439
    %s1448 = scalar_lea.vmem %s0, 13
    %v1449 = vld [vmem:[%s1448] sm:$0x1]
    %s1450 = scalar_lea.vmem %s0, 513
    %s1451 = smov 6
    %v1452 = vld [vmem:[%s1450] ss:$-212 sm:%s1451]
    %vm1453 = vcmask 1042433
    %v1454 = vsel %vm1453, %v1452, %v1449
    %s1455 = scalar_lea.vmem %s0, 1001
    %s1456 = smov 24
    %v1457 = vld [vmem:[%s1455] ss:$-208 sm:%s1456]
    %vm1458 = vcmask 1044483
    %v1459 = vsel %vm1458, %v1457, %v1454
    %s1460 = scalar_lea.vmem %s0, 1517
    %s1461 = smov 96
    %v1462 = vld [vmem:[%s1460] ss:$-212 sm:%s1461]
    %vm1463 = vcmask 1046533
    %v1464 = vsel %vm1463, %v1462, %v1459
    %s1465 = scalar_lea.vmem %s0, 526
    %v1466 = vld [vmem:[%s1465] sm:$0x80]
    %vm1467 = vcmask 1047559
    %v1468 = vsel %vm1467, %v1466, %v1464
    %1469 = vrot.lane.b32.xlu0 %v1468, 26
    %v1470 = vpop.permute.xlu0 %1469
    %vm1471 = vcmask 228560
    %1472 = vst.msk [vmem:[#allocation0] sm:$0x3] %vm1471, %v1470
    %s1473 = scalar_lea.vmem [#allocation0], 6
    %1474 = vst.msk [vmem:[%s1473] sm:$0xc] %vm1471, %v1470
    %s1475 = scalar_lea.vmem [#allocation0], 12
    %1476 = vst.msk [vmem:[%s1475] sm:$0x30] %vm1471, %v1470
    %s1477 = scalar_lea.vmem [#allocation0], 18
    %1478 = vst.msk [vmem:[%s1477] sm:$0xc0] %vm1471, %v1470
    %s1479 = scalar_lea.vmem %s0, 12
    %v1480 = vld [vmem:[%s1479] sm:$0x1]
    %s1481 = scalar_lea.vmem %s0, 512
    %s1482 = smov 6
    %v1483 = vld [vmem:[%s1481] ss:$-212 sm:%s1482]
    %vm1484 = vcmask 1042433
    %v1485 = vsel %vm1484, %v1483, %v1480
    %s1486 = scalar_lea.vmem %s0, 1000
    %s1487 = smov 24
    %v1488 = vld [vmem:[%s1486] ss:$-208 sm:%s1487]
    %vm1489 = vcmask 1044483
    %v1490 = vsel %vm1489, %v1488, %v1485
    %s1491 = scalar_lea.vmem %s0, 1516
    %s1492 = smov 96
    %v1493 = vld [vmem:[%s1491] ss:$-212 sm:%s1492]
    %vm1494 = vcmask 1046533
    %v1495 = vsel %vm1494, %v1493, %v1490
    %s1496 = scalar_lea.vmem %s0, 525
    %v1497 = vld [vmem:[%s1496] sm:$0x80]
    %vm1498 = vcmask 1047559
    %v1499 = vsel %vm1498, %v1497, %v1495
    %1500 = vrot.lane.b32.xlu0 %v1499, 24
    %v1501 = vpop.permute.xlu0 %1500
    %vm1502 = vcmask 212160
    %1503 = vst.msk [vmem:[#allocation0] sm:$0x3] %vm1502, %v1501
    %s1504 = scalar_lea.vmem [#allocation0], 6
    %1505 = vst.msk [vmem:[%s1504] sm:$0xc] %vm1502, %v1501
    %s1506 = scalar_lea.vmem [#allocation0], 12
    %1507 = vst.msk [vmem:[%s1506] sm:$0x30] %vm1502, %v1501
    %s1508 = scalar_lea.vmem [#allocation0], 18
    %1509 = vst.msk [vmem:[%s1508] sm:$0xc0] %vm1502, %v1501
    %s1510 = scalar_lea.vmem %s0, 11
    %v1511 = vld [vmem:[%s1510] sm:$0x1]
    %s1512 = scalar_lea.vmem %s0, 511
    %s1513 = smov 6
    %v1514 = vld [vmem:[%s1512] ss:$-212 sm:%s1513]
    %vm1515 = vcmask 1042433
    %v1516 = vsel %vm1515, %v1514, %v1511
    %s1517 = scalar_lea.vmem %s0, 1011
    %s1518 = smov 24
    %v1519 = vld [vmem:[%s1517] ss:$-212 sm:%s1518]
    %vm1520 = vcmask 1044483
    %v1521 = vsel %vm1520, %v1519, %v1516
    %s1522 = scalar_lea.vmem %s0, 1491
    %s1523 = smov 96
    %v1524 = vld [vmem:[%s1522] ss:$-208 sm:%s1523]
    %vm1525 = vcmask 1046533
    %v1526 = vsel %vm1525, %v1524, %v1521
    %s1527 = scalar_lea.vmem %s0, 524
    %v1528 = vld [vmem:[%s1527] sm:$0x80]
    %vm1529 = vcmask 1047559
    %v1530 = vsel %vm1529, %v1528, %v1526
    %1531 = vrot.lane.b32.xlu0 %v1530, 22
    %v1532 = vpop.permute.xlu0 %1531
    %vm1533 = vcmask 195760
    %1534 = vst.msk [vmem:[#allocation0] sm:$0x3] %vm1533, %v1532
    %s1535 = scalar_lea.vmem [#allocation0], 6
    %1536 = vst.msk [vmem:[%s1535] sm:$0xc] %vm1533, %v1532
    %s1537 = scalar_lea.vmem [#allocation0], 12
    %1538 = vst.msk [vmem:[%s1537] sm:$0x30] %vm1533, %v1532
    %s1539 = scalar_lea.vmem [#allocation0], 18
    %1540 = vst.msk [vmem:[%s1539] sm:$0xc0] %vm1533, %v1532
    %s1541 = scalar_lea.vmem %s0, 10
    %v1542 = vld [vmem:[%s1541] sm:$0x1]
    %s1543 = scalar_lea.vmem %s0, 510
    %s1544 = smov 6
    %v1545 = vld [vmem:[%s1543] ss:$-212 sm:%s1544]
    %vm1546 = vcmask 1042433
    %v1547 = vsel %vm1546, %v1545, %v1542
    %s1548 = scalar_lea.vmem %s0, 1010
    %s1549 = smov 24
    %v1550 = vld [vmem:[%s1548] ss:$-212 sm:%s1549]
    %vm1551 = vcmask 1044483
    %v1552 = vsel %vm1551, %v1550, %v1547
    %s1553 = scalar_lea.vmem %s0, 1490
    %s1554 = smov 96
    %v1555 = vld [vmem:[%s1553] ss:$-208 sm:%s1554]
    %vm1556 = vcmask 1046533
    %v1557 = vsel %vm1556, %v1555, %v1552
    %s1558 = scalar_lea.vmem %s0, 523
    %v1559 = vld [vmem:[%s1558] sm:$0x80]
    %vm1560 = vcmask 1047559
    %v1561 = vsel %vm1560, %v1559, %v1557
    %1562 = vrot.lane.b32.xlu0 %v1561, 20
    %v1563 = vpop.permute.xlu0 %1562
    %vm1564 = vcmask 179360
    %1565 = vst.msk [vmem:[#allocation0] sm:$0x3] %vm1564, %v1563
    %s1566 = scalar_lea.vmem [#allocation0], 6
    %1567 = vst.msk [vmem:[%s1566] sm:$0xc] %vm1564, %v1563
    %s1568 = scalar_lea.vmem [#allocation0], 12
    %1569 = vst.msk [vmem:[%s1568] sm:$0x30] %vm1564, %v1563
    %s1570 = scalar_lea.vmem [#allocation0], 18
    %1571 = vst.msk [vmem:[%s1570] sm:$0xc0] %vm1564, %v1563
    %s1572 = scalar_lea.vmem %s0, 9
    %v1573 = vld [vmem:[%s1572] sm:$0x1]
    %s1574 = scalar_lea.vmem %s0, 509
    %s1575 = smov 6
    %v1576 = vld [vmem:[%s1574] ss:$-212 sm:%s1575]
    %vm1577 = vcmask 1042433
    %v1578 = vsel %vm1577, %v1576, %v1573
    %s1579 = scalar_lea.vmem %s0, 1009
    %s1580 = smov 24
    %v1581 = vld [vmem:[%s1579] ss:$-212 sm:%s1580]
    %vm1582 = vcmask 1044483
    %v1583 = vsel %vm1582, %v1581, %v1578
    %s1584 = scalar_lea.vmem %s0, 1489
    %s1585 = smov 96
    %v1586 = vld [vmem:[%s1584] ss:$-208 sm:%s1585]
    %vm1587 = vcmask 1046533
    %v1588 = vsel %vm1587, %v1586, %v1583
    %s1589 = scalar_lea.vmem %s0, 522
    %v1590 = vld [vmem:[%s1589] sm:$0x80]
    %vm1591 = vcmask 1047559
    %v1592 = vsel %vm1591, %v1590, %v1588
    %1593 = vrot.lane.b32.xlu0 %v1592, 18
    %v1594 = vpop.permute.xlu0 %1593
    %vm1595 = vcmask 162960
    %1596 = vst.msk [vmem:[#allocation0] sm:$0x3] %vm1595, %v1594
    %s1597 = scalar_lea.vmem [#allocation0], 6
    %1598 = vst.msk [vmem:[%s1597] sm:$0xc] %vm1595, %v1594
    %s1599 = scalar_lea.vmem [#allocation0], 12
    %1600 = vst.msk [vmem:[%s1599] sm:$0x30] %vm1595, %v1594
    %s1601 = scalar_lea.vmem [#allocation0], 18
    %1602 = vst.msk [vmem:[%s1601] sm:$0xc0] %vm1595, %v1594
    %s1603 = scalar_lea.vmem %s0, 8
    %v1604 = vld [vmem:[%s1603] sm:$0x1]
    %s1605 = scalar_lea.vmem %s0, 508
    %s1606 = smov 6
    %v1607 = vld [vmem:[%s1605] ss:$-212 sm:%s1606]
    %vm1608 = vcmask 1042433
    %v1609 = vsel %vm1608, %v1607, %v1604
    %s1610 = scalar_lea.vmem %s0, 1008
    %s1611 = smov 24
    %v1612 = vld [vmem:[%s1610] ss:$-212 sm:%s1611]
    %vm1613 = vcmask 1044483
    %v1614 = vsel %vm1613, %v1612, %v1609
    %s1615 = scalar_lea.vmem %s0, 1488
    %s1616 = smov 96
    %v1617 = vld [vmem:[%s1615] ss:$-208 sm:%s1616]
    %vm1618 = vcmask 1046533
    %v1619 = vsel %vm1618, %v1617, %v1614
    %s1620 = scalar_lea.vmem %s0, 521
    %v1621 = vld [vmem:[%s1620] sm:$0x80]
    %vm1622 = vcmask 1047559
    %v1623 = vsel %vm1622, %v1621, %v1619
    %1624 = vrot.lane.b32.xlu0 %v1623, 16
    %v1625 = vpop.permute.xlu0 %1624
    %vm1626 = vcmask 146560
    %1627 = vst.msk [vmem:[#allocation0] sm:$0x3] %vm1626, %v1625
    %s1628 = scalar_lea.vmem [#allocation0], 6
    %1629 = vst.msk [vmem:[%s1628] sm:$0xc] %vm1626, %v1625
    %s1630 = scalar_lea.vmem [#allocation0], 12
    %1631 = vst.msk [vmem:[%s1630] sm:$0x30] %vm1626, %v1625
    %s1632 = scalar_lea.vmem [#allocation0], 18
    %1633 = vst.msk [vmem:[%s1632] sm:$0xc0] %vm1626, %v1625
    %s1634 = scalar_lea.vmem %s0, 7
    %v1635 = vld [vmem:[%s1634] sm:$0x1]
    %s1636 = scalar_lea.vmem %s0, 507
    %s1637 = smov 6
    %v1638 = vld [vmem:[%s1636] ss:$-212 sm:%s1637]
    %vm1639 = vcmask 1042433
    %v1640 = vsel %vm1639, %v1638, %v1635
    %s1641 = scalar_lea.vmem %s0, 1007
    %s1642 = smov 24
    %v1643 = vld [vmem:[%s1641] ss:$-212 sm:%s1642]
    %vm1644 = vcmask 1044483
    %v1645 = vsel %vm1644, %v1643, %v1640
    %s1646 = scalar_lea.vmem %s0, 1507
    %s1647 = smov 96
    %v1648 = vld [vmem:[%s1646] ss:$-212 sm:%s1647]
    %vm1649 = vcmask 1046533
    %v1650 = vsel %vm1649, %v1648, %v1645
    %s1651 = scalar_lea.vmem %s0, 516
    %v1652 = vld [vmem:[%s1651] sm:$0x80]
    %vm1653 = vcmask 1047559
    %v1654 = vsel %vm1653, %v1652, %v1650
    %1655 = vrot.lane.b32.xlu0 %v1654, 14
    %v1656 = vpop.permute.xlu0 %1655
    %vm1657 = vcmask 130160
    %1658 = vst.msk [vmem:[#allocation0] sm:$0x3] %vm1657, %v1656
    %s1659 = scalar_lea.vmem [#allocation0], 6
    %1660 = vst.msk [vmem:[%s1659] sm:$0xc] %vm1657, %v1656
    %s1661 = scalar_lea.vmem [#allocation0], 12
    %1662 = vst.msk [vmem:[%s1661] sm:$0x30] %vm1657, %v1656
    %s1663 = scalar_lea.vmem [#allocation0], 18
    %1664 = vst.msk [vmem:[%s1663] sm:$0xc0] %vm1657, %v1656
    %s1665 = scalar_lea.vmem %s0, 6
    %v1666 = vld [vmem:[%s1665] sm:$0x1]
    %s1667 = scalar_lea.vmem %s0, 506
    %s1668 = smov 6
    %v1669 = vld [vmem:[%s1667] ss:$-212 sm:%s1668]
    %vm1670 = vcmask 1042433
    %v1671 = vsel %vm1670, %v1669, %v1666
    %s1672 = scalar_lea.vmem %s0, 1006
    %s1673 = smov 24
    %v1674 = vld [vmem:[%s1672] ss:$-212 sm:%s1673]
    %vm1675 = vcmask 1044483
    %v1676 = vsel %vm1675, %v1674, %v1671
    %s1677 = scalar_lea.vmem %s0, 1506
    %s1678 = smov 96
    %v1679 = vld [vmem:[%s1677] ss:$-212 sm:%s1678]
    %vm1680 = vcmask 1046533
    %v1681 = vsel %vm1680, %v1679, %v1676
    %s1682 = scalar_lea.vmem %s0, 515
    %v1683 = vld [vmem:[%s1682] sm:$0x80]
    %vm1684 = vcmask 1047559
    %v1685 = vsel %vm1684, %v1683, %v1681
    %1686 = vrot.lane.b32.xlu0 %v1685, 12
    %v1687 = vpop.permute.xlu0 %1686
    %vm1688 = vcmask 113760
    %1689 = vst.msk [vmem:[#allocation0] sm:$0x3] %vm1688, %v1687
    %s1690 = scalar_lea.vmem [#allocation0], 6
    %1691 = vst.msk [vmem:[%s1690] sm:$0xc] %vm1688, %v1687
    %s1692 = scalar_lea.vmem [#allocation0], 12
    %1693 = vst.msk [vmem:[%s1692] sm:$0x30] %vm1688, %v1687
    %s1694 = scalar_lea.vmem [#allocation0], 18
    %1695 = vst.msk [vmem:[%s1694] sm:$0xc0] %vm1688, %v1687
    %s1696 = scalar_lea.vmem %s0, 5
    %v1697 = vld [vmem:[%s1696] sm:$0x1]
    %s1698 = scalar_lea.vmem %s0, 505
    %s1699 = smov 6
    %v1700 = vld [vmem:[%s1698] ss:$-212 sm:%s1699]
    %vm1701 = vcmask 1042433
    %v1702 = vsel %vm1701, %v1700, %v1697
    %s1703 = scalar_lea.vmem %s0, 1005
    %s1704 = smov 24
    %v1705 = vld [vmem:[%s1703] ss:$-212 sm:%s1704]
    %vm1706 = vcmask 1044483
    %v1707 = vsel %vm1706, %v1705, %v1702
    %s1708 = scalar_lea.vmem %s0, 1505
    %s1709 = smov 96
    %v1710 = vld [vmem:[%s1708] ss:$-212 sm:%s1709]
    %vm1711 = vcmask 1046533
    %v1712 = vsel %vm1711, %v1710, %v1707
    %s1713 = scalar_lea.vmem %s0, 514
    %v1714 = vld [vmem:[%s1713] sm:$0x80]
    %vm1715 = vcmask 1047559
    %v1716 = vsel %vm1715, %v1714, %v1712
    %1717 = vrot.lane.b32.xlu0 %v1716, 10
    %v1718 = vpop.permute.xlu0 %1717
    %vm1719 = vcmask 97360
    %1720 = vst.msk [vmem:[#allocation0] sm:$0x3] %vm1719, %v1718
    %s1721 = scalar_lea.vmem [#allocation0], 6
    %1722 = vst.msk [vmem:[%s1721] sm:$0xc] %vm1719, %v1718
    %s1723 = scalar_lea.vmem [#allocation0], 12
    %1724 = vst.msk [vmem:[%s1723] sm:$0x30] %vm1719, %v1718
    %s1725 = scalar_lea.vmem [#allocation0], 18
    %1726 = vst.msk [vmem:[%s1725] sm:$0xc0] %vm1719, %v1718
    %s1727 = scalar_lea.vmem %s0, 4
    %v1728 = vld [vmem:[%s1727] sm:$0x1]
    %s1729 = scalar_lea.vmem %s0, 504
    %s1730 = smov 6
    %v1731 = vld [vmem:[%s1729] ss:$-212 sm:%s1730]
    %vm1732 = vcmask 1042433
    %v1733 = vsel %vm1732, %v1731, %v1728
    %s1734 = scalar_lea.vmem %s0, 1004
    %s1735 = smov 24
    %v1736 = vld [vmem:[%s1734] ss:$-212 sm:%s1735]
    %vm1737 = vcmask 1044483
    %v1738 = vsel %vm1737, %v1736, %v1733
    %s1739 = scalar_lea.vmem %s0, 1504
    %s1740 = smov 96
    %v1741 = vld [vmem:[%s1739] ss:$-212 sm:%s1740]
    %vm1742 = vcmask 1046533
    %v1743 = vsel %vm1742, %v1741, %v1738
    %s1744 = scalar_lea.vmem %s0, 513
    %v1745 = vld [vmem:[%s1744] sm:$0x80]
    %vm1746 = vcmask 1047559
    %v1747 = vsel %vm1746, %v1745, %v1743
    %1748 = vrot.lane.b32.xlu0 %v1747, 8
    %v1749 = vpop.permute.xlu0 %1748
    %vm1750 = vcmask 80960
    %1751 = vst.msk [vmem:[#allocation0] sm:$0x3] %vm1750, %v1749
    %s1752 = scalar_lea.vmem [#allocation0], 6
    %1753 = vst.msk [vmem:[%s1752] sm:$0xc] %vm1750, %v1749
    %s1754 = scalar_lea.vmem [#allocation0], 12
    %1755 = vst.msk [vmem:[%s1754] sm:$0x30] %vm1750, %v1749
    %s1756 = scalar_lea.vmem [#allocation0], 18
    %1757 = vst.msk [vmem:[%s1756] sm:$0xc0] %vm1750, %v1749
    %s1758 = scalar_lea.vmem %s0, 3
    %v1759 = vld [vmem:[%s1758] sm:$0x1]
    %s1760 = scalar_lea.vmem %s0, 503
    %s1761 = smov 6
    %v1762 = vld [vmem:[%s1760] ss:$-212 sm:%s1761]
    %vm1763 = vcmask 1042433
    %v1764 = vsel %vm1763, %v1762, %v1759
    %s1765 = scalar_lea.vmem %s0, 1003
    %s1766 = smov 24
    %v1767 = vld [vmem:[%s1765] ss:$-212 sm:%s1766]
    %vm1768 = vcmask 1044483
    %v1769 = vsel %vm1768, %v1767, %v1764
    %s1770 = scalar_lea.vmem %s0, 1503
    %s1771 = smov 96
    %v1772 = vld [vmem:[%s1770] ss:$-212 sm:%s1771]
    %vm1773 = vcmask 1046533
    %v1774 = vsel %vm1773, %v1772, %v1769
    %s1775 = scalar_lea.vmem %s0, 512
    %v1776 = vld [vmem:[%s1775] sm:$0x80]
    %vm1777 = vcmask 1047559
    %v1778 = vsel %vm1777, %v1776, %v1774
    %1779 = vrot.lane.b32.xlu0 %v1778, 6
    %v1780 = vpop.permute.xlu0 %1779
    %vm1781 = vcmask 64560
    %1782 = vst.msk [vmem:[#allocation0] sm:$0x3] %vm1781, %v1780
    %s1783 = scalar_lea.vmem [#allocation0], 6
    %1784 = vst.msk [vmem:[%s1783] sm:$0xc] %vm1781, %v1780
    %s1785 = scalar_lea.vmem [#allocation0], 12
    %1786 = vst.msk [vmem:[%s1785] sm:$0x30] %vm1781, %v1780
    %s1787 = scalar_lea.vmem [#allocation0], 18
    %1788 = vst.msk [vmem:[%s1787] sm:$0xc0] %vm1781, %v1780
    %s1789 = scalar_lea.vmem %s0, 2
    %v1790 = vld [vmem:[%s1789] sm:$0x1]
    %s1791 = scalar_lea.vmem %s0, 502
    %s1792 = smov 6
    %v1793 = vld [vmem:[%s1791] ss:$-212 sm:%s1792]
    %vm1794 = vcmask 1042433
    %v1795 = vsel %vm1794, %v1793, %v1790
    %s1796 = scalar_lea.vmem %s0, 1002
    %s1797 = smov 24
    %v1798 = vld [vmem:[%s1796] ss:$-212 sm:%s1797]
    %vm1799 = vcmask 1044483
    %v1800 = vsel %vm1799, %v1798, %v1795
    %s1801 = scalar_lea.vmem %s0, 1502
    %s1802 = smov 96
    %v1803 = vld [vmem:[%s1801] ss:$-212 sm:%s1802]
    %vm1804 = vcmask 1046533
    %v1805 = vsel %vm1804, %v1803, %v1800
    %s1806 = scalar_lea.vmem %s0, 511
    %v1807 = vld [vmem:[%s1806] sm:$0x80]
    %vm1808 = vcmask 1047559
    %v1809 = vsel %vm1808, %v1807, %v1805
    %1810 = vrot.lane.b32.xlu0 %v1809, 4
    %v1811 = vpop.permute.xlu0 %1810
    %vm1812 = vcmask 48160
    %1813 = vst.msk [vmem:[#allocation0] sm:$0x3] %vm1812, %v1811
    %s1814 = scalar_lea.vmem [#allocation0], 6
    %1815 = vst.msk [vmem:[%s1814] sm:$0xc] %vm1812, %v1811
    %s1816 = scalar_lea.vmem [#allocation0], 12
    %1817 = vst.msk [vmem:[%s1816] sm:$0x30] %vm1812, %v1811
    %s1818 = scalar_lea.vmem [#allocation0], 18
    %1819 = vst.msk [vmem:[%s1818] sm:$0xc0] %vm1812, %v1811
    %s1820 = scalar_lea.vmem %s0, 1
    %v1821 = vld [vmem:[%s1820] sm:$0x1]
    %s1822 = scalar_lea.vmem %s0, 501
    %s1823 = smov 6
    %v1824 = vld [vmem:[%s1822] ss:$-212 sm:%s1823]
    %vm1825 = vcmask 1042433
    %v1826 = vsel %vm1825, %v1824, %v1821
    %s1827 = scalar_lea.vmem %s0, 1001
    %s1828 = smov 24
    %v1829 = vld [vmem:[%s1827] ss:$-212 sm:%s1828]
    %vm1830 = vcmask 1044483
    %v1831 = vsel %vm1830, %v1829, %v1826
    %s1832 = scalar_lea.vmem %s0, 1501
    %s1833 = smov 96
    %v1834 = vld [vmem:[%s1832] ss:$-212 sm:%s1833]
    %vm1835 = vcmask 1046533
    %v1836 = vsel %vm1835, %v1834, %v1831
    %s1837 = scalar_lea.vmem %s0, 510
    %v1838 = vld [vmem:[%s1837] sm:$0x80]
    %vm1839 = vcmask 1047559
    %v1840 = vsel %vm1839, %v1838, %v1836
    %1841 = vrot.lane.b32.xlu0 %v1840, 2
    %v1842 = vpop.permute.xlu0 %1841
    %vm1843 = vcmask 31760
    %1844 = vst.msk [vmem:[#allocation0] sm:$0x3] %vm1843, %v1842
    %s1845 = scalar_lea.vmem [#allocation0], 6
    %1846 = vst.msk [vmem:[%s1845] sm:$0xc] %vm1843, %v1842
    %s1847 = scalar_lea.vmem [#allocation0], 12
    %1848 = vst.msk [vmem:[%s1847] sm:$0x30] %vm1843, %v1842
    %s1849 = scalar_lea.vmem [#allocation0], 18
    %1850 = vst.msk [vmem:[%s1849] sm:$0xc0] %vm1843, %v1842
    %s1852 = sshll.u32 1, 2
    %s1853 = ssub.s32 %s1852, 1
    %v1855 = vld [vmem:[#allocation0] sm:%s1853]
    %s1856 = sshll.u32 1, 2
    %s1857 = ssub.s32 %s1856, 1
    %1858 = vst [vmem:[%s1] sm:%s1857] %v1855
    %s1859 = scalar_lea.vmem [#allocation0], 8
    %v1860 = vld [vmem:[%s1859] sm:%s1853]
    %s1861 = sshll.u32 1, 2
    %s1862 = ssub.s32 %s1861, 1
    %s1863 = scalar_lea.vmem %s1, 2
    %1864 = vst [vmem:[%s1863] sm:%s1862] %v1860
    %s1865 = scalar_lea.vmem [#allocation0], 16
    %v1866 = vld [vmem:[%s1865] sm:%s1853]
    %s1867 = sshll.u32 1, 2
    %s1868 = ssub.s32 %s1867, 1
    %s1869 = smul.addr 2, 2
    %s1870 = scalar_lea.vmem %s1, %s1869
    %1871 = vst [vmem:[%s1870] sm:%s1868] %v1866
    %s1872 = scalar_lea.vmem [#allocation0], 24
    %v1873 = vld [vmem:[%s1872] sm:%s1853]
    %s1874 = sshll.u32 1, 2
    %s1875 = ssub.s32 %s1874, 1
    %s1876 = smul.addr 2, 3
    %s1877 = scalar_lea.vmem %s1, %s1876
    %1878 = vst [vmem:[%s1877] sm:%s1875] %v1873

// kernel: forward.1
$region0: #{forward.1}
  #allocation0 [shape = 'u32[]', space=smem, size = 0x4, offset = 0x4, fixed_abs, tag = 'smem constant byte address 0x4 - core index']
  #allocation1 [shape = 'u32[144,128]{1,0:T(1,128)}', space=vmem, size = 0x12000, scoped, tag = 'internal scratch']
  %s0 = inlined_call_operand.vmem [shape: f32[24,4], index: 0, kind: input, shape index: {}]
  %s1 = inlined_call_operand.vmem [shape: f32[2,558], index: 1, kind: input, shape index: {}]
  %s2 = inlined_call_operand.vmem [shape: f32[88,256], index: 2, kind: input, shape index: {}]
  %s3 = inlined_call_operand.vmem [shape: f32[368,552], index: 3, kind: input, shape index: {}]
  %s4 = inlined_call_operand.vmem [shape: f32[2,480], index: 4, kind: output, shape index: {0}]
  %s5 = inlined_call_operand.hbm [shape: f32[1,1], index: 5, kind: output, shape index: {1}]
  %6 = xla_tuple %s4, %s5
  %s7 = sld [smem:[#allocation0]]
  $region34: #{forward.1} parent=0
    _
  %s9 = ssub.s32 1, %s7
  %s10 = scalar_select 0, %s9, %s7
  $region1: #{forward.1} parent=0
    #allocation2 [shape = 'u8[512]{0}', space=vmem, size = 0x400, scoped, tag = 'output window, operand 1, single buffered']
    #allocation3 [shape = 's32[1]{0}', space=sflag, size = 0x4, scoped, tag = 'scoped memory for forward.1']
    %11 = vsyncpa [#allocation3], 0
    // Predicated region
    $region2: #{forward.1} parent=1 // pred_check
      _
    $region3: #{forward.1} parent=1 // pred_check_branch
      %13 = sbr.rel (0) target = $region5
    $region4: #{forward.1} parent=1 // pred_region
      _
    $region5: #{forward.1} parent=1 // pred_fallthru
      _
    // Predicated region
    $region6: #{forward.1} parent=1 // pred_check
      _
    $region7: #{forward.1} parent=1 // pred_check_branch
      %15 = sbr.rel (0) target = $region9
    $region8: #{forward.1} parent=1 // pred_region
      _
    $region9: #{forward.1} parent=1 // pred_fallthru
      _
    // Predicated region
    $region10: #{forward.1} parent=1 // pred_check
      _
    $region11: #{forward.1} parent=1 // pred_check_branch
      %17 = sbr.rel (0) target = $region13
    $region12: #{forward.1} parent=1 // pred_region
      _
    $region13: #{forward.1} parent=1 // pred_fallthru
      _
    // Predicated region
    $region14: #{forward.1} parent=1 // pred_check
      _
    $region15: #{forward.1} parent=1 // pred_check_branch
      %19 = sbr.rel (0) target = $region17
    $region16: #{forward.1} parent=1 // pred_region
      _
    $region17: #{forward.1} parent=1 // pred_fallthru
      _
    %v20 = vld [vmem:[%s0] sm:$0xff]
    %v21 = vld [vmem:[%s0 + $0x8] sm:$0xff]
    %v22 = vld [vmem:[%s0 + $0x10] sm:$0xff]
    %v23 = vld [vmem:[%s1] sm:$0xff]
    %v24 = vld [vmem:[%s1 + $0x8] sm:$0x3]
    %v25 = vld [vmem:[%s2] sm:$0x3f]
    %v26 = vld [vmem:[%s2 + $0x10] ss:$0 sm:$0xff]
    %s27 = scalar_lea.vmem %s2, 17
    %v28 = vld [vmem:[%s27] ss:$8 sm:$0x3]
    %v29 = vld [vmem:[%s2 + $0x20] sm:$0xf]
    %v30 = vld [vmem:[%s2 + $0x28] sm:$0xf]
    %v31 = vld [vmem:[%s2 + $0x30] sm:$0xff]
    %v32 = vld [vmem:[%s2 + $0x38] sm:$0xff]
    %v33 = vld [vmem:[%s2 + $0x40] sm:$0xff]
    %v34 = vld [vmem:[%s2 + $0x48] sm:$0xff]
    %v35 = vld [vmem:[%s2 + $0x50] sm:$0xff]
    %v36 = vld [vmem:[%s2 + $0x58] sm:$0xff]
    %v37 = vld [vmem:[%s2 + $0x60] sm:$0xff]
    %v38 = vld [vmem:[%s2 + $0x68] sm:$0xff]
    %v39 = vld [vmem:[%s2 + $0x70] sm:$0xff]
    %v40 = vld [vmem:[%s2 + $0x78] sm:$0xff]
    %v41 = vld [vmem:[%s2 + $0x80] sm:$0xff]
    %v42 = vld [vmem:[%s2 + $0x88] sm:$0xff]
    %v43 = vld [vmem:[%s2 + $0x90] sm:$0xff]
    %v44 = vld [vmem:[%s2 + $0x98] sm:$0xff]
    %v45 = vld [vmem:[%s2 + $0xa0] sm:$0xff]
    %v46 = vld [vmem:[%s2 + $0xa8] sm:$0xff]
    %v49 = vunpack.c.l.s4 1983009808
    %v50 = vunpack.c.0.s8 %v49
    %v51 = vlaneseq
    %v52 = vshrl.u32 %v51, 7
    %v53 = vsub.s32 %v50, %v52
    %v54 = vrot.slane %v24, %v53
    %55 = vrot.lane.b32.xlu0 %v54, 88
    %v56 = vpop.permute.xlu0 %55
    %vm57 = vcmask 48128
    %v58 = vsel %vm57, %v56, 0
    %vm60 = vcmask 1045504
    %v62 = vsel %vm60, %v25, 0
    %64 = vmatprep.subr.mxu0 0.0
    %65 = vmatpush1.msra.mxu0 0.0
    %66 = vmatprep.subr.mxu0 0.0
    %67 = vmatpush1.msra.mxu0 0.0
    %68 = vmatprep.subr.mxu0 0.0
    %69 = vmatpush1.msra.mxu0 0.0
    %70 = vmatprep.subr.mxu0 0.0
    %71 = vmatpush1.msra.mxu0 0.0
    %72 = vmatprep.subr.mxu0 0.0
    %73 = vmatpush1.msra.mxu0 0.0
    %74 = vmatprep.subr.mxu0 0.0
    %75 = vmatpush1.msra.mxu0 0.0
    %76 = vmatprep.subr.mxu0 0.0
    %77 = vmatpush1.msra.mxu0 0.0
    %78 = vmatprep.subr.mxu0 0.0
    %79 = vmatpush1.msra.mxu0 0.0
    %80 = vmatprep.subr.mxu0 0.0
    %81 = vmatpush1.msra.mxu0 0.0
    %82 = vmatprep.subr.mxu0 0.0
    %83 = vmatpush1.msra.mxu0 0.0
    %84 = vmatprep.subr.mxu0 0.0
    %85 = vmatpush1.msra.mxu0 0.0
    %86 = vmatprep.subr.mxu0 0.0
    %87 = vmatpush1.msra.mxu0 0.0
    %88 = vmatprep.subr.mxu0 0.0
    %89 = vmatpush1.msra.mxu0 0.0
    %90 = vmatprep.subr.mxu0 0.0
    %91 = vmatpush1.msra.mxu0 0.0
    %92 = vmatprep.subr.mxu0 0.0
    %93 = vmatpush1.msra.mxu0 0.0
    %94 = vmatprep.subr.mxu0 0.0
    %95 = vmatpush1.msra.mxu0 %v62
    %96 = vmatprep.subr.mxu0 0.0
    %97 = vmatpush2.msra.mxu0 0.0
    %98 = vmatprep.subr.mxu0 0.0
    %99 = vmatpush2.msra.mxu0 0.0
    %100 = vmatprep.subr.mxu0 0.0
    %101 = vmatpush2.msra.mxu0 0.0
    %102 = vmatprep.subr.mxu0 0.0
    %103 = vmatpush2.msra.mxu0 0.0
    %104 = vmatprep.subr.mxu0 0.0
    %105 = vmatpush2.msra.mxu0 0.0
    %106 = vmatprep.subr.mxu0 0.0
    %107 = vmatpush2.msra.mxu0 0.0
    %108 = vmatprep.subr.mxu0 0.0
    %109 = vmatpush2.msra.mxu0 0.0
    %110 = vmatprep.subr.mxu0 0.0
    %111 = vmatpush2.msra.mxu0 0.0
    %112 = vmatprep.subr.mxu0 0.0
    %113 = vmatpush2.msra.mxu0 0.0
    %114 = vmatprep.subr.mxu0 0.0
    %115 = vmatpush2.msra.mxu0 0.0
    %116 = vmatprep.subr.mxu0 0.0
    %117 = vmatpush2.msra.mxu0 0.0
    %118 = vmatprep.subr.mxu0 0.0
    %119 = vmatpush2.msra.mxu0 0.0
    %120 = vmatprep.subr.mxu0 0.0
    %121 = vmatpush2.msra.mxu0 0.0
    %122 = vmatprep.subr.mxu0 0.0
    %123 = vmatpush2.msra.mxu0 0.0
    %124 = vmatprep.subr.mxu0 0.0
    %125 = vmatpush2.msra.mxu0 0.0
    %126 = vmatprep.subr.mxu0 0.0
    %127 = vmatpush2.msra.mxu0 0.0
    %128 = vmatprep.mubr.f32.mxu0 0.0
    %129 = vmatmul.mubr.f32.gmra.mxu0 %v58
    %v130 = vpop.f32.mrf.mxu0
    %v131 = vadd.f32 %v26, %v130
    %v132 = vpop.f32.mrf.mxu0
    %133 = vdwg.mxu0
    %v135 = vlaneseq
    %v136 = vshrl.u32 %v135, 7
    %v137 = vsub.s32 0, %v136
    %v138 = vrot.slane %v28, %v137
    %v139 = vlaneseq
    %v140 = vshrl.u32 %v139, 7
    %v141 = vsub.s32 1, %v140
    %v142 = vrot.slane %v28, %v141
    %vm145 = vcmask 31744
    %v147 = vsel %vm145, %v20, 0
    %v150 = vsel %vm145, %v21, 0
    %v153 = vsel %vm145, %v22, 0
    %vm155 = vcmask 1043456
    %v157 = vsel %vm155, %v29, 0
    %v160 = vsel %vm155, %v30, 0
    %162 = vmatprep.subr.mxu0 0.0
    %163 = vmatpush1.msra.mxu0 0.0
    %164 = vmatprep.subr.mxu0 0.0
    %165 = vmatpush1.msra.mxu0 0.0
    %166 = vmatprep.subr.mxu0 0.0
    %167 = vmatpush1.msra.mxu0 0.0
    %168 = vmatprep.subr.mxu0 0.0
    %169 = vmatpush1.msra.mxu0 0.0
    %170 = vmatprep.subr.mxu0 0.0
    %171 = vmatpush1.msra.mxu0 0.0
    %172 = vmatprep.subr.mxu0 0.0
    %173 = vmatpush1.msra.mxu0 0.0
    %174 = vmatprep.subr.mxu0 0.0
    %175 = vmatpush1.msra.mxu0 0.0
    %176 = vmatprep.subr.mxu0 0.0
    %177 = vmatpush1.msra.mxu0 0.0
    %178 = vmatprep.subr.mxu0 0.0
    %179 = vmatpush1.msra.mxu0 0.0
    %180 = vmatprep.subr.mxu0 0.0
    %181 = vmatpush1.msra.mxu0 0.0
    %182 = vmatprep.subr.mxu0 0.0
    %183 = vmatpush1.msra.mxu0 0.0
    %184 = vmatprep.subr.mxu0 0.0
    %185 = vmatpush1.msra.mxu0 0.0
    %186 = vmatprep.subr.mxu0 0.0
    %187 = vmatpush1.msra.mxu0 0.0
    %188 = vmatprep.subr.mxu0 0.0
    %189 = vmatpush1.msra.mxu0 0.0
    %190 = vmatprep.subr.mxu0 0.0
    %191 = vmatpush1.msra.mxu0 0.0
    %192 = vmatprep.subr.mxu0 %v160
    %193 = vmatpush1.msra.mxu0 %v157
    %194 = vmatprep.subr.mxu0 0.0
    %195 = vmatpush2.msra.mxu0 0.0
    %196 = vmatprep.subr.mxu0 0.0
    %197 = vmatpush2.msra.mxu0 0.0
    %198 = vmatprep.subr.mxu0 0.0
    %199 = vmatpush2.msra.mxu0 0.0
    %200 = vmatprep.subr.mxu0 0.0
    %201 = vmatpush2.msra.mxu0 0.0
    %202 = vmatprep.subr.mxu0 0.0
    %203 = vmatpush2.msra.mxu0 0.0
    %204 = vmatprep.subr.mxu0 0.0
    %205 = vmatpush2.msra.mxu0 0.0
    %206 = vmatprep.subr.mxu0 0.0
    %207 = vmatpush2.msra.mxu0 0.0
    %208 = vmatprep.subr.mxu0 0.0
    %209 = vmatpush2.msra.mxu0 0.0
    %210 = vmatprep.subr.mxu0 0.0
    %211 = vmatpush2.msra.mxu0 0.0
    %212 = vmatprep.subr.mxu0 0.0
    %213 = vmatpush2.msra.mxu0 0.0
    %214 = vmatprep.subr.mxu0 0.0
    %215 = vmatpush2.msra.mxu0 0.0
    %216 = vmatprep.subr.mxu0 0.0
    %217 = vmatpush2.msra.mxu0 0.0
    %218 = vmatprep.subr.mxu0 0.0
    %219 = vmatpush2.msra.mxu0 0.0
    %220 = vmatprep.subr.mxu0 0.0
    %221 = vmatpush2.msra.mxu0 0.0
    %222 = vmatprep.subr.mxu0 0.0
    %223 = vmatpush2.msra.mxu0 0.0
    %224 = vmatprep.subr.mxu0 0.0
    %225 = vmatpush2.msra.mxu0 0.0
    %226 = vmatprep.mubr.f32.mxu0 0.0
    %227 = vmatmul.mubr.f32.gmra.mxu0 %v147
    %v228 = vpop.f32.mrf.mxu0
    %v229 = vadd.f32 %v138, %v228
    %v230 = vpop.f32.mrf.mxu0
    %v231 = vadd.f32 %v142, %v230
    %232 = vmatprep.mubr.f32.mxu0 0.0
    %233 = vmatmul.mubr.f32.gmra.mxu0 %v150
    %v234 = vpop.f32.mrf.mxu0
    %v235 = vadd.f32 %v138, %v234
    %v236 = vpop.f32.mrf.mxu0
    %v237 = vadd.f32 %v142, %v236
    %238 = vmatprep.mubr.f32.mxu0 0.0
    %239 = vmatmul.mubr.f32.gmra.mxu0 %v153
    %v240 = vpop.f32.mrf.mxu0
    %v241 = vadd.f32 %v138, %v240
    %v242 = vpop.f32.mrf.mxu0
    %v243 = vadd.f32 %v142, %v242
    %244 = vdwg.mxu0
    %vm245 = vcmask 523264
    %v247 = vsel %vm245, %v131, 0
    %249 = vmatprep.subr.mxu0 0.0
    %250 = vmatpush1.msra.mxu0 0.0
    %251 = vmatprep.subr.mxu0 0.0
    %252 = vmatpush1.msra.mxu0 0.0
    %253 = vmatprep.subr.mxu0 0.0
    %254 = vmatpush1.msra.mxu0 0.0
    %255 = vmatprep.subr.mxu0 0.0
    %256 = vmatpush1.msra.mxu0 0.0
    %257 = vmatprep.subr.mxu0 0.0
    %258 = vmatpush1.msra.mxu0 0.0
    %259 = vmatprep.subr.mxu0 0.0
    %260 = vmatpush1.msra.mxu0 0.0
    %261 = vmatprep.subr.mxu0 0.0
    %262 = vmatpush1.msra.mxu0 0.0
    %263 = vmatprep.subr.mxu0 0.0
    %264 = vmatpush1.msra.mxu0 0.0
    %265 = vmatprep.subr.mxu0 %v46
    %266 = vmatpush1.msra.mxu0 %v45
    %267 = vmatprep.subr.mxu0 %v44
    %268 = vmatpush1.msra.mxu0 %v43
    %269 = vmatprep.subr.mxu0 %v42
    %270 = vmatpush1.msra.mxu0 %v41
    %271 = vmatprep.subr.mxu0 %v40
    %272 = vmatpush1.msra.mxu0 %v39
    %273 = vmatprep.subr.mxu0 %v38
    %274 = vmatpush1.msra.mxu0 %v37
    %275 = vmatprep.subr.mxu0 %v36
    %276 = vmatpush1.msra.mxu0 %v35
    %277 = vmatprep.subr.mxu0 %v34
    %278 = vmatpush1.msra.mxu0 %v33
    %279 = vmatprep.subr.mxu0 %v32
    %280 = vmatpush1.msra.mxu0 %v31
    %281 = vmatprep.subr.mxu0 0.0
    %282 = vmatpush2.msra.mxu0 0.0
    %283 = vmatprep.subr.mxu0 0.0
    %284 = vmatpush2.msra.mxu0 0.0
    %285 = vmatprep.subr.mxu0 0.0
    %286 = vmatpush2.msra.mxu0 0.0
    %287 = vmatprep.subr.mxu0 0.0
    %288 = vmatpush2.msra.mxu0 0.0
    %289 = vmatprep.subr.mxu0 0.0
    %290 = vmatpush2.msra.mxu0 0.0
    %291 = vmatprep.subr.mxu0 0.0
    %292 = vmatpush2.msra.mxu0 0.0
    %293 = vmatprep.subr.mxu0 0.0
    %294 = vmatpush2.msra.mxu0 0.0
    %295 = vmatprep.subr.mxu0 0.0
    %296 = vmatpush2.msra.mxu0 0.0
    %297 = vmatprep.subr.mxu0 0.0
    %298 = vmatpush2.msra.mxu0 0.0
    %299 = vmatprep.subr.mxu0 0.0
    %300 = vmatpush2.msra.mxu0 0.0
    %301 = vmatprep.subr.mxu0 0.0
    %302 = vmatpush2.msra.mxu0 0.0
    %303 = vmatprep.subr.mxu0 0.0
    %304 = vmatpush2.msra.mxu0 0.0
    %305 = vmatprep.subr.mxu0 0.0
    %306 = vmatpush2.msra.mxu0 0.0
    %307 = vmatprep.subr.mxu0 0.0
    %308 = vmatpush2.msra.mxu0 0.0
    %309 = vmatprep.subr.mxu0 0.0
    %310 = vmatpush2.msra.mxu0 0.0
    %311 = vmatprep.subr.mxu0 0.0
    %312 = vmatpush2.msra.mxu0 0.0
    %313 = vmatprep.mubr.f32.mxu0 0.0
    %314 = vmatmul.mubr.f32.gmra.mxu0 %v247
    %v315 = vpop.f32.mrf.mxu0
    %v316 = vadd.f32 0.0, %v315
    %v317 = vpop.f32.mrf.mxu0
    %v318 = vadd.f32 0.0, %v317
    %319 = vdwg.mxu0
    %v320 = vadd.f32 %v229, %v316
    %v321 = vadd.f32 %v231, %v318
    %v322 = vxor.u32 %v320, 2147483648
    %v323 = vxor.u32 %v321, 2147483648
    %v324 = vmul.f32 %v322, 1.442695
    %v325 = vpow.pop %v324
    %v326 = vmul.f32 %v323, 1.442695
    %v327 = vpow.pop %v326
    %v328 = vadd.f32 %v325, 1.0
    %v329 = vadd.f32 %v327, 1.0
    %v330 = vrcp.pop %v328
    %v331 = vmul.f32 1.0, %v330
    %v332 = vrcp.pop %v329
    %v333 = vmul.f32 1.0, %v332
    %v334 = vtanh.pop %v321
    %v335 = vmul.f32 %v331, %v131
    %337 = vrot.lane.b32.xlu0 %v334, 64
    %v338 = vpop.permute.xlu0 %337
    %v340 = vmul.f32 %v331, %v338
    %342 = vrot.lane.b32.xlu0 %v340, 64
    %v343 = vpop.permute.xlu0 %342
    %v345 = vadd.f32 %v335, %v343
    %v346 = vtanh.pop %v345
    %348 = vrot.lane.b32.xlu0 %v346, 64
    %v349 = vpop.permute.xlu0 %348
    %v351 = vmul.f32 %v333, %v349
    %v353 = vsel %vm245, %v351, 0
    %355 = vmatprep.subr.mxu0 0.0
    %356 = vmatpush1.msra.mxu0 0.0
    %357 = vmatprep.subr.mxu0 0.0
    %358 = vmatpush1.msra.mxu0 0.0
    %359 = vmatprep.subr.mxu0 0.0
    %360 = vmatpush1.msra.mxu0 0.0
    %361 = vmatprep.subr.mxu0 0.0
    %362 = vmatpush1.msra.mxu0 0.0
    %363 = vmatprep.subr.mxu0 0.0
    %364 = vmatpush1.msra.mxu0 0.0
    %365 = vmatprep.subr.mxu0 0.0
    %366 = vmatpush1.msra.mxu0 0.0
    %367 = vmatprep.subr.mxu0 0.0
    %368 = vmatpush1.msra.mxu0 0.0
    %369 = vmatprep.subr.mxu0 0.0
    %370 = vmatpush1.msra.mxu0 0.0
    %371 = vmatprep.subr.mxu0 %v46
    %372 = vmatpush1.msra.mxu0 %v45
    %373 = vmatprep.subr.mxu0 %v44
    %374 = vmatpush1.msra.mxu0 %v43
    %375 = vmatprep.subr.mxu0 %v42
    %376 = vmatpush1.msra.mxu0 %v41
    %377 = vmatprep.subr.mxu0 %v40
    %378 = vmatpush1.msra.mxu0 %v39
    %379 = vmatprep.subr.mxu0 %v38
    %380 = vmatpush1.msra.mxu0 %v37
    %381 = vmatprep.subr.mxu0 %v36
    %382 = vmatpush1.msra.mxu0 %v35
    %383 = vmatprep.subr.mxu0 %v34
    %384 = vmatpush1.msra.mxu0 %v33
    %385 = vmatprep.subr.mxu0 %v32
    %386 = vmatpush1.msra.mxu0 %v31
    %387 = vmatprep.subr.mxu0 0.0
    %388 = vmatpush2.msra.mxu0 0.0
    %389 = vmatprep.subr.mxu0 0.0
    %390 = vmatpush2.msra.mxu0 0.0
    %391 = vmatprep.subr.mxu0 0.0
    %392 = vmatpush2.msra.mxu0 0.0
    %393 = vmatprep.subr.mxu0 0.0
    %394 = vmatpush2.msra.mxu0 0.0
    %395 = vmatprep.subr.mxu0 0.0
    %396 = vmatpush2.msra.mxu0 0.0
    %397 = vmatprep.subr.mxu0 0.0
    %398 = vmatpush2.msra.mxu0 0.0
    %399 = vmatprep.subr.mxu0 0.0
    %400 = vmatpush2.msra.mxu0 0.0
    %401 = vmatprep.subr.mxu0 0.0
    %402 = vmatpush2.msra.mxu0 0.0
    %403 = vmatprep.subr.mxu0 0.0
    %404 = vmatpush2.msra.mxu0 0.0
    %405 = vmatprep.subr.mxu0 0.0
    %406 = vmatpush2.msra.mxu0 0.0
    %407 = vmatprep.subr.mxu0 0.0
    %408 = vmatpush2.msra.mxu0 0.0
    %409 = vmatprep.subr.mxu0 0.0
    %410 = vmatpush2.msra.mxu0 0.0
    %411 = vmatprep.subr.mxu0 0.0
    %412 = vmatpush2.msra.mxu0 0.0
    %413 = vmatprep.subr.mxu0 0.0
    %414 = vmatpush2.msra.mxu0 0.0
    %415 = vmatprep.subr.mxu0 0.0
    %416 = vmatpush2.msra.mxu0 0.0
    %417 = vmatprep.subr.mxu0 0.0
    %418 = vmatpush2.msra.mxu0 0.0
    %419 = vmatprep.mubr.f32.mxu0 0.0
    %420 = vmatmul.mubr.f32.gmra.mxu0 %v353
    %v421 = vpop.f32.mrf.mxu0
    %v422 = vadd.f32 0.0, %v421
    %v423 = vpop.f32.mrf.mxu0
    %v424 = vadd.f32 0.0, %v423
    %425 = vdwg.mxu0
    %v428 = vrot.slane %v422, 6
    %v429 = vrot.slane %v424, 6
    %v432 = vadd.f32 %v229, %v428
    %v433 = vadd.f32 %v231, %v429
    %v434 = vxor.u32 %v432, 2147483648
    %v435 = vxor.u32 %v433, 2147483648
    %v436 = vmul.f32 %v434, 1.442695
    %v437 = vpow.pop %v436
    %v438 = vmul.f32 %v435, 1.442695
    %v439 = vpow.pop %v438
    %v440 = vadd.f32 %v437, 1.0
    %v441 = vadd.f32 %v439, 1.0
    %v442 = vrcp.pop %v440
    %v443 = vmul.f32 1.0, %v442
    %v444 = vrcp.pop %v441
    %v445 = vmul.f32 1.0, %v444
    %v446 = vtanh.pop %v433
    %v448 = vrot.slane %v345, 6
    %v450 = vmul.f32 %v443, %v448
    %452 = vrot.lane.b32.xlu0 %v446, 64
    %v453 = vpop.permute.xlu0 %452
    %v455 = vmul.f32 %v443, %v453
    %457 = vrot.lane.b32.xlu0 %v455, 64
    %v458 = vpop.permute.xlu0 %457
    %v460 = vadd.f32 %v450, %v458
    %v461 = vtanh.pop %v460
    %463 = vrot.lane.b32.xlu0 %v461, 64
    %v464 = vpop.permute.xlu0 %463
    %v466 = vmul.f32 %v445, %v464
    %v468 = vrot.slane %v466, 2
    %v469 = vsel %vm245, %v468, 0
    %471 = vmatprep.subr.mxu0 0.0
    %472 = vmatpush1.msra.mxu0 0.0
    %473 = vmatprep.subr.mxu0 0.0
    %474 = vmatpush1.msra.mxu0 0.0
    %475 = vmatprep.subr.mxu0 0.0
    %476 = vmatpush1.msra.mxu0 0.0
    %477 = vmatprep.subr.mxu0 0.0
    %478 = vmatpush1.msra.mxu0 0.0
    %479 = vmatprep.subr.mxu0 0.0
    %480 = vmatpush1.msra.mxu0 0.0
    %481 = vmatprep.subr.mxu0 0.0
    %482 = vmatpush1.msra.mxu0 0.0
    %483 = vmatprep.subr.mxu0 0.0
    %484 = vmatpush1.msra.mxu0 0.0
    %485 = vmatprep.subr.mxu0 0.0
    %486 = vmatpush1.msra.mxu0 0.0
    %487 = vmatprep.subr.mxu0 %v46
    %488 = vmatpush1.msra.mxu0 %v45
    %489 = vmatprep.subr.mxu0 %v44
    %490 = vmatpush1.msra.mxu0 %v43
    %491 = vmatprep.subr.mxu0 %v42
    %492 = vmatpush1.msra.mxu0 %v41
    %493 = vmatprep.subr.mxu0 %v40
    %494 = vmatpush1.msra.mxu0 %v39
    %495 = vmatprep.subr.mxu0 %v38
    %496 = vmatpush1.msra.mxu0 %v37
    %497 = vmatprep.subr.mxu0 %v36
    %498 = vmatpush1.msra.mxu0 %v35
    %499 = vmatprep.subr.mxu0 %v34
    %500 = vmatpush1.msra.mxu0 %v33
    %501 = vmatprep.subr.mxu0 %v32
    %502 = vmatpush1.msra.mxu0 %v31
    %503 = vmatprep.subr.mxu0 0.0
    %504 = vmatpush2.msra.mxu0 0.0
    %505 = vmatprep.subr.mxu0 0.0
    %506 = vmatpush2.msra.mxu0 0.0
    %507 = vmatprep.subr.mxu0 0.0
    %508 = vmatpush2.msra.mxu0 0.0
    %509 = vmatprep.subr.mxu0 0.0
    %510 = vmatpush2.msra.mxu0 0.0
    %511 = vmatprep.subr.mxu0 0.0
    %512 = vmatpush2.msra.mxu0 0.0
    %513 = vmatprep.subr.mxu0 0.0
    %514 = vmatpush2.msra.mxu0 0.0
    %515 = vmatprep.subr.mxu0 0.0
    %516 = vmatpush2.msra.mxu0 0.0
    %517 = vmatprep.subr.mxu0 0.0
    %518 = vmatpush2.msra.mxu0 0.0
    %519 = vmatprep.subr.mxu0 0.0
    %520 = vmatpush2.msra.mxu0 0.0
    %521 = vmatprep.subr.mxu0 0.0
    %522 = vmatpush2.msra.mxu0 0.0
    %523 = vmatprep.subr.mxu0 0.0
    %524 = vmatpush2.msra.mxu0 0.0
    %525 = vmatprep.subr.mxu0 0.0
    %526 = vmatpush2.msra.mxu0 0.0
    %527 = vmatprep.subr.mxu0 0.0
    %528 = vmatpush2.msra.mxu0 0.0
    %529 = vmatprep.subr.mxu0 0.0
    %530 = vmatpush2.msra.mxu0 0.0
    %531 = vmatprep.subr.mxu0 0.0
    %532 = vmatpush2.msra.mxu0 0.0
    %533 = vmatprep.subr.mxu0 0.0
    %534 = vmatpush2.msra.mxu0 0.0
    %535 = vmatprep.mubr.f32.mxu0 0.0
    %536 = vmatmul.mubr.f32.gmra.mxu0 %v469
    %v537 = vpop.f32.mrf.mxu0
    %v538 = vadd.f32 0.0, %v537
    %v539 = vpop.f32.mrf.mxu0
    %v540 = vadd.f32 0.0, %v539
    %541 = vdwg.mxu0
    %v544 = vrot.slane %v538, 4
    %v545 = vrot.slane %v540, 4
    %v548 = vadd.f32 %v229, %v544
    %v549 = vadd.f32 %v231, %v545
    %v550 = vxor.u32 %v548, 2147483648
    %v551 = vxor.u32 %v549, 2147483648
    %v552 = vmul.f32 %v550, 1.442695
    %v553 = vpow.pop %v552
    %v554 = vmul.f32 %v551, 1.442695
    %v555 = vpow.pop %v554
    %v556 = vadd.f32 %v553, 1.0
    %v557 = vadd.f32 %v555, 1.0
    %v558 = vrcp.pop %v556
    %v559 = vmul.f32 1.0, %v558
    %v560 = vrcp.pop %v557
    %v561 = vmul.f32 1.0, %v560
    %v562 = vtanh.pop %v549
    %v564 = vrot.slane %v460, 6
    %v566 = vmul.f32 %v559, %v564
    %568 = vrot.lane.b32.xlu0 %v562, 64
    %v569 = vpop.permute.xlu0 %568
    %v571 = vmul.f32 %v559, %v569
    %573 = vrot.lane.b32.xlu0 %v571, 64
    %v574 = vpop.permute.xlu0 %573
    %v576 = vadd.f32 %v566, %v574
    %v577 = vtanh.pop %v576
    %579 = vrot.lane.b32.xlu0 %v577, 64
    %v580 = vpop.permute.xlu0 %579
    %v582 = vmul.f32 %v561, %v580
    %v584 = vrot.slane %v582, 4
    %v585 = vsel %vm245, %v584, 0
    %587 = vmatprep.subr.mxu0 0.0
    %588 = vmatpush1.msra.mxu0 0.0
    %589 = vmatprep.subr.mxu0 0.0
    %590 = vmatpush1.msra.mxu0 0.0
    %591 = vmatprep.subr.mxu0 0.0
    %592 = vmatpush1.msra.mxu0 0.0
    %593 = vmatprep.subr.mxu0 0.0
    %594 = vmatpush1.msra.mxu0 0.0
    %595 = vmatprep.subr.mxu0 0.0
    %596 = vmatpush1.msra.mxu0 0.0
    %597 = vmatprep.subr.mxu0 0.0
    %598 = vmatpush1.msra.mxu0 0.0
    %599 = vmatprep.subr.mxu0 0.0
    %600 = vmatpush1.msra.mxu0 0.0
    %601 = vmatprep.subr.mxu0 0.0
    %602 = vmatpush1.msra.mxu0 0.0
    %603 = vmatprep.subr.mxu0 %v46
    %604 = vmatpush1.msra.mxu0 %v45
    %605 = vmatprep.subr.mxu0 %v44
    %606 = vmatpush1.msra.mxu0 %v43
    %607 = vmatprep.subr.mxu0 %v42
    %608 = vmatpush1.msra.mxu0 %v41
    %609 = vmatprep.subr.mxu0 %v40
    %610 = vmatpush1.msra.mxu0 %v39
    %611 = vmatprep.subr.mxu0 %v38
    %612 = vmatpush1.msra.mxu0 %v37
    %613 = vmatprep.subr.mxu0 %v36
    %614 = vmatpush1.msra.mxu0 %v35
    %615 = vmatprep.subr.mxu0 %v34
    %616 = vmatpush1.msra.mxu0 %v33
    %617 = vmatprep.subr.mxu0 %v32
    %618 = vmatpush1.msra.mxu0 %v31
    %619 = vmatprep.subr.mxu0 0.0
    %620 = vmatpush2.msra.mxu0 0.0
    %621 = vmatprep.subr.mxu0 0.0
    %622 = vmatpush2.msra.mxu0 0.0
    %623 = vmatprep.subr.mxu0 0.0
    %624 = vmatpush2.msra.mxu0 0.0
    %625 = vmatprep.subr.mxu0 0.0
    %626 = vmatpush2.msra.mxu0 0.0
    %627 = vmatprep.subr.mxu0 0.0
    %628 = vmatpush2.msra.mxu0 0.0
    %629 = vmatprep.subr.mxu0 0.0
    %630 = vmatpush2.msra.mxu0 0.0
    %631 = vmatprep.subr.mxu0 0.0
    %632 = vmatpush2.msra.mxu0 0.0
    %633 = vmatprep.subr.mxu0 0.0
    %634 = vmatpush2.msra.mxu0 0.0
    %635 = vmatprep.subr.mxu0 0.0
    %636 = vmatpush2.msra.mxu0 0.0
    %637 = vmatprep.subr.mxu0 0.0
    %638 = vmatpush2.msra.mxu0 0.0
    %639 = vmatprep.subr.mxu0 0.0
    %640 = vmatpush2.msra.mxu0 0.0
    %641 = vmatprep.subr.mxu0 0.0
    %642 = vmatpush2.msra.mxu0 0.0
    %643 = vmatprep.subr.mxu0 0.0
    %644 = vmatpush2.msra.mxu0 0.0
    %645 = vmatprep.subr.mxu0 0.0
    %646 = vmatpush2.msra.mxu0 0.0
    %647 = vmatprep.subr.mxu0 0.0
    %648 = vmatpush2.msra.mxu0 0.0
    %649 = vmatprep.subr.mxu0 0.0
    %650 = vmatpush2.msra.mxu0 0.0
    %651 = vmatprep.mubr.f32.mxu0 0.0
    %652 = vmatmul.mubr.f32.gmra.mxu0 %v585
    %v653 = vpop.f32.mrf.mxu0
    %v654 = vadd.f32 0.0, %v653
    %v655 = vpop.f32.mrf.mxu0
    %v656 = vadd.f32 0.0, %v655
    %657 = vdwg.mxu0
    %v660 = vrot.slane %v654, 2
    %v661 = vrot.slane %v656, 2
    %v664 = vadd.f32 %v229, %v660
    %v665 = vadd.f32 %v231, %v661
    %v666 = vxor.u32 %v664, 2147483648
    %v667 = vxor.u32 %v665, 2147483648
    %v668 = vmul.f32 %v666, 1.442695
    %v669 = vpow.pop %v668
    %v670 = vmul.f32 %v667, 1.442695
    %v671 = vpow.pop %v670
    %v672 = vadd.f32 %v669, 1.0
    %v673 = vadd.f32 %v671, 1.0
    %v674 = vrcp.pop %v672
    %v675 = vmul.f32 1.0, %v674
    %v676 = vrcp.pop %v673
    %v677 = vmul.f32 1.0, %v676
    %v678 = vtanh.pop %v665
    %v680 = vrot.slane %v576, 6
    %v682 = vmul.f32 %v675, %v680
    %684 = vrot.lane.b32.xlu0 %v678, 64
    %v685 = vpop.permute.xlu0 %684
    %v687 = vmul.f32 %v675, %v685
    %689 = vrot.lane.b32.xlu0 %v687, 64
    %v690 = vpop.permute.xlu0 %689
    %v692 = vadd.f32 %v682, %v690
    %v693 = vtanh.pop %v692
    %695 = vrot.lane.b32.xlu0 %v693, 64
    %v696 = vpop.permute.xlu0 %695
    %v698 = vmul.f32 %v677, %v696
    %v700 = vrot.slane %v698, 6
    %v701 = vsel %vm245, %v700, 0
    %703 = vmatprep.subr.mxu0 0.0
    %704 = vmatpush1.msra.mxu0 0.0
    %705 = vmatprep.subr.mxu0 0.0
    %706 = vmatpush1.msra.mxu0 0.0
    %707 = vmatprep.subr.mxu0 0.0
    %708 = vmatpush1.msra.mxu0 0.0
    %709 = vmatprep.subr.mxu0 0.0
    %710 = vmatpush1.msra.mxu0 0.0
    %711 = vmatprep.subr.mxu0 0.0
    %712 = vmatpush1.msra.mxu0 0.0
    %713 = vmatprep.subr.mxu0 0.0
    %714 = vmatpush1.msra.mxu0 0.0
    %715 = vmatprep.subr.mxu0 0.0
    %716 = vmatpush1.msra.mxu0 0.0
    %717 = vmatprep.subr.mxu0 0.0
    %718 = vmatpush1.msra.mxu0 0.0
    %719 = vmatprep.subr.mxu0 %v46
    %720 = vmatpush1.msra.mxu0 %v45
    %721 = vmatprep.subr.mxu0 %v44
    %722 = vmatpush1.msra.mxu0 %v43
    %723 = vmatprep.subr.mxu0 %v42
    %724 = vmatpush1.msra.mxu0 %v41
    %725 = vmatprep.subr.mxu0 %v40
    %726 = vmatpush1.msra.mxu0 %v39
    %727 = vmatprep.subr.mxu0 %v38
    %728 = vmatpush1.msra.mxu0 %v37
    %729 = vmatprep.subr.mxu0 %v36
    %730 = vmatpush1.msra.mxu0 %v35
    %731 = vmatprep.subr.mxu0 %v34
    %732 = vmatpush1.msra.mxu0 %v33
    %733 = vmatprep.subr.mxu0 %v32
    %734 = vmatpush1.msra.mxu0 %v31
    %735 = vmatprep.subr.mxu0 0.0
    %736 = vmatpush2.msra.mxu0 0.0
    %737 = vmatprep.subr.mxu0 0.0
    %738 = vmatpush2.msra.mxu0 0.0
    %739 = vmatprep.subr.mxu0 0.0
    %740 = vmatpush2.msra.mxu0 0.0
    %741 = vmatprep.subr.mxu0 0.0
    %742 = vmatpush2.msra.mxu0 0.0
    %743 = vmatprep.subr.mxu0 0.0
    %744 = vmatpush2.msra.mxu0 0.0
    %745 = vmatprep.subr.mxu0 0.0
    %746 = vmatpush2.msra.mxu0 0.0
    %747 = vmatprep.subr.mxu0 0.0
    %748 = vmatpush2.msra.mxu0 0.0
    %749 = vmatprep.subr.mxu0 0.0
    %750 = vmatpush2.msra.mxu0 0.0
    %751 = vmatprep.subr.mxu0 0.0
    %752 = vmatpush2.msra.mxu0 0.0
    %753 = vmatprep.subr.mxu0 0.0
    %754 = vmatpush2.msra.mxu0 0.0
    %755 = vmatprep.subr.mxu0 0.0
    %756 = vmatpush2.msra.mxu0 0.0
    %757 = vmatprep.subr.mxu0 0.0
    %758 = vmatpush2.msra.mxu0 0.0
    %759 = vmatprep.subr.mxu0 0.0
    %760 = vmatpush2.msra.mxu0 0.0
    %761 = vmatprep.subr.mxu0 0.0
    %762 = vmatpush2.msra.mxu0 0.0
    %763 = vmatprep.subr.mxu0 0.0
    %764 = vmatpush2.msra.mxu0 0.0
    %765 = vmatprep.subr.mxu0 0.0
    %766 = vmatpush2.msra.mxu0 0.0
    %767 = vmatprep.mubr.f32.mxu0 0.0
    %768 = vmatmul.mubr.f32.gmra.mxu0 %v701
    %v769 = vpop.f32.mrf.mxu0
    %v770 = vadd.f32 0.0, %v769
    %v771 = vpop.f32.mrf.mxu0
    %v772 = vadd.f32 0.0, %v771
    %773 = vdwg.mxu0
    %v774 = vadd.f32 %v235, %v770
    %v775 = vadd.f32 %v237, %v772
    %v776 = vxor.u32 %v774, 2147483648
    %v777 = vxor.u32 %v775, 2147483648
    %v778 = vmul.f32 %v776, 1.442695
    %v779 = vpow.pop %v778
    %v780 = vmul.f32 %v777, 1.442695
    %v781 = vpow.pop %v780
    %v782 = vadd.f32 %v779, 1.0
    %v783 = vadd.f32 %v781, 1.0
    %v784 = vrcp.pop %v782
    %v785 = vmul.f32 1.0, %v784
    %v786 = vrcp.pop %v783
    %v787 = vmul.f32 1.0, %v786
    %v788 = vtanh.pop %v775
    %v790 = vrot.slane %v692, 6
    %v792 = vmul.f32 %v785, %v790
    %794 = vrot.lane.b32.xlu0 %v788, 64
    %v795 = vpop.permute.xlu0 %794
    %v797 = vmul.f32 %v785, %v795
    %799 = vrot.lane.b32.xlu0 %v797, 64
    %v800 = vpop.permute.xlu0 %799
    %v802 = vadd.f32 %v792, %v800
    %v803 = vtanh.pop %v802
    %805 = vrot.lane.b32.xlu0 %v803, 64
    %v806 = vpop.permute.xlu0 %805
    %v808 = vmul.f32 %v787, %v806
    %v810 = vsel %vm245, %v808, 0
    %812 = vmatprep.subr.mxu0 0.0
    %813 = vmatpush1.msra.mxu0 0.0
    %814 = vmatprep.subr.mxu0 0.0
    %815 = vmatpush1.msra.mxu0 0.0
    %816 = vmatprep.subr.mxu0 0.0
    %817 = vmatpush1.msra.mxu0 0.0
    %818 = vmatprep.subr.mxu0 0.0
    %819 = vmatpush1.msra.mxu0 0.0
    %820 = vmatprep.subr.mxu0 0.0
    %821 = vmatpush1.msra.mxu0 0.0
    %822 = vmatprep.subr.mxu0 0.0
    %823 = vmatpush1.msra.mxu0 0.0
    %824 = vmatprep.subr.mxu0 0.0
    %825 = vmatpush1.msra.mxu0 0.0
    %826 = vmatprep.subr.mxu0 0.0
    %827 = vmatpush1.msra.mxu0 0.0
    %828 = vmatprep.subr.mxu0 %v46
    %829 = vmatpush1.msra.mxu0 %v45
    %830 = vmatprep.subr.mxu0 %v44
    %831 = vmatpush1.msra.mxu0 %v43
    %832 = vmatprep.subr.mxu0 %v42
    %833 = vmatpush1.msra.mxu0 %v41
    %834 = vmatprep.subr.mxu0 %v40
    %835 = vmatpush1.msra.mxu0 %v39
    %836 = vmatprep.subr.mxu0 %v38
    %837 = vmatpush1.msra.mxu0 %v37
    %838 = vmatprep.subr.mxu0 %v36
    %839 = vmatpush1.msra.mxu0 %v35
    %840 = vmatprep.subr.mxu0 %v34
    %841 = vmatpush1.msra.mxu0 %v33
    %842 = vmatprep.subr.mxu0 %v32
    %843 = vmatpush1.msra.mxu0 %v31
    %844 = vmatprep.subr.mxu0 0.0
    %845 = vmatpush2.msra.mxu0 0.0
    %846 = vmatprep.subr.mxu0 0.0
    %847 = vmatpush2.msra.mxu0 0.0
    %848 = vmatprep.subr.mxu0 0.0
    %849 = vmatpush2.msra.mxu0 0.0
    %850 = vmatprep.subr.mxu0 0.0
    %851 = vmatpush2.msra.mxu0 0.0
    %852 = vmatprep.subr.mxu0 0.0
    %853 = vmatpush2.msra.mxu0 0.0
    %854 = vmatprep.subr.mxu0 0.0
    %855 = vmatpush2.msra.mxu0 0.0
    %856 = vmatprep.subr.mxu0 0.0
    %857 = vmatpush2.msra.mxu0 0.0
    %858 = vmatprep.subr.mxu0 0.0
    %859 = vmatpush2.msra.mxu0 0.0
    %860 = vmatprep.subr.mxu0 0.0
    %861 = vmatpush2.msra.mxu0 0.0
    %862 = vmatprep.subr.mxu0 0.0
    %863 = vmatpush2.msra.mxu0 0.0
    %864 = vmatprep.subr.mxu0 0.0
    %865 = vmatpush2.msra.mxu0 0.0
    %866 = vmatprep.subr.mxu0 0.0
    %867 = vmatpush2.msra.mxu0 0.0
    %868 = vmatprep.subr.mxu0 0.0
    %869 = vmatpush2.msra.mxu0 0.0
    %870 = vmatprep.subr.mxu0 0.0
    %871 = vmatpush2.msra.mxu0 0.0
    %872 = vmatprep.subr.mxu0 0.0
    %873 = vmatpush2.msra.mxu0 0.0
    %874 = vmatprep.subr.mxu0 0.0
    %875 = vmatpush2.msra.mxu0 0.0
    %876 = vmatprep.mubr.f32.mxu0 0.0
    %877 = vmatmul.mubr.f32.gmra.mxu0 %v810
    %v878 = vpop.f32.mrf.mxu0
    %v879 = vadd.f32 0.0, %v878
    %v880 = vpop.f32.mrf.mxu0
    %v881 = vadd.f32 0.0, %v880
    %882 = vdwg.mxu0
    %v885 = vrot.slane %v879, 6
    %v886 = vrot.slane %v881, 6
    %v889 = vadd.f32 %v235, %v885
    %v890 = vadd.f32 %v237, %v886
    %v891 = vxor.u32 %v889, 2147483648
    %v892 = vxor.u32 %v890, 2147483648
    %v893 = vmul.f32 %v891, 1.442695
    %v894 = vpow.pop %v893
    %v895 = vmul.f32 %v892, 1.442695
    %v896 = vpow.pop %v895
    %v897 = vadd.f32 %v894, 1.0
    %v898 = vadd.f32 %v896, 1.0
    %v899 = vrcp.pop %v897
    %v900 = vmul.f32 1.0, %v899
    %v901 = vrcp.pop %v898
    %v902 = vmul.f32 1.0, %v901
    %v903 = vtanh.pop %v890
    %v905 = vrot.slane %v802, 6
    %v907 = vmul.f32 %v900, %v905
    %909 = vrot.lane.b32.xlu0 %v903, 64
    %v910 = vpop.permute.xlu0 %909
    %v912 = vmul.f32 %v900, %v910
    %914 = vrot.lane.b32.xlu0 %v912, 64
    %v915 = vpop.permute.xlu0 %914
    %v917 = vadd.f32 %v907, %v915
    %v918 = vtanh.pop %v917
    %920 = vrot.lane.b32.xlu0 %v918, 64
    %v921 = vpop.permute.xlu0 %920
    %v923 = vmul.f32 %v902, %v921
    %v925 = vrot.slane %v923, 2
    %v926 = vsel %vm245, %v925, 0
    %928 = vmatprep.subr.mxu0 0.0
    %929 = vmatpush1.msra.mxu0 0.0
    %930 = vmatprep.subr.mxu0 0.0
    %931 = vmatpush1.msra.mxu0 0.0
    %932 = vmatprep.subr.mxu0 0.0
    %933 = vmatpush1.msra.mxu0 0.0
    %934 = vmatprep.subr.mxu0 0.0
    %935 = vmatpush1.msra.mxu0 0.0
    %936 = vmatprep.subr.mxu0 0.0
    %937 = vmatpush1.msra.mxu0 0.0
    %938 = vmatprep.subr.mxu0 0.0
    %939 = vmatpush1.msra.mxu0 0.0
    %940 = vmatprep.subr.mxu0 0.0
    %941 = vmatpush1.msra.mxu0 0.0
    %942 = vmatprep.subr.mxu0 0.0
    %943 = vmatpush1.msra.mxu0 0.0
    %944 = vmatprep.subr.mxu0 %v46
    %945 = vmatpush1.msra.mxu0 %v45
    %946 = vmatprep.subr.mxu0 %v44
    %947 = vmatpush1.msra.mxu0 %v43
    %948 = vmatprep.subr.mxu0 %v42
    %949 = vmatpush1.msra.mxu0 %v41
    %950 = vmatprep.subr.mxu0 %v40
    %951 = vmatpush1.msra.mxu0 %v39
    %952 = vmatprep.subr.mxu0 %v38
    %953 = vmatpush1.msra.mxu0 %v37
    %954 = vmatprep.subr.mxu0 %v36
    %955 = vmatpush1.msra.mxu0 %v35
    %956 = vmatprep.subr.mxu0 %v34
    %957 = vmatpush1.msra.mxu0 %v33
    %958 = vmatprep.subr.mxu0 %v32
    %959 = vmatpush1.msra.mxu0 %v31
    %960 = vmatprep.subr.mxu0 0.0
    %961 = vmatpush2.msra.mxu0 0.0
    %962 = vmatprep.subr.mxu0 0.0
    %963 = vmatpush2.msra.mxu0 0.0
    %964 = vmatprep.subr.mxu0 0.0
    %965 = vmatpush2.msra.mxu0 0.0
    %966 = vmatprep.subr.mxu0 0.0
    %967 = vmatpush2.msra.mxu0 0.0
    %968 = vmatprep.subr.mxu0 0.0
    %969 = vmatpush2.msra.mxu0 0.0
    %970 = vmatprep.subr.mxu0 0.0
    %971 = vmatpush2.msra.mxu0 0.0
    %972 = vmatprep.subr.mxu0 0.0
    %973 = vmatpush2.msra.mxu0 0.0
    %974 = vmatprep.subr.mxu0 0.0
    %975 = vmatpush2.msra.mxu0 0.0
    %976 = vmatprep.subr.mxu0 0.0
    %977 = vmatpush2.msra.mxu0 0.0
    %978 = vmatprep.subr.mxu0 0.0
    %979 = vmatpush2.msra.mxu0 0.0
    %980 = vmatprep.subr.mxu0 0.0
    %981 = vmatpush2.msra.mxu0 0.0
    %982 = vmatprep.subr.mxu0 0.0
    %983 = vmatpush2.msra.mxu0 0.0
    %984 = vmatprep.subr.mxu0 0.0
    %985 = vmatpush2.msra.mxu0 0.0
    %986 = vmatprep.subr.mxu0 0.0
    %987 = vmatpush2.msra.mxu0 0.0
    %988 = vmatprep.subr.mxu0 0.0
    %989 = vmatpush2.msra.mxu0 0.0
    %990 = vmatprep.subr.mxu0 0.0
    %991 = vmatpush2.msra.mxu0 0.0
    %992 = vmatprep.mubr.f32.mxu0 0.0
    %993 = vmatmul.mubr.f32.gmra.mxu0 %v926
    %v994 = vpop.f32.mrf.mxu0
    %v995 = vadd.f32 0.0, %v994
    %v996 = vpop.f32.mrf.mxu0
    %v997 = vadd.f32 0.0, %v996
    %998 = vdwg.mxu0
    %v1001 = vrot.slane %v995, 4
    %v1002 = vrot.slane %v997, 4
    %v1005 = vadd.f32 %v235, %v1001
    %v1006 = vadd.f32 %v237, %v1002
    %v1007 = vxor.u32 %v1005, 2147483648
    %v1008 = vxor.u32 %v1006, 2147483648
    %v1009 = vmul.f32 %v1007, 1.442695
    %v1010 = vpow.pop %v1009
    %v1011 = vmul.f32 %v1008, 1.442695
    %v1012 = vpow.pop %v1011
    %v1013 = vadd.f32 %v1010, 1.0
    %v1014 = vadd.f32 %v1012, 1.0
    %v1015 = vrcp.pop %v1013
    %v1016 = vmul.f32 1.0, %v1015
    %v1017 = vrcp.pop %v1014
    %v1018 = vmul.f32 1.0, %v1017
    %v1019 = vtanh.pop %v1006
    %v1021 = vrot.slane %v917, 6
    %v1023 = vmul.f32 %v1016, %v1021
    %1025 = vrot.lane.b32.xlu0 %v1019, 64
    %v1026 = vpop.permute.xlu0 %1025
    %v1028 = vmul.f32 %v1016, %v1026
    %1030 = vrot.lane.b32.xlu0 %v1028, 64
    %v1031 = vpop.permute.xlu0 %1030
    %v1033 = vadd.f32 %v1023, %v1031
    %v1034 = vtanh.pop %v1033
    %1036 = vrot.lane.b32.xlu0 %v1034, 64
    %v1037 = vpop.permute.xlu0 %1036
    %v1039 = vmul.f32 %v1018, %v1037
    %v1041 = vrot.slane %v1039, 4
    %v1042 = vsel %vm245, %v1041, 0
    %1044 = vmatprep.subr.mxu0 0.0
    %1045 = vmatpush1.msra.mxu0 0.0
    %1046 = vmatprep.subr.mxu0 0.0
    %1047 = vmatpush1.msra.mxu0 0.0
    %1048 = vmatprep.subr.mxu0 0.0
    %1049 = vmatpush1.msra.mxu0 0.0
    %1050 = vmatprep.subr.mxu0 0.0
    %1051 = vmatpush1.msra.mxu0 0.0
    %1052 = vmatprep.subr.mxu0 0.0
    %1053 = vmatpush1.msra.mxu0 0.0
    %1054 = vmatprep.subr.mxu0 0.0
    %1055 = vmatpush1.msra.mxu0 0.0
    %1056 = vmatprep.subr.mxu0 0.0
    %1057 = vmatpush1.msra.mxu0 0.0
    %1058 = vmatprep.subr.mxu0 0.0
    %1059 = vmatpush1.msra.mxu0 0.0
    %1060 = vmatprep.subr.mxu0 %v46
    %1061 = vmatpush1.msra.mxu0 %v45
    %1062 = vmatprep.subr.mxu0 %v44
    %1063 = vmatpush1.msra.mxu0 %v43
    %1064 = vmatprep.subr.mxu0 %v42
    %1065 = vmatpush1.msra.mxu0 %v41
    %1066 = vmatprep.subr.mxu0 %v40
    %1067 = vmatpush1.msra.mxu0 %v39
    %1068 = vmatprep.subr.mxu0 %v38
    %1069 = vmatpush1.msra.mxu0 %v37
    %1070 = vmatprep.subr.mxu0 %v36
    %1071 = vmatpush1.msra.mxu0 %v35
    %1072 = vmatprep.subr.mxu0 %v34
    %1073 = vmatpush1.msra.mxu0 %v33
    %1074 = vmatprep.subr.mxu0 %v32
    %1075 = vmatpush1.msra.mxu0 %v31
    %1076 = vmatprep.subr.mxu0 0.0
    %1077 = vmatpush2.msra.mxu0 0.0
    %1078 = vmatprep.subr.mxu0 0.0
    %1079 = vmatpush2.msra.mxu0 0.0
    %1080 = vmatprep.subr.mxu0 0.0
    %1081 = vmatpush2.msra.mxu0 0.0
    %1082 = vmatprep.subr.mxu0 0.0
    %1083 = vmatpush2.msra.mxu0 0.0
    %1084 = vmatprep.subr.mxu0 0.0
    %1085 = vmatpush2.msra.mxu0 0.0
    %1086 = vmatprep.subr.mxu0 0.0
    %1087 = vmatpush2.msra.mxu0 0.0
    %1088 = vmatprep.subr.mxu0 0.0
    %1089 = vmatpush2.msra.mxu0 0.0
    %1090 = vmatprep.subr.mxu0 0.0
    %1091 = vmatpush2.msra.mxu0 0.0
    %1092 = vmatprep.subr.mxu0 0.0
    %1093 = vmatpush2.msra.mxu0 0.0
    %1094 = vmatprep.subr.mxu0 0.0
    %1095 = vmatpush2.msra.mxu0 0.0
    %1096 = vmatprep.subr.mxu0 0.0
    %1097 = vmatpush2.msra.mxu0 0.0
    %1098 = vmatprep.subr.mxu0 0.0
    %1099 = vmatpush2.msra.mxu0 0.0
    %1100 = vmatprep.subr.mxu0 0.0
    %1101 = vmatpush2.msra.mxu0 0.0
    %1102 = vmatprep.subr.mxu0 0.0
    %1103 = vmatpush2.msra.mxu0 0.0
    %1104 = vmatprep.subr.mxu0 0.0
    %1105 = vmatpush2.msra.mxu0 0.0
    %1106 = vmatprep.subr.mxu0 0.0
    %1107 = vmatpush2.msra.mxu0 0.0
    %1108 = vmatprep.mubr.f32.mxu0 0.0
    %1109 = vmatmul.mubr.f32.gmra.mxu0 %v1042
    %v1110 = vpop.f32.mrf.mxu0
    %v1111 = vadd.f32 0.0, %v1110
    %v1112 = vpop.f32.mrf.mxu0
    %v1113 = vadd.f32 0.0, %v1112
    %1114 = vdwg.mxu0
    %v1117 = vrot.slane %v1111, 2
    %v1118 = vrot.slane %v1113, 2
    %v1121 = vadd.f32 %v235, %v1117
    %v1122 = vadd.f32 %v237, %v1118
    %v1123 = vxor.u32 %v1121, 2147483648
    %v1124 = vxor.u32 %v1122, 2147483648
    %v1125 = vmul.f32 %v1123, 1.442695
    %v1126 = vpow.pop %v1125
    %v1127 = vmul.f32 %v1124, 1.442695
    %v1128 = vpow.pop %v1127
    %v1129 = vadd.f32 %v1126, 1.0
    %v1130 = vadd.f32 %v1128, 1.0
    %v1131 = vrcp.pop %v1129
    %v1132 = vmul.f32 1.0, %v1131
    %v1133 = vrcp.pop %v1130
    %v1134 = vmul.f32 1.0, %v1133
    %v1135 = vtanh.pop %v1122
    %v1137 = vrot.slane %v1033, 6
    %v1139 = vmul.f32 %v1132, %v1137
    %1141 = vrot.lane.b32.xlu0 %v1135, 64
    %v1142 = vpop.permute.xlu0 %1141
    %v1144 = vmul.f32 %v1132, %v1142
    %1146 = vrot.lane.b32.xlu0 %v1144, 64
    %v1147 = vpop.permute.xlu0 %1146
    %v1149 = vadd.f32 %v1139, %v1147
    %v1150 = vtanh.pop %v1149
    %1152 = vrot.lane.b32.xlu0 %v1150, 64
    %v1153 = vpop.permute.xlu0 %1152
    %v1155 = vmul.f32 %v1134, %v1153
    %v1157 = vrot.slane %v1155, 6
    %v1158 = vsel %vm245, %v1157, 0
    %1160 = vmatprep.subr.mxu0 0.0
    %1161 = vmatpush1.msra.mxu0 0.0
    %1162 = vmatprep.subr.mxu0 0.0
    %1163 = vmatpush1.msra.mxu0 0.0
    %1164 = vmatprep.subr.mxu0 0.0
    %1165 = vmatpush1.msra.mxu0 0.0
    %1166 = vmatprep.subr.mxu0 0.0
    %1167 = vmatpush1.msra.mxu0 0.0
    %1168 = vmatprep.subr.mxu0 0.0
    %1169 = vmatpush1.msra.mxu0 0.0
    %1170 = vmatprep.subr.mxu0 0.0
    %1171 = vmatpush1.msra.mxu0 0.0
    %1172 = vmatprep.subr.mxu0 0.0
    %1173 = vmatpush1.msra.mxu0 0.0
    %1174 = vmatprep.subr.mxu0 0.0
    %1175 = vmatpush1.msra.mxu0 0.0
    %1176 = vmatprep.subr.mxu0 %v46
    %1177 = vmatpush1.msra.mxu0 %v45
    %1178 = vmatprep.subr.mxu0 %v44
    %1179 = vmatpush1.msra.mxu0 %v43
    %1180 = vmatprep.subr.mxu0 %v42
    %1181 = vmatpush1.msra.mxu0 %v41
    %1182 = vmatprep.subr.mxu0 %v40
    %1183 = vmatpush1.msra.mxu0 %v39
    %1184 = vmatprep.subr.mxu0 %v38
    %1185 = vmatpush1.msra.mxu0 %v37
    %1186 = vmatprep.subr.mxu0 %v36
    %1187 = vmatpush1.msra.mxu0 %v35
    %1188 = vmatprep.subr.mxu0 %v34
    %1189 = vmatpush1.msra.mxu0 %v33
    %1190 = vmatprep.subr.mxu0 %v32
    %1191 = vmatpush1.msra.mxu0 %v31
    %1192 = vmatprep.subr.mxu0 0.0
    %1193 = vmatpush2.msra.mxu0 0.0
    %1194 = vmatprep.subr.mxu0 0.0
    %1195 = vmatpush2.msra.mxu0 0.0
    %1196 = vmatprep.subr.mxu0 0.0
    %1197 = vmatpush2.msra.mxu0 0.0
    %1198 = vmatprep.subr.mxu0 0.0
    %1199 = vmatpush2.msra.mxu0 0.0
    %1200 = vmatprep.subr.mxu0 0.0
    %1201 = vmatpush2.msra.mxu0 0.0
    %1202 = vmatprep.subr.mxu0 0.0
    %1203 = vmatpush2.msra.mxu0 0.0
    %1204 = vmatprep.subr.mxu0 0.0
    %1205 = vmatpush2.msra.mxu0 0.0
    %1206 = vmatprep.subr.mxu0 0.0
    %1207 = vmatpush2.msra.mxu0 0.0
    %1208 = vmatprep.subr.mxu0 0.0
    %1209 = vmatpush2.msra.mxu0 0.0
    %1210 = vmatprep.subr.mxu0 0.0
    %1211 = vmatpush2.msra.mxu0 0.0
    %1212 = vmatprep.subr.mxu0 0.0
    %1213 = vmatpush2.msra.mxu0 0.0
    %1214 = vmatprep.subr.mxu0 0.0
    %1215 = vmatpush2.msra.mxu0 0.0
    %1216 = vmatprep.subr.mxu0 0.0
    %1217 = vmatpush2.msra.mxu0 0.0
    %1218 = vmatprep.subr.mxu0 0.0
    %1219 = vmatpush2.msra.mxu0 0.0
    %1220 = vmatprep.subr.mxu0 0.0
    %1221 = vmatpush2.msra.mxu0 0.0
    %1222 = vmatprep.subr.mxu0 0.0
    %1223 = vmatpush2.msra.mxu0 0.0
    %1224 = vmatprep.mubr.f32.mxu0 0.0
    %1225 = vmatmul.mubr.f32.gmra.mxu0 %v1158
    %v1226 = vpop.f32.mrf.mxu0
    %v1227 = vadd.f32 0.0, %v1226
    %v1228 = vpop.f32.mrf.mxu0
    %v1229 = vadd.f32 0.0, %v1228
    %1230 = vdwg.mxu0
    %v1231 = vadd.f32 %v241, %v1227
    %v1232 = vadd.f32 %v243, %v1229
    %v1233 = vxor.u32 %v1231, 2147483648
    %v1234 = vxor.u32 %v1232, 2147483648
    %v1235 = vmul.f32 %v1233, 1.442695
    %v1236 = vpow.pop %v1235
    %v1237 = vmul.f32 %v1234, 1.442695
    %v1238 = vpow.pop %v1237
    %v1239 = vadd.f32 %v1236, 1.0
    %v1240 = vadd.f32 %v1238, 1.0
    %v1241 = vrcp.pop %v1239
    %v1242 = vmul.f32 1.0, %v1241
    %v1243 = vrcp.pop %v1240
    %v1244 = vmul.f32 1.0, %v1243
    %v1245 = vtanh.pop %v1232
    %v1247 = vrot.slane %v1149, 6
    %v1249 = vmul.f32 %v1242, %v1247
    %1251 = vrot.lane.b32.xlu0 %v1245, 64
    %v1252 = vpop.permute.xlu0 %1251
    %v1254 = vmul.f32 %v1242, %v1252
    %1256 = vrot.lane.b32.xlu0 %v1254, 64
    %v1257 = vpop.permute.xlu0 %1256
    %v1259 = vadd.f32 %v1249, %v1257
    %v1260 = vtanh.pop %v1259
    %1262 = vrot.lane.b32.xlu0 %v1260, 64
    %v1263 = vpop.permute.xlu0 %1262
    %v1265 = vmul.f32 %v1244, %v1263
    %v1267 = vsel %vm245, %v1265, 0
    %1269 = vmatprep.subr.mxu0 0.0
    %1270 = vmatpush1.msra.mxu0 0.0
    %1271 = vmatprep.subr.mxu0 0.0
    %1272 = vmatpush1.msra.mxu0 0.0
    %1273 = vmatprep.subr.mxu0 0.0
    %1274 = vmatpush1.msra.mxu0 0.0
    %1275 = vmatprep.subr.mxu0 0.0
    %1276 = vmatpush1.msra.mxu0 0.0
    %1277 = vmatprep.subr.mxu0 0.0
    %1278 = vmatpush1.msra.mxu0 0.0
    %1279 = vmatprep.subr.mxu0 0.0
    %1280 = vmatpush1.msra.mxu0 0.0
    %1281 = vmatprep.subr.mxu0 0.0
    %1282 = vmatpush1.msra.mxu0 0.0
    %1283 = vmatprep.subr.mxu0 0.0
    %1284 = vmatpush1.msra.mxu0 0.0
    %1285 = vmatprep.subr.mxu0 %v46
    %1286 = vmatpush1.msra.mxu0 %v45
    %1287 = vmatprep.subr.mxu0 %v44
    %1288 = vmatpush1.msra.mxu0 %v43
    %1289 = vmatprep.subr.mxu0 %v42
    %1290 = vmatpush1.msra.mxu0 %v41
    %1291 = vmatprep.subr.mxu0 %v40
    %1292 = vmatpush1.msra.mxu0 %v39
    %1293 = vmatprep.subr.mxu0 %v38
    %1294 = vmatpush1.msra.mxu0 %v37
    %1295 = vmatprep.subr.mxu0 %v36
    %1296 = vmatpush1.msra.mxu0 %v35
    %1297 = vmatprep.subr.mxu0 %v34
    %1298 = vmatpush1.msra.mxu0 %v33
    %1299 = vmatprep.subr.mxu0 %v32
    %1300 = vmatpush1.msra.mxu0 %v31
    %1301 = vmatprep.subr.mxu0 0.0
    %1302 = vmatpush2.msra.mxu0 0.0
    %1303 = vmatprep.subr.mxu0 0.0
    %1304 = vmatpush2.msra.mxu0 0.0
    %1305 = vmatprep.subr.mxu0 0.0
    %1306 = vmatpush2.msra.mxu0 0.0
    %1307 = vmatprep.subr.mxu0 0.0
    %1308 = vmatpush2.msra.mxu0 0.0
    %1309 = vmatprep.subr.mxu0 0.0
    %1310 = vmatpush2.msra.mxu0 0.0
    %1311 = vmatprep.subr.mxu0 0.0
    %1312 = vmatpush2.msra.mxu0 0.0
    %1313 = vmatprep.subr.mxu0 0.0
    %1314 = vmatpush2.msra.mxu0 0.0
    %1315 = vmatprep.subr.mxu0 0.0
    %1316 = vmatpush2.msra.mxu0 0.0
    %1317 = vmatprep.subr.mxu0 0.0
    %1318 = vmatpush2.msra.mxu0 0.0
    %1319 = vmatprep.subr.mxu0 0.0
    %1320 = vmatpush2.msra.mxu0 0.0
    %1321 = vmatprep.subr.mxu0 0.0
    %1322 = vmatpush2.msra.mxu0 0.0
    %1323 = vmatprep.subr.mxu0 0.0
    %1324 = vmatpush2.msra.mxu0 0.0
    %1325 = vmatprep.subr.mxu0 0.0
    %1326 = vmatpush2.msra.mxu0 0.0
    %1327 = vmatprep.subr.mxu0 0.0
    %1328 = vmatpush2.msra.mxu0 0.0
    %1329 = vmatprep.subr.mxu0 0.0
    %1330 = vmatpush2.msra.mxu0 0.0
    %1331 = vmatprep.subr.mxu0 0.0
    %1332 = vmatpush2.msra.mxu0 0.0
    %1333 = vmatprep.mubr.f32.mxu0 0.0
    %1334 = vmatmul.mubr.f32.gmra.mxu0 %v1267
    %v1335 = vpop.f32.mrf.mxu0
    %v1336 = vadd.f32 0.0, %v1335
    %v1337 = vpop.f32.mrf.mxu0
    %v1338 = vadd.f32 0.0, %v1337
    %1339 = vdwg.mxu0
    %v1342 = vrot.slane %v1336, 6
    %v1343 = vrot.slane %v1338, 6
    %v1346 = vadd.f32 %v241, %v1342
    %v1347 = vadd.f32 %v243, %v1343
    %v1348 = vxor.u32 %v1346, 2147483648
    %v1349 = vxor.u32 %v1347, 2147483648
    %v1350 = vmul.f32 %v1348, 1.442695
    %v1351 = vpow.pop %v1350
    %v1352 = vmul.f32 %v1349, 1.442695
    %v1353 = vpow.pop %v1352
    %v1354 = vadd.f32 %v1351, 1.0
    %v1355 = vadd.f32 %v1353, 1.0
    %v1356 = vrcp.pop %v1354
    %v1357 = vmul.f32 1.0, %v1356
    %v1358 = vrcp.pop %v1355
    %v1359 = vmul.f32 1.0, %v1358
    %v1360 = vtanh.pop %v1347
    %v1362 = vrot.slane %v1259, 6
    %v1364 = vmul.f32 %v1357, %v1362
    %1366 = vrot.lane.b32.xlu0 %v1360, 64
    %v1367 = vpop.permute.xlu0 %1366
    %v1369 = vmul.f32 %v1357, %v1367
    %1371 = vrot.lane.b32.xlu0 %v1369, 64
    %v1372 = vpop.permute.xlu0 %1371
    %v1374 = vadd.f32 %v1364, %v1372
    %v1375 = vtanh.pop %v1374
    %1377 = vrot.lane.b32.xlu0 %v1375, 64
    %v1378 = vpop.permute.xlu0 %1377
    %v1380 = vmul.f32 %v1359, %v1378
    %v1382 = vrot.slane %v1380, 2
    %v1383 = vsel %vm245, %v1382, 0
    %1385 = vmatprep.subr.mxu0 0.0
    %1386 = vmatpush1.msra.mxu0 0.0
    %1387 = vmatprep.subr.mxu0 0.0
    %1388 = vmatpush1.msra.mxu0 0.0
    %1389 = vmatprep.subr.mxu0 0.0
    %1390 = vmatpush1.msra.mxu0 0.0
    %1391 = vmatprep.subr.mxu0 0.0
    %1392 = vmatpush1.msra.mxu0 0.0
    %1393 = vmatprep.subr.mxu0 0.0
    %1394 = vmatpush1.msra.mxu0 0.0
    %1395 = vmatprep.subr.mxu0 0.0
    %1396 = vmatpush1.msra.mxu0 0.0
    %1397 = vmatprep.subr.mxu0 0.0
    %1398 = vmatpush1.msra.mxu0 0.0
    %1399 = vmatprep.subr.mxu0 0.0
    %1400 = vmatpush1.msra.mxu0 0.0
    %1401 = vmatprep.subr.mxu0 %v46
    %1402 = vmatpush1.msra.mxu0 %v45
    %1403 = vmatprep.subr.mxu0 %v44
    %1404 = vmatpush1.msra.mxu0 %v43
    %1405 = vmatprep.subr.mxu0 %v42
    %1406 = vmatpush1.msra.mxu0 %v41
    %1407 = vmatprep.subr.mxu0 %v40
    %1408 = vmatpush1.msra.mxu0 %v39
    %1409 = vmatprep.subr.mxu0 %v38
    %1410 = vmatpush1.msra.mxu0 %v37
    %1411 = vmatprep.subr.mxu0 %v36
    %1412 = vmatpush1.msra.mxu0 %v35
    %1413 = vmatprep.subr.mxu0 %v34
    %1414 = vmatpush1.msra.mxu0 %v33
    %1415 = vmatprep.subr.mxu0 %v32
    %1416 = vmatpush1.msra.mxu0 %v31
    %1417 = vmatprep.subr.mxu0 0.0
    %1418 = vmatpush2.msra.mxu0 0.0
    %1419 = vmatprep.subr.mxu0 0.0
    %1420 = vmatpush2.msra.mxu0 0.0
    %1421 = vmatprep.subr.mxu0 0.0
    %1422 = vmatpush2.msra.mxu0 0.0
    %1423 = vmatprep.subr.mxu0 0.0
    %1424 = vmatpush2.msra.mxu0 0.0
    %1425 = vmatprep.subr.mxu0 0.0
    %1426 = vmatpush2.msra.mxu0 0.0
    %1427 = vmatprep.subr.mxu0 0.0
    %1428 = vmatpush2.msra.mxu0 0.0
    %1429 = vmatprep.subr.mxu0 0.0
    %1430 = vmatpush2.msra.mxu0 0.0
    %1431 = vmatprep.subr.mxu0 0.0
    %1432 = vmatpush2.msra.mxu0 0.0
    %1433 = vmatprep.subr.mxu0 0.0
    %1434 = vmatpush2.msra.mxu0 0.0
    %1435 = vmatprep.subr.mxu0 0.0
    %1436 = vmatpush2.msra.mxu0 0.0
    %1437 = vmatprep.subr.mxu0 0.0
    %1438 = vmatpush2.msra.mxu0 0.0
    %1439 = vmatprep.subr.mxu0 0.0
    %1440 = vmatpush2.msra.mxu0 0.0
    %1441 = vmatprep.subr.mxu0 0.0
    %1442 = vmatpush2.msra.mxu0 0.0
    %1443 = vmatprep.subr.mxu0 0.0
    %1444 = vmatpush2.msra.mxu0 0.0
    %1445 = vmatprep.subr.mxu0 0.0
    %1446 = vmatpush2.msra.mxu0 0.0
    %1447 = vmatprep.subr.mxu0 0.0
    %1448 = vmatpush2.msra.mxu0 0.0
    %1449 = vmatprep.mubr.f32.mxu0 0.0
    %1450 = vmatmul.mubr.f32.gmra.mxu0 %v1383
    %v1451 = vpop.f32.mrf.mxu0
    %v1452 = vadd.f32 0.0, %v1451
    %v1453 = vpop.f32.mrf.mxu0
    %v1454 = vadd.f32 0.0, %v1453
    %1455 = vdwg.mxu0
    %v1458 = vrot.slane %v1452, 4
    %v1459 = vrot.slane %v1454, 4
    %v1462 = vadd.f32 %v241, %v1458
    %v1463 = vadd.f32 %v243, %v1459
    %v1464 = vxor.u32 %v1462, 2147483648
    %v1465 = vxor.u32 %v1463, 2147483648
    %v1466 = vmul.f32 %v1464, 1.442695
    %v1467 = vpow.pop %v1466
    %v1468 = vmul.f32 %v1465, 1.442695
    %v1469 = vpow.pop %v1468
    %v1470 = vadd.f32 %v1467, 1.0
    %v1471 = vadd.f32 %v1469, 1.0
    %v1472 = vrcp.pop %v1470
    %v1473 = vmul.f32 1.0, %v1472
    %v1474 = vrcp.pop %v1471
    %v1475 = vmul.f32 1.0, %v1474
    %v1476 = vtanh.pop %v1463
    %v1478 = vrot.slane %v1374, 6
    %v1480 = vmul.f32 %v1473, %v1478
    %1482 = vrot.lane.b32.xlu0 %v1476, 64
    %v1483 = vpop.permute.xlu0 %1482
    %v1485 = vmul.f32 %v1473, %v1483
    %1487 = vrot.lane.b32.xlu0 %v1485, 64
    %v1488 = vpop.permute.xlu0 %1487
    %v1490 = vadd.f32 %v1480, %v1488
    %v1491 = vtanh.pop %v1490
    %1493 = vrot.lane.b32.xlu0 %v1491, 64
    %v1494 = vpop.permute.xlu0 %1493
    %v1496 = vmul.f32 %v1475, %v1494
    %v1498 = vrot.slane %v1496, 4
    %v1499 = vsel %vm245, %v1498, 0
    %1501 = vmatprep.subr.mxu0 0.0
    %1502 = vmatpush1.msra.mxu0 0.0
    %1503 = vmatprep.subr.mxu0 0.0
    %1504 = vmatpush1.msra.mxu0 0.0
    %1505 = vmatprep.subr.mxu0 0.0
    %1506 = vmatpush1.msra.mxu0 0.0
    %1507 = vmatprep.subr.mxu0 0.0
    %1508 = vmatpush1.msra.mxu0 0.0
    %1509 = vmatprep.subr.mxu0 0.0
    %1510 = vmatpush1.msra.mxu0 0.0
    %1511 = vmatprep.subr.mxu0 0.0
    %1512 = vmatpush1.msra.mxu0 0.0
    %1513 = vmatprep.subr.mxu0 0.0
    %1514 = vmatpush1.msra.mxu0 0.0
    %1515 = vmatprep.subr.mxu0 0.0
    %1516 = vmatpush1.msra.mxu0 0.0
    %1517 = vmatprep.subr.mxu0 %v46
    %1518 = vmatpush1.msra.mxu0 %v45
    %1519 = vmatprep.subr.mxu0 %v44
    %1520 = vmatpush1.msra.mxu0 %v43
    %1521 = vmatprep.subr.mxu0 %v42
    %1522 = vmatpush1.msra.mxu0 %v41
    %1523 = vmatprep.subr.mxu0 %v40
    %1524 = vmatpush1.msra.mxu0 %v39
    %1525 = vmatprep.subr.mxu0 %v38
    %1526 = vmatpush1.msra.mxu0 %v37
    %1527 = vmatprep.subr.mxu0 %v36
    %1528 = vmatpush1.msra.mxu0 %v35
    %1529 = vmatprep.subr.mxu0 %v34
    %1530 = vmatpush1.msra.mxu0 %v33
    %1531 = vmatprep.subr.mxu0 %v32
    %1532 = vmatpush1.msra.mxu0 %v31
    %1533 = vmatprep.subr.mxu0 0.0
    %1534 = vmatpush2.msra.mxu0 0.0
    %1535 = vmatprep.subr.mxu0 0.0
    %1536 = vmatpush2.msra.mxu0 0.0
    %1537 = vmatprep.subr.mxu0 0.0
    %1538 = vmatpush2.msra.mxu0 0.0
    %1539 = vmatprep.subr.mxu0 0.0
    %1540 = vmatpush2.msra.mxu0 0.0
    %1541 = vmatprep.subr.mxu0 0.0
    %1542 = vmatpush2.msra.mxu0 0.0
    %1543 = vmatprep.subr.mxu0 0.0
    %1544 = vmatpush2.msra.mxu0 0.0
    %1545 = vmatprep.subr.mxu0 0.0
    %1546 = vmatpush2.msra.mxu0 0.0
    %1547 = vmatprep.subr.mxu0 0.0
    %1548 = vmatpush2.msra.mxu0 0.0
    %1549 = vmatprep.subr.mxu0 0.0
    %1550 = vmatpush2.msra.mxu0 0.0
    %1551 = vmatprep.subr.mxu0 0.0
    %1552 = vmatpush2.msra.mxu0 0.0
    %1553 = vmatprep.subr.mxu0 0.0
    %1554 = vmatpush2.msra.mxu0 0.0
    %1555 = vmatprep.subr.mxu0 0.0
    %1556 = vmatpush2.msra.mxu0 0.0
    %1557 = vmatprep.subr.mxu0 0.0
    %1558 = vmatpush2.msra.mxu0 0.0
    %1559 = vmatprep.subr.mxu0 0.0
    %1560 = vmatpush2.msra.mxu0 0.0
    %1561 = vmatprep.subr.mxu0 0.0
    %1562 = vmatpush2.msra.mxu0 0.0
    %1563 = vmatprep.subr.mxu0 0.0
    %1564 = vmatpush2.msra.mxu0 0.0
    %1565 = vmatprep.mubr.f32.mxu0 0.0
    %1566 = vmatmul.mubr.f32.gmra.mxu0 %v1499
    %v1567 = vpop.f32.mrf.mxu0
    %v1568 = vadd.f32 0.0, %v1567
    %v1569 = vpop.f32.mrf.mxu0
    %v1570 = vadd.f32 0.0, %v1569
    %1571 = vdwg.mxu0
    %v1574 = vrot.slane %v1568, 2
    %v1575 = vrot.slane %v1570, 2
    %v1578 = vadd.f32 %v241, %v1574
    %v1579 = vadd.f32 %v243, %v1575
    %v1580 = vxor.u32 %v1578, 2147483648
    %v1581 = vxor.u32 %v1579, 2147483648
    %v1582 = vmul.f32 %v1580, 1.442695
    %v1583 = vpow.pop %v1582
    %v1584 = vmul.f32 %v1581, 1.442695
    %v1585 = vpow.pop %v1584
    %v1586 = vadd.f32 %v1583, 1.0
    %v1587 = vadd.f32 %v1585, 1.0
    %v1588 = vrcp.pop %v1586
    %v1589 = vmul.f32 1.0, %v1588
    %v1590 = vrcp.pop %v1587
    %v1591 = vmul.f32 1.0, %v1590
    %v1592 = vtanh.pop %v1579
    %v1594 = vrot.slane %v1490, 6
    %v1596 = vmul.f32 %v1589, %v1594
    %1598 = vrot.lane.b32.xlu0 %v1592, 64
    %v1599 = vpop.permute.xlu0 %1598
    %v1601 = vmul.f32 %v1589, %v1599
    %1603 = vrot.lane.b32.xlu0 %v1601, 64
    %v1604 = vpop.permute.xlu0 %1603
    %v1606 = vadd.f32 %v1596, %v1604
    %v1607 = vtanh.pop %v1606
    %1609 = vrot.lane.b32.xlu0 %v1607, 64
    %v1610 = vpop.permute.xlu0 %1609
    %v1612 = vmul.f32 %v1591, %v1610
    %v1613 = vsel %vm245, %v1612, %v1606
    %v1614 = vld [vmem:[%s3] sm:$0xff]
    %v1615 = vld [vmem:[%s3 + $0x8] sm:$0xff]
    %v1616 = vld [vmem:[%s3 + $0x10] sm:$0xff]
    %v1617 = vld [vmem:[%s3 + $0x18] sm:$0xff]
    %v1618 = vld [vmem:[%s3 + $0x28] sm:$0xff]
    %v1619 = vld [vmem:[%s3 + $0x30] sm:$0xff]
    %v1620 = vld [vmem:[%s3 + $0x38] sm:$0xff]
    %v1621 = vld [vmem:[%s3 + $0x40] sm:$0xff]
    %v1622 = vld [vmem:[%s3 + $0x50] sm:$0xff]
    %v1623 = vld [vmem:[%s3 + $0x58] sm:$0xff]
    %v1624 = vld [vmem:[%s3 + $0x60] sm:$0xff]
    %v1625 = vld [vmem:[%s3 + $0x68] sm:$0xff]
    %v1626 = vld [vmem:[%s3 + $0x78] sm:$0xff]
    %v1627 = vld [vmem:[%s3 + $0x80] sm:$0xff]
    %v1628 = vld [vmem:[%s3 + $0x88] sm:$0xff]
    %v1629 = vld [vmem:[%s3 + $0x90] sm:$0xff]
    %v1630 = vld [vmem:[%s3 + $0xa0] sm:$0xff]
    %v1631 = vld [vmem:[%s3 + $0xa8] sm:$0xff]
    %v1632 = vld [vmem:[%s3 + $0xb0] sm:$0xff]
    %v1633 = vld [vmem:[%s3 + $0xb8] sm:$0xff]
    %v1634 = vld [vmem:[%s3 + $0xc8] sm:$0xff]
    %v1635 = vld [vmem:[%s3 + $0xd0] sm:$0xff]
    %v1636 = vld [vmem:[%s3 + $0xd8] sm:$0xff]
    %v1637 = vld [vmem:[%s3 + $0xe0] sm:$0xff]
    %v1638 = vld [vmem:[%s3 + $0xf0] sm:$0xff]
    %v1639 = vld [vmem:[%s3 + $0xf8] sm:$0xff]
    %v1640 = vld [vmem:[%s3 + $0x100] sm:$0xff]
    %v1641 = vld [vmem:[%s3 + $0x108] sm:$0xff]
    %v1642 = vld [vmem:[%s3 + $0x118] sm:$0xff]
    %v1643 = vld [vmem:[%s3 + $0x120] sm:$0xff]
    %v1644 = vld [vmem:[%s3 + $0x128] sm:$0xff]
    %v1645 = vld [vmem:[%s3 + $0x130] sm:$0xff]
    %s1646 = scalar_lea.vmem %s3, 320
    %v1647 = vld [vmem:[%s1646] ss:$8 sm:$0xf]
    %s1648 = scalar_lea.vmem %s3, 321
    %v1649 = vld [vmem:[%s1648] ss:$8 sm:$0xf]
    %v1650 = vld [vmem:[%s3 + $0x142] ss:$0 sm:$0xff]
    %v1651 = vld [vmem:[%s3 + $0x168] sm:$0xff]
    %v1652 = vld [vmem:[%s3 + $0x170] sm:$0xff]
    %v1653 = vld [vmem:[%s3 + $0x178] sm:$0xff]
    %v1654 = vld [vmem:[%s3 + $0x180] sm:$0xff]
    %v1655 = vld [vmem:[%s3 + $0x190] sm:$0xff]
    %v1656 = vld [vmem:[%s3 + $0x198] sm:$0xff]
    %v1657 = vld [vmem:[%s3 + $0x1a0] sm:$0xff]
    %v1658 = vld [vmem:[%s3 + $0x1a8] sm:$0xff]
    %v1659 = vld [vmem:[%s3 + $0x1b8] sm:$0xff]
    %v1660 = vld [vmem:[%s3 + $0x1c0] sm:$0xff]
    %v1661 = vld [vmem:[%s3 + $0x1c8] sm:$0xff]
    %v1662 = vld [vmem:[%s3 + $0x1d0] sm:$0xff]
    %v1663 = vld [vmem:[%s3 + $0x1e0] sm:$0xff]
    %v1664 = vld [vmem:[%s3 + $0x1e8] sm:$0xff]
    %v1665 = vld [vmem:[%s3 + $0x1f0] sm:$0xff]
    %v1666 = vld [vmem:[%s3 + $0x1f8] sm:$0xff]
    %v1667 = vld [vmem:[%s3 + $0x208] sm:$0xff]
    %v1668 = vld [vmem:[%s3 + $0x210] sm:$0xff]
    %v1669 = vld [vmem:[%s3 + $0x218] sm:$0xff]
    %v1670 = vld [vmem:[%s3 + $0x220] sm:$0xff]
    %v1671 = vld [vmem:[%s3 + $0x230] sm:$0xff]
    %v1672 = vld [vmem:[%s3 + $0x238] sm:$0xff]
    %v1673 = vld [vmem:[%s3 + $0x240] sm:$0xff]
    %v1674 = vld [vmem:[%s3 + $0x248] sm:$0xff]
    %v1675 = vld [vmem:[%s3 + $0x258] sm:$0xff]
    %v1676 = vld [vmem:[%s3 + $0x260] sm:$0xff]
    %v1677 = vld [vmem:[%s3 + $0x268] sm:$0xff]
    %v1678 = vld [vmem:[%s3 + $0x270] sm:$0xff]
    %v1679 = vld [vmem:[%s3 + $0x280] sm:$0xff]
    %v1680 = vld [vmem:[%s3 + $0x288] sm:$0xff]
    %v1681 = vld [vmem:[%s3 + $0x290] sm:$0xff]
    %v1682 = vld [vmem:[%s3 + $0x298] sm:$0xff]
    %v1683 = vld [vmem:[%s3 + $0x2a8] sm:$0xff]
    %v1684 = vld [vmem:[%s3 + $0x2b0] sm:$0xff]
    %v1685 = vld [vmem:[%s3 + $0x2b8] sm:$0xff]
    %v1686 = vld [vmem:[%s3 + $0x2c0] sm:$0xff]
    %v1687 = vld [vmem:[%s3 + $0x2d0] sm:$0xff]
    %v1688 = vld [vmem:[%s3 + $0x2d8] sm:$0xff]
    %v1689 = vld [vmem:[%s3 + $0x2e0] sm:$0xff]
    %v1690 = vld [vmem:[%s3 + $0x2e8] sm:$0xff]
    %v1691 = vld [vmem:[%s3 + $0x2f8] sm:$0xff]
    %v1692 = vld [vmem:[%s3 + $0x300] sm:$0xff]
    %v1693 = vld [vmem:[%s3 + $0x308] sm:$0xff]
    %v1694 = vld [vmem:[%s3 + $0x310] sm:$0xff]
    %v1695 = vld [vmem:[%s3 + $0x320] sm:$0xff]
    %v1696 = vld [vmem:[%s3 + $0x328] sm:$0xff]
    %v1697 = vld [vmem:[%s3 + $0x330] sm:$0xff]
    %v1698 = vld [vmem:[%s3 + $0x338] sm:$0xff]
    %v1699 = vld [vmem:[%s3 + $0x348] sm:$0xff]
    %v1700 = vld [vmem:[%s3 + $0x350] sm:$0xff]
    %v1701 = vld [vmem:[%s3 + $0x358] sm:$0xff]
    %v1702 = vld [vmem:[%s3 + $0x360] sm:$0xff]
    %v1703 = vld [vmem:[%s3 + $0x370] sm:$0xff]
    %v1704 = vld [vmem:[%s3 + $0x378] sm:$0xff]
    %v1705 = vld [vmem:[%s3 + $0x380] sm:$0xff]
    %v1706 = vld [vmem:[%s3 + $0x388] sm:$0xff]
    %v1707 = vld [vmem:[%s3 + $0x398] sm:$0xff]
    %v1708 = vld [vmem:[%s3 + $0x3a0] sm:$0xff]
    %v1709 = vld [vmem:[%s3 + $0x3a8] sm:$0xff]
    %v1710 = vld [vmem:[%s3 + $0x3b0] sm:$0xff]
    %v1711 = vld [vmem:[%s3 + $0x3c0] sm:$0xff]
    %v1712 = vld [vmem:[%s3 + $0x3c8] sm:$0xff]
    %v1713 = vld [vmem:[%s3 + $0x3d0] sm:$0xff]
    %v1714 = vld [vmem:[%s3 + $0x3d8] sm:$0xff]
    %v1715 = vld [vmem:[%s3 + $0x3e8] sm:$0xff]
    %v1716 = vld [vmem:[%s3 + $0x3f0] sm:$0xff]
    %v1717 = vld [vmem:[%s3 + $0x3f8] sm:$0xff]
    %v1718 = vld [vmem:[%s3 + $0x400] sm:$0xff]
    %v1719 = vld [vmem:[%s3 + $0x410] sm:$0xff]
    %v1720 = vld [vmem:[%s3 + $0x418] sm:$0xff]
    %v1721 = vld [vmem:[%s3 + $0x420] sm:$0xff]
    %v1722 = vld [vmem:[%s3 + $0x428] sm:$0xff]
    %v1723 = vld [vmem:[%s3 + $0x438] sm:$0xff]
    %v1724 = vld [vmem:[%s3 + $0x440] sm:$0xff]
    %v1725 = vld [vmem:[%s3 + $0x448] sm:$0xff]
    %v1726 = vld [vmem:[%s3 + $0x450] sm:$0xff]
    %v1727 = vld [vmem:[%s3 + $0x460] sm:$0xff]
    %v1728 = vld [vmem:[%s3 + $0x468] sm:$0xff]
    %v1729 = vld [vmem:[%s3 + $0x470] sm:$0xff]
    %v1730 = vld [vmem:[%s3 + $0x478] sm:$0xff]
    %v1731 = vld [vmem:[%s3 + $0x488] sm:$0xff]
    %v1732 = vld [vmem:[%s3 + $0x490] sm:$0xff]
    %v1733 = vld [vmem:[%s3 + $0x498] sm:$0xff]
    %v1734 = vld [vmem:[%s3 + $0x4a0] sm:$0xff]
    %v1735 = vld [vmem:[%s3 + $0x4b0] sm:$0xff]
    %v1736 = vld [vmem:[%s3 + $0x4b8] sm:$0xff]
    %v1737 = vld [vmem:[%s3 + $0x4c0] sm:$0xff]
    %v1738 = vld [vmem:[%s3 + $0x4c8] sm:$0xff]
    %v1739 = vld [vmem:[%s3 + $0x4d0] sm:$0xff]
    %v1740 = vld [vmem:[%s3 + $0x4d8] sm:$0xff]
    %v1741 = vld [vmem:[%s3 + $0x4e0] sm:$0xff]
    %v1742 = vld [vmem:[%s3 + $0x4e8] sm:$0xff]
    %v1743 = vld [vmem:[%s3 + $0x4f0] sm:$0xff]
    %v1744 = vld [vmem:[%s3 + $0x4f8] sm:$0xff]
    %v1745 = vld [vmem:[%s3 + $0x500] sm:$0xff]
    %v1746 = vld [vmem:[%s3 + $0x508] sm:$0xff]
    %v1747 = vld [vmem:[%s3 + $0x510] sm:$0xff]
    %v1748 = vld [vmem:[%s3 + $0x518] sm:$0xff]
    %v1749 = vld [vmem:[%s3 + $0x520] sm:$0xff]
    %v1750 = vld [vmem:[%s3 + $0x528] sm:$0xff]
    %v1751 = vld [vmem:[%s3 + $0x530] sm:$0xff]
    %v1752 = vld [vmem:[%s3 + $0x538] sm:$0xff]
    %v1753 = vld [vmem:[%s3 + $0x540] sm:$0xff]
    %v1754 = vld [vmem:[%s3 + $0x548] sm:$0xff]
    %v1755 = vld [vmem:[%s3 + $0x550] sm:$0xff]
    %v1756 = vld [vmem:[%s3 + $0x558] sm:$0xff]
    %v1757 = vld [vmem:[%s3 + $0x560] sm:$0xff]
    %v1758 = vld [vmem:[%s3 + $0x568] sm:$0xff]
    %v1759 = vld [vmem:[%s3 + $0x570] sm:$0xff]
    %v1760 = vld [vmem:[%s3 + $0x578] sm:$0xff]
    %v1761 = vld [vmem:[%s3 + $0x580] sm:$0xff]
    %v1762 = vld [vmem:[%s3 + $0x588] sm:$0xff]
    %v1763 = vld [vmem:[%s3 + $0x590] sm:$0xff]
    %v1764 = vld [vmem:[%s3 + $0x598] sm:$0xff]
    %v1765 = vld [vmem:[%s3 + $0x5a0] sm:$0xff]
    %v1766 = vld [vmem:[%s3 + $0x5a8] sm:$0xff]
    %v1767 = vld [vmem:[%s3 + $0x5b0] sm:$0xff]
    %v1768 = vld [vmem:[%s3 + $0x5b8] sm:$0xff]
    %v1769 = vld [vmem:[%s3 + $0x5c0] sm:$0xff]
    %v1770 = vld [vmem:[%s3 + $0x5c8] sm:$0xff]
    %v1771 = vld [vmem:[%s3 + $0x5d0] sm:$0xff]
    %v1772 = vld [vmem:[%s3 + $0x5d8] sm:$0xff]
    %v1773 = vld [vmem:[%s3 + $0x5e0] sm:$0xff]
    %v1774 = vld [vmem:[%s3 + $0x5e8] sm:$0xff]
    %v1775 = vld [vmem:[%s3 + $0x5f0] sm:$0xff]
    %v1776 = vld [vmem:[%s3 + $0x5f8] sm:$0xff]
    %v1777 = vld [vmem:[%s3 + $0x600] sm:$0xff]
    %v1778 = vld [vmem:[%s3 + $0x608] sm:$0xff]
    %v1779 = vld [vmem:[%s3 + $0x610] sm:$0xff]
    %v1780 = vld [vmem:[%s3 + $0x618] sm:$0xff]
    %v1781 = vld [vmem:[%s3 + $0x620] sm:$0xff]
    %v1782 = vld [vmem:[%s3 + $0x628] sm:$0xff]
    %v1783 = vld [vmem:[%s3 + $0x630] sm:$0xff]
    %v1784 = vld [vmem:[%s3 + $0x638] sm:$0xff]
    %v1785 = vld [vmem:[%s3 + $0x640] sm:$0xff]
    %v1786 = vld [vmem:[%s3 + $0x648] sm:$0xff]
    %v1787 = vld [vmem:[%s3 + $0x650] sm:$0xff]
    %v1788 = vld [vmem:[%s3 + $0x658] sm:$0xff]
    %v1789 = vld [vmem:[%s3 + $0x660] sm:$0xff]
    %v1790 = vld [vmem:[%s3 + $0x668] sm:$0xff]
    %v1791 = vld [vmem:[%s3 + $0x670] sm:$0xff]
    %v1792 = vld [vmem:[%s3 + $0x678] sm:$0xff]
    %v1793 = vld [vmem:[%s3 + $0x680] sm:$0xff]
    %v1794 = vld [vmem:[%s3 + $0x688] sm:$0xff]
    %v1795 = vld [vmem:[%s3 + $0x690] sm:$0xff]
    %v1796 = vld [vmem:[%s3 + $0x698] sm:$0xff]
    %v1797 = vld [vmem:[%s3 + $0x6a0] sm:$0xff]
    %v1798 = vld [vmem:[%s3 + $0x6a8] sm:$0xff]
    %v1799 = vld [vmem:[%s3 + $0x6b0] sm:$0xff]
    %v1800 = vld [vmem:[%s3 + $0x6b8] sm:$0xff]
    %v1801 = vld [vmem:[%s3 + $0x6c0] sm:$0xff]
    %v1802 = vld [vmem:[%s3 + $0x6c8] sm:$0xff]
    %v1803 = vld [vmem:[%s3 + $0x6d0] sm:$0xff]
    %v1804 = vld [vmem:[%s3 + $0x6d8] sm:$0xff]
    %v1805 = vld [vmem:[%s3 + $0x6e0] sm:$0xff]
    %v1806 = vld [vmem:[%s3 + $0x6e8] sm:$0xff]
    %v1807 = vld [vmem:[%s3 + $0x6f0] sm:$0xff]
    %v1808 = vld [vmem:[%s3 + $0x6f8] sm:$0xff]
    %v1809 = vld [vmem:[%s3 + $0x700] sm:$0xff]
    %v1810 = vld [vmem:[%s3 + $0x708] sm:$0xff]
    %v1811 = vld [vmem:[%s3 + $0x710] sm:$0xff]
    %v1812 = vld [vmem:[%s3 + $0x718] sm:$0xff]
    %v1813 = vld [vmem:[%s3 + $0x720] sm:$0xff]
    %v1814 = vld [vmem:[%s3 + $0x728] sm:$0xff]
    %v1816 = vlaneseq
    %v1817 = vshrl.u32 %v1816, 7
    %v1818 = vsub.s32 0, %v1817
    %v1819 = vrot.slane %v1647, %v1818
    %v1820 = vlaneseq
    %v1821 = vshrl.u32 %v1820, 7
    %v1822 = vsub.s32 1, %v1821
    %v1823 = vrot.slane %v1647, %v1822
    %v1824 = vlaneseq
    %v1825 = vshrl.u32 %v1824, 7
    %v1826 = vsub.s32 2, %v1825
    %v1827 = vrot.slane %v1647, %v1826
    %v1828 = vlaneseq
    %v1829 = vshrl.u32 %v1828, 7
    %v1830 = vsub.s32 3, %v1829
    %v1831 = vrot.slane %v1647, %v1830
    %v1837 = vrot.slane %v1613, 6
    %v1838 = vsel %vm245, %v1837, 0
    %1840 = vmatprep.subr.mxu0 0.0
    %1841 = vmatpush1.msra.mxu0 0.0
    %1842 = vmatprep.subr.mxu0 0.0
    %1843 = vmatpush1.msra.mxu0 0.0
    %1844 = vmatprep.subr.mxu0 0.0
    %1845 = vmatpush1.msra.mxu0 0.0
    %1846 = vmatprep.subr.mxu0 0.0
    %1847 = vmatpush1.msra.mxu0 0.0
    %1848 = vmatprep.subr.mxu0 0.0
    %1849 = vmatpush1.msra.mxu0 0.0
    %1850 = vmatprep.subr.mxu0 0.0
    %1851 = vmatpush1.msra.mxu0 0.0
    %1852 = vmatprep.subr.mxu0 0.0
    %1853 = vmatpush1.msra.mxu0 0.0
    %1854 = vmatprep.subr.mxu0 0.0
    %1855 = vmatpush1.msra.mxu0 0.0
    %1856 = vmatprep.subr.mxu0 %v1643
    %1857 = vmatpush1.msra.mxu0 %v1642
    %1858 = vmatprep.subr.mxu0 %v1639
    %1859 = vmatpush1.msra.mxu0 %v1638
    %1860 = vmatprep.subr.mxu0 %v1635
    %1861 = vmatpush1.msra.mxu0 %v1634
    %1862 = vmatprep.subr.mxu0 %v1631
    %1863 = vmatpush1.msra.mxu0 %v1630
    %1864 = vmatprep.subr.mxu0 %v1627
    %1865 = vmatpush1.msra.mxu0 %v1626
    %1866 = vmatprep.subr.mxu0 %v1623
    %1867 = vmatpush1.msra.mxu0 %v1622
    %1868 = vmatprep.subr.mxu0 %v1619
    %1869 = vmatpush1.msra.mxu0 %v1618
    %1870 = vmatprep.subr.mxu0 %v1615
    %1871 = vmatpush1.msra.mxu0 %v1614
    %1872 = vmatprep.subr.mxu0 0.0
    %1873 = vmatpush2.msra.mxu0 0.0
    %1874 = vmatprep.subr.mxu0 0.0
    %1875 = vmatpush2.msra.mxu0 0.0
    %1876 = vmatprep.subr.mxu0 0.0
    %1877 = vmatpush2.msra.mxu0 0.0
    %1878 = vmatprep.subr.mxu0 0.0
    %1879 = vmatpush2.msra.mxu0 0.0
    %1880 = vmatprep.subr.mxu0 0.0
    %1881 = vmatpush2.msra.mxu0 0.0
    %1882 = vmatprep.subr.mxu0 0.0
    %1883 = vmatpush2.msra.mxu0 0.0
    %1884 = vmatprep.subr.mxu0 0.0
    %1885 = vmatpush2.msra.mxu0 0.0
    %1886 = vmatprep.subr.mxu0 0.0
    %1887 = vmatpush2.msra.mxu0 0.0
    %1888 = vmatprep.subr.mxu0 0.0
    %1889 = vmatpush2.msra.mxu0 0.0
    %1890 = vmatprep.subr.mxu0 0.0
    %1891 = vmatpush2.msra.mxu0 0.0
    %1892 = vmatprep.subr.mxu0 0.0
    %1893 = vmatpush2.msra.mxu0 0.0
    %1894 = vmatprep.subr.mxu0 0.0
    %1895 = vmatpush2.msra.mxu0 0.0
    %1896 = vmatprep.subr.mxu0 0.0
    %1897 = vmatpush2.msra.mxu0 0.0
    %1898 = vmatprep.subr.mxu0 0.0
    %1899 = vmatpush2.msra.mxu0 0.0
    %1900 = vmatprep.subr.mxu0 0.0
    %1901 = vmatpush2.msra.mxu0 0.0
    %1902 = vmatprep.subr.mxu0 0.0
    %1903 = vmatpush2.msra.mxu0 0.0
    %1904 = vmatprep.mubr.f32.mxu0 0.0
    %1905 = vmatmul.mubr.f32.gmra.mxu0 %v1838
    %v1906 = vpop.f32.mrf.mxu0
    %v1907 = vadd.f32 %v1819, %v1906
    %v1908 = vpop.f32.mrf.mxu0
    %v1909 = vadd.f32 %v1823, %v1908
    %1910 = vdwg.mxu0
    %1911 = vmatprep.subr.mxu0 0.0
    %1912 = vmatpush1.msra.mxu0 0.0
    %1913 = vmatprep.subr.mxu0 0.0
    %1914 = vmatpush1.msra.mxu0 0.0
    %1915 = vmatprep.subr.mxu0 0.0
    %1916 = vmatpush1.msra.mxu0 0.0
    %1917 = vmatprep.subr.mxu0 0.0
    %1918 = vmatpush1.msra.mxu0 0.0
    %1919 = vmatprep.subr.mxu0 0.0
    %1920 = vmatpush1.msra.mxu0 0.0
    %1921 = vmatprep.subr.mxu0 0.0
    %1922 = vmatpush1.msra.mxu0 0.0
    %1923 = vmatprep.subr.mxu0 0.0
    %1924 = vmatpush1.msra.mxu0 0.0
    %1925 = vmatprep.subr.mxu0 0.0
    %1926 = vmatpush1.msra.mxu0 0.0
    %1927 = vmatprep.subr.mxu0 %v1645
    %1928 = vmatpush1.msra.mxu0 %v1644
    %1929 = vmatprep.subr.mxu0 %v1641
    %1930 = vmatpush1.msra.mxu0 %v1640
    %1931 = vmatprep.subr.mxu0 %v1637
    %1932 = vmatpush1.msra.mxu0 %v1636
    %1933 = vmatprep.subr.mxu0 %v1633
    %1934 = vmatpush1.msra.mxu0 %v1632
    %1935 = vmatprep.subr.mxu0 %v1629
    %1936 = vmatpush1.msra.mxu0 %v1628
    %1937 = vmatprep.subr.mxu0 %v1625
    %1938 = vmatpush1.msra.mxu0 %v1624
    %1939 = vmatprep.subr.mxu0 %v1621
    %1940 = vmatpush1.msra.mxu0 %v1620
    %1941 = vmatprep.subr.mxu0 %v1617
    %1942 = vmatpush1.msra.mxu0 %v1616
    %1943 = vmatprep.subr.mxu0 0.0
    %1944 = vmatpush2.msra.mxu0 0.0
    %1945 = vmatprep.subr.mxu0 0.0
    %1946 = vmatpush2.msra.mxu0 0.0
    %1947 = vmatprep.subr.mxu0 0.0
    %1948 = vmatpush2.msra.mxu0 0.0
    %1949 = vmatprep.subr.mxu0 0.0
    %1950 = vmatpush2.msra.mxu0 0.0
    %1951 = vmatprep.subr.mxu0 0.0
    %1952 = vmatpush2.msra.mxu0 0.0
    %1953 = vmatprep.subr.mxu0 0.0
    %1954 = vmatpush2.msra.mxu0 0.0
    %1955 = vmatprep.subr.mxu0 0.0
    %1956 = vmatpush2.msra.mxu0 0.0
    %1957 = vmatprep.subr.mxu0 0.0
    %1958 = vmatpush2.msra.mxu0 0.0
    %1959 = vmatprep.subr.mxu0 0.0
    %1960 = vmatpush2.msra.mxu0 0.0
    %1961 = vmatprep.subr.mxu0 0.0
    %1962 = vmatpush2.msra.mxu0 0.0
    %1963 = vmatprep.subr.mxu0 0.0
    %1964 = vmatpush2.msra.mxu0 0.0
    %1965 = vmatprep.subr.mxu0 0.0
    %1966 = vmatpush2.msra.mxu0 0.0
    %1967 = vmatprep.subr.mxu0 0.0
    %1968 = vmatpush2.msra.mxu0 0.0
    %1969 = vmatprep.subr.mxu0 0.0
    %1970 = vmatpush2.msra.mxu0 0.0
    %1971 = vmatprep.subr.mxu0 0.0
    %1972 = vmatpush2.msra.mxu0 0.0
    %1973 = vmatprep.subr.mxu0 0.0
    %1974 = vmatpush2.msra.mxu0 0.0
    %1975 = vmatprep.mubr.f32.mxu0 0.0
    %1976 = vmatmul.mubr.f32.gmra.mxu0 %v1838
    %v1977 = vpop.f32.mrf.mxu0
    %v1978 = vadd.f32 %v1827, %v1977
    %v1979 = vpop.f32.mrf.mxu0
    %v1980 = vadd.f32 %v1831, %v1979
    %1981 = vdwg.mxu0
    %v1983 = vlaneseq
    %v1984 = vshrl.u32 %v1983, 7
    %v1985 = vsub.s32 0, %v1984
    %v1986 = vrot.slane %v1649, %v1985
    %v1987 = vlaneseq
    %v1988 = vshrl.u32 %v1987, 7
    %v1989 = vsub.s32 1, %v1988
    %v1990 = vrot.slane %v1649, %v1989
    %v1991 = vlaneseq
    %v1992 = vshrl.u32 %v1991, 7
    %v1993 = vsub.s32 2, %v1992
    %v1994 = vrot.slane %v1649, %v1993
    %v1995 = vlaneseq
    %v1996 = vshrl.u32 %v1995, 7
    %v1997 = vsub.s32 3, %v1996
    %v1998 = vrot.slane %v1649, %v1997
    %v2003 = vadd.f32 %v1907, %v1986
    %v2004 = vadd.f32 %v1909, %v1990
    %v2005 = vadd.f32 %v1978, %v1994
    %v2006 = vadd.f32 %v1980, %v1998
    %2007 = vrot.lane.b32.xlu0 %v1613, 64
    %v2008 = vpop.permute.xlu0 %2007
    %2010 = vrot.lane.b32.xlu0 %v1613, 40
    %v2011 = vpop.permute.xlu0 %2010
    %vm2013 = vcmask 326656
    %v2014 = vsel %vm2013, %v2008, %v2011
    %v2016 = vrot.slane %v2014, 6
    %v2017 = vrot.slane %v2011, 6
    %v2019 = vsel %vm2013, %v2017, 0
    %2021 = vmatprep.subr.mxu0 %v1712
    %2022 = vmatpush1.msra.mxu0 %v1711
    %2023 = vmatprep.subr.mxu0 %v1708
    %2024 = vmatpush1.msra.mxu0 %v1707
    %2025 = vmatprep.subr.mxu0 %v1704
    %2026 = vmatpush1.msra.mxu0 %v1703
    %2027 = vmatprep.subr.mxu0 %v1700
    %2028 = vmatpush1.msra.mxu0 %v1699
    %2029 = vmatprep.subr.mxu0 %v1696
    %2030 = vmatpush1.msra.mxu0 %v1695
    %2031 = vmatprep.subr.mxu0 %v1692
    %2032 = vmatpush1.msra.mxu0 %v1691
    %2033 = vmatprep.subr.mxu0 %v1688
    %2034 = vmatpush1.msra.mxu0 %v1687
    %2035 = vmatprep.subr.mxu0 %v1684
    %2036 = vmatpush1.msra.mxu0 %v1683
    %2037 = vmatprep.subr.mxu0 %v1680
    %2038 = vmatpush1.msra.mxu0 %v1679
    %2039 = vmatprep.subr.mxu0 %v1676
    %2040 = vmatpush1.msra.mxu0 %v1675
    %2041 = vmatprep.subr.mxu0 %v1672
    %2042 = vmatpush1.msra.mxu0 %v1671
    %2043 = vmatprep.subr.mxu0 %v1668
    %2044 = vmatpush1.msra.mxu0 %v1667
    %2045 = vmatprep.subr.mxu0 %v1664
    %2046 = vmatpush1.msra.mxu0 %v1663
    %2047 = vmatprep.subr.mxu0 %v1660
    %2048 = vmatpush1.msra.mxu0 %v1659
    %2049 = vmatprep.subr.mxu0 %v1656
    %2050 = vmatpush1.msra.mxu0 %v1655
    %2051 = vmatprep.subr.mxu0 %v1652
    %2052 = vmatpush1.msra.mxu0 %v1651
    %2053 = vmatprep.subr.mxu0 0.0
    %2054 = vmatpush2.msra.mxu0 0.0
    %2055 = vmatprep.subr.mxu0 0.0
    %2056 = vmatpush2.msra.mxu0 0.0
    %2057 = vmatprep.subr.mxu0 0.0
    %2058 = vmatpush2.msra.mxu0 0.0
    %2059 = vmatprep.subr.mxu0 0.0
    %2060 = vmatpush2.msra.mxu0 0.0
    %2061 = vmatprep.subr.mxu0 0.0
    %2062 = vmatpush2.msra.mxu0 0.0
    %2063 = vmatprep.subr.mxu0 0.0
    %2064 = vmatpush2.msra.mxu0 0.0
    %2065 = vmatprep.subr.mxu0 0.0
    %2066 = vmatpush2.msra.mxu0 0.0
    %2067 = vmatprep.subr.mxu0 0.0
    %2068 = vmatpush2.msra.mxu0 0.0
    %2069 = vmatprep.subr.mxu0 0.0
    %2070 = vmatpush2.msra.mxu0 0.0
    %2071 = vmatprep.subr.mxu0 0.0
    %2072 = vmatpush2.msra.mxu0 0.0
    %2073 = vmatprep.subr.mxu0 0.0
    %2074 = vmatpush2.msra.mxu0 0.0
    %2075 = vmatprep.subr.mxu0 %v1732
    %2076 = vmatpush2.msra.mxu0 %v1731
    %2077 = vmatprep.subr.mxu0 %v1728
    %2078 = vmatpush2.msra.mxu0 %v1727
    %2079 = vmatprep.subr.mxu0 %v1724
    %2080 = vmatpush2.msra.mxu0 %v1723
    %2081 = vmatprep.subr.mxu0 %v1720
    %2082 = vmatpush2.msra.mxu0 %v1719
    %2083 = vmatprep.subr.mxu0 %v1716
    %2084 = vmatpush2.msra.mxu0 %v1715
    %2085 = vmatprep.mubr.f32.mxu0 %v2019
    %2086 = vmatmul.mubr.f32.gmra.mxu0 %v2016
    %v2087 = vpop.f32.mrf.mxu0
    %v2088 = vadd.f32 0.0, %v2087
    %v2089 = vpop.f32.mrf.mxu0
    %v2090 = vadd.f32 0.0, %v2089
    %2091 = vdwg.mxu0
    %2092 = vmatprep.subr.mxu0 %v1714
    %2093 = vmatpush1.msra.mxu0 %v1713
    %2094 = vmatprep.subr.mxu0 %v1710
    %2095 = vmatpush1.msra.mxu0 %v1709
    %2096 = vmatprep.subr.mxu0 %v1706
    %2097 = vmatpush1.msra.mxu0 %v1705
    %2098 = vmatprep.subr.mxu0 %v1702
    %2099 = vmatpush1.msra.mxu0 %v1701
    %2100 = vmatprep.subr.mxu0 %v1698
    %2101 = vmatpush1.msra.mxu0 %v1697
    %2102 = vmatprep.subr.mxu0 %v1694
    %2103 = vmatpush1.msra.mxu0 %v1693
    %2104 = vmatprep.subr.mxu0 %v1690
    %2105 = vmatpush1.msra.mxu0 %v1689
    %2106 = vmatprep.subr.mxu0 %v1686
    %2107 = vmatpush1.msra.mxu0 %v1685
    %2108 = vmatprep.subr.mxu0 %v1682
    %2109 = vmatpush1.msra.mxu0 %v1681
    %2110 = vmatprep.subr.mxu0 %v1678
    %2111 = vmatpush1.msra.mxu0 %v1677
    %2112 = vmatprep.subr.mxu0 %v1674
    %2113 = vmatpush1.msra.mxu0 %v1673
    %2114 = vmatprep.subr.mxu0 %v1670
    %2115 = vmatpush1.msra.mxu0 %v1669
    %2116 = vmatprep.subr.mxu0 %v1666
    %2117 = vmatpush1.msra.mxu0 %v1665
    %2118 = vmatprep.subr.mxu0 %v1662
    %2119 = vmatpush1.msra.mxu0 %v1661
    %2120 = vmatprep.subr.mxu0 %v1658
    %2121 = vmatpush1.msra.mxu0 %v1657
    %2122 = vmatprep.subr.mxu0 %v1654
    %2123 = vmatpush1.msra.mxu0 %v1653
    %2124 = vmatprep.subr.mxu0 0.0
    %2125 = vmatpush2.msra.mxu0 0.0
    %2126 = vmatprep.subr.mxu0 0.0
    %2127 = vmatpush2.msra.mxu0 0.0
    %2128 = vmatprep.subr.mxu0 0.0
    %2129 = vmatpush2.msra.mxu0 0.0
    %2130 = vmatprep.subr.mxu0 0.0
    %2131 = vmatpush2.msra.mxu0 0.0
    %2132 = vmatprep.subr.mxu0 0.0
    %2133 = vmatpush2.msra.mxu0 0.0
    %2134 = vmatprep.subr.mxu0 0.0
    %2135 = vmatpush2.msra.mxu0 0.0
    %2136 = vmatprep.subr.mxu0 0.0
    %2137 = vmatpush2.msra.mxu0 0.0
    %2138 = vmatprep.subr.mxu0 0.0
    %2139 = vmatpush2.msra.mxu0 0.0
    %2140 = vmatprep.subr.mxu0 0.0
    %2141 = vmatpush2.msra.mxu0 0.0
    %2142 = vmatprep.subr.mxu0 0.0
    %2143 = vmatpush2.msra.mxu0 0.0
    %2144 = vmatprep.subr.mxu0 0.0
    %2145 = vmatpush2.msra.mxu0 0.0
    %2146 = vmatprep.subr.mxu0 %v1734
    %2147 = vmatpush2.msra.mxu0 %v1733
    %2148 = vmatprep.subr.mxu0 %v1730
    %2149 = vmatpush2.msra.mxu0 %v1729
    %2150 = vmatprep.subr.mxu0 %v1726
    %2151 = vmatpush2.msra.mxu0 %v1725
    %2152 = vmatprep.subr.mxu0 %v1722
    %2153 = vmatpush2.msra.mxu0 %v1721
    %2154 = vmatprep.subr.mxu0 %v1718
    %2155 = vmatpush2.msra.mxu0 %v1717
    %2156 = vmatprep.mubr.f32.mxu0 %v2019
    %2157 = vmatmul.mubr.f32.gmra.mxu0 %v2016
    %v2158 = vpop.f32.mrf.mxu0
    %v2159 = vadd.f32 0.0, %v2158
    %v2160 = vpop.f32.mrf.mxu0
    %v2161 = vadd.f32 0.0, %v2160
    %2162 = vdwg.mxu0
    %v2163 = vadd.f32 %v1907, %v2088
    %v2164 = vadd.f32 %v1909, %v2090
    %v2165 = vadd.f32 %v1978, %v2159
    %v2166 = vadd.f32 %v1980, %v2161
    %v2167 = vxor.u32 %v2163, 2147483648
    %v2168 = vxor.u32 %v2164, 2147483648
    %v2169 = vmul.f32 %v2167, 1.442695
    %v2170 = vpow.pop %v2169
    %v2171 = vmul.f32 %v2168, 1.442695
    %v2172 = vpow.pop %v2171
    %v2173 = vadd.f32 %v2170, 1.0
    %v2174 = vadd.f32 %v2172, 1.0
    %v2175 = vrcp.pop %v2173
    %v2176 = vmul.f32 1.0, %v2175
    %v2177 = vrcp.pop %v2174
    %v2178 = vmul.f32 1.0, %v2177
    %v2179 = vmul.f32 %v2176, %v2166
    %v2180 = vadd.f32 %v2165, %v2179
    %v2181 = vtanh.pop %v2180
    %v2182 = vsub.f32 1.0, %v2178
    %v2183 = vmul.f32 %v2182, %v2181
    %v2185 = vmul.f32 %v2178, %v1837
    %v2186 = vadd.f32 %v2183, %v2185
    %2187 = vmatprep.subr.mxu0 %v1811
    %2188 = vmatpush1.msra.mxu0 %v1810
    %2189 = vmatprep.subr.mxu0 %v1806
    %2190 = vmatpush1.msra.mxu0 %v1805
    %2191 = vmatprep.subr.mxu0 %v1801
    %2192 = vmatpush1.msra.mxu0 %v1800
    %2193 = vmatprep.subr.mxu0 %v1796
    %2194 = vmatpush1.msra.mxu0 %v1795
    %2195 = vmatprep.subr.mxu0 %v1791
    %2196 = vmatpush1.msra.mxu0 %v1790
    %2197 = vmatprep.subr.mxu0 %v1786
    %2198 = vmatpush1.msra.mxu0 %v1785
    %2199 = vmatprep.subr.mxu0 %v1781
    %2200 = vmatpush1.msra.mxu0 %v1780
    %2201 = vmatprep.subr.mxu0 %v1776
    %2202 = vmatpush1.msra.mxu0 %v1775
    %2203 = vmatprep.subr.mxu0 %v1771
    %2204 = vmatpush1.msra.mxu0 %v1770
    %2205 = vmatprep.subr.mxu0 %v1766
    %2206 = vmatpush1.msra.mxu0 %v1765
    %2207 = vmatprep.subr.mxu0 %v1761
    %2208 = vmatpush1.msra.mxu0 %v1760
    %2209 = vmatprep.subr.mxu0 %v1756
    %2210 = vmatpush1.msra.mxu0 %v1755
    %2211 = vmatprep.subr.mxu0 %v1751
    %2212 = vmatpush1.msra.mxu0 %v1750
    %2213 = vmatprep.subr.mxu0 %v1746
    %2214 = vmatpush1.msra.mxu0 %v1745
    %2215 = vmatprep.subr.mxu0 %v1741
    %2216 = vmatpush1.msra.mxu0 %v1740
    %2217 = vmatprep.subr.mxu0 %v1736
    %2218 = vmatpush1.msra.mxu0 %v1735
    %2219 = vmatprep.subr.mxu0 0.0
    %2220 = vmatpush2.msra.mxu0 0.0
    %2221 = vmatprep.subr.mxu0 0.0
    %2222 = vmatpush2.msra.mxu0 0.0
    %2223 = vmatprep.subr.mxu0 0.0
    %2224 = vmatpush2.msra.mxu0 0.0
    %2225 = vmatprep.subr.mxu0 0.0
    %2226 = vmatpush2.msra.mxu0 0.0
    %2227 = vmatprep.subr.mxu0 0.0
    %2228 = vmatpush2.msra.mxu0 0.0
    %2229 = vmatprep.subr.mxu0 0.0
    %2230 = vmatpush2.msra.mxu0 0.0
    %2231 = vmatprep.subr.mxu0 0.0
    %2232 = vmatpush2.msra.mxu0 0.0
    %2233 = vmatprep.subr.mxu0 0.0
    %2234 = vmatpush2.msra.mxu0 0.0
    %2235 = vmatprep.subr.mxu0 0.0
    %2236 = vmatpush2.msra.mxu0 0.0
    %2237 = vmatprep.subr.mxu0 0.0
    %2238 = vmatpush2.msra.mxu0 0.0
    %2239 = vmatprep.subr.mxu0 0.0
    %2240 = vmatpush2.msra.mxu0 0.0
    %2241 = vmatprep.subr.mxu0 0.0
    %2242 = vmatpush2.msra.mxu0 0.0
    %2243 = vmatprep.subr.mxu0 0.0
    %2244 = vmatpush2.msra.mxu0 0.0
    %2245 = vmatprep.subr.mxu0 0.0
    %2246 = vmatpush2.msra.mxu0 0.0
    %2247 = vmatprep.subr.mxu0 0.0
    %2248 = vmatpush2.msra.mxu0 0.0
    %2249 = vmatprep.subr.mxu0 0.0
    %2250 = vmatpush2.msra.mxu0 0.0
    %2251 = vmatprep.mubr.f32.mxu0 0.0
    %2252 = vmatmul.mubr.f32.gmra.mxu0 %v2186
    %v2253 = vpop.f32.mrf.mxu0
    %v2254 = vadd.f32 0.0, %v2253
    %v2255 = vpop.f32.mrf.mxu0
    %v2256 = vadd.f32 0.0, %v2255
    %2257 = vdwg.mxu0
    %2258 = vmatprep.subr.mxu0 %v1813
    %2259 = vmatpush1.msra.mxu0 %v1812
    %2260 = vmatprep.subr.mxu0 %v1808
    %2261 = vmatpush1.msra.mxu0 %v1807
    %2262 = vmatprep.subr.mxu0 %v1803
    %2263 = vmatpush1.msra.mxu0 %v1802
    %2264 = vmatprep.subr.mxu0 %v1798
    %2265 = vmatpush1.msra.mxu0 %v1797
    %2266 = vmatprep.subr.mxu0 %v1793
    %2267 = vmatpush1.msra.mxu0 %v1792
    %2268 = vmatprep.subr.mxu0 %v1788
    %2269 = vmatpush1.msra.mxu0 %v1787
    %2270 = vmatprep.subr.mxu0 %v1783
    %2271 = vmatpush1.msra.mxu0 %v1782
    %2272 = vmatprep.subr.mxu0 %v1778
    %2273 = vmatpush1.msra.mxu0 %v1777
    %2274 = vmatprep.subr.mxu0 %v1773
    %2275 = vmatpush1.msra.mxu0 %v1772
    %2276 = vmatprep.subr.mxu0 %v1768
    %2277 = vmatpush1.msra.mxu0 %v1767
    %2278 = vmatprep.subr.mxu0 %v1763
    %2279 = vmatpush1.msra.mxu0 %v1762
    %2280 = vmatprep.subr.mxu0 %v1758
    %2281 = vmatpush1.msra.mxu0 %v1757
    %2282 = vmatprep.subr.mxu0 %v1753
    %2283 = vmatpush1.msra.mxu0 %v1752
    %2284 = vmatprep.subr.mxu0 %v1748
    %2285 = vmatpush1.msra.mxu0 %v1747
    %2286 = vmatprep.subr.mxu0 %v1743
    %2287 = vmatpush1.msra.mxu0 %v1742
    %2288 = vmatprep.subr.mxu0 %v1738
    %2289 = vmatpush1.msra.mxu0 %v1737
    %2290 = vmatprep.subr.mxu0 0.0
    %2291 = vmatpush2.msra.mxu0 0.0
    %2292 = vmatprep.subr.mxu0 0.0
    %2293 = vmatpush2.msra.mxu0 0.0
    %2294 = vmatprep.subr.mxu0 0.0
    %2295 = vmatpush2.msra.mxu0 0.0
    %2296 = vmatprep.subr.mxu0 0.0
    %2297 = vmatpush2.msra.mxu0 0.0
    %2298 = vmatprep.subr.mxu0 0.0
    %2299 = vmatpush2.msra.mxu0 0.0
    %2300 = vmatprep.subr.mxu0 0.0
    %2301 = vmatpush2.msra.mxu0 0.0
    %2302 = vmatprep.subr.mxu0 0.0
    %2303 = vmatpush2.msra.mxu0 0.0
    %2304 = vmatprep.subr.mxu0 0.0
    %2305 = vmatpush2.msra.mxu0 0.0
    %2306 = vmatprep.subr.mxu0 0.0
    %2307 = vmatpush2.msra.mxu0 0.0
    %2308 = vmatprep.subr.mxu0 0.0
    %2309 = vmatpush2.msra.mxu0 0.0
    %2310 = vmatprep.subr.mxu0 0.0
    %2311 = vmatpush2.msra.mxu0 0.0
    %2312 = vmatprep.subr.mxu0 0.0
    %2313 = vmatpush2.msra.mxu0 0.0
    %2314 = vmatprep.subr.mxu0 0.0
    %2315 = vmatpush2.msra.mxu0 0.0
    %2316 = vmatprep.subr.mxu0 0.0
    %2317 = vmatpush2.msra.mxu0 0.0
    %2318 = vmatprep.subr.mxu0 0.0
    %2319 = vmatpush2.msra.mxu0 0.0
    %2320 = vmatprep.subr.mxu0 0.0
    %2321 = vmatpush2.msra.mxu0 0.0
    %2322 = vmatprep.mubr.f32.mxu0 0.0
    %2323 = vmatmul.mubr.f32.gmra.mxu0 %v2186
    %v2324 = vpop.f32.mrf.mxu0
    %v2325 = vadd.f32 0.0, %v2324
    %v2326 = vpop.f32.mrf.mxu0
    %v2327 = vadd.f32 0.0, %v2326
    %2328 = vdwg.mxu0
    %2329 = vmatprep.subr.mxu0 0.0
    %2330 = vmatpush1.msra.mxu0 %v1814
    %2331 = vmatprep.subr.mxu0 0.0
    %2332 = vmatpush1.msra.mxu0 %v1809
    %2333 = vmatprep.subr.mxu0 0.0
    %2334 = vmatpush1.msra.mxu0 %v1804
    %2335 = vmatprep.subr.mxu0 0.0
    %2336 = vmatpush1.msra.mxu0 %v1799
    %2337 = vmatprep.subr.mxu0 0.0
    %2338 = vmatpush1.msra.mxu0 %v1794
    %2339 = vmatprep.subr.mxu0 0.0
    %2340 = vmatpush1.msra.mxu0 %v1789
    %2341 = vmatprep.subr.mxu0 0.0
    %2342 = vmatpush1.msra.mxu0 %v1784
    %2343 = vmatprep.subr.mxu0 0.0
    %2344 = vmatpush1.msra.mxu0 %v1779
    %2345 = vmatprep.subr.mxu0 0.0
    %2346 = vmatpush1.msra.mxu0 %v1774
    %2347 = vmatprep.subr.mxu0 0.0
    %2348 = vmatpush1.msra.mxu0 %v1769
    %2349 = vmatprep.subr.mxu0 0.0
    %2350 = vmatpush1.msra.mxu0 %v1764
    %2351 = vmatprep.subr.mxu0 0.0
    %2352 = vmatpush1.msra.mxu0 %v1759
    %2353 = vmatprep.subr.mxu0 0.0
    %2354 = vmatpush1.msra.mxu0 %v1754
    %2355 = vmatprep.subr.mxu0 0.0
    %2356 = vmatpush1.msra.mxu0 %v1749
    %2357 = vmatprep.subr.mxu0 0.0
    %2358 = vmatpush1.msra.mxu0 %v1744
    %2359 = vmatprep.subr.mxu0 0.0
    %2360 = vmatpush1.msra.mxu0 %v1739
    %2361 = vmatprep.subr.mxu0 0.0
    %2362 = vmatpush2.msra.mxu0 0.0
    %2363 = vmatprep.subr.mxu0 0.0
    %2364 = vmatpush2.msra.mxu0 0.0
    %2365 = vmatprep.subr.mxu0 0.0
    %2366 = vmatpush2.msra.mxu0 0.0
    %2367 = vmatprep.subr.mxu0 0.0
    %2368 = vmatpush2.msra.mxu0 0.0
    %2369 = vmatprep.subr.mxu0 0.0
    %2370 = vmatpush2.msra.mxu0 0.0
    %2371 = vmatprep.subr.mxu0 0.0
    %2372 = vmatpush2.msra.mxu0 0.0
    %2373 = vmatprep.subr.mxu0 0.0
    %2374 = vmatpush2.msra.mxu0 0.0
    %2375 = vmatprep.subr.mxu0 0.0
    %2376 = vmatpush2.msra.mxu0 0.0
    %2377 = vmatprep.subr.mxu0 0.0
    %2378 = vmatpush2.msra.mxu0 0.0
    %2379 = vmatprep.subr.mxu0 0.0
    %2380 = vmatpush2.msra.mxu0 0.0
    %2381 = vmatprep.subr.mxu0 0.0
    %2382 = vmatpush2.msra.mxu0 0.0
    %2383 = vmatprep.subr.mxu0 0.0
    %2384 = vmatpush2.msra.mxu0 0.0
    %2385 = vmatprep.subr.mxu0 0.0
    %2386 = vmatpush2.msra.mxu0 0.0
    %2387 = vmatprep.subr.mxu0 0.0
    %2388 = vmatpush2.msra.mxu0 0.0
    %2389 = vmatprep.subr.mxu0 0.0
    %2390 = vmatpush2.msra.mxu0 0.0
    %2391 = vmatprep.subr.mxu0 0.0
    %2392 = vmatpush2.msra.mxu0 0.0
    %2393 = vmatprep.mubr.f32.mxu0 0.0
    %2394 = vmatmul.mubr.f32.gmra.mxu0 %v2186
    %v2395 = vpop.f32.mrf.mxu0
    %v2396 = vadd.f32 0.0, %v2395
    %v2397 = vpop.f32.mrf.mxu0
    %2398 = vdwg.mxu0
    %v2399 = vadd.f32 %v2254, %v1650
    %2404 = vrot.lane.b32.xlu0 %v2003, 40
    %v2405 = vpop.permute.xlu0 %2404
    %2406 = vrot.lane.b32.xlu0 %v2004, 40
    %v2407 = vpop.permute.xlu0 %2406
    %2408 = vrot.lane.b32.xlu0 %v2005, 40
    %v2409 = vpop.permute.xlu0 %2408
    %2410 = vrot.lane.b32.xlu0 %v2006, 40
    %v2411 = vpop.permute.xlu0 %2410
    %v2412 = vsel %vm2013, %v2405, %v2407
    %v2413 = vsel %vm2013, %v2407, %v2409
    %v2414 = vsel %vm2013, %v2409, %v2411
    %v2420 = vadd.f32 %v2254, %v2405
    %v2421 = vadd.f32 %v2256, %v2412
    %v2422 = vadd.f32 %v2325, %v2413
    %v2423 = vadd.f32 %v2327, %v2414
    %v2424 = vadd.f32 %v2396, %v2411
    %v2425 = vxor.u32 %v2420, 2147483648
    %v2426 = vxor.u32 %v2421, 2147483648
    %v2427 = vxor.u32 %v2422, 2147483648
    %v2428 = vmul.f32 %v2425, 1.442695
    %v2429 = vpow.pop %v2428
    %v2430 = vmul.f32 %v2426, 1.442695
    %v2431 = vpow.pop %v2430
    %v2432 = vmul.f32 %v2427, 1.442695
    %v2433 = vpow.pop %v2432
    %v2434 = vadd.f32 %v2429, 1.0
    %v2435 = vadd.f32 %v2431, 1.0
    %v2436 = vadd.f32 %v2433, 1.0
    %v2437 = vrcp.pop %v2434
    %v2438 = vmul.f32 1.0, %v2437
    %v2439 = vrcp.pop %v2435
    %v2440 = vmul.f32 1.0, %v2439
    %v2441 = vrcp.pop %v2436
    %v2442 = vmul.f32 1.0, %v2441
    %v2443 = vmul.f32 %v2438, %v2423
    %v2444 = vmul.f32 %v2440, %v2424
    %v2445 = vadd.f32 %v2422, %v2443
    %v2446 = vadd.f32 %v2423, %v2444
    %v2447 = vtanh.pop %v2445
    %v2448 = vtanh.pop %v2446
    %v2449 = vsub.f32 1.0, %v2440
    %v2450 = vsub.f32 1.0, %v2442
    %v2451 = vmul.f32 %v2449, %v2447
    %v2452 = vmul.f32 %v2450, %v2448
    %2454 = vrot.lane.b32.xlu0 %v2186, 40
    %v2455 = vpop.permute.xlu0 %2454
    %v2457 = vmul.f32 %v2440, %v2455
    %v2458 = vmul.f32 %v2442, %v2455
    %v2459 = vadd.f32 %v2451, %v2457
    %v2460 = vadd.f32 %v2452, %v2458
    %2463 = vrot.lane.b32.xlu0 %v2459, 88
    %v2464 = vpop.permute.xlu0 %2463
    %2465 = vrot.lane.b32.xlu0 %v2460, 88
    %v2466 = vpop.permute.xlu0 %2465
    %vm2467 = vcmask 719872
    %v2468 = vsel %vm2467, %v2464, %v2466
    %2470 = vmatprep.subr.mxu0 %v1811
    %2471 = vmatpush1.msra.mxu0 %v1810
    %2472 = vmatprep.subr.mxu0 %v1806
    %2473 = vmatpush1.msra.mxu0 %v1805
    %2474 = vmatprep.subr.mxu0 %v1801
    %2475 = vmatpush1.msra.mxu0 %v1800
    %2476 = vmatprep.subr.mxu0 %v1796
    %2477 = vmatpush1.msra.mxu0 %v1795
    %2478 = vmatprep.subr.mxu0 %v1791
    %2479 = vmatpush1.msra.mxu0 %v1790
    %2480 = vmatprep.subr.mxu0 %v1786
    %2481 = vmatpush1.msra.mxu0 %v1785
    %2482 = vmatprep.subr.mxu0 %v1781
    %2483 = vmatpush1.msra.mxu0 %v1780
    %2484 = vmatprep.subr.mxu0 %v1776
    %2485 = vmatpush1.msra.mxu0 %v1775
    %2486 = vmatprep.subr.mxu0 %v1771
    %2487 = vmatpush1.msra.mxu0 %v1770
    %2488 = vmatprep.subr.mxu0 %v1766
    %2489 = vmatpush1.msra.mxu0 %v1765
    %2490 = vmatprep.subr.mxu0 %v1761
    %2491 = vmatpush1.msra.mxu0 %v1760
    %2492 = vmatprep.subr.mxu0 %v1756
    %2493 = vmatpush1.msra.mxu0 %v1755
    %2494 = vmatprep.subr.mxu0 %v1751
    %2495 = vmatpush1.msra.mxu0 %v1750
    %2496 = vmatprep.subr.mxu0 %v1746
    %2497 = vmatpush1.msra.mxu0 %v1745
    %2498 = vmatprep.subr.mxu0 %v1741
    %2499 = vmatpush1.msra.mxu0 %v1740
    %2500 = vmatprep.subr.mxu0 %v1736
    %2501 = vmatpush1.msra.mxu0 %v1735
    %2502 = vmatprep.subr.mxu0 0.0
    %2503 = vmatpush2.msra.mxu0 0.0
    %2504 = vmatprep.subr.mxu0 0.0
    %2505 = vmatpush2.msra.mxu0 0.0
    %2506 = vmatprep.subr.mxu0 0.0
    %2507 = vmatpush2.msra.mxu0 0.0
    %2508 = vmatprep.subr.mxu0 0.0
    %2509 = vmatpush2.msra.mxu0 0.0
    %2510 = vmatprep.subr.mxu0 0.0
    %2511 = vmatpush2.msra.mxu0 0.0
    %2512 = vmatprep.subr.mxu0 0.0
    %2513 = vmatpush2.msra.mxu0 0.0
    %2514 = vmatprep.subr.mxu0 0.0
    %2515 = vmatpush2.msra.mxu0 0.0
    %2516 = vmatprep.subr.mxu0 0.0
    %2517 = vmatpush2.msra.mxu0 0.0
    %2518 = vmatprep.subr.mxu0 0.0
    %2519 = vmatpush2.msra.mxu0 0.0
    %2520 = vmatprep.subr.mxu0 0.0
    %2521 = vmatpush2.msra.mxu0 0.0
    %2522 = vmatprep.subr.mxu0 0.0
    %2523 = vmatpush2.msra.mxu0 0.0
    %2524 = vmatprep.subr.mxu0 0.0
    %2525 = vmatpush2.msra.mxu0 0.0
    %2526 = vmatprep.subr.mxu0 0.0
    %2527 = vmatpush2.msra.mxu0 0.0
    %2528 = vmatprep.subr.mxu0 0.0
    %2529 = vmatpush2.msra.mxu0 0.0
    %2530 = vmatprep.subr.mxu0 0.0
    %2531 = vmatpush2.msra.mxu0 0.0
    %2532 = vmatprep.subr.mxu0 0.0
    %2533 = vmatpush2.msra.mxu0 0.0
    %2534 = vmatprep.mubr.f32.mxu0 0.0
    %2535 = vmatmul.mubr.f32.gmra.mxu0 %v2468
    %v2536 = vpop.f32.mrf.mxu0
    %v2537 = vadd.f32 0.0, %v2536
    %v2538 = vpop.f32.mrf.mxu0
    %v2539 = vadd.f32 0.0, %v2538
    %2540 = vdwg.mxu0
    %2541 = vmatprep.subr.mxu0 %v1813
    %2542 = vmatpush1.msra.mxu0 %v1812
    %2543 = vmatprep.subr.mxu0 %v1808
    %2544 = vmatpush1.msra.mxu0 %v1807
    %2545 = vmatprep.subr.mxu0 %v1803
    %2546 = vmatpush1.msra.mxu0 %v1802
    %2547 = vmatprep.subr.mxu0 %v1798
    %2548 = vmatpush1.msra.mxu0 %v1797
    %2549 = vmatprep.subr.mxu0 %v1793
    %2550 = vmatpush1.msra.mxu0 %v1792
    %2551 = vmatprep.subr.mxu0 %v1788
    %2552 = vmatpush1.msra.mxu0 %v1787
    %2553 = vmatprep.subr.mxu0 %v1783
    %2554 = vmatpush1.msra.mxu0 %v1782
    %2555 = vmatprep.subr.mxu0 %v1778
    %2556 = vmatpush1.msra.mxu0 %v1777
    %2557 = vmatprep.subr.mxu0 %v1773
    %2558 = vmatpush1.msra.mxu0 %v1772
    %2559 = vmatprep.subr.mxu0 %v1768
    %2560 = vmatpush1.msra.mxu0 %v1767
    %2561 = vmatprep.subr.mxu0 %v1763
    %2562 = vmatpush1.msra.mxu0 %v1762
    %2563 = vmatprep.subr.mxu0 %v1758
    %2564 = vmatpush1.msra.mxu0 %v1757
    %2565 = vmatprep.subr.mxu0 %v1753
    %2566 = vmatpush1.msra.mxu0 %v1752
    %2567 = vmatprep.subr.mxu0 %v1748
    %2568 = vmatpush1.msra.mxu0 %v1747
    %2569 = vmatprep.subr.mxu0 %v1743
    %2570 = vmatpush1.msra.mxu0 %v1742
    %2571 = vmatprep.subr.mxu0 %v1738
    %2572 = vmatpush1.msra.mxu0 %v1737
    %2573 = vmatprep.subr.mxu0 0.0
    %2574 = vmatpush2.msra.mxu0 0.0
    %2575 = vmatprep.subr.mxu0 0.0
    %2576 = vmatpush2.msra.mxu0 0.0
    %2577 = vmatprep.subr.mxu0 0.0
    %2578 = vmatpush2.msra.mxu0 0.0
    %2579 = vmatprep.subr.mxu0 0.0
    %2580 = vmatpush2.msra.mxu0 0.0
    %2581 = vmatprep.subr.mxu0 0.0
    %2582 = vmatpush2.msra.mxu0 0.0
    %2583 = vmatprep.subr.mxu0 0.0
    %2584 = vmatpush2.msra.mxu0 0.0
    %2585 = vmatprep.subr.mxu0 0.0
    %2586 = vmatpush2.msra.mxu0 0.0
    %2587 = vmatprep.subr.mxu0 0.0
    %2588 = vmatpush2.msra.mxu0 0.0
    %2589 = vmatprep.subr.mxu0 0.0
    %2590 = vmatpush2.msra.mxu0 0.0
    %2591 = vmatprep.subr.mxu0 0.0
    %2592 = vmatpush2.msra.mxu0 0.0
    %2593 = vmatprep.subr.mxu0 0.0
    %2594 = vmatpush2.msra.mxu0 0.0
    %2595 = vmatprep.subr.mxu0 0.0
    %2596 = vmatpush2.msra.mxu0 0.0
    %2597 = vmatprep.subr.mxu0 0.0
    %2598 = vmatpush2.msra.mxu0 0.0
    %2599 = vmatprep.subr.mxu0 0.0
    %2600 = vmatpush2.msra.mxu0 0.0
    %2601 = vmatprep.subr.mxu0 0.0
    %2602 = vmatpush2.msra.mxu0 0.0
    %2603 = vmatprep.subr.mxu0 0.0
    %2604 = vmatpush2.msra.mxu0 0.0
    %2605 = vmatprep.mubr.f32.mxu0 0.0
    %2606 = vmatmul.mubr.f32.gmra.mxu0 %v2468
    %v2607 = vpop.f32.mrf.mxu0
    %v2608 = vadd.f32 0.0, %v2607
    %v2609 = vpop.f32.mrf.mxu0
    %v2610 = vadd.f32 0.0, %v2609
    %2611 = vdwg.mxu0
    %2612 = vmatprep.subr.mxu0 0.0
    %2613 = vmatpush1.msra.mxu0 %v1814
    %2614 = vmatprep.subr.mxu0 0.0
    %2615 = vmatpush1.msra.mxu0 %v1809
    %2616 = vmatprep.subr.mxu0 0.0
    %2617 = vmatpush1.msra.mxu0 %v1804
    %2618 = vmatprep.subr.mxu0 0.0
    %2619 = vmatpush1.msra.mxu0 %v1799
    %2620 = vmatprep.subr.mxu0 0.0
    %2621 = vmatpush1.msra.mxu0 %v1794
    %2622 = vmatprep.subr.mxu0 0.0
    %2623 = vmatpush1.msra.mxu0 %v1789
    %2624 = vmatprep.subr.mxu0 0.0
    %2625 = vmatpush1.msra.mxu0 %v1784
    %2626 = vmatprep.subr.mxu0 0.0
    %2627 = vmatpush1.msra.mxu0 %v1779
    %2628 = vmatprep.subr.mxu0 0.0
    %2629 = vmatpush1.msra.mxu0 %v1774
    %2630 = vmatprep.subr.mxu0 0.0
    %2631 = vmatpush1.msra.mxu0 %v1769
    %2632 = vmatprep.subr.mxu0 0.0
    %2633 = vmatpush1.msra.mxu0 %v1764
    %2634 = vmatprep.subr.mxu0 0.0
    %2635 = vmatpush1.msra.mxu0 %v1759
    %2636 = vmatprep.subr.mxu0 0.0
    %2637 = vmatpush1.msra.mxu0 %v1754
    %2638 = vmatprep.subr.mxu0 0.0
    %2639 = vmatpush1.msra.mxu0 %v1749
    %2640 = vmatprep.subr.mxu0 0.0
    %2641 = vmatpush1.msra.mxu0 %v1744
    %2642 = vmatprep.subr.mxu0 0.0
    %2643 = vmatpush1.msra.mxu0 %v1739
    %2644 = vmatprep.subr.mxu0 0.0
    %2645 = vmatpush2.msra.mxu0 0.0
    %2646 = vmatprep.subr.mxu0 0.0
    %2647 = vmatpush2.msra.mxu0 0.0
    %2648 = vmatprep.subr.mxu0 0.0
    %2649 = vmatpush2.msra.mxu0 0.0
    %2650 = vmatprep.subr.mxu0 0.0
    %2651 = vmatpush2.msra.mxu0 0.0
    %2652 = vmatprep.subr.mxu0 0.0
    %2653 = vmatpush2.msra.mxu0 0.0
    %2654 = vmatprep.subr.mxu0 0.0
    %2655 = vmatpush2.msra.mxu0 0.0
    %2656 = vmatprep.subr.mxu0 0.0
    %2657 = vmatpush2.msra.mxu0 0.0
    %2658 = vmatprep.subr.mxu0 0.0
    %2659 = vmatpush2.msra.mxu0 0.0
    %2660 = vmatprep.subr.mxu0 0.0
    %2661 = vmatpush2.msra.mxu0 0.0
    %2662 = vmatprep.subr.mxu0 0.0
    %2663 = vmatpush2.msra.mxu0 0.0
    %2664 = vmatprep.subr.mxu0 0.0
    %2665 = vmatpush2.msra.mxu0 0.0
    %2666 = vmatprep.subr.mxu0 0.0
    %2667 = vmatpush2.msra.mxu0 0.0
    %2668 = vmatprep.subr.mxu0 0.0
    %2669 = vmatpush2.msra.mxu0 0.0
    %2670 = vmatprep.subr.mxu0 0.0
    %2671 = vmatpush2.msra.mxu0 0.0
    %2672 = vmatprep.subr.mxu0 0.0
    %2673 = vmatpush2.msra.mxu0 0.0
    %2674 = vmatprep.subr.mxu0 0.0
    %2675 = vmatpush2.msra.mxu0 0.0
    %2676 = vmatprep.mubr.f32.mxu0 0.0
    %2677 = vmatmul.mubr.f32.gmra.mxu0 %v2468
    %v2678 = vpop.f32.mrf.mxu0
    %v2679 = vadd.f32 0.0, %v2678
    %v2680 = vpop.f32.mrf.mxu0
    %2681 = vdwg.mxu0
    %v2682 = vadd.f32 %v2537, %v1650
    %v2683 = vadd.f32 %v2537, %v2405
    %v2684 = vadd.f32 %v2539, %v2412
    %v2685 = vadd.f32 %v2608, %v2413
    %v2686 = vadd.f32 %v2610, %v2414
    %v2687 = vadd.f32 %v2679, %v2411
    %v2688 = vxor.u32 %v2683, 2147483648
    %v2689 = vxor.u32 %v2684, 2147483648
    %v2690 = vxor.u32 %v2685, 2147483648
    %v2691 = vmul.f32 %v2688, 1.442695
    %v2692 = vpow.pop %v2691
    %v2693 = vmul.f32 %v2689, 1.442695
    %v2694 = vpow.pop %v2693
    %v2695 = vmul.f32 %v2690, 1.442695
    %v2696 = vpow.pop %v2695
    %v2697 = vadd.f32 %v2692, 1.0
    %v2698 = vadd.f32 %v2694, 1.0
    %v2699 = vadd.f32 %v2696, 1.0
    %v2700 = vrcp.pop %v2697
    %v2701 = vmul.f32 1.0, %v2700
    %v2702 = vrcp.pop %v2698
    %v2703 = vmul.f32 1.0, %v2702
    %v2704 = vrcp.pop %v2699
    %v2705 = vmul.f32 1.0, %v2704
    %v2706 = vmul.f32 %v2701, %v2686
    %v2707 = vmul.f32 %v2703, %v2687
    %v2708 = vadd.f32 %v2685, %v2706
    %v2709 = vadd.f32 %v2686, %v2707
    %v2710 = vtanh.pop %v2708
    %v2711 = vtanh.pop %v2709
    %v2712 = vsub.f32 1.0, %v2703
    %v2713 = vsub.f32 1.0, %v2705
    %v2714 = vmul.f32 %v2712, %v2710
    %v2715 = vmul.f32 %v2713, %v2711
    %v2716 = vmul.f32 %v2703, %v2459
    %v2717 = vmul.f32 %v2705, %v2460
    %v2718 = vadd.f32 %v2714, %v2716
    %v2719 = vadd.f32 %v2715, %v2717
    %2722 = vrot.lane.b32.xlu0 %v2718, 88
    %v2723 = vpop.permute.xlu0 %2722
    %2724 = vrot.lane.b32.xlu0 %v2719, 88
    %v2725 = vpop.permute.xlu0 %2724
    %v2726 = vsel %vm2467, %v2723, %v2725
    %2728 = vmatprep.subr.mxu0 %v1811
    %2729 = vmatpush1.msra.mxu0 %v1810
    %2730 = vmatprep.subr.mxu0 %v1806
    %2731 = vmatpush1.msra.mxu0 %v1805
    %2732 = vmatprep.subr.mxu0 %v1801
    %2733 = vmatpush1.msra.mxu0 %v1800
    %2734 = vmatprep.subr.mxu0 %v1796
    %2735 = vmatpush1.msra.mxu0 %v1795
    %2736 = vmatprep.subr.mxu0 %v1791
    %2737 = vmatpush1.msra.mxu0 %v1790
    %2738 = vmatprep.subr.mxu0 %v1786
    %2739 = vmatpush1.msra.mxu0 %v1785
    %2740 = vmatprep.subr.mxu0 %v1781
    %2741 = vmatpush1.msra.mxu0 %v1780
    %2742 = vmatprep.subr.mxu0 %v1776
    %2743 = vmatpush1.msra.mxu0 %v1775
    %2744 = vmatprep.subr.mxu0 %v1771
    %2745 = vmatpush1.msra.mxu0 %v1770
    %2746 = vmatprep.subr.mxu0 %v1766
    %2747 = vmatpush1.msra.mxu0 %v1765
    %2748 = vmatprep.subr.mxu0 %v1761
    %2749 = vmatpush1.msra.mxu0 %v1760
    %2750 = vmatprep.subr.mxu0 %v1756
    %2751 = vmatpush1.msra.mxu0 %v1755
    %2752 = vmatprep.subr.mxu0 %v1751
    %2753 = vmatpush1.msra.mxu0 %v1750
    %2754 = vmatprep.subr.mxu0 %v1746
    %2755 = vmatpush1.msra.mxu0 %v1745
    %2756 = vmatprep.subr.mxu0 %v1741
    %2757 = vmatpush1.msra.mxu0 %v1740
    %2758 = vmatprep.subr.mxu0 %v1736
    %2759 = vmatpush1.msra.mxu0 %v1735
    %2760 = vmatprep.subr.mxu0 0.0
    %2761 = vmatpush2.msra.mxu0 0.0
    %2762 = vmatprep.subr.mxu0 0.0
    %2763 = vmatpush2.msra.mxu0 0.0
    %2764 = vmatprep.subr.mxu0 0.0
    %2765 = vmatpush2.msra.mxu0 0.0
    %2766 = vmatprep.subr.mxu0 0.0
    %2767 = vmatpush2.msra.mxu0 0.0
    %2768 = vmatprep.subr.mxu0 0.0
    %2769 = vmatpush2.msra.mxu0 0.0
    %2770 = vmatprep.subr.mxu0 0.0
    %2771 = vmatpush2.msra.mxu0 0.0
    %2772 = vmatprep.subr.mxu0 0.0
    %2773 = vmatpush2.msra.mxu0 0.0
    %2774 = vmatprep.subr.mxu0 0.0
    %2775 = vmatpush2.msra.mxu0 0.0
    %2776 = vmatprep.subr.mxu0 0.0
    %2777 = vmatpush2.msra.mxu0 0.0
    %2778 = vmatprep.subr.mxu0 0.0
    %2779 = vmatpush2.msra.mxu0 0.0
    %2780 = vmatprep.subr.mxu0 0.0
    %2781 = vmatpush2.msra.mxu0 0.0
    %2782 = vmatprep.subr.mxu0 0.0
    %2783 = vmatpush2.msra.mxu0 0.0
    %2784 = vmatprep.subr.mxu0 0.0
    %2785 = vmatpush2.msra.mxu0 0.0
    %2786 = vmatprep.subr.mxu0 0.0
    %2787 = vmatpush2.msra.mxu0 0.0
    %2788 = vmatprep.subr.mxu0 0.0
    %2789 = vmatpush2.msra.mxu0 0.0
    %2790 = vmatprep.subr.mxu0 0.0
    %2791 = vmatpush2.msra.mxu0 0.0
    %2792 = vmatprep.mubr.f32.mxu0 0.0
    %2793 = vmatmul.mubr.f32.gmra.mxu0 %v2726
    %v2794 = vpop.f32.mrf.mxu0
    %v2795 = vadd.f32 0.0, %v2794
    %v2796 = vpop.f32.mrf.mxu0
    %v2797 = vadd.f32 0.0, %v2796
    %2798 = vdwg.mxu0
    %2799 = vmatprep.subr.mxu0 %v1813
    %2800 = vmatpush1.msra.mxu0 %v1812
    %2801 = vmatprep.subr.mxu0 %v1808
    %2802 = vmatpush1.msra.mxu0 %v1807
    %2803 = vmatprep.subr.mxu0 %v1803
    %2804 = vmatpush1.msra.mxu0 %v1802
    %2805 = vmatprep.subr.mxu0 %v1798
    %2806 = vmatpush1.msra.mxu0 %v1797
    %2807 = vmatprep.subr.mxu0 %v1793
    %2808 = vmatpush1.msra.mxu0 %v1792
    %2809 = vmatprep.subr.mxu0 %v1788
    %2810 = vmatpush1.msra.mxu0 %v1787
    %2811 = vmatprep.subr.mxu0 %v1783
    %2812 = vmatpush1.msra.mxu0 %v1782
    %2813 = vmatprep.subr.mxu0 %v1778
    %2814 = vmatpush1.msra.mxu0 %v1777
    %2815 = vmatprep.subr.mxu0 %v1773
    %2816 = vmatpush1.msra.mxu0 %v1772
    %2817 = vmatprep.subr.mxu0 %v1768
    %2818 = vmatpush1.msra.mxu0 %v1767
    %2819 = vmatprep.subr.mxu0 %v1763
    %2820 = vmatpush1.msra.mxu0 %v1762
    %2821 = vmatprep.subr.mxu0 %v1758
    %2822 = vmatpush1.msra.mxu0 %v1757
    %2823 = vmatprep.subr.mxu0 %v1753
    %2824 = vmatpush1.msra.mxu0 %v1752
    %2825 = vmatprep.subr.mxu0 %v1748
    %2826 = vmatpush1.msra.mxu0 %v1747
    %2827 = vmatprep.subr.mxu0 %v1743
    %2828 = vmatpush1.msra.mxu0 %v1742
    %2829 = vmatprep.subr.mxu0 %v1738
    %2830 = vmatpush1.msra.mxu0 %v1737
    %2831 = vmatprep.subr.mxu0 0.0
    %2832 = vmatpush2.msra.mxu0 0.0
    %2833 = vmatprep.subr.mxu0 0.0
    %2834 = vmatpush2.msra.mxu0 0.0
    %2835 = vmatprep.subr.mxu0 0.0
    %2836 = vmatpush2.msra.mxu0 0.0
    %2837 = vmatprep.subr.mxu0 0.0
    %2838 = vmatpush2.msra.mxu0 0.0
    %2839 = vmatprep.subr.mxu0 0.0
    %2840 = vmatpush2.msra.mxu0 0.0
    %2841 = vmatprep.subr.mxu0 0.0
    %2842 = vmatpush2.msra.mxu0 0.0
    %2843 = vmatprep.subr.mxu0 0.0
    %2844 = vmatpush2.msra.mxu0 0.0
    %2845 = vmatprep.subr.mxu0 0.0
    %2846 = vmatpush2.msra.mxu0 0.0
    %2847 = vmatprep.subr.mxu0 0.0
    %2848 = vmatpush2.msra.mxu0 0.0
    %2849 = vmatprep.subr.mxu0 0.0
    %2850 = vmatpush2.msra.mxu0 0.0
    %2851 = vmatprep.subr.mxu0 0.0
    %2852 = vmatpush2.msra.mxu0 0.0
    %2853 = vmatprep.subr.mxu0 0.0
    %2854 = vmatpush2.msra.mxu0 0.0
    %2855 = vmatprep.subr.mxu0 0.0
    %2856 = vmatpush2.msra.mxu0 0.0
    %2857 = vmatprep.subr.mxu0 0.0
    %2858 = vmatpush2.msra.mxu0 0.0
    %2859 = vmatprep.subr.mxu0 0.0
    %2860 = vmatpush2.msra.mxu0 0.0
    %2861 = vmatprep.subr.mxu0 0.0
    %2862 = vmatpush2.msra.mxu0 0.0
    %2863 = vmatprep.mubr.f32.mxu0 0.0
    %2864 = vmatmul.mubr.f32.gmra.mxu0 %v2726
    %v2865 = vpop.f32.mrf.mxu0
    %v2866 = vadd.f32 0.0, %v2865
    %v2867 = vpop.f32.mrf.mxu0
    %v2868 = vadd.f32 0.0, %v2867
    %2869 = vdwg.mxu0
    %2870 = vmatprep.subr.mxu0 0.0
    %2871 = vmatpush1.msra.mxu0 %v1814
    %2872 = vmatprep.subr.mxu0 0.0
    %2873 = vmatpush1.msra.mxu0 %v1809
    %2874 = vmatprep.subr.mxu0 0.0
    %2875 = vmatpush1.msra.mxu0 %v1804
    %2876 = vmatprep.subr.mxu0 0.0
    %2877 = vmatpush1.msra.mxu0 %v1799
    %2878 = vmatprep.subr.mxu0 0.0
    %2879 = vmatpush1.msra.mxu0 %v1794
    %2880 = vmatprep.subr.mxu0 0.0
    %2881 = vmatpush1.msra.mxu0 %v1789
    %2882 = vmatprep.subr.mxu0 0.0
    %2883 = vmatpush1.msra.mxu0 %v1784
    %2884 = vmatprep.subr.mxu0 0.0
    %2885 = vmatpush1.msra.mxu0 %v1779
    %2886 = vmatprep.subr.mxu0 0.0
    %2887 = vmatpush1.msra.mxu0 %v1774
    %2888 = vmatprep.subr.mxu0 0.0
    %2889 = vmatpush1.msra.mxu0 %v1769
    %2890 = vmatprep.subr.mxu0 0.0
    %2891 = vmatpush1.msra.mxu0 %v1764
    %2892 = vmatprep.subr.mxu0 0.0
    %2893 = vmatpush1.msra.mxu0 %v1759
    %2894 = vmatprep.subr.mxu0 0.0
    %2895 = vmatpush1.msra.mxu0 %v1754
    %2896 = vmatprep.subr.mxu0 0.0
    %2897 = vmatpush1.msra.mxu0 %v1749
    %2898 = vmatprep.subr.mxu0 0.0
    %2899 = vmatpush1.msra.mxu0 %v1744
    %2900 = vmatprep.subr.mxu0 0.0
    %2901 = vmatpush1.msra.mxu0 %v1739
    %2902 = vmatprep.subr.mxu0 0.0
    %2903 = vmatpush2.msra.mxu0 0.0
    %2904 = vmatprep.subr.mxu0 0.0
    %2905 = vmatpush2.msra.mxu0 0.0
    %2906 = vmatprep.subr.mxu0 0.0
    %2907 = vmatpush2.msra.mxu0 0.0
    %2908 = vmatprep.subr.mxu0 0.0
    %2909 = vmatpush2.msra.mxu0 0.0
    %2910 = vmatprep.subr.mxu0 0.0
    %2911 = vmatpush2.msra.mxu0 0.0
    %2912 = vmatprep.subr.mxu0 0.0
    %2913 = vmatpush2.msra.mxu0 0.0
    %2914 = vmatprep.subr.mxu0 0.0
    %2915 = vmatpush2.msra.mxu0 0.0
    %2916 = vmatprep.subr.mxu0 0.0
    %2917 = vmatpush2.msra.mxu0 0.0
    %2918 = vmatprep.subr.mxu0 0.0
    %2919 = vmatpush2.msra.mxu0 0.0
    %2920 = vmatprep.subr.mxu0 0.0
    %2921 = vmatpush2.msra.mxu0 0.0
    %2922 = vmatprep.subr.mxu0 0.0
    %2923 = vmatpush2.msra.mxu0 0.0
    %2924 = vmatprep.subr.mxu0 0.0
    %2925 = vmatpush2.msra.mxu0 0.0
    %2926 = vmatprep.subr.mxu0 0.0
    %2927 = vmatpush2.msra.mxu0 0.0
    %2928 = vmatprep.subr.mxu0 0.0
    %2929 = vmatpush2.msra.mxu0 0.0
    %2930 = vmatprep.subr.mxu0 0.0
    %2931 = vmatpush2.msra.mxu0 0.0
    %2932 = vmatprep.subr.mxu0 0.0
    %2933 = vmatpush2.msra.mxu0 0.0
    %2934 = vmatprep.mubr.f32.mxu0 0.0
    %2935 = vmatmul.mubr.f32.gmra.mxu0 %v2726
    %v2936 = vpop.f32.mrf.mxu0
    %v2937 = vadd.f32 0.0, %v2936
    %v2938 = vpop.f32.mrf.mxu0
    %2939 = vdwg.mxu0
    %v2940 = vadd.f32 %v2795, %v1650
    %v2941 = vadd.f32 %v2795, %v2405
    %v2942 = vadd.f32 %v2797, %v2412
    %v2943 = vadd.f32 %v2866, %v2413
    %v2944 = vadd.f32 %v2868, %v2414
    %v2945 = vadd.f32 %v2937, %v2411
    %v2946 = vxor.u32 %v2941, 2147483648
    %v2947 = vxor.u32 %v2942, 2147483648
    %v2948 = vxor.u32 %v2943, 2147483648
    %v2949 = vmul.f32 %v2946, 1.442695
    %v2950 = vpow.pop %v2949
    %v2951 = vmul.f32 %v2947, 1.442695
    %v2952 = vpow.pop %v2951
    %v2953 = vmul.f32 %v2948, 1.442695
    %v2954 = vpow.pop %v2953
    %v2955 = vadd.f32 %v2950, 1.0
    %v2956 = vadd.f32 %v2952, 1.0
    %v2957 = vadd.f32 %v2954, 1.0
    %v2958 = vrcp.pop %v2955
    %v2959 = vmul.f32 1.0, %v2958
    %v2960 = vrcp.pop %v2956
    %v2961 = vmul.f32 1.0, %v2960
    %v2962 = vrcp.pop %v2957
    %v2963 = vmul.f32 1.0, %v2962
    %v2964 = vmul.f32 %v2959, %v2944
    %v2965 = vmul.f32 %v2961, %v2945
    %v2966 = vadd.f32 %v2943, %v2964
    %v2967 = vadd.f32 %v2944, %v2965
    %v2968 = vtanh.pop %v2966
    %v2969 = vtanh.pop %v2967
    %v2970 = vsub.f32 1.0, %v2961
    %v2971 = vsub.f32 1.0, %v2963
    %v2972 = vmul.f32 %v2970, %v2968
    %v2973 = vmul.f32 %v2971, %v2969
    %v2974 = vmul.f32 %v2961, %v2718
    %v2975 = vmul.f32 %v2963, %v2719
    %v2976 = vadd.f32 %v2972, %v2974
    %v2977 = vadd.f32 %v2973, %v2975
    %2980 = vrot.lane.b32.xlu0 %v2976, 88
    %v2981 = vpop.permute.xlu0 %2980
    %2982 = vrot.lane.b32.xlu0 %v2977, 88
    %v2983 = vpop.permute.xlu0 %2982
    %v2984 = vsel %vm2467, %v2981, %v2983
    %2986 = vmatprep.subr.mxu0 %v1811
    %2987 = vmatpush1.msra.mxu0 %v1810
    %2988 = vmatprep.subr.mxu0 %v1806
    %2989 = vmatpush1.msra.mxu0 %v1805
    %2990 = vmatprep.subr.mxu0 %v1801
    %2991 = vmatpush1.msra.mxu0 %v1800
    %2992 = vmatprep.subr.mxu0 %v1796
    %2993 = vmatpush1.msra.mxu0 %v1795
    %2994 = vmatprep.subr.mxu0 %v1791
    %2995 = vmatpush1.msra.mxu0 %v1790
    %2996 = vmatprep.subr.mxu0 %v1786
    %2997 = vmatpush1.msra.mxu0 %v1785
    %2998 = vmatprep.subr.mxu0 %v1781
    %2999 = vmatpush1.msra.mxu0 %v1780
    %3000 = vmatprep.subr.mxu0 %v1776
    %3001 = vmatpush1.msra.mxu0 %v1775
    %3002 = vmatprep.subr.mxu0 %v1771
    %3003 = vmatpush1.msra.mxu0 %v1770
    %3004 = vmatprep.subr.mxu0 %v1766
    %3005 = vmatpush1.msra.mxu0 %v1765
    %3006 = vmatprep.subr.mxu0 %v1761
    %3007 = vmatpush1.msra.mxu0 %v1760
    %3008 = vmatprep.subr.mxu0 %v1756
    %3009 = vmatpush1.msra.mxu0 %v1755
    %3010 = vmatprep.subr.mxu0 %v1751
    %3011 = vmatpush1.msra.mxu0 %v1750
    %3012 = vmatprep.subr.mxu0 %v1746
    %3013 = vmatpush1.msra.mxu0 %v1745
    %3014 = vmatprep.subr.mxu0 %v1741
    %3015 = vmatpush1.msra.mxu0 %v1740
    %3016 = vmatprep.subr.mxu0 %v1736
    %3017 = vmatpush1.msra.mxu0 %v1735
    %3018 = vmatprep.subr.mxu0 0.0
    %3019 = vmatpush2.msra.mxu0 0.0
    %3020 = vmatprep.subr.mxu0 0.0
    %3021 = vmatpush2.msra.mxu0 0.0
    %3022 = vmatprep.subr.mxu0 0.0
    %3023 = vmatpush2.msra.mxu0 0.0
    %3024 = vmatprep.subr.mxu0 0.0
    %3025 = vmatpush2.msra.mxu0 0.0
    %3026 = vmatprep.subr.mxu0 0.0
    %3027 = vmatpush2.msra.mxu0 0.0
    %3028 = vmatprep.subr.mxu0 0.0
    %3029 = vmatpush2.msra.mxu0 0.0
    %3030 = vmatprep.subr.mxu0 0.0
    %3031 = vmatpush2.msra.mxu0 0.0
    %3032 = vmatprep.subr.mxu0 0.0
    %3033 = vmatpush2.msra.mxu0 0.0
    %3034 = vmatprep.subr.mxu0 0.0
    %3035 = vmatpush2.msra.mxu0 0.0
    %3036 = vmatprep.subr.mxu0 0.0
    %3037 = vmatpush2.msra.mxu0 0.0
    %3038 = vmatprep.subr.mxu0 0.0
    %3039 = vmatpush2.msra.mxu0 0.0
    %3040 = vmatprep.subr.mxu0 0.0
    %3041 = vmatpush2.msra.mxu0 0.0
    %3042 = vmatprep.subr.mxu0 0.0
    %3043 = vmatpush2.msra.mxu0 0.0
    %3044 = vmatprep.subr.mxu0 0.0
    %3045 = vmatpush2.msra.mxu0 0.0
    %3046 = vmatprep.subr.mxu0 0.0
    %3047 = vmatpush2.msra.mxu0 0.0
    %3048 = vmatprep.subr.mxu0 0.0
    %3049 = vmatpush2.msra.mxu0 0.0
    %3050 = vmatprep.mubr.f32.mxu0 0.0
    %3051 = vmatmul.mubr.f32.gmra.mxu0 %v2984
    %v3052 = vpop.f32.mrf.mxu0
    %v3053 = vadd.f32 0.0, %v3052
    %v3054 = vpop.f32.mrf.mxu0
    %v3055 = vadd.f32 0.0, %v3054
    %3056 = vdwg.mxu0
    %3057 = vmatprep.subr.mxu0 %v1813
    %3058 = vmatpush1.msra.mxu0 %v1812
    %3059 = vmatprep.subr.mxu0 %v1808
    %3060 = vmatpush1.msra.mxu0 %v1807
    %3061 = vmatprep.subr.mxu0 %v1803
    %3062 = vmatpush1.msra.mxu0 %v1802
    %3063 = vmatprep.subr.mxu0 %v1798
    %3064 = vmatpush1.msra.mxu0 %v1797
    %3065 = vmatprep.subr.mxu0 %v1793
    %3066 = vmatpush1.msra.mxu0 %v1792
    %3067 = vmatprep.subr.mxu0 %v1788
    %3068 = vmatpush1.msra.mxu0 %v1787
    %3069 = vmatprep.subr.mxu0 %v1783
    %3070 = vmatpush1.msra.mxu0 %v1782
    %3071 = vmatprep.subr.mxu0 %v1778
    %3072 = vmatpush1.msra.mxu0 %v1777
    %3073 = vmatprep.subr.mxu0 %v1773
    %3074 = vmatpush1.msra.mxu0 %v1772
    %3075 = vmatprep.subr.mxu0 %v1768
    %3076 = vmatpush1.msra.mxu0 %v1767
    %3077 = vmatprep.subr.mxu0 %v1763
    %3078 = vmatpush1.msra.mxu0 %v1762
    %3079 = vmatprep.subr.mxu0 %v1758
    %3080 = vmatpush1.msra.mxu0 %v1757
    %3081 = vmatprep.subr.mxu0 %v1753
    %3082 = vmatpush1.msra.mxu0 %v1752
    %3083 = vmatprep.subr.mxu0 %v1748
    %3084 = vmatpush1.msra.mxu0 %v1747
    %3085 = vmatprep.subr.mxu0 %v1743
    %3086 = vmatpush1.msra.mxu0 %v1742
    %3087 = vmatprep.subr.mxu0 %v1738
    %3088 = vmatpush1.msra.mxu0 %v1737
    %3089 = vmatprep.subr.mxu0 0.0
    %3090 = vmatpush2.msra.mxu0 0.0
    %3091 = vmatprep.subr.mxu0 0.0
    %3092 = vmatpush2.msra.mxu0 0.0
    %3093 = vmatprep.subr.mxu0 0.0
    %3094 = vmatpush2.msra.mxu0 0.0
    %3095 = vmatprep.subr.mxu0 0.0
    %3096 = vmatpush2.msra.mxu0 0.0
    %3097 = vmatprep.subr.mxu0 0.0
    %3098 = vmatpush2.msra.mxu0 0.0
    %3099 = vmatprep.subr.mxu0 0.0
    %3100 = vmatpush2.msra.mxu0 0.0
    %3101 = vmatprep.subr.mxu0 0.0
    %3102 = vmatpush2.msra.mxu0 0.0
    %3103 = vmatprep.subr.mxu0 0.0
    %3104 = vmatpush2.msra.mxu0 0.0
    %3105 = vmatprep.subr.mxu0 0.0
    %3106 = vmatpush2.msra.mxu0 0.0
    %3107 = vmatprep.subr.mxu0 0.0
    %3108 = vmatpush2.msra.mxu0 0.0
    %3109 = vmatprep.subr.mxu0 0.0
    %3110 = vmatpush2.msra.mxu0 0.0
    %3111 = vmatprep.subr.mxu0 0.0
    %3112 = vmatpush2.msra.mxu0 0.0
    %3113 = vmatprep.subr.mxu0 0.0
    %3114 = vmatpush2.msra.mxu0 0.0
    %3115 = vmatprep.subr.mxu0 0.0
    %3116 = vmatpush2.msra.mxu0 0.0
    %3117 = vmatprep.subr.mxu0 0.0
    %3118 = vmatpush2.msra.mxu0 0.0
    %3119 = vmatprep.subr.mxu0 0.0
    %3120 = vmatpush2.msra.mxu0 0.0
    %3121 = vmatprep.mubr.f32.mxu0 0.0
    %3122 = vmatmul.mubr.f32.gmra.mxu0 %v2984
    %v3123 = vpop.f32.mrf.mxu0
    %v3124 = vadd.f32 0.0, %v3123
    %v3125 = vpop.f32.mrf.mxu0
    %v3126 = vadd.f32 0.0, %v3125
    %3127 = vdwg.mxu0
    %3128 = vmatprep.subr.mxu0 0.0
    %3129 = vmatpush1.msra.mxu0 %v1814
    %3130 = vmatprep.subr.mxu0 0.0
    %3131 = vmatpush1.msra.mxu0 %v1809
    %3132 = vmatprep.subr.mxu0 0.0
    %3133 = vmatpush1.msra.mxu0 %v1804
    %3134 = vmatprep.subr.mxu0 0.0
    %3135 = vmatpush1.msra.mxu0 %v1799
    %3136 = vmatprep.subr.mxu0 0.0
    %3137 = vmatpush1.msra.mxu0 %v1794
    %3138 = vmatprep.subr.mxu0 0.0
    %3139 = vmatpush1.msra.mxu0 %v1789
    %3140 = vmatprep.subr.mxu0 0.0
    %3141 = vmatpush1.msra.mxu0 %v1784
    %3142 = vmatprep.subr.mxu0 0.0
    %3143 = vmatpush1.msra.mxu0 %v1779
    %3144 = vmatprep.subr.mxu0 0.0
    %3145 = vmatpush1.msra.mxu0 %v1774
    %3146 = vmatprep.subr.mxu0 0.0
    %3147 = vmatpush1.msra.mxu0 %v1769
    %3148 = vmatprep.subr.mxu0 0.0
    %3149 = vmatpush1.msra.mxu0 %v1764
    %3150 = vmatprep.subr.mxu0 0.0
    %3151 = vmatpush1.msra.mxu0 %v1759
    %3152 = vmatprep.subr.mxu0 0.0
    %3153 = vmatpush1.msra.mxu0 %v1754
    %3154 = vmatprep.subr.mxu0 0.0
    %3155 = vmatpush1.msra.mxu0 %v1749
    %3156 = vmatprep.subr.mxu0 0.0
    %3157 = vmatpush1.msra.mxu0 %v1744
    %3158 = vmatprep.subr.mxu0 0.0
    %3159 = vmatpush1.msra.mxu0 %v1739
    %3160 = vmatprep.subr.mxu0 0.0
    %3161 = vmatpush2.msra.mxu0 0.0
    %3162 = vmatprep.subr.mxu0 0.0
    %3163 = vmatpush2.msra.mxu0 0.0
    %3164 = vmatprep.subr.mxu0 0.0
    %3165 = vmatpush2.msra.mxu0 0.0
    %3166 = vmatprep.subr.mxu0 0.0
    %3167 = vmatpush2.msra.mxu0 0.0
    %3168 = vmatprep.subr.mxu0 0.0
    %3169 = vmatpush2.msra.mxu0 0.0
    %3170 = vmatprep.subr.mxu0 0.0
    %3171 = vmatpush2.msra.mxu0 0.0
    %3172 = vmatprep.subr.mxu0 0.0
    %3173 = vmatpush2.msra.mxu0 0.0
    %3174 = vmatprep.subr.mxu0 0.0
    %3175 = vmatpush2.msra.mxu0 0.0
    %3176 = vmatprep.subr.mxu0 0.0
    %3177 = vmatpush2.msra.mxu0 0.0
    %3178 = vmatprep.subr.mxu0 0.0
    %3179 = vmatpush2.msra.mxu0 0.0
    %3180 = vmatprep.subr.mxu0 0.0
    %3181 = vmatpush2.msra.mxu0 0.0
    %3182 = vmatprep.subr.mxu0 0.0
    %3183 = vmatpush2.msra.mxu0 0.0
    %3184 = vmatprep.subr.mxu0 0.0
    %3185 = vmatpush2.msra.mxu0 0.0
    %3186 = vmatprep.subr.mxu0 0.0
    %3187 = vmatpush2.msra.mxu0 0.0
    %3188 = vmatprep.subr.mxu0 0.0
    %3189 = vmatpush2.msra.mxu0 0.0
    %3190 = vmatprep.subr.mxu0 0.0
    %3191 = vmatpush2.msra.mxu0 0.0
    %3192 = vmatprep.mubr.f32.mxu0 0.0
    %3193 = vmatmul.mubr.f32.gmra.mxu0 %v2984
    %v3194 = vpop.f32.mrf.mxu0
    %v3195 = vadd.f32 0.0, %v3194
    %v3196 = vpop.f32.mrf.mxu0
    %3197 = vdwg.mxu0
    %v3198 = vadd.f32 %v3053, %v1650
    %v3199 = vadd.f32 %v3053, %v2405
    %v3200 = vadd.f32 %v3055, %v2412
    %v3201 = vadd.f32 %v3124, %v2413
    %v3202 = vadd.f32 %v3126, %v2414
    %v3203 = vadd.f32 %v3195, %v2411
    %v3204 = vxor.u32 %v3199, 2147483648
    %v3205 = vxor.u32 %v3200, 2147483648
    %v3206 = vxor.u32 %v3201, 2147483648
    %v3207 = vmul.f32 %v3204, 1.442695
    %v3208 = vpow.pop %v3207
    %v3209 = vmul.f32 %v3205, 1.442695
    %v3210 = vpow.pop %v3209
    %v3211 = vmul.f32 %v3206, 1.442695
    %v3212 = vpow.pop %v3211
    %v3213 = vadd.f32 %v3208, 1.0
    %v3214 = vadd.f32 %v3210, 1.0
    %v3215 = vadd.f32 %v3212, 1.0
    %v3216 = vrcp.pop %v3213
    %v3217 = vmul.f32 1.0, %v3216
    %v3218 = vrcp.pop %v3214
    %v3219 = vmul.f32 1.0, %v3218
    %v3220 = vrcp.pop %v3215
    %v3221 = vmul.f32 1.0, %v3220
    %v3222 = vmul.f32 %v3217, %v3202
    %v3223 = vmul.f32 %v3219, %v3203
    %v3224 = vadd.f32 %v3201, %v3222
    %v3225 = vadd.f32 %v3202, %v3223
    %v3226 = vtanh.pop %v3224
    %v3227 = vtanh.pop %v3225
    %v3228 = vsub.f32 1.0, %v3219
    %v3229 = vsub.f32 1.0, %v3221
    %v3230 = vmul.f32 %v3228, %v3226
    %v3231 = vmul.f32 %v3229, %v3227
    %v3232 = vmul.f32 %v3219, %v2976
    %v3233 = vmul.f32 %v3221, %v2977
    %v3234 = vadd.f32 %v3230, %v3232
    %v3235 = vadd.f32 %v3231, %v3233
    %3238 = vrot.lane.b32.xlu0 %v3234, 88
    %v3239 = vpop.permute.xlu0 %3238
    %3240 = vrot.lane.b32.xlu0 %v3235, 88
    %v3241 = vpop.permute.xlu0 %3240
    %v3242 = vsel %vm2467, %v3239, %v3241
    %3244 = vmatprep.subr.mxu0 %v1811
    %3245 = vmatpush1.msra.mxu0 %v1810
    %3246 = vmatprep.subr.mxu0 %v1806
    %3247 = vmatpush1.msra.mxu0 %v1805
    %3248 = vmatprep.subr.mxu0 %v1801
    %3249 = vmatpush1.msra.mxu0 %v1800
    %3250 = vmatprep.subr.mxu0 %v1796
    %3251 = vmatpush1.msra.mxu0 %v1795
    %3252 = vmatprep.subr.mxu0 %v1791
    %3253 = vmatpush1.msra.mxu0 %v1790
    %3254 = vmatprep.subr.mxu0 %v1786
    %3255 = vmatpush1.msra.mxu0 %v1785
    %3256 = vmatprep.subr.mxu0 %v1781
    %3257 = vmatpush1.msra.mxu0 %v1780
    %3258 = vmatprep.subr.mxu0 %v1776
    %3259 = vmatpush1.msra.mxu0 %v1775
    %3260 = vmatprep.subr.mxu0 %v1771
    %3261 = vmatpush1.msra.mxu0 %v1770
    %3262 = vmatprep.subr.mxu0 %v1766
    %3263 = vmatpush1.msra.mxu0 %v1765
    %3264 = vmatprep.subr.mxu0 %v1761
    %3265 = vmatpush1.msra.mxu0 %v1760
    %3266 = vmatprep.subr.mxu0 %v1756
    %3267 = vmatpush1.msra.mxu0 %v1755
    %3268 = vmatprep.subr.mxu0 %v1751
    %3269 = vmatpush1.msra.mxu0 %v1750
    %3270 = vmatprep.subr.mxu0 %v1746
    %3271 = vmatpush1.msra.mxu0 %v1745
    %3272 = vmatprep.subr.mxu0 %v1741
    %3273 = vmatpush1.msra.mxu0 %v1740
    %3274 = vmatprep.subr.mxu0 %v1736
    %3275 = vmatpush1.msra.mxu0 %v1735
    %3276 = vmatprep.subr.mxu0 0.0
    %3277 = vmatpush2.msra.mxu0 0.0
    %3278 = vmatprep.subr.mxu0 0.0
    %3279 = vmatpush2.msra.mxu0 0.0
    %3280 = vmatprep.subr.mxu0 0.0
    %3281 = vmatpush2.msra.mxu0 0.0
    %3282 = vmatprep.subr.mxu0 0.0
    %3283 = vmatpush2.msra.mxu0 0.0
    %3284 = vmatprep.subr.mxu0 0.0
    %3285 = vmatpush2.msra.mxu0 0.0
    %3286 = vmatprep.subr.mxu0 0.0
    %3287 = vmatpush2.msra.mxu0 0.0
    %3288 = vmatprep.subr.mxu0 0.0
    %3289 = vmatpush2.msra.mxu0 0.0
    %3290 = vmatprep.subr.mxu0 0.0
    %3291 = vmatpush2.msra.mxu0 0.0
    %3292 = vmatprep.subr.mxu0 0.0
    %3293 = vmatpush2.msra.mxu0 0.0
    %3294 = vmatprep.subr.mxu0 0.0
    %3295 = vmatpush2.msra.mxu0 0.0
    %3296 = vmatprep.subr.mxu0 0.0
    %3297 = vmatpush2.msra.mxu0 0.0
    %3298 = vmatprep.subr.mxu0 0.0
    %3299 = vmatpush2.msra.mxu0 0.0
    %3300 = vmatprep.subr.mxu0 0.0
    %3301 = vmatpush2.msra.mxu0 0.0
    %3302 = vmatprep.subr.mxu0 0.0
    %3303 = vmatpush2.msra.mxu0 0.0
    %3304 = vmatprep.subr.mxu0 0.0
    %3305 = vmatpush2.msra.mxu0 0.0
    %3306 = vmatprep.subr.mxu0 0.0
    %3307 = vmatpush2.msra.mxu0 0.0
    %3308 = vmatprep.mubr.f32.mxu0 0.0
    %3309 = vmatmul.mubr.f32.gmra.mxu0 %v3242
    %v3310 = vpop.f32.mrf.mxu0
    %v3311 = vadd.f32 0.0, %v3310
    %v3312 = vpop.f32.mrf.mxu0
    %v3313 = vadd.f32 0.0, %v3312
    %3314 = vdwg.mxu0
    %3315 = vmatprep.subr.mxu0 %v1813
    %3316 = vmatpush1.msra.mxu0 %v1812
    %3317 = vmatprep.subr.mxu0 %v1808
    %3318 = vmatpush1.msra.mxu0 %v1807
    %3319 = vmatprep.subr.mxu0 %v1803
    %3320 = vmatpush1.msra.mxu0 %v1802
    %3321 = vmatprep.subr.mxu0 %v1798
    %3322 = vmatpush1.msra.mxu0 %v1797
    %3323 = vmatprep.subr.mxu0 %v1793
    %3324 = vmatpush1.msra.mxu0 %v1792
    %3325 = vmatprep.subr.mxu0 %v1788
    %3326 = vmatpush1.msra.mxu0 %v1787
    %3327 = vmatprep.subr.mxu0 %v1783
    %3328 = vmatpush1.msra.mxu0 %v1782
    %3329 = vmatprep.subr.mxu0 %v1778
    %3330 = vmatpush1.msra.mxu0 %v1777
    %3331 = vmatprep.subr.mxu0 %v1773
    %3332 = vmatpush1.msra.mxu0 %v1772
    %3333 = vmatprep.subr.mxu0 %v1768
    %3334 = vmatpush1.msra.mxu0 %v1767
    %3335 = vmatprep.subr.mxu0 %v1763
    %3336 = vmatpush1.msra.mxu0 %v1762
    %3337 = vmatprep.subr.mxu0 %v1758
    %3338 = vmatpush1.msra.mxu0 %v1757
    %3339 = vmatprep.subr.mxu0 %v1753
    %3340 = vmatpush1.msra.mxu0 %v1752
    %3341 = vmatprep.subr.mxu0 %v1748
    %3342 = vmatpush1.msra.mxu0 %v1747
    %3343 = vmatprep.subr.mxu0 %v1743
    %3344 = vmatpush1.msra.mxu0 %v1742
    %3345 = vmatprep.subr.mxu0 %v1738
    %3346 = vmatpush1.msra.mxu0 %v1737
    %3347 = vmatprep.subr.mxu0 0.0
    %3348 = vmatpush2.msra.mxu0 0.0
    %3349 = vmatprep.subr.mxu0 0.0
    %3350 = vmatpush2.msra.mxu0 0.0
    %3351 = vmatprep.subr.mxu0 0.0
    %3352 = vmatpush2.msra.mxu0 0.0
    %3353 = vmatprep.subr.mxu0 0.0
    %3354 = vmatpush2.msra.mxu0 0.0
    %3355 = vmatprep.subr.mxu0 0.0
    %3356 = vmatpush2.msra.mxu0 0.0
    %3357 = vmatprep.subr.mxu0 0.0
    %3358 = vmatpush2.msra.mxu0 0.0
    %3359 = vmatprep.subr.mxu0 0.0
    %3360 = vmatpush2.msra.mxu0 0.0
    %3361 = vmatprep.subr.mxu0 0.0
    %3362 = vmatpush2.msra.mxu0 0.0
    %3363 = vmatprep.subr.mxu0 0.0
    %3364 = vmatpush2.msra.mxu0 0.0
    %3365 = vmatprep.subr.mxu0 0.0
    %3366 = vmatpush2.msra.mxu0 0.0
    %3367 = vmatprep.subr.mxu0 0.0
    %3368 = vmatpush2.msra.mxu0 0.0
    %3369 = vmatprep.subr.mxu0 0.0
    %3370 = vmatpush2.msra.mxu0 0.0
    %3371 = vmatprep.subr.mxu0 0.0
    %3372 = vmatpush2.msra.mxu0 0.0
    %3373 = vmatprep.subr.mxu0 0.0
    %3374 = vmatpush2.msra.mxu0 0.0
    %3375 = vmatprep.subr.mxu0 0.0
    %3376 = vmatpush2.msra.mxu0 0.0
    %3377 = vmatprep.subr.mxu0 0.0
    %3378 = vmatpush2.msra.mxu0 0.0
    %3379 = vmatprep.mubr.f32.mxu0 0.0
    %3380 = vmatmul.mubr.f32.gmra.mxu0 %v3242
    %v3381 = vpop.f32.mrf.mxu0
    %v3382 = vadd.f32 0.0, %v3381
    %v3383 = vpop.f32.mrf.mxu0
    %v3384 = vadd.f32 0.0, %v3383
    %3385 = vdwg.mxu0
    %3386 = vmatprep.subr.mxu0 0.0
    %3387 = vmatpush1.msra.mxu0 %v1814
    %3388 = vmatprep.subr.mxu0 0.0
    %3389 = vmatpush1.msra.mxu0 %v1809
    %3390 = vmatprep.subr.mxu0 0.0
    %3391 = vmatpush1.msra.mxu0 %v1804
    %3392 = vmatprep.subr.mxu0 0.0
    %3393 = vmatpush1.msra.mxu0 %v1799
    %3394 = vmatprep.subr.mxu0 0.0
    %3395 = vmatpush1.msra.mxu0 %v1794
    %3396 = vmatprep.subr.mxu0 0.0
    %3397 = vmatpush1.msra.mxu0 %v1789
    %3398 = vmatprep.subr.mxu0 0.0
    %3399 = vmatpush1.msra.mxu0 %v1784
    %3400 = vmatprep.subr.mxu0 0.0
    %3401 = vmatpush1.msra.mxu0 %v1779
    %3402 = vmatprep.subr.mxu0 0.0
    %3403 = vmatpush1.msra.mxu0 %v1774
    %3404 = vmatprep.subr.mxu0 0.0
    %3405 = vmatpush1.msra.mxu0 %v1769
    %3406 = vmatprep.subr.mxu0 0.0
    %3407 = vmatpush1.msra.mxu0 %v1764
    %3408 = vmatprep.subr.mxu0 0.0
    %3409 = vmatpush1.msra.mxu0 %v1759
    %3410 = vmatprep.subr.mxu0 0.0
    %3411 = vmatpush1.msra.mxu0 %v1754
    %3412 = vmatprep.subr.mxu0 0.0
    %3413 = vmatpush1.msra.mxu0 %v1749
    %3414 = vmatprep.subr.mxu0 0.0
    %3415 = vmatpush1.msra.mxu0 %v1744
    %3416 = vmatprep.subr.mxu0 0.0
    %3417 = vmatpush1.msra.mxu0 %v1739
    %3418 = vmatprep.subr.mxu0 0.0
    %3419 = vmatpush2.msra.mxu0 0.0
    %3420 = vmatprep.subr.mxu0 0.0
    %3421 = vmatpush2.msra.mxu0 0.0
    %3422 = vmatprep.subr.mxu0 0.0
    %3423 = vmatpush2.msra.mxu0 0.0
    %3424 = vmatprep.subr.mxu0 0.0
    %3425 = vmatpush2.msra.mxu0 0.0
    %3426 = vmatprep.subr.mxu0 0.0
    %3427 = vmatpush2.msra.mxu0 0.0
    %3428 = vmatprep.subr.mxu0 0.0
    %3429 = vmatpush2.msra.mxu0 0.0
    %3430 = vmatprep.subr.mxu0 0.0
    %3431 = vmatpush2.msra.mxu0 0.0
    %3432 = vmatprep.subr.mxu0 0.0
    %3433 = vmatpush2.msra.mxu0 0.0
    %3434 = vmatprep.subr.mxu0 0.0
    %3435 = vmatpush2.msra.mxu0 0.0
    %3436 = vmatprep.subr.mxu0 0.0
    %3437 = vmatpush2.msra.mxu0 0.0
    %3438 = vmatprep.subr.mxu0 0.0
    %3439 = vmatpush2.msra.mxu0 0.0
    %3440 = vmatprep.subr.mxu0 0.0
    %3441 = vmatpush2.msra.mxu0 0.0
    %3442 = vmatprep.subr.mxu0 0.0
    %3443 = vmatpush2.msra.mxu0 0.0
    %3444 = vmatprep.subr.mxu0 0.0
    %3445 = vmatpush2.msra.mxu0 0.0
    %3446 = vmatprep.subr.mxu0 0.0
    %3447 = vmatpush2.msra.mxu0 0.0
    %3448 = vmatprep.subr.mxu0 0.0
    %3449 = vmatpush2.msra.mxu0 0.0
    %3450 = vmatprep.mubr.f32.mxu0 0.0
    %3451 = vmatmul.mubr.f32.gmra.mxu0 %v3242
    %v3452 = vpop.f32.mrf.mxu0
    %v3453 = vadd.f32 0.0, %v3452
    %v3454 = vpop.f32.mrf.mxu0
    %3455 = vdwg.mxu0
    %v3456 = vadd.f32 %v3311, %v1650
    %v3457 = vadd.f32 %v3311, %v2405
    %v3458 = vadd.f32 %v3313, %v2412
    %v3459 = vadd.f32 %v3382, %v2413
    %v3460 = vadd.f32 %v3384, %v2414
    %v3461 = vadd.f32 %v3453, %v2411
    %v3462 = vxor.u32 %v3457, 2147483648
    %v3463 = vxor.u32 %v3458, 2147483648
    %v3464 = vxor.u32 %v3459, 2147483648
    %v3465 = vmul.f32 %v3462, 1.442695
    %v3466 = vpow.pop %v3465
    %v3467 = vmul.f32 %v3463, 1.442695
    %v3468 = vpow.pop %v3467
    %v3469 = vmul.f32 %v3464, 1.442695
    %v3470 = vpow.pop %v3469
    %v3471 = vadd.f32 %v3466, 1.0
    %v3472 = vadd.f32 %v3468, 1.0
    %v3473 = vadd.f32 %v3470, 1.0
    %v3474 = vrcp.pop %v3471
    %v3475 = vmul.f32 1.0, %v3474
    %v3476 = vrcp.pop %v3472
    %v3477 = vmul.f32 1.0, %v3476
    %v3478 = vrcp.pop %v3473
    %v3479 = vmul.f32 1.0, %v3478
    %v3480 = vmul.f32 %v3475, %v3460
    %v3481 = vmul.f32 %v3477, %v3461
    %v3482 = vadd.f32 %v3459, %v3480
    %v3483 = vadd.f32 %v3460, %v3481
    %v3484 = vtanh.pop %v3482
    %v3485 = vtanh.pop %v3483
    %v3486 = vsub.f32 1.0, %v3477
    %v3487 = vsub.f32 1.0, %v3479
    %v3488 = vmul.f32 %v3486, %v3484
    %v3489 = vmul.f32 %v3487, %v3485
    %v3490 = vmul.f32 %v3477, %v3234
    %v3491 = vmul.f32 %v3479, %v3235
    %v3492 = vadd.f32 %v3488, %v3490
    %v3493 = vadd.f32 %v3489, %v3491
    %3496 = vrot.lane.b32.xlu0 %v3492, 88
    %v3497 = vpop.permute.xlu0 %3496
    %3498 = vrot.lane.b32.xlu0 %v3493, 88
    %v3499 = vpop.permute.xlu0 %3498
    %v3500 = vsel %vm2467, %v3497, %v3499
    %3502 = vmatprep.subr.mxu0 %v1811
    %3503 = vmatpush1.msra.mxu0 %v1810
    %3504 = vmatprep.subr.mxu0 %v1806
    %3505 = vmatpush1.msra.mxu0 %v1805
    %3506 = vmatprep.subr.mxu0 %v1801
    %3507 = vmatpush1.msra.mxu0 %v1800
    %3508 = vmatprep.subr.mxu0 %v1796
    %3509 = vmatpush1.msra.mxu0 %v1795
    %3510 = vmatprep.subr.mxu0 %v1791
    %3511 = vmatpush1.msra.mxu0 %v1790
    %3512 = vmatprep.subr.mxu0 %v1786
    %3513 = vmatpush1.msra.mxu0 %v1785
    %3514 = vmatprep.subr.mxu0 %v1781
    %3515 = vmatpush1.msra.mxu0 %v1780
    %3516 = vmatprep.subr.mxu0 %v1776
    %3517 = vmatpush1.msra.mxu0 %v1775
    %3518 = vmatprep.subr.mxu0 %v1771
    %3519 = vmatpush1.msra.mxu0 %v1770
    %3520 = vmatprep.subr.mxu0 %v1766
    %3521 = vmatpush1.msra.mxu0 %v1765
    %3522 = vmatprep.subr.mxu0 %v1761
    %3523 = vmatpush1.msra.mxu0 %v1760
    %3524 = vmatprep.subr.mxu0 %v1756
    %3525 = vmatpush1.msra.mxu0 %v1755
    %3526 = vmatprep.subr.mxu0 %v1751
    %3527 = vmatpush1.msra.mxu0 %v1750
    %3528 = vmatprep.subr.mxu0 %v1746
    %3529 = vmatpush1.msra.mxu0 %v1745
    %3530 = vmatprep.subr.mxu0 %v1741
    %3531 = vmatpush1.msra.mxu0 %v1740
    %3532 = vmatprep.subr.mxu0 %v1736
    %3533 = vmatpush1.msra.mxu0 %v1735
    %3534 = vmatprep.subr.mxu0 0.0
    %3535 = vmatpush2.msra.mxu0 0.0
    %3536 = vmatprep.subr.mxu0 0.0
    %3537 = vmatpush2.msra.mxu0 0.0
    %3538 = vmatprep.subr.mxu0 0.0
    %3539 = vmatpush2.msra.mxu0 0.0
    %3540 = vmatprep.subr.mxu0 0.0
    %3541 = vmatpush2.msra.mxu0 0.0
    %3542 = vmatprep.subr.mxu0 0.0
    %3543 = vmatpush2.msra.mxu0 0.0
    %3544 = vmatprep.subr.mxu0 0.0
    %3545 = vmatpush2.msra.mxu0 0.0
    %3546 = vmatprep.subr.mxu0 0.0
    %3547 = vmatpush2.msra.mxu0 0.0
    %3548 = vmatprep.subr.mxu0 0.0
    %3549 = vmatpush2.msra.mxu0 0.0
    %3550 = vmatprep.subr.mxu0 0.0
    %3551 = vmatpush2.msra.mxu0 0.0
    %3552 = vmatprep.subr.mxu0 0.0
    %3553 = vmatpush2.msra.mxu0 0.0
    %3554 = vmatprep.subr.mxu0 0.0
    %3555 = vmatpush2.msra.mxu0 0.0
    %3556 = vmatprep.subr.mxu0 0.0
    %3557 = vmatpush2.msra.mxu0 0.0
    %3558 = vmatprep.subr.mxu0 0.0
    %3559 = vmatpush2.msra.mxu0 0.0
    %3560 = vmatprep.subr.mxu0 0.0
    %3561 = vmatpush2.msra.mxu0 0.0
    %3562 = vmatprep.subr.mxu0 0.0
    %3563 = vmatpush2.msra.mxu0 0.0
    %3564 = vmatprep.subr.mxu0 0.0
    %3565 = vmatpush2.msra.mxu0 0.0
    %3566 = vmatprep.mubr.f32.mxu0 0.0
    %3567 = vmatmul.mubr.f32.gmra.mxu0 %v3500
    %v3568 = vpop.f32.mrf.mxu0
    %v3569 = vadd.f32 0.0, %v3568
    %v3570 = vpop.f32.mrf.mxu0
    %v3571 = vadd.f32 0.0, %v3570
    %3572 = vdwg.mxu0
    %3573 = vmatprep.subr.mxu0 %v1813
    %3574 = vmatpush1.msra.mxu0 %v1812
    %3575 = vmatprep.subr.mxu0 %v1808
    %3576 = vmatpush1.msra.mxu0 %v1807
    %3577 = vmatprep.subr.mxu0 %v1803
    %3578 = vmatpush1.msra.mxu0 %v1802
    %3579 = vmatprep.subr.mxu0 %v1798
    %3580 = vmatpush1.msra.mxu0 %v1797
    %3581 = vmatprep.subr.mxu0 %v1793
    %3582 = vmatpush1.msra.mxu0 %v1792
    %3583 = vmatprep.subr.mxu0 %v1788
    %3584 = vmatpush1.msra.mxu0 %v1787
    %3585 = vmatprep.subr.mxu0 %v1783
    %3586 = vmatpush1.msra.mxu0 %v1782
    %3587 = vmatprep.subr.mxu0 %v1778
    %3588 = vmatpush1.msra.mxu0 %v1777
    %3589 = vmatprep.subr.mxu0 %v1773
    %3590 = vmatpush1.msra.mxu0 %v1772
    %3591 = vmatprep.subr.mxu0 %v1768
    %3592 = vmatpush1.msra.mxu0 %v1767
    %3593 = vmatprep.subr.mxu0 %v1763
    %3594 = vmatpush1.msra.mxu0 %v1762
    %3595 = vmatprep.subr.mxu0 %v1758
    %3596 = vmatpush1.msra.mxu0 %v1757
    %3597 = vmatprep.subr.mxu0 %v1753
    %3598 = vmatpush1.msra.mxu0 %v1752
    %3599 = vmatprep.subr.mxu0 %v1748
    %3600 = vmatpush1.msra.mxu0 %v1747
    %3601 = vmatprep.subr.mxu0 %v1743
    %3602 = vmatpush1.msra.mxu0 %v1742
    %3603 = vmatprep.subr.mxu0 %v1738
    %3604 = vmatpush1.msra.mxu0 %v1737
    %3605 = vmatprep.subr.mxu0 0.0
    %3606 = vmatpush2.msra.mxu0 0.0
    %3607 = vmatprep.subr.mxu0 0.0
    %3608 = vmatpush2.msra.mxu0 0.0
    %3609 = vmatprep.subr.mxu0 0.0
    %3610 = vmatpush2.msra.mxu0 0.0
    %3611 = vmatprep.subr.mxu0 0.0
    %3612 = vmatpush2.msra.mxu0 0.0
    %3613 = vmatprep.subr.mxu0 0.0
    %3614 = vmatpush2.msra.mxu0 0.0
    %3615 = vmatprep.subr.mxu0 0.0
    %3616 = vmatpush2.msra.mxu0 0.0
    %3617 = vmatprep.subr.mxu0 0.0
    %3618 = vmatpush2.msra.mxu0 0.0
    %3619 = vmatprep.subr.mxu0 0.0
    %3620 = vmatpush2.msra.mxu0 0.0
    %3621 = vmatprep.subr.mxu0 0.0
    %3622 = vmatpush2.msra.mxu0 0.0
    %3623 = vmatprep.subr.mxu0 0.0
    %3624 = vmatpush2.msra.mxu0 0.0
    %3625 = vmatprep.subr.mxu0 0.0
    %3626 = vmatpush2.msra.mxu0 0.0
    %3627 = vmatprep.subr.mxu0 0.0
    %3628 = vmatpush2.msra.mxu0 0.0
    %3629 = vmatprep.subr.mxu0 0.0
    %3630 = vmatpush2.msra.mxu0 0.0
    %3631 = vmatprep.subr.mxu0 0.0
    %3632 = vmatpush2.msra.mxu0 0.0
    %3633 = vmatprep.subr.mxu0 0.0
    %3634 = vmatpush2.msra.mxu0 0.0
    %3635 = vmatprep.subr.mxu0 0.0
    %3636 = vmatpush2.msra.mxu0 0.0
    %3637 = vmatprep.mubr.f32.mxu0 0.0
    %3638 = vmatmul.mubr.f32.gmra.mxu0 %v3500
    %v3639 = vpop.f32.mrf.mxu0
    %v3640 = vadd.f32 0.0, %v3639
    %v3641 = vpop.f32.mrf.mxu0
    %v3642 = vadd.f32 0.0, %v3641
    %3643 = vdwg.mxu0
    %3644 = vmatprep.subr.mxu0 0.0
    %3645 = vmatpush1.msra.mxu0 %v1814
    %3646 = vmatprep.subr.mxu0 0.0
    %3647 = vmatpush1.msra.mxu0 %v1809
    %3648 = vmatprep.subr.mxu0 0.0
    %3649 = vmatpush1.msra.mxu0 %v1804
    %3650 = vmatprep.subr.mxu0 0.0
    %3651 = vmatpush1.msra.mxu0 %v1799
    %3652 = vmatprep.subr.mxu0 0.0
    %3653 = vmatpush1.msra.mxu0 %v1794
    %3654 = vmatprep.subr.mxu0 0.0
    %3655 = vmatpush1.msra.mxu0 %v1789
    %3656 = vmatprep.subr.mxu0 0.0
    %3657 = vmatpush1.msra.mxu0 %v1784
    %3658 = vmatprep.subr.mxu0 0.0
    %3659 = vmatpush1.msra.mxu0 %v1779
    %3660 = vmatprep.subr.mxu0 0.0
    %3661 = vmatpush1.msra.mxu0 %v1774
    %3662 = vmatprep.subr.mxu0 0.0
    %3663 = vmatpush1.msra.mxu0 %v1769
    %3664 = vmatprep.subr.mxu0 0.0
    %3665 = vmatpush1.msra.mxu0 %v1764
    %3666 = vmatprep.subr.mxu0 0.0
    %3667 = vmatpush1.msra.mxu0 %v1759
    %3668 = vmatprep.subr.mxu0 0.0
    %3669 = vmatpush1.msra.mxu0 %v1754
    %3670 = vmatprep.subr.mxu0 0.0
    %3671 = vmatpush1.msra.mxu0 %v1749
    %3672 = vmatprep.subr.mxu0 0.0
    %3673 = vmatpush1.msra.mxu0 %v1744
    %3674 = vmatprep.subr.mxu0 0.0
    %3675 = vmatpush1.msra.mxu0 %v1739
    %3676 = vmatprep.subr.mxu0 0.0
    %3677 = vmatpush2.msra.mxu0 0.0
    %3678 = vmatprep.subr.mxu0 0.0
    %3679 = vmatpush2.msra.mxu0 0.0
    %3680 = vmatprep.subr.mxu0 0.0
    %3681 = vmatpush2.msra.mxu0 0.0
    %3682 = vmatprep.subr.mxu0 0.0
    %3683 = vmatpush2.msra.mxu0 0.0
    %3684 = vmatprep.subr.mxu0 0.0
    %3685 = vmatpush2.msra.mxu0 0.0
    %3686 = vmatprep.subr.mxu0 0.0
    %3687 = vmatpush2.msra.mxu0 0.0
    %3688 = vmatprep.subr.mxu0 0.0
    %3689 = vmatpush2.msra.mxu0 0.0
    %3690 = vmatprep.subr.mxu0 0.0
    %3691 = vmatpush2.msra.mxu0 0.0
    %3692 = vmatprep.subr.mxu0 0.0
    %3693 = vmatpush2.msra.mxu0 0.0
    %3694 = vmatprep.subr.mxu0 0.0
    %3695 = vmatpush2.msra.mxu0 0.0
    %3696 = vmatprep.subr.mxu0 0.0
    %3697 = vmatpush2.msra.mxu0 0.0
    %3698 = vmatprep.subr.mxu0 0.0
    %3699 = vmatpush2.msra.mxu0 0.0
    %3700 = vmatprep.subr.mxu0 0.0
    %3701 = vmatpush2.msra.mxu0 0.0
    %3702 = vmatprep.subr.mxu0 0.0
    %3703 = vmatpush2.msra.mxu0 0.0
    %3704 = vmatprep.subr.mxu0 0.0
    %3705 = vmatpush2.msra.mxu0 0.0
    %3706 = vmatprep.subr.mxu0 0.0
    %3707 = vmatpush2.msra.mxu0 0.0
    %3708 = vmatprep.mubr.f32.mxu0 0.0
    %3709 = vmatmul.mubr.f32.gmra.mxu0 %v3500
    %v3710 = vpop.f32.mrf.mxu0
    %v3711 = vadd.f32 0.0, %v3710
    %v3712 = vpop.f32.mrf.mxu0
    %3713 = vdwg.mxu0
    %v3714 = vadd.f32 %v3569, %v1650
    %v3715 = vadd.f32 %v3569, %v2405
    %v3716 = vadd.f32 %v3571, %v2412
    %v3717 = vadd.f32 %v3640, %v2413
    %v3718 = vadd.f32 %v3642, %v2414
    %v3719 = vadd.f32 %v3711, %v2411
    %v3720 = vxor.u32 %v3715, 2147483648
    %v3721 = vxor.u32 %v3716, 2147483648
    %v3722 = vxor.u32 %v3717, 2147483648
    %v3723 = vmul.f32 %v3720, 1.442695
    %v3724 = vpow.pop %v3723
    %v3725 = vmul.f32 %v3721, 1.442695
    %v3726 = vpow.pop %v3725
    %v3727 = vmul.f32 %v3722, 1.442695
    %v3728 = vpow.pop %v3727
    %v3729 = vadd.f32 %v3724, 1.0
    %v3730 = vadd.f32 %v3726, 1.0
    %v3731 = vadd.f32 %v3728, 1.0
    %v3732 = vrcp.pop %v3729
    %v3733 = vmul.f32 1.0, %v3732
    %v3734 = vrcp.pop %v3730
    %v3735 = vmul.f32 1.0, %v3734
    %v3736 = vrcp.pop %v3731
    %v3737 = vmul.f32 1.0, %v3736
    %v3738 = vmul.f32 %v3733, %v3718
    %v3739 = vmul.f32 %v3735, %v3719
    %v3740 = vadd.f32 %v3717, %v3738
    %v3741 = vadd.f32 %v3718, %v3739
    %v3742 = vtanh.pop %v3740
    %v3743 = vtanh.pop %v3741
    %v3744 = vsub.f32 1.0, %v3735
    %v3745 = vsub.f32 1.0, %v3737
    %v3746 = vmul.f32 %v3744, %v3742
    %v3747 = vmul.f32 %v3745, %v3743
    %v3748 = vmul.f32 %v3735, %v3492
    %v3749 = vmul.f32 %v3737, %v3493
    %v3750 = vadd.f32 %v3746, %v3748
    %v3751 = vadd.f32 %v3747, %v3749
    %3754 = vrot.lane.b32.xlu0 %v3750, 88
    %v3755 = vpop.permute.xlu0 %3754
    %3756 = vrot.lane.b32.xlu0 %v3751, 88
    %v3757 = vpop.permute.xlu0 %3756
    %v3758 = vsel %vm2467, %v3755, %v3757
    %3760 = vmatprep.subr.mxu0 %v1811
    %3761 = vmatpush1.msra.mxu0 %v1810
    %3762 = vmatprep.subr.mxu0 %v1806
    %3763 = vmatpush1.msra.mxu0 %v1805
    %3764 = vmatprep.subr.mxu0 %v1801
    %3765 = vmatpush1.msra.mxu0 %v1800
    %3766 = vmatprep.subr.mxu0 %v1796
    %3767 = vmatpush1.msra.mxu0 %v1795
    %3768 = vmatprep.subr.mxu0 %v1791
    %3769 = vmatpush1.msra.mxu0 %v1790
    %3770 = vmatprep.subr.mxu0 %v1786
    %3771 = vmatpush1.msra.mxu0 %v1785
    %3772 = vmatprep.subr.mxu0 %v1781
    %3773 = vmatpush1.msra.mxu0 %v1780
    %3774 = vmatprep.subr.mxu0 %v1776
    %3775 = vmatpush1.msra.mxu0 %v1775
    %3776 = vmatprep.subr.mxu0 %v1771
    %3777 = vmatpush1.msra.mxu0 %v1770
    %3778 = vmatprep.subr.mxu0 %v1766
    %3779 = vmatpush1.msra.mxu0 %v1765
    %3780 = vmatprep.subr.mxu0 %v1761
    %3781 = vmatpush1.msra.mxu0 %v1760
    %3782 = vmatprep.subr.mxu0 %v1756
    %3783 = vmatpush1.msra.mxu0 %v1755
    %3784 = vmatprep.subr.mxu0 %v1751
    %3785 = vmatpush1.msra.mxu0 %v1750
    %3786 = vmatprep.subr.mxu0 %v1746
    %3787 = vmatpush1.msra.mxu0 %v1745
    %3788 = vmatprep.subr.mxu0 %v1741
    %3789 = vmatpush1.msra.mxu0 %v1740
    %3790 = vmatprep.subr.mxu0 %v1736
    %3791 = vmatpush1.msra.mxu0 %v1735
    %3792 = vmatprep.subr.mxu0 0.0
    %3793 = vmatpush2.msra.mxu0 0.0
    %3794 = vmatprep.subr.mxu0 0.0
    %3795 = vmatpush2.msra.mxu0 0.0
    %3796 = vmatprep.subr.mxu0 0.0
    %3797 = vmatpush2.msra.mxu0 0.0
    %3798 = vmatprep.subr.mxu0 0.0
    %3799 = vmatpush2.msra.mxu0 0.0
    %3800 = vmatprep.subr.mxu0 0.0
    %3801 = vmatpush2.msra.mxu0 0.0
    %3802 = vmatprep.subr.mxu0 0.0
    %3803 = vmatpush2.msra.mxu0 0.0
    %3804 = vmatprep.subr.mxu0 0.0
    %3805 = vmatpush2.msra.mxu0 0.0
    %3806 = vmatprep.subr.mxu0 0.0
    %3807 = vmatpush2.msra.mxu0 0.0
    %3808 = vmatprep.subr.mxu0 0.0
    %3809 = vmatpush2.msra.mxu0 0.0
    %3810 = vmatprep.subr.mxu0 0.0
    %3811 = vmatpush2.msra.mxu0 0.0
    %3812 = vmatprep.subr.mxu0 0.0
    %3813 = vmatpush2.msra.mxu0 0.0
    %3814 = vmatprep.subr.mxu0 0.0
    %3815 = vmatpush2.msra.mxu0 0.0
    %3816 = vmatprep.subr.mxu0 0.0
    %3817 = vmatpush2.msra.mxu0 0.0
    %3818 = vmatprep.subr.mxu0 0.0
    %3819 = vmatpush2.msra.mxu0 0.0
    %3820 = vmatprep.subr.mxu0 0.0
    %3821 = vmatpush2.msra.mxu0 0.0
    %3822 = vmatprep.subr.mxu0 0.0
    %3823 = vmatpush2.msra.mxu0 0.0
    %3824 = vmatprep.mubr.f32.mxu0 0.0
    %3825 = vmatmul.mubr.f32.gmra.mxu0 %v3758
    %v3826 = vpop.f32.mrf.mxu0
    %v3827 = vadd.f32 0.0, %v3826
    %v3828 = vpop.f32.mrf.mxu0
    %v3829 = vadd.f32 0.0, %v3828
    %3830 = vdwg.mxu0
    %3831 = vmatprep.subr.mxu0 %v1813
    %3832 = vmatpush1.msra.mxu0 %v1812
    %3833 = vmatprep.subr.mxu0 %v1808
    %3834 = vmatpush1.msra.mxu0 %v1807
    %3835 = vmatprep.subr.mxu0 %v1803
    %3836 = vmatpush1.msra.mxu0 %v1802
    %3837 = vmatprep.subr.mxu0 %v1798
    %3838 = vmatpush1.msra.mxu0 %v1797
    %3839 = vmatprep.subr.mxu0 %v1793
    %3840 = vmatpush1.msra.mxu0 %v1792
    %3841 = vmatprep.subr.mxu0 %v1788
    %3842 = vmatpush1.msra.mxu0 %v1787
    %3843 = vmatprep.subr.mxu0 %v1783
    %3844 = vmatpush1.msra.mxu0 %v1782
    %3845 = vmatprep.subr.mxu0 %v1778
    %3846 = vmatpush1.msra.mxu0 %v1777
    %3847 = vmatprep.subr.mxu0 %v1773
    %3848 = vmatpush1.msra.mxu0 %v1772
    %3849 = vmatprep.subr.mxu0 %v1768
    %3850 = vmatpush1.msra.mxu0 %v1767
    %3851 = vmatprep.subr.mxu0 %v1763
    %3852 = vmatpush1.msra.mxu0 %v1762
    %3853 = vmatprep.subr.mxu0 %v1758
    %3854 = vmatpush1.msra.mxu0 %v1757
    %3855 = vmatprep.subr.mxu0 %v1753
    %3856 = vmatpush1.msra.mxu0 %v1752
    %3857 = vmatprep.subr.mxu0 %v1748
    %3858 = vmatpush1.msra.mxu0 %v1747
    %3859 = vmatprep.subr.mxu0 %v1743
    %3860 = vmatpush1.msra.mxu0 %v1742
    %3861 = vmatprep.subr.mxu0 %v1738
    %3862 = vmatpush1.msra.mxu0 %v1737
    %3863 = vmatprep.subr.mxu0 0.0
    %3864 = vmatpush2.msra.mxu0 0.0
    %3865 = vmatprep.subr.mxu0 0.0
    %3866 = vmatpush2.msra.mxu0 0.0
    %3867 = vmatprep.subr.mxu0 0.0
    %3868 = vmatpush2.msra.mxu0 0.0
    %3869 = vmatprep.subr.mxu0 0.0
    %3870 = vmatpush2.msra.mxu0 0.0
    %3871 = vmatprep.subr.mxu0 0.0
    %3872 = vmatpush2.msra.mxu0 0.0
    %3873 = vmatprep.subr.mxu0 0.0
    %3874 = vmatpush2.msra.mxu0 0.0
    %3875 = vmatprep.subr.mxu0 0.0
    %3876 = vmatpush2.msra.mxu0 0.0
    %3877 = vmatprep.subr.mxu0 0.0
    %3878 = vmatpush2.msra.mxu0 0.0
    %3879 = vmatprep.subr.mxu0 0.0
    %3880 = vmatpush2.msra.mxu0 0.0
    %3881 = vmatprep.subr.mxu0 0.0
    %3882 = vmatpush2.msra.mxu0 0.0
    %3883 = vmatprep.subr.mxu0 0.0
    %3884 = vmatpush2.msra.mxu0 0.0
    %3885 = vmatprep.subr.mxu0 0.0
    %3886 = vmatpush2.msra.mxu0 0.0
    %3887 = vmatprep.subr.mxu0 0.0
    %3888 = vmatpush2.msra.mxu0 0.0
    %3889 = vmatprep.subr.mxu0 0.0
    %3890 = vmatpush2.msra.mxu0 0.0
    %3891 = vmatprep.subr.mxu0 0.0
    %3892 = vmatpush2.msra.mxu0 0.0
    %3893 = vmatprep.subr.mxu0 0.0
    %3894 = vmatpush2.msra.mxu0 0.0
    %3895 = vmatprep.mubr.f32.mxu0 0.0
    %3896 = vmatmul.mubr.f32.gmra.mxu0 %v3758
    %v3897 = vpop.f32.mrf.mxu0
    %v3898 = vadd.f32 0.0, %v3897
    %v3899 = vpop.f32.mrf.mxu0
    %v3900 = vadd.f32 0.0, %v3899
    %3901 = vdwg.mxu0
    %3902 = vmatprep.subr.mxu0 0.0
    %3903 = vmatpush1.msra.mxu0 %v1814
    %3904 = vmatprep.subr.mxu0 0.0
    %3905 = vmatpush1.msra.mxu0 %v1809
    %3906 = vmatprep.subr.mxu0 0.0
    %3907 = vmatpush1.msra.mxu0 %v1804
    %3908 = vmatprep.subr.mxu0 0.0
    %3909 = vmatpush1.msra.mxu0 %v1799
    %3910 = vmatprep.subr.mxu0 0.0
    %3911 = vmatpush1.msra.mxu0 %v1794
    %3912 = vmatprep.subr.mxu0 0.0
    %3913 = vmatpush1.msra.mxu0 %v1789
    %3914 = vmatprep.subr.mxu0 0.0
    %3915 = vmatpush1.msra.mxu0 %v1784
    %3916 = vmatprep.subr.mxu0 0.0
    %3917 = vmatpush1.msra.mxu0 %v1779
    %3918 = vmatprep.subr.mxu0 0.0
    %3919 = vmatpush1.msra.mxu0 %v1774
    %3920 = vmatprep.subr.mxu0 0.0
    %3921 = vmatpush1.msra.mxu0 %v1769
    %3922 = vmatprep.subr.mxu0 0.0
    %3923 = vmatpush1.msra.mxu0 %v1764
    %3924 = vmatprep.subr.mxu0 0.0
    %3925 = vmatpush1.msra.mxu0 %v1759
    %3926 = vmatprep.subr.mxu0 0.0
    %3927 = vmatpush1.msra.mxu0 %v1754
    %3928 = vmatprep.subr.mxu0 0.0
    %3929 = vmatpush1.msra.mxu0 %v1749
    %3930 = vmatprep.subr.mxu0 0.0
    %3931 = vmatpush1.msra.mxu0 %v1744
    %3932 = vmatprep.subr.mxu0 0.0
    %3933 = vmatpush1.msra.mxu0 %v1739
    %3934 = vmatprep.subr.mxu0 0.0
    %3935 = vmatpush2.msra.mxu0 0.0
    %3936 = vmatprep.subr.mxu0 0.0
    %3937 = vmatpush2.msra.mxu0 0.0
    %3938 = vmatprep.subr.mxu0 0.0
    %3939 = vmatpush2.msra.mxu0 0.0
    %3940 = vmatprep.subr.mxu0 0.0
    %3941 = vmatpush2.msra.mxu0 0.0
    %3942 = vmatprep.subr.mxu0 0.0
    %3943 = vmatpush2.msra.mxu0 0.0
    %3944 = vmatprep.subr.mxu0 0.0
    %3945 = vmatpush2.msra.mxu0 0.0
    %3946 = vmatprep.subr.mxu0 0.0
    %3947 = vmatpush2.msra.mxu0 0.0
    %3948 = vmatprep.subr.mxu0 0.0
    %3949 = vmatpush2.msra.mxu0 0.0
    %3950 = vmatprep.subr.mxu0 0.0
    %3951 = vmatpush2.msra.mxu0 0.0
    %3952 = vmatprep.subr.mxu0 0.0
    %3953 = vmatpush2.msra.mxu0 0.0
    %3954 = vmatprep.subr.mxu0 0.0
    %3955 = vmatpush2.msra.mxu0 0.0
    %3956 = vmatprep.subr.mxu0 0.0
    %3957 = vmatpush2.msra.mxu0 0.0
    %3958 = vmatprep.subr.mxu0 0.0
    %3959 = vmatpush2.msra.mxu0 0.0
    %3960 = vmatprep.subr.mxu0 0.0
    %3961 = vmatpush2.msra.mxu0 0.0
    %3962 = vmatprep.subr.mxu0 0.0
    %3963 = vmatpush2.msra.mxu0 0.0
    %3964 = vmatprep.subr.mxu0 0.0
    %3965 = vmatpush2.msra.mxu0 0.0
    %3966 = vmatprep.mubr.f32.mxu0 0.0
    %3967 = vmatmul.mubr.f32.gmra.mxu0 %v3758
    %v3968 = vpop.f32.mrf.mxu0
    %v3969 = vadd.f32 0.0, %v3968
    %v3970 = vpop.f32.mrf.mxu0
    %3971 = vdwg.mxu0
    %v3972 = vadd.f32 %v3827, %v1650
    %v3973 = vadd.f32 %v3827, %v2405
    %v3974 = vadd.f32 %v3829, %v2412
    %v3975 = vadd.f32 %v3898, %v2413
    %v3976 = vadd.f32 %v3900, %v2414
    %v3977 = vadd.f32 %v3969, %v2411
    %v3978 = vxor.u32 %v3973, 2147483648
    %v3979 = vxor.u32 %v3974, 2147483648
    %v3980 = vxor.u32 %v3975, 2147483648
    %v3981 = vmul.f32 %v3978, 1.442695
    %v3982 = vpow.pop %v3981
    %v3983 = vmul.f32 %v3979, 1.442695
    %v3984 = vpow.pop %v3983
    %v3985 = vmul.f32 %v3980, 1.442695
    %v3986 = vpow.pop %v3985
    %v3987 = vadd.f32 %v3982, 1.0
    %v3988 = vadd.f32 %v3984, 1.0
    %v3989 = vadd.f32 %v3986, 1.0
    %v3990 = vrcp.pop %v3987
    %v3991 = vmul.f32 1.0, %v3990
    %v3992 = vrcp.pop %v3988
    %v3993 = vmul.f32 1.0, %v3992
    %v3994 = vrcp.pop %v3989
    %v3995 = vmul.f32 1.0, %v3994
    %v3996 = vmul.f32 %v3991, %v3976
    %v3997 = vmul.f32 %v3993, %v3977
    %v3998 = vadd.f32 %v3975, %v3996
    %v3999 = vadd.f32 %v3976, %v3997
    %v4000 = vtanh.pop %v3998
    %v4001 = vtanh.pop %v3999
    %v4002 = vsub.f32 1.0, %v3993
    %v4003 = vsub.f32 1.0, %v3995
    %v4004 = vmul.f32 %v4002, %v4000
    %v4005 = vmul.f32 %v4003, %v4001
    %v4006 = vmul.f32 %v3993, %v3750
    %v4007 = vmul.f32 %v3995, %v3751
    %v4008 = vadd.f32 %v4004, %v4006
    %v4009 = vadd.f32 %v4005, %v4007
    %4012 = vrot.lane.b32.xlu0 %v4008, 88
    %v4013 = vpop.permute.xlu0 %4012
    %4014 = vrot.lane.b32.xlu0 %v4009, 88
    %v4015 = vpop.permute.xlu0 %4014
    %v4016 = vsel %vm2467, %v4013, %v4015
    %4018 = vmatprep.subr.mxu0 %v1811
    %4019 = vmatpush1.msra.mxu0 %v1810
    %4020 = vmatprep.subr.mxu0 %v1806
    %4021 = vmatpush1.msra.mxu0 %v1805
    %4022 = vmatprep.subr.mxu0 %v1801
    %4023 = vmatpush1.msra.mxu0 %v1800
    %4024 = vmatprep.subr.mxu0 %v1796
    %4025 = vmatpush1.msra.mxu0 %v1795
    %4026 = vmatprep.subr.mxu0 %v1791
    %4027 = vmatpush1.msra.mxu0 %v1790
    %4028 = vmatprep.subr.mxu0 %v1786
    %4029 = vmatpush1.msra.mxu0 %v1785
    %4030 = vmatprep.subr.mxu0 %v1781
    %4031 = vmatpush1.msra.mxu0 %v1780
    %4032 = vmatprep.subr.mxu0 %v1776
    %4033 = vmatpush1.msra.mxu0 %v1775
    %4034 = vmatprep.subr.mxu0 %v1771
    %4035 = vmatpush1.msra.mxu0 %v1770
    %4036 = vmatprep.subr.mxu0 %v1766
    %4037 = vmatpush1.msra.mxu0 %v1765
    %4038 = vmatprep.subr.mxu0 %v1761
    %4039 = vmatpush1.msra.mxu0 %v1760
    %4040 = vmatprep.subr.mxu0 %v1756
    %4041 = vmatpush1.msra.mxu0 %v1755
    %4042 = vmatprep.subr.mxu0 %v1751
    %4043 = vmatpush1.msra.mxu0 %v1750
    %4044 = vmatprep.subr.mxu0 %v1746
    %4045 = vmatpush1.msra.mxu0 %v1745
    %4046 = vmatprep.subr.mxu0 %v1741
    %4047 = vmatpush1.msra.mxu0 %v1740
    %4048 = vmatprep.subr.mxu0 %v1736
    %4049 = vmatpush1.msra.mxu0 %v1735
    %4050 = vmatprep.subr.mxu0 0.0
    %4051 = vmatpush2.msra.mxu0 0.0
    %4052 = vmatprep.subr.mxu0 0.0
    %4053 = vmatpush2.msra.mxu0 0.0
    %4054 = vmatprep.subr.mxu0 0.0
    %4055 = vmatpush2.msra.mxu0 0.0
    %4056 = vmatprep.subr.mxu0 0.0
    %4057 = vmatpush2.msra.mxu0 0.0
    %4058 = vmatprep.subr.mxu0 0.0
    %4059 = vmatpush2.msra.mxu0 0.0
    %4060 = vmatprep.subr.mxu0 0.0
    %4061 = vmatpush2.msra.mxu0 0.0
    %4062 = vmatprep.subr.mxu0 0.0
    %4063 = vmatpush2.msra.mxu0 0.0
    %4064 = vmatprep.subr.mxu0 0.0
    %4065 = vmatpush2.msra.mxu0 0.0
    %4066 = vmatprep.subr.mxu0 0.0
    %4067 = vmatpush2.msra.mxu0 0.0
    %4068 = vmatprep.subr.mxu0 0.0
    %4069 = vmatpush2.msra.mxu0 0.0
    %4070 = vmatprep.subr.mxu0 0.0
    %4071 = vmatpush2.msra.mxu0 0.0
    %4072 = vmatprep.subr.mxu0 0.0
    %4073 = vmatpush2.msra.mxu0 0.0
    %4074 = vmatprep.subr.mxu0 0.0
    %4075 = vmatpush2.msra.mxu0 0.0
    %4076 = vmatprep.subr.mxu0 0.0
    %4077 = vmatpush2.msra.mxu0 0.0
    %4078 = vmatprep.subr.mxu0 0.0
    %4079 = vmatpush2.msra.mxu0 0.0
    %4080 = vmatprep.subr.mxu0 0.0
    %4081 = vmatpush2.msra.mxu0 0.0
    %4082 = vmatprep.mubr.f32.mxu0 0.0
    %4083 = vmatmul.mubr.f32.gmra.mxu0 %v4016
    %v4084 = vpop.f32.mrf.mxu0
    %v4085 = vadd.f32 0.0, %v4084
    %v4086 = vpop.f32.mrf.mxu0
    %v4087 = vadd.f32 0.0, %v4086
    %4088 = vdwg.mxu0
    %4089 = vmatprep.subr.mxu0 %v1813
    %4090 = vmatpush1.msra.mxu0 %v1812
    %4091 = vmatprep.subr.mxu0 %v1808
    %4092 = vmatpush1.msra.mxu0 %v1807
    %4093 = vmatprep.subr.mxu0 %v1803
    %4094 = vmatpush1.msra.mxu0 %v1802
    %4095 = vmatprep.subr.mxu0 %v1798
    %4096 = vmatpush1.msra.mxu0 %v1797
    %4097 = vmatprep.subr.mxu0 %v1793
    %4098 = vmatpush1.msra.mxu0 %v1792
    %4099 = vmatprep.subr.mxu0 %v1788
    %4100 = vmatpush1.msra.mxu0 %v1787
    %4101 = vmatprep.subr.mxu0 %v1783
    %4102 = vmatpush1.msra.mxu0 %v1782
    %4103 = vmatprep.subr.mxu0 %v1778
    %4104 = vmatpush1.msra.mxu0 %v1777
    %4105 = vmatprep.subr.mxu0 %v1773
    %4106 = vmatpush1.msra.mxu0 %v1772
    %4107 = vmatprep.subr.mxu0 %v1768
    %4108 = vmatpush1.msra.mxu0 %v1767
    %4109 = vmatprep.subr.mxu0 %v1763
    %4110 = vmatpush1.msra.mxu0 %v1762
    %4111 = vmatprep.subr.mxu0 %v1758
    %4112 = vmatpush1.msra.mxu0 %v1757
    %4113 = vmatprep.subr.mxu0 %v1753
    %4114 = vmatpush1.msra.mxu0 %v1752
    %4115 = vmatprep.subr.mxu0 %v1748
    %4116 = vmatpush1.msra.mxu0 %v1747
    %4117 = vmatprep.subr.mxu0 %v1743
    %4118 = vmatpush1.msra.mxu0 %v1742
    %4119 = vmatprep.subr.mxu0 %v1738
    %4120 = vmatpush1.msra.mxu0 %v1737
    %4121 = vmatprep.subr.mxu0 0.0
    %4122 = vmatpush2.msra.mxu0 0.0
    %4123 = vmatprep.subr.mxu0 0.0
    %4124 = vmatpush2.msra.mxu0 0.0
    %4125 = vmatprep.subr.mxu0 0.0
    %4126 = vmatpush2.msra.mxu0 0.0
    %4127 = vmatprep.subr.mxu0 0.0
    %4128 = vmatpush2.msra.mxu0 0.0
    %4129 = vmatprep.subr.mxu0 0.0
    %4130 = vmatpush2.msra.mxu0 0.0
    %4131 = vmatprep.subr.mxu0 0.0
    %4132 = vmatpush2.msra.mxu0 0.0
    %4133 = vmatprep.subr.mxu0 0.0
    %4134 = vmatpush2.msra.mxu0 0.0
    %4135 = vmatprep.subr.mxu0 0.0
    %4136 = vmatpush2.msra.mxu0 0.0
    %4137 = vmatprep.subr.mxu0 0.0
    %4138 = vmatpush2.msra.mxu0 0.0
    %4139 = vmatprep.subr.mxu0 0.0
    %4140 = vmatpush2.msra.mxu0 0.0
    %4141 = vmatprep.subr.mxu0 0.0
    %4142 = vmatpush2.msra.mxu0 0.0
    %4143 = vmatprep.subr.mxu0 0.0
    %4144 = vmatpush2.msra.mxu0 0.0
    %4145 = vmatprep.subr.mxu0 0.0
    %4146 = vmatpush2.msra.mxu0 0.0
    %4147 = vmatprep.subr.mxu0 0.0
    %4148 = vmatpush2.msra.mxu0 0.0
    %4149 = vmatprep.subr.mxu0 0.0
    %4150 = vmatpush2.msra.mxu0 0.0
    %4151 = vmatprep.subr.mxu0 0.0
    %4152 = vmatpush2.msra.mxu0 0.0
    %4153 = vmatprep.mubr.f32.mxu0 0.0
    %4154 = vmatmul.mubr.f32.gmra.mxu0 %v4016
    %v4155 = vpop.f32.mrf.mxu0
    %v4156 = vadd.f32 0.0, %v4155
    %v4157 = vpop.f32.mrf.mxu0
    %v4158 = vadd.f32 0.0, %v4157
    %4159 = vdwg.mxu0
    %4160 = vmatprep.subr.mxu0 0.0
    %4161 = vmatpush1.msra.mxu0 %v1814
    %4162 = vmatprep.subr.mxu0 0.0
    %4163 = vmatpush1.msra.mxu0 %v1809
    %4164 = vmatprep.subr.mxu0 0.0
    %4165 = vmatpush1.msra.mxu0 %v1804
    %4166 = vmatprep.subr.mxu0 0.0
    %4167 = vmatpush1.msra.mxu0 %v1799
    %4168 = vmatprep.subr.mxu0 0.0
    %4169 = vmatpush1.msra.mxu0 %v1794
    %4170 = vmatprep.subr.mxu0 0.0
    %4171 = vmatpush1.msra.mxu0 %v1789
    %4172 = vmatprep.subr.mxu0 0.0
    %4173 = vmatpush1.msra.mxu0 %v1784
    %4174 = vmatprep.subr.mxu0 0.0
    %4175 = vmatpush1.msra.mxu0 %v1779
    %4176 = vmatprep.subr.mxu0 0.0
    %4177 = vmatpush1.msra.mxu0 %v1774
    %4178 = vmatprep.subr.mxu0 0.0
    %4179 = vmatpush1.msra.mxu0 %v1769
    %4180 = vmatprep.subr.mxu0 0.0
    %4181 = vmatpush1.msra.mxu0 %v1764
    %4182 = vmatprep.subr.mxu0 0.0
    %4183 = vmatpush1.msra.mxu0 %v1759
    %4184 = vmatprep.subr.mxu0 0.0
    %4185 = vmatpush1.msra.mxu0 %v1754
    %4186 = vmatprep.subr.mxu0 0.0
    %4187 = vmatpush1.msra.mxu0 %v1749
    %4188 = vmatprep.subr.mxu0 0.0
    %4189 = vmatpush1.msra.mxu0 %v1744
    %4190 = vmatprep.subr.mxu0 0.0
    %4191 = vmatpush1.msra.mxu0 %v1739
    %4192 = vmatprep.subr.mxu0 0.0
    %4193 = vmatpush2.msra.mxu0 0.0
    %4194 = vmatprep.subr.mxu0 0.0
    %4195 = vmatpush2.msra.mxu0 0.0
    %4196 = vmatprep.subr.mxu0 0.0
    %4197 = vmatpush2.msra.mxu0 0.0
    %4198 = vmatprep.subr.mxu0 0.0
    %4199 = vmatpush2.msra.mxu0 0.0
    %4200 = vmatprep.subr.mxu0 0.0
    %4201 = vmatpush2.msra.mxu0 0.0
    %4202 = vmatprep.subr.mxu0 0.0
    %4203 = vmatpush2.msra.mxu0 0.0
    %4204 = vmatprep.subr.mxu0 0.0
    %4205 = vmatpush2.msra.mxu0 0.0
    %4206 = vmatprep.subr.mxu0 0.0
    %4207 = vmatpush2.msra.mxu0 0.0
    %4208 = vmatprep.subr.mxu0 0.0
    %4209 = vmatpush2.msra.mxu0 0.0
    %4210 = vmatprep.subr.mxu0 0.0
    %4211 = vmatpush2.msra.mxu0 0.0
    %4212 = vmatprep.subr.mxu0 0.0
    %4213 = vmatpush2.msra.mxu0 0.0
    %4214 = vmatprep.subr.mxu0 0.0
    %4215 = vmatpush2.msra.mxu0 0.0
    %4216 = vmatprep.subr.mxu0 0.0
    %4217 = vmatpush2.msra.mxu0 0.0
    %4218 = vmatprep.subr.mxu0 0.0
    %4219 = vmatpush2.msra.mxu0 0.0
    %4220 = vmatprep.subr.mxu0 0.0
    %4221 = vmatpush2.msra.mxu0 0.0
    %4222 = vmatprep.subr.mxu0 0.0
    %4223 = vmatpush2.msra.mxu0 0.0
    %4224 = vmatprep.mubr.f32.mxu0 0.0
    %4225 = vmatmul.mubr.f32.gmra.mxu0 %v4016
    %v4226 = vpop.f32.mrf.mxu0
    %v4227 = vadd.f32 0.0, %v4226
    %v4228 = vpop.f32.mrf.mxu0
    %4229 = vdwg.mxu0
    %v4230 = vadd.f32 %v4085, %v1650
    %v4231 = vadd.f32 %v4085, %v2405
    %v4232 = vadd.f32 %v4087, %v2412
    %v4233 = vadd.f32 %v4156, %v2413
    %v4234 = vadd.f32 %v4158, %v2414
    %v4235 = vadd.f32 %v4227, %v2411
    %v4236 = vxor.u32 %v4231, 2147483648
    %v4237 = vxor.u32 %v4232, 2147483648
    %v4238 = vxor.u32 %v4233, 2147483648
    %v4239 = vmul.f32 %v4236, 1.442695
    %v4240 = vpow.pop %v4239
    %v4241 = vmul.f32 %v4237, 1.442695
    %v4242 = vpow.pop %v4241
    %v4243 = vmul.f32 %v4238, 1.442695
    %v4244 = vpow.pop %v4243
    %v4245 = vadd.f32 %v4240, 1.0
    %v4246 = vadd.f32 %v4242, 1.0
    %v4247 = vadd.f32 %v4244, 1.0
    %v4248 = vrcp.pop %v4245
    %v4249 = vmul.f32 1.0, %v4248
    %v4250 = vrcp.pop %v4246
    %v4251 = vmul.f32 1.0, %v4250
    %v4252 = vrcp.pop %v4247
    %v4253 = vmul.f32 1.0, %v4252
    %v4254 = vmul.f32 %v4249, %v4234
    %v4255 = vmul.f32 %v4251, %v4235
    %v4256 = vadd.f32 %v4233, %v4254
    %v4257 = vadd.f32 %v4234, %v4255
    %v4258 = vtanh.pop %v4256
    %v4259 = vtanh.pop %v4257
    %v4260 = vsub.f32 1.0, %v4251
    %v4261 = vsub.f32 1.0, %v4253
    %v4262 = vmul.f32 %v4260, %v4258
    %v4263 = vmul.f32 %v4261, %v4259
    %v4264 = vmul.f32 %v4251, %v4008
    %v4265 = vmul.f32 %v4253, %v4009
    %v4266 = vadd.f32 %v4262, %v4264
    %v4267 = vadd.f32 %v4263, %v4265
    %4270 = vrot.lane.b32.xlu0 %v4266, 88
    %v4271 = vpop.permute.xlu0 %4270
    %4272 = vrot.lane.b32.xlu0 %v4267, 88
    %v4273 = vpop.permute.xlu0 %4272
    %v4274 = vsel %vm2467, %v4271, %v4273
    %4276 = vmatprep.subr.mxu0 %v1811
    %4277 = vmatpush1.msra.mxu0 %v1810
    %4278 = vmatprep.subr.mxu0 %v1806
    %4279 = vmatpush1.msra.mxu0 %v1805
    %4280 = vmatprep.subr.mxu0 %v1801
    %4281 = vmatpush1.msra.mxu0 %v1800
    %4282 = vmatprep.subr.mxu0 %v1796
    %4283 = vmatpush1.msra.mxu0 %v1795
    %4284 = vmatprep.subr.mxu0 %v1791
    %4285 = vmatpush1.msra.mxu0 %v1790
    %4286 = vmatprep.subr.mxu0 %v1786
    %4287 = vmatpush1.msra.mxu0 %v1785
    %4288 = vmatprep.subr.mxu0 %v1781
    %4289 = vmatpush1.msra.mxu0 %v1780
    %4290 = vmatprep.subr.mxu0 %v1776
    %4291 = vmatpush1.msra.mxu0 %v1775
    %4292 = vmatprep.subr.mxu0 %v1771
    %4293 = vmatpush1.msra.mxu0 %v1770
    %4294 = vmatprep.subr.mxu0 %v1766
    %4295 = vmatpush1.msra.mxu0 %v1765
    %4296 = vmatprep.subr.mxu0 %v1761
    %4297 = vmatpush1.msra.mxu0 %v1760
    %4298 = vmatprep.subr.mxu0 %v1756
    %4299 = vmatpush1.msra.mxu0 %v1755
    %4300 = vmatprep.subr.mxu0 %v1751
    %4301 = vmatpush1.msra.mxu0 %v1750
    %4302 = vmatprep.subr.mxu0 %v1746
    %4303 = vmatpush1.msra.mxu0 %v1745
    %4304 = vmatprep.subr.mxu0 %v1741
    %4305 = vmatpush1.msra.mxu0 %v1740
    %4306 = vmatprep.subr.mxu0 %v1736
    %4307 = vmatpush1.msra.mxu0 %v1735
    %4308 = vmatprep.subr.mxu0 0.0
    %4309 = vmatpush2.msra.mxu0 0.0
    %4310 = vmatprep.subr.mxu0 0.0
    %4311 = vmatpush2.msra.mxu0 0.0
    %4312 = vmatprep.subr.mxu0 0.0
    %4313 = vmatpush2.msra.mxu0 0.0
    %4314 = vmatprep.subr.mxu0 0.0
    %4315 = vmatpush2.msra.mxu0 0.0
    %4316 = vmatprep.subr.mxu0 0.0
    %4317 = vmatpush2.msra.mxu0 0.0
    %4318 = vmatprep.subr.mxu0 0.0
    %4319 = vmatpush2.msra.mxu0 0.0
    %4320 = vmatprep.subr.mxu0 0.0
    %4321 = vmatpush2.msra.mxu0 0.0
    %4322 = vmatprep.subr.mxu0 0.0
    %4323 = vmatpush2.msra.mxu0 0.0
    %4324 = vmatprep.subr.mxu0 0.0
    %4325 = vmatpush2.msra.mxu0 0.0
    %4326 = vmatprep.subr.mxu0 0.0
    %4327 = vmatpush2.msra.mxu0 0.0
    %4328 = vmatprep.subr.mxu0 0.0
    %4329 = vmatpush2.msra.mxu0 0.0
    %4330 = vmatprep.subr.mxu0 0.0
    %4331 = vmatpush2.msra.mxu0 0.0
    %4332 = vmatprep.subr.mxu0 0.0
    %4333 = vmatpush2.msra.mxu0 0.0
    %4334 = vmatprep.subr.mxu0 0.0
    %4335 = vmatpush2.msra.mxu0 0.0
    %4336 = vmatprep.subr.mxu0 0.0
    %4337 = vmatpush2.msra.mxu0 0.0
    %4338 = vmatprep.subr.mxu0 0.0
    %4339 = vmatpush2.msra.mxu0 0.0
    %4340 = vmatprep.mubr.f32.mxu0 0.0
    %4341 = vmatmul.mubr.f32.gmra.mxu0 %v4274
    %v4342 = vpop.f32.mrf.mxu0
    %v4343 = vadd.f32 0.0, %v4342
    %v4344 = vpop.f32.mrf.mxu0
    %v4345 = vadd.f32 0.0, %v4344
    %4346 = vdwg.mxu0
    %4347 = vmatprep.subr.mxu0 %v1813
    %4348 = vmatpush1.msra.mxu0 %v1812
    %4349 = vmatprep.subr.mxu0 %v1808
    %4350 = vmatpush1.msra.mxu0 %v1807
    %4351 = vmatprep.subr.mxu0 %v1803
    %4352 = vmatpush1.msra.mxu0 %v1802
    %4353 = vmatprep.subr.mxu0 %v1798
    %4354 = vmatpush1.msra.mxu0 %v1797
    %4355 = vmatprep.subr.mxu0 %v1793
    %4356 = vmatpush1.msra.mxu0 %v1792
    %4357 = vmatprep.subr.mxu0 %v1788
    %4358 = vmatpush1.msra.mxu0 %v1787
    %4359 = vmatprep.subr.mxu0 %v1783
    %4360 = vmatpush1.msra.mxu0 %v1782
    %4361 = vmatprep.subr.mxu0 %v1778
    %4362 = vmatpush1.msra.mxu0 %v1777
    %4363 = vmatprep.subr.mxu0 %v1773
    %4364 = vmatpush1.msra.mxu0 %v1772
    %4365 = vmatprep.subr.mxu0 %v1768
    %4366 = vmatpush1.msra.mxu0 %v1767
    %4367 = vmatprep.subr.mxu0 %v1763
    %4368 = vmatpush1.msra.mxu0 %v1762
    %4369 = vmatprep.subr.mxu0 %v1758
    %4370 = vmatpush1.msra.mxu0 %v1757
    %4371 = vmatprep.subr.mxu0 %v1753
    %4372 = vmatpush1.msra.mxu0 %v1752
    %4373 = vmatprep.subr.mxu0 %v1748
    %4374 = vmatpush1.msra.mxu0 %v1747
    %4375 = vmatprep.subr.mxu0 %v1743
    %4376 = vmatpush1.msra.mxu0 %v1742
    %4377 = vmatprep.subr.mxu0 %v1738
    %4378 = vmatpush1.msra.mxu0 %v1737
    %4379 = vmatprep.subr.mxu0 0.0
    %4380 = vmatpush2.msra.mxu0 0.0
    %4381 = vmatprep.subr.mxu0 0.0
    %4382 = vmatpush2.msra.mxu0 0.0
    %4383 = vmatprep.subr.mxu0 0.0
    %4384 = vmatpush2.msra.mxu0 0.0
    %4385 = vmatprep.subr.mxu0 0.0
    %4386 = vmatpush2.msra.mxu0 0.0
    %4387 = vmatprep.subr.mxu0 0.0
    %4388 = vmatpush2.msra.mxu0 0.0
    %4389 = vmatprep.subr.mxu0 0.0
    %4390 = vmatpush2.msra.mxu0 0.0
    %4391 = vmatprep.subr.mxu0 0.0
    %4392 = vmatpush2.msra.mxu0 0.0
    %4393 = vmatprep.subr.mxu0 0.0
    %4394 = vmatpush2.msra.mxu0 0.0
    %4395 = vmatprep.subr.mxu0 0.0
    %4396 = vmatpush2.msra.mxu0 0.0
    %4397 = vmatprep.subr.mxu0 0.0
    %4398 = vmatpush2.msra.mxu0 0.0
    %4399 = vmatprep.subr.mxu0 0.0
    %4400 = vmatpush2.msra.mxu0 0.0
    %4401 = vmatprep.subr.mxu0 0.0
    %4402 = vmatpush2.msra.mxu0 0.0
    %4403 = vmatprep.subr.mxu0 0.0
    %4404 = vmatpush2.msra.mxu0 0.0
    %4405 = vmatprep.subr.mxu0 0.0
    %4406 = vmatpush2.msra.mxu0 0.0
    %4407 = vmatprep.subr.mxu0 0.0
    %4408 = vmatpush2.msra.mxu0 0.0
    %4409 = vmatprep.subr.mxu0 0.0
    %4410 = vmatpush2.msra.mxu0 0.0
    %4411 = vmatprep.mubr.f32.mxu0 0.0
    %4412 = vmatmul.mubr.f32.gmra.mxu0 %v4274
    %v4413 = vpop.f32.mrf.mxu0
    %v4414 = vadd.f32 0.0, %v4413
    %v4415 = vpop.f32.mrf.mxu0
    %v4416 = vadd.f32 0.0, %v4415
    %4417 = vdwg.mxu0
    %4418 = vmatprep.subr.mxu0 0.0
    %4419 = vmatpush1.msra.mxu0 %v1814
    %4420 = vmatprep.subr.mxu0 0.0
    %4421 = vmatpush1.msra.mxu0 %v1809
    %4422 = vmatprep.subr.mxu0 0.0
    %4423 = vmatpush1.msra.mxu0 %v1804
    %4424 = vmatprep.subr.mxu0 0.0
    %4425 = vmatpush1.msra.mxu0 %v1799
    %4426 = vmatprep.subr.mxu0 0.0
    %4427 = vmatpush1.msra.mxu0 %v1794
    %4428 = vmatprep.subr.mxu0 0.0
    %4429 = vmatpush1.msra.mxu0 %v1789
    %4430 = vmatprep.subr.mxu0 0.0
    %4431 = vmatpush1.msra.mxu0 %v1784
    %4432 = vmatprep.subr.mxu0 0.0
    %4433 = vmatpush1.msra.mxu0 %v1779
    %4434 = vmatprep.subr.mxu0 0.0
    %4435 = vmatpush1.msra.mxu0 %v1774
    %4436 = vmatprep.subr.mxu0 0.0
    %4437 = vmatpush1.msra.mxu0 %v1769
    %4438 = vmatprep.subr.mxu0 0.0
    %4439 = vmatpush1.msra.mxu0 %v1764
    %4440 = vmatprep.subr.mxu0 0.0
    %4441 = vmatpush1.msra.mxu0 %v1759
    %4442 = vmatprep.subr.mxu0 0.0
    %4443 = vmatpush1.msra.mxu0 %v1754
    %4444 = vmatprep.subr.mxu0 0.0
    %4445 = vmatpush1.msra.mxu0 %v1749
    %4446 = vmatprep.subr.mxu0 0.0
    %4447 = vmatpush1.msra.mxu0 %v1744
    %4448 = vmatprep.subr.mxu0 0.0
    %4449 = vmatpush1.msra.mxu0 %v1739
    %4450 = vmatprep.subr.mxu0 0.0
    %4451 = vmatpush2.msra.mxu0 0.0
    %4452 = vmatprep.subr.mxu0 0.0
    %4453 = vmatpush2.msra.mxu0 0.0
    %4454 = vmatprep.subr.mxu0 0.0
    %4455 = vmatpush2.msra.mxu0 0.0
    %4456 = vmatprep.subr.mxu0 0.0
    %4457 = vmatpush2.msra.mxu0 0.0
    %4458 = vmatprep.subr.mxu0 0.0
    %4459 = vmatpush2.msra.mxu0 0.0
    %4460 = vmatprep.subr.mxu0 0.0
    %4461 = vmatpush2.msra.mxu0 0.0
    %4462 = vmatprep.subr.mxu0 0.0
    %4463 = vmatpush2.msra.mxu0 0.0
    %4464 = vmatprep.subr.mxu0 0.0
    %4465 = vmatpush2.msra.mxu0 0.0
    %4466 = vmatprep.subr.mxu0 0.0
    %4467 = vmatpush2.msra.mxu0 0.0
    %4468 = vmatprep.subr.mxu0 0.0
    %4469 = vmatpush2.msra.mxu0 0.0
    %4470 = vmatprep.subr.mxu0 0.0
    %4471 = vmatpush2.msra.mxu0 0.0
    %4472 = vmatprep.subr.mxu0 0.0
    %4473 = vmatpush2.msra.mxu0 0.0
    %4474 = vmatprep.subr.mxu0 0.0
    %4475 = vmatpush2.msra.mxu0 0.0
    %4476 = vmatprep.subr.mxu0 0.0
    %4477 = vmatpush2.msra.mxu0 0.0
    %4478 = vmatprep.subr.mxu0 0.0
    %4479 = vmatpush2.msra.mxu0 0.0
    %4480 = vmatprep.subr.mxu0 0.0
    %4481 = vmatpush2.msra.mxu0 0.0
    %4482 = vmatprep.mubr.f32.mxu0 0.0
    %4483 = vmatmul.mubr.f32.gmra.mxu0 %v4274
    %v4484 = vpop.f32.mrf.mxu0
    %v4485 = vadd.f32 0.0, %v4484
    %v4486 = vpop.f32.mrf.mxu0
    %4487 = vdwg.mxu0
    %v4488 = vadd.f32 %v4343, %v1650
    %v4489 = vadd.f32 %v4343, %v2405
    %v4490 = vadd.f32 %v4345, %v2412
    %v4491 = vadd.f32 %v4414, %v2413
    %v4492 = vadd.f32 %v4416, %v2414
    %v4493 = vadd.f32 %v4485, %v2411
    %v4494 = vxor.u32 %v4489, 2147483648
    %v4495 = vxor.u32 %v4490, 2147483648
    %v4496 = vxor.u32 %v4491, 2147483648
    %v4497 = vmul.f32 %v4494, 1.442695
    %v4498 = vpow.pop %v4497
    %v4499 = vmul.f32 %v4495, 1.442695
    %v4500 = vpow.pop %v4499
    %v4501 = vmul.f32 %v4496, 1.442695
    %v4502 = vpow.pop %v4501
    %v4503 = vadd.f32 %v4498, 1.0
    %v4504 = vadd.f32 %v4500, 1.0
    %v4505 = vadd.f32 %v4502, 1.0
    %v4506 = vrcp.pop %v4503
    %v4507 = vmul.f32 1.0, %v4506
    %v4508 = vrcp.pop %v4504
    %v4509 = vmul.f32 1.0, %v4508
    %v4510 = vrcp.pop %v4505
    %v4511 = vmul.f32 1.0, %v4510
    %v4512 = vmul.f32 %v4507, %v4492
    %v4513 = vmul.f32 %v4509, %v4493
    %v4514 = vadd.f32 %v4491, %v4512
    %v4515 = vadd.f32 %v4492, %v4513
    %v4516 = vtanh.pop %v4514
    %v4517 = vtanh.pop %v4515
    %v4518 = vsub.f32 1.0, %v4509
    %v4519 = vsub.f32 1.0, %v4511
    %v4520 = vmul.f32 %v4518, %v4516
    %v4521 = vmul.f32 %v4519, %v4517
    %v4522 = vmul.f32 %v4509, %v4266
    %v4523 = vmul.f32 %v4511, %v4267
    %v4524 = vadd.f32 %v4520, %v4522
    %v4525 = vadd.f32 %v4521, %v4523
    %4528 = vrot.lane.b32.xlu0 %v4524, 88
    %v4529 = vpop.permute.xlu0 %4528
    %4530 = vrot.lane.b32.xlu0 %v4525, 88
    %v4531 = vpop.permute.xlu0 %4530
    %v4532 = vsel %vm2467, %v4529, %v4531
    %4534 = vmatprep.subr.mxu0 %v1811
    %4535 = vmatpush1.msra.mxu0 %v1810
    %4536 = vmatprep.subr.mxu0 %v1806
    %4537 = vmatpush1.msra.mxu0 %v1805
    %4538 = vmatprep.subr.mxu0 %v1801
    %4539 = vmatpush1.msra.mxu0 %v1800
    %4540 = vmatprep.subr.mxu0 %v1796
    %4541 = vmatpush1.msra.mxu0 %v1795
    %4542 = vmatprep.subr.mxu0 %v1791
    %4543 = vmatpush1.msra.mxu0 %v1790
    %4544 = vmatprep.subr.mxu0 %v1786
    %4545 = vmatpush1.msra.mxu0 %v1785
    %4546 = vmatprep.subr.mxu0 %v1781
    %4547 = vmatpush1.msra.mxu0 %v1780
    %4548 = vmatprep.subr.mxu0 %v1776
    %4549 = vmatpush1.msra.mxu0 %v1775
    %4550 = vmatprep.subr.mxu0 %v1771
    %4551 = vmatpush1.msra.mxu0 %v1770
    %4552 = vmatprep.subr.mxu0 %v1766
    %4553 = vmatpush1.msra.mxu0 %v1765
    %4554 = vmatprep.subr.mxu0 %v1761
    %4555 = vmatpush1.msra.mxu0 %v1760
    %4556 = vmatprep.subr.mxu0 %v1756
    %4557 = vmatpush1.msra.mxu0 %v1755
    %4558 = vmatprep.subr.mxu0 %v1751
    %4559 = vmatpush1.msra.mxu0 %v1750
    %4560 = vmatprep.subr.mxu0 %v1746
    %4561 = vmatpush1.msra.mxu0 %v1745
    %4562 = vmatprep.subr.mxu0 %v1741
    %4563 = vmatpush1.msra.mxu0 %v1740
    %4564 = vmatprep.subr.mxu0 %v1736
    %4565 = vmatpush1.msra.mxu0 %v1735
    %4566 = vmatprep.subr.mxu0 0.0
    %4567 = vmatpush2.msra.mxu0 0.0
    %4568 = vmatprep.subr.mxu0 0.0
    %4569 = vmatpush2.msra.mxu0 0.0
    %4570 = vmatprep.subr.mxu0 0.0
    %4571 = vmatpush2.msra.mxu0 0.0
    %4572 = vmatprep.subr.mxu0 0.0
    %4573 = vmatpush2.msra.mxu0 0.0
    %4574 = vmatprep.subr.mxu0 0.0
    %4575 = vmatpush2.msra.mxu0 0.0
    %4576 = vmatprep.subr.mxu0 0.0
    %4577 = vmatpush2.msra.mxu0 0.0
    %4578 = vmatprep.subr.mxu0 0.0
    %4579 = vmatpush2.msra.mxu0 0.0
    %4580 = vmatprep.subr.mxu0 0.0
    %4581 = vmatpush2.msra.mxu0 0.0
    %4582 = vmatprep.subr.mxu0 0.0
    %4583 = vmatpush2.msra.mxu0 0.0
    %4584 = vmatprep.subr.mxu0 0.0
    %4585 = vmatpush2.msra.mxu0 0.0
    %4586 = vmatprep.subr.mxu0 0.0
    %4587 = vmatpush2.msra.mxu0 0.0
    %4588 = vmatprep.subr.mxu0 0.0
    %4589 = vmatpush2.msra.mxu0 0.0
    %4590 = vmatprep.subr.mxu0 0.0
    %4591 = vmatpush2.msra.mxu0 0.0
    %4592 = vmatprep.subr.mxu0 0.0
    %4593 = vmatpush2.msra.mxu0 0.0
    %4594 = vmatprep.subr.mxu0 0.0
    %4595 = vmatpush2.msra.mxu0 0.0
    %4596 = vmatprep.subr.mxu0 0.0
    %4597 = vmatpush2.msra.mxu0 0.0
    %4598 = vmatprep.mubr.f32.mxu0 0.0
    %4599 = vmatmul.mubr.f32.gmra.mxu0 %v4532
    %v4600 = vpop.f32.mrf.mxu0
    %v4601 = vadd.f32 0.0, %v4600
    %v4602 = vpop.f32.mrf.mxu0
    %v4603 = vadd.f32 0.0, %v4602
    %4604 = vdwg.mxu0
    %4605 = vmatprep.subr.mxu0 %v1813
    %4606 = vmatpush1.msra.mxu0 %v1812
    %4607 = vmatprep.subr.mxu0 %v1808
    %4608 = vmatpush1.msra.mxu0 %v1807
    %4609 = vmatprep.subr.mxu0 %v1803
    %4610 = vmatpush1.msra.mxu0 %v1802
    %4611 = vmatprep.subr.mxu0 %v1798
    %4612 = vmatpush1.msra.mxu0 %v1797
    %4613 = vmatprep.subr.mxu0 %v1793
    %4614 = vmatpush1.msra.mxu0 %v1792
    %4615 = vmatprep.subr.mxu0 %v1788
    %4616 = vmatpush1.msra.mxu0 %v1787
    %4617 = vmatprep.subr.mxu0 %v1783
    %4618 = vmatpush1.msra.mxu0 %v1782
    %4619 = vmatprep.subr.mxu0 %v1778
    %4620 = vmatpush1.msra.mxu0 %v1777
    %4621 = vmatprep.subr.mxu0 %v1773
    %4622 = vmatpush1.msra.mxu0 %v1772
    %4623 = vmatprep.subr.mxu0 %v1768
    %4624 = vmatpush1.msra.mxu0 %v1767
    %4625 = vmatprep.subr.mxu0 %v1763
    %4626 = vmatpush1.msra.mxu0 %v1762
    %4627 = vmatprep.subr.mxu0 %v1758
    %4628 = vmatpush1.msra.mxu0 %v1757
    %4629 = vmatprep.subr.mxu0 %v1753
    %4630 = vmatpush1.msra.mxu0 %v1752
    %4631 = vmatprep.subr.mxu0 %v1748
    %4632 = vmatpush1.msra.mxu0 %v1747
    %4633 = vmatprep.subr.mxu0 %v1743
    %4634 = vmatpush1.msra.mxu0 %v1742
    %4635 = vmatprep.subr.mxu0 %v1738
    %4636 = vmatpush1.msra.mxu0 %v1737
    %4637 = vmatprep.subr.mxu0 0.0
    %4638 = vmatpush2.msra.mxu0 0.0
    %4639 = vmatprep.subr.mxu0 0.0
    %4640 = vmatpush2.msra.mxu0 0.0
    %4641 = vmatprep.subr.mxu0 0.0
    %4642 = vmatpush2.msra.mxu0 0.0
    %4643 = vmatprep.subr.mxu0 0.0
    %4644 = vmatpush2.msra.mxu0 0.0
    %4645 = vmatprep.subr.mxu0 0.0
    %4646 = vmatpush2.msra.mxu0 0.0
    %4647 = vmatprep.subr.mxu0 0.0
    %4648 = vmatpush2.msra.mxu0 0.0
    %4649 = vmatprep.subr.mxu0 0.0
    %4650 = vmatpush2.msra.mxu0 0.0
    %4651 = vmatprep.subr.mxu0 0.0
    %4652 = vmatpush2.msra.mxu0 0.0
    %4653 = vmatprep.subr.mxu0 0.0
    %4654 = vmatpush2.msra.mxu0 0.0
    %4655 = vmatprep.subr.mxu0 0.0
    %4656 = vmatpush2.msra.mxu0 0.0
    %4657 = vmatprep.subr.mxu0 0.0
    %4658 = vmatpush2.msra.mxu0 0.0
    %4659 = vmatprep.subr.mxu0 0.0
    %4660 = vmatpush2.msra.mxu0 0.0
    %4661 = vmatprep.subr.mxu0 0.0
    %4662 = vmatpush2.msra.mxu0 0.0
    %4663 = vmatprep.subr.mxu0 0.0
    %4664 = vmatpush2.msra.mxu0 0.0
    %4665 = vmatprep.subr.mxu0 0.0
    %4666 = vmatpush2.msra.mxu0 0.0
    %4667 = vmatprep.subr.mxu0 0.0
    %4668 = vmatpush2.msra.mxu0 0.0
    %4669 = vmatprep.mubr.f32.mxu0 0.0
    %4670 = vmatmul.mubr.f32.gmra.mxu0 %v4532
    %v4671 = vpop.f32.mrf.mxu0
    %v4672 = vadd.f32 0.0, %v4671
    %v4673 = vpop.f32.mrf.mxu0
    %v4674 = vadd.f32 0.0, %v4673
    %4675 = vdwg.mxu0
    %4676 = vmatprep.subr.mxu0 0.0
    %4677 = vmatpush1.msra.mxu0 %v1814
    %4678 = vmatprep.subr.mxu0 0.0
    %4679 = vmatpush1.msra.mxu0 %v1809
    %4680 = vmatprep.subr.mxu0 0.0
    %4681 = vmatpush1.msra.mxu0 %v1804
    %4682 = vmatprep.subr.mxu0 0.0
    %4683 = vmatpush1.msra.mxu0 %v1799
    %4684 = vmatprep.subr.mxu0 0.0
    %4685 = vmatpush1.msra.mxu0 %v1794
    %4686 = vmatprep.subr.mxu0 0.0
    %4687 = vmatpush1.msra.mxu0 %v1789
    %4688 = vmatprep.subr.mxu0 0.0
    %4689 = vmatpush1.msra.mxu0 %v1784
    %4690 = vmatprep.subr.mxu0 0.0
    %4691 = vmatpush1.msra.mxu0 %v1779
    %4692 = vmatprep.subr.mxu0 0.0
    %4693 = vmatpush1.msra.mxu0 %v1774
    %4694 = vmatprep.subr.mxu0 0.0
    %4695 = vmatpush1.msra.mxu0 %v1769
    %4696 = vmatprep.subr.mxu0 0.0
    %4697 = vmatpush1.msra.mxu0 %v1764
    %4698 = vmatprep.subr.mxu0 0.0
    %4699 = vmatpush1.msra.mxu0 %v1759
    %4700 = vmatprep.subr.mxu0 0.0
    %4701 = vmatpush1.msra.mxu0 %v1754
    %4702 = vmatprep.subr.mxu0 0.0
    %4703 = vmatpush1.msra.mxu0 %v1749
    %4704 = vmatprep.subr.mxu0 0.0
    %4705 = vmatpush1.msra.mxu0 %v1744
    %4706 = vmatprep.subr.mxu0 0.0
    %4707 = vmatpush1.msra.mxu0 %v1739
    %4708 = vmatprep.subr.mxu0 0.0
    %4709 = vmatpush2.msra.mxu0 0.0
    %4710 = vmatprep.subr.mxu0 0.0
    %4711 = vmatpush2.msra.mxu0 0.0
    %4712 = vmatprep.subr.mxu0 0.0
    %4713 = vmatpush2.msra.mxu0 0.0
    %4714 = vmatprep.subr.mxu0 0.0
    %4715 = vmatpush2.msra.mxu0 0.0
    %4716 = vmatprep.subr.mxu0 0.0
    %4717 = vmatpush2.msra.mxu0 0.0
    %4718 = vmatprep.subr.mxu0 0.0
    %4719 = vmatpush2.msra.mxu0 0.0
    %4720 = vmatprep.subr.mxu0 0.0
    %4721 = vmatpush2.msra.mxu0 0.0
    %4722 = vmatprep.subr.mxu0 0.0
    %4723 = vmatpush2.msra.mxu0 0.0
    %4724 = vmatprep.subr.mxu0 0.0
    %4725 = vmatpush2.msra.mxu0 0.0
    %4726 = vmatprep.subr.mxu0 0.0
    %4727 = vmatpush2.msra.mxu0 0.0
    %4728 = vmatprep.subr.mxu0 0.0
    %4729 = vmatpush2.msra.mxu0 0.0
    %4730 = vmatprep.subr.mxu0 0.0
    %4731 = vmatpush2.msra.mxu0 0.0
    %4732 = vmatprep.subr.mxu0 0.0
    %4733 = vmatpush2.msra.mxu0 0.0
    %4734 = vmatprep.subr.mxu0 0.0
    %4735 = vmatpush2.msra.mxu0 0.0
    %4736 = vmatprep.subr.mxu0 0.0
    %4737 = vmatpush2.msra.mxu0 0.0
    %4738 = vmatprep.subr.mxu0 0.0
    %4739 = vmatpush2.msra.mxu0 0.0
    %4740 = vmatprep.mubr.f32.mxu0 0.0
    %4741 = vmatmul.mubr.f32.gmra.mxu0 %v4532
    %v4742 = vpop.f32.mrf.mxu0
    %v4743 = vadd.f32 0.0, %v4742
    %v4744 = vpop.f32.mrf.mxu0
    %4745 = vdwg.mxu0
    %v4746 = vadd.f32 %v4601, %v1650
    %v4747 = vadd.f32 %v4601, %v2405
    %v4748 = vadd.f32 %v4603, %v2412
    %v4749 = vadd.f32 %v4672, %v2413
    %v4750 = vadd.f32 %v4674, %v2414
    %v4751 = vadd.f32 %v4743, %v2411
    %v4752 = vxor.u32 %v4747, 2147483648
    %v4753 = vxor.u32 %v4748, 2147483648
    %v4754 = vxor.u32 %v4749, 2147483648
    %v4755 = vmul.f32 %v4752, 1.442695
    %v4756 = vpow.pop %v4755
    %v4757 = vmul.f32 %v4753, 1.442695
    %v4758 = vpow.pop %v4757
    %v4759 = vmul.f32 %v4754, 1.442695
    %v4760 = vpow.pop %v4759
    %v4761 = vadd.f32 %v4756, 1.0
    %v4762 = vadd.f32 %v4758, 1.0
    %v4763 = vadd.f32 %v4760, 1.0
    %v4764 = vrcp.pop %v4761
    %v4765 = vmul.f32 1.0, %v4764
    %v4766 = vrcp.pop %v4762
    %v4767 = vmul.f32 1.0, %v4766
    %v4768 = vrcp.pop %v4763
    %v4769 = vmul.f32 1.0, %v4768
    %v4770 = vmul.f32 %v4765, %v4750
    %v4771 = vmul.f32 %v4767, %v4751
    %v4772 = vadd.f32 %v4749, %v4770
    %v4773 = vadd.f32 %v4750, %v4771
    %v4774 = vtanh.pop %v4772
    %v4775 = vtanh.pop %v4773
    %v4776 = vsub.f32 1.0, %v4767
    %v4777 = vsub.f32 1.0, %v4769
    %v4778 = vmul.f32 %v4776, %v4774
    %v4779 = vmul.f32 %v4777, %v4775
    %v4780 = vmul.f32 %v4767, %v4524
    %v4781 = vmul.f32 %v4769, %v4525
    %v4782 = vadd.f32 %v4778, %v4780
    %v4783 = vadd.f32 %v4779, %v4781
    %4786 = vrot.lane.b32.xlu0 %v4782, 88
    %v4787 = vpop.permute.xlu0 %4786
    %4788 = vrot.lane.b32.xlu0 %v4783, 88
    %v4789 = vpop.permute.xlu0 %4788
    %v4790 = vsel %vm2467, %v4787, %v4789
    %4792 = vmatprep.subr.mxu0 %v1811
    %4793 = vmatpush1.msra.mxu0 %v1810
    %4794 = vmatprep.subr.mxu0 %v1806
    %4795 = vmatpush1.msra.mxu0 %v1805
    %4796 = vmatprep.subr.mxu0 %v1801
    %4797 = vmatpush1.msra.mxu0 %v1800
    %4798 = vmatprep.subr.mxu0 %v1796
    %4799 = vmatpush1.msra.mxu0 %v1795
    %4800 = vmatprep.subr.mxu0 %v1791
    %4801 = vmatpush1.msra.mxu0 %v1790
    %4802 = vmatprep.subr.mxu0 %v1786
    %4803 = vmatpush1.msra.mxu0 %v1785
    %4804 = vmatprep.subr.mxu0 %v1781
    %4805 = vmatpush1.msra.mxu0 %v1780
    %4806 = vmatprep.subr.mxu0 %v1776
    %4807 = vmatpush1.msra.mxu0 %v1775
    %4808 = vmatprep.subr.mxu0 %v1771
    %4809 = vmatpush1.msra.mxu0 %v1770
    %4810 = vmatprep.subr.mxu0 %v1766
    %4811 = vmatpush1.msra.mxu0 %v1765
    %4812 = vmatprep.subr.mxu0 %v1761
    %4813 = vmatpush1.msra.mxu0 %v1760
    %4814 = vmatprep.subr.mxu0 %v1756
    %4815 = vmatpush1.msra.mxu0 %v1755
    %4816 = vmatprep.subr.mxu0 %v1751
    %4817 = vmatpush1.msra.mxu0 %v1750
    %4818 = vmatprep.subr.mxu0 %v1746
    %4819 = vmatpush1.msra.mxu0 %v1745
    %4820 = vmatprep.subr.mxu0 %v1741
    %4821 = vmatpush1.msra.mxu0 %v1740
    %4822 = vmatprep.subr.mxu0 %v1736
    %4823 = vmatpush1.msra.mxu0 %v1735
    %4824 = vmatprep.subr.mxu0 0.0
    %4825 = vmatpush2.msra.mxu0 0.0
    %4826 = vmatprep.subr.mxu0 0.0
    %4827 = vmatpush2.msra.mxu0 0.0
    %4828 = vmatprep.subr.mxu0 0.0
    %4829 = vmatpush2.msra.mxu0 0.0
    %4830 = vmatprep.subr.mxu0 0.0
    %4831 = vmatpush2.msra.mxu0 0.0
    %4832 = vmatprep.subr.mxu0 0.0
    %4833 = vmatpush2.msra.mxu0 0.0
    %4834 = vmatprep.subr.mxu0 0.0
    %4835 = vmatpush2.msra.mxu0 0.0
    %4836 = vmatprep.subr.mxu0 0.0
    %4837 = vmatpush2.msra.mxu0 0.0
    %4838 = vmatprep.subr.mxu0 0.0
    %4839 = vmatpush2.msra.mxu0 0.0
    %4840 = vmatprep.subr.mxu0 0.0
    %4841 = vmatpush2.msra.mxu0 0.0
    %4842 = vmatprep.subr.mxu0 0.0
    %4843 = vmatpush2.msra.mxu0 0.0
    %4844 = vmatprep.subr.mxu0 0.0
    %4845 = vmatpush2.msra.mxu0 0.0
    %4846 = vmatprep.subr.mxu0 0.0
    %4847 = vmatpush2.msra.mxu0 0.0
    %4848 = vmatprep.subr.mxu0 0.0
    %4849 = vmatpush2.msra.mxu0 0.0
    %4850 = vmatprep.subr.mxu0 0.0
    %4851 = vmatpush2.msra.mxu0 0.0
    %4852 = vmatprep.subr.mxu0 0.0
    %4853 = vmatpush2.msra.mxu0 0.0
    %4854 = vmatprep.subr.mxu0 0.0
    %4855 = vmatpush2.msra.mxu0 0.0
    %4856 = vmatprep.mubr.f32.mxu0 0.0
    %4857 = vmatmul.mubr.f32.gmra.mxu0 %v4790
    %v4858 = vpop.f32.mrf.mxu0
    %v4859 = vadd.f32 0.0, %v4858
    %v4860 = vpop.f32.mrf.mxu0
    %v4861 = vadd.f32 0.0, %v4860
    %4862 = vdwg.mxu0
    %4863 = vmatprep.subr.mxu0 %v1813
    %4864 = vmatpush1.msra.mxu0 %v1812
    %4865 = vmatprep.subr.mxu0 %v1808
    %4866 = vmatpush1.msra.mxu0 %v1807
    %4867 = vmatprep.subr.mxu0 %v1803
    %4868 = vmatpush1.msra.mxu0 %v1802
    %4869 = vmatprep.subr.mxu0 %v1798
    %4870 = vmatpush1.msra.mxu0 %v1797
    %4871 = vmatprep.subr.mxu0 %v1793
    %4872 = vmatpush1.msra.mxu0 %v1792
    %4873 = vmatprep.subr.mxu0 %v1788
    %4874 = vmatpush1.msra.mxu0 %v1787
    %4875 = vmatprep.subr.mxu0 %v1783
    %4876 = vmatpush1.msra.mxu0 %v1782
    %4877 = vmatprep.subr.mxu0 %v1778
    %4878 = vmatpush1.msra.mxu0 %v1777
    %4879 = vmatprep.subr.mxu0 %v1773
    %4880 = vmatpush1.msra.mxu0 %v1772
    %4881 = vmatprep.subr.mxu0 %v1768
    %4882 = vmatpush1.msra.mxu0 %v1767
    %4883 = vmatprep.subr.mxu0 %v1763
    %4884 = vmatpush1.msra.mxu0 %v1762
    %4885 = vmatprep.subr.mxu0 %v1758
    %4886 = vmatpush1.msra.mxu0 %v1757
    %4887 = vmatprep.subr.mxu0 %v1753
    %4888 = vmatpush1.msra.mxu0 %v1752
    %4889 = vmatprep.subr.mxu0 %v1748
    %4890 = vmatpush1.msra.mxu0 %v1747
    %4891 = vmatprep.subr.mxu0 %v1743
    %4892 = vmatpush1.msra.mxu0 %v1742
    %4893 = vmatprep.subr.mxu0 %v1738
    %4894 = vmatpush1.msra.mxu0 %v1737
    %4895 = vmatprep.subr.mxu0 0.0
    %4896 = vmatpush2.msra.mxu0 0.0
    %4897 = vmatprep.subr.mxu0 0.0
    %4898 = vmatpush2.msra.mxu0 0.0
    %4899 = vmatprep.subr.mxu0 0.0
    %4900 = vmatpush2.msra.mxu0 0.0
    %4901 = vmatprep.subr.mxu0 0.0
    %4902 = vmatpush2.msra.mxu0 0.0
    %4903 = vmatprep.subr.mxu0 0.0
    %4904 = vmatpush2.msra.mxu0 0.0
    %4905 = vmatprep.subr.mxu0 0.0
    %4906 = vmatpush2.msra.mxu0 0.0
    %4907 = vmatprep.subr.mxu0 0.0
    %4908 = vmatpush2.msra.mxu0 0.0
    %4909 = vmatprep.subr.mxu0 0.0
    %4910 = vmatpush2.msra.mxu0 0.0
    %4911 = vmatprep.subr.mxu0 0.0
    %4912 = vmatpush2.msra.mxu0 0.0
    %4913 = vmatprep.subr.mxu0 0.0
    %4914 = vmatpush2.msra.mxu0 0.0
    %4915 = vmatprep.subr.mxu0 0.0
    %4916 = vmatpush2.msra.mxu0 0.0
    %4917 = vmatprep.subr.mxu0 0.0
    %4918 = vmatpush2.msra.mxu0 0.0
    %4919 = vmatprep.subr.mxu0 0.0
    %4920 = vmatpush2.msra.mxu0 0.0
    %4921 = vmatprep.subr.mxu0 0.0
    %4922 = vmatpush2.msra.mxu0 0.0
    %4923 = vmatprep.subr.mxu0 0.0
    %4924 = vmatpush2.msra.mxu0 0.0
    %4925 = vmatprep.subr.mxu0 0.0
    %4926 = vmatpush2.msra.mxu0 0.0
    %4927 = vmatprep.mubr.f32.mxu0 0.0
    %4928 = vmatmul.mubr.f32.gmra.mxu0 %v4790
    %v4929 = vpop.f32.mrf.mxu0
    %v4930 = vadd.f32 0.0, %v4929
    %v4931 = vpop.f32.mrf.mxu0
    %v4932 = vadd.f32 0.0, %v4931
    %4933 = vdwg.mxu0
    %4934 = vmatprep.subr.mxu0 0.0
    %4935 = vmatpush1.msra.mxu0 %v1814
    %4936 = vmatprep.subr.mxu0 0.0
    %4937 = vmatpush1.msra.mxu0 %v1809
    %4938 = vmatprep.subr.mxu0 0.0
    %4939 = vmatpush1.msra.mxu0 %v1804
    %4940 = vmatprep.subr.mxu0 0.0
    %4941 = vmatpush1.msra.mxu0 %v1799
    %4942 = vmatprep.subr.mxu0 0.0
    %4943 = vmatpush1.msra.mxu0 %v1794
    %4944 = vmatprep.subr.mxu0 0.0
    %4945 = vmatpush1.msra.mxu0 %v1789
    %4946 = vmatprep.subr.mxu0 0.0
    %4947 = vmatpush1.msra.mxu0 %v1784
    %4948 = vmatprep.subr.mxu0 0.0
    %4949 = vmatpush1.msra.mxu0 %v1779
    %4950 = vmatprep.subr.mxu0 0.0
    %4951 = vmatpush1.msra.mxu0 %v1774
    %4952 = vmatprep.subr.mxu0 0.0
    %4953 = vmatpush1.msra.mxu0 %v1769
    %4954 = vmatprep.subr.mxu0 0.0
    %4955 = vmatpush1.msra.mxu0 %v1764
    %4956 = vmatprep.subr.mxu0 0.0
    %4957 = vmatpush1.msra.mxu0 %v1759
    %4958 = vmatprep.subr.mxu0 0.0
    %4959 = vmatpush1.msra.mxu0 %v1754
    %4960 = vmatprep.subr.mxu0 0.0
    %4961 = vmatpush1.msra.mxu0 %v1749
    %4962 = vmatprep.subr.mxu0 0.0
    %4963 = vmatpush1.msra.mxu0 %v1744
    %4964 = vmatprep.subr.mxu0 0.0
    %4965 = vmatpush1.msra.mxu0 %v1739
    %4966 = vmatprep.subr.mxu0 0.0
    %4967 = vmatpush2.msra.mxu0 0.0
    %4968 = vmatprep.subr.mxu0 0.0
    %4969 = vmatpush2.msra.mxu0 0.0
    %4970 = vmatprep.subr.mxu0 0.0
    %4971 = vmatpush2.msra.mxu0 0.0
    %4972 = vmatprep.subr.mxu0 0.0
    %4973 = vmatpush2.msra.mxu0 0.0
    %4974 = vmatprep.subr.mxu0 0.0
    %4975 = vmatpush2.msra.mxu0 0.0
    %4976 = vmatprep.subr.mxu0 0.0
    %4977 = vmatpush2.msra.mxu0 0.0
    %4978 = vmatprep.subr.mxu0 0.0
    %4979 = vmatpush2.msra.mxu0 0.0
    %4980 = vmatprep.subr.mxu0 0.0
    %4981 = vmatpush2.msra.mxu0 0.0
    %4982 = vmatprep.subr.mxu0 0.0
    %4983 = vmatpush2.msra.mxu0 0.0
    %4984 = vmatprep.subr.mxu0 0.0
    %4985 = vmatpush2.msra.mxu0 0.0
    %4986 = vmatprep.subr.mxu0 0.0
    %4987 = vmatpush2.msra.mxu0 0.0
    %4988 = vmatprep.subr.mxu0 0.0
    %4989 = vmatpush2.msra.mxu0 0.0
    %4990 = vmatprep.subr.mxu0 0.0
    %4991 = vmatpush2.msra.mxu0 0.0
    %4992 = vmatprep.subr.mxu0 0.0
    %4993 = vmatpush2.msra.mxu0 0.0
    %4994 = vmatprep.subr.mxu0 0.0
    %4995 = vmatpush2.msra.mxu0 0.0
    %4996 = vmatprep.subr.mxu0 0.0
    %4997 = vmatpush2.msra.mxu0 0.0
    %4998 = vmatprep.mubr.f32.mxu0 0.0
    %4999 = vmatmul.mubr.f32.gmra.mxu0 %v4790
    %v5000 = vpop.f32.mrf.mxu0
    %v5001 = vadd.f32 0.0, %v5000
    %v5002 = vpop.f32.mrf.mxu0
    %5003 = vdwg.mxu0
    %v5004 = vadd.f32 %v4859, %v1650
    %v5005 = vadd.f32 %v4859, %v2405
    %v5006 = vadd.f32 %v4861, %v2412
    %v5007 = vadd.f32 %v4930, %v2413
    %v5008 = vadd.f32 %v4932, %v2414
    %v5009 = vadd.f32 %v5001, %v2411
    %v5010 = vxor.u32 %v5005, 2147483648
    %v5011 = vxor.u32 %v5006, 2147483648
    %v5012 = vxor.u32 %v5007, 2147483648
    %v5013 = vmul.f32 %v5010, 1.442695
    %v5014 = vpow.pop %v5013
    %v5015 = vmul.f32 %v5011, 1.442695
    %v5016 = vpow.pop %v5015
    %v5017 = vmul.f32 %v5012, 1.442695
    %v5018 = vpow.pop %v5017
    %v5019 = vadd.f32 %v5014, 1.0
    %v5020 = vadd.f32 %v5016, 1.0
    %v5021 = vadd.f32 %v5018, 1.0
    %v5022 = vrcp.pop %v5019
    %v5023 = vmul.f32 1.0, %v5022
    %v5024 = vrcp.pop %v5020
    %v5025 = vmul.f32 1.0, %v5024
    %v5026 = vrcp.pop %v5021
    %v5027 = vmul.f32 1.0, %v5026
    %v5028 = vmul.f32 %v5023, %v5008
    %v5029 = vmul.f32 %v5025, %v5009
    %v5030 = vadd.f32 %v5007, %v5028
    %v5031 = vadd.f32 %v5008, %v5029
    %v5032 = vtanh.pop %v5030
    %v5033 = vtanh.pop %v5031
    %v5034 = vsub.f32 1.0, %v5025
    %v5035 = vsub.f32 1.0, %v5027
    %v5036 = vmul.f32 %v5034, %v5032
    %v5037 = vmul.f32 %v5035, %v5033
    %v5038 = vmul.f32 %v5025, %v4782
    %v5039 = vmul.f32 %v5027, %v4783
    %v5040 = vadd.f32 %v5036, %v5038
    %v5041 = vadd.f32 %v5037, %v5039
    %5044 = vrot.lane.b32.xlu0 %v5040, 88
    %v5045 = vpop.permute.xlu0 %5044
    %5046 = vrot.lane.b32.xlu0 %v5041, 88
    %v5047 = vpop.permute.xlu0 %5046
    %v5048 = vsel %vm2467, %v5045, %v5047
    %5050 = vmatprep.subr.mxu0 %v1811
    %5051 = vmatpush1.msra.mxu0 %v1810
    %5052 = vmatprep.subr.mxu0 %v1806
    %5053 = vmatpush1.msra.mxu0 %v1805
    %5054 = vmatprep.subr.mxu0 %v1801
    %5055 = vmatpush1.msra.mxu0 %v1800
    %5056 = vmatprep.subr.mxu0 %v1796
    %5057 = vmatpush1.msra.mxu0 %v1795
    %5058 = vmatprep.subr.mxu0 %v1791
    %5059 = vmatpush1.msra.mxu0 %v1790
    %5060 = vmatprep.subr.mxu0 %v1786
    %5061 = vmatpush1.msra.mxu0 %v1785
    %5062 = vmatprep.subr.mxu0 %v1781
    %5063 = vmatpush1.msra.mxu0 %v1780
    %5064 = vmatprep.subr.mxu0 %v1776
    %5065 = vmatpush1.msra.mxu0 %v1775
    %5066 = vmatprep.subr.mxu0 %v1771
    %5067 = vmatpush1.msra.mxu0 %v1770
    %5068 = vmatprep.subr.mxu0 %v1766
    %5069 = vmatpush1.msra.mxu0 %v1765
    %5070 = vmatprep.subr.mxu0 %v1761
    %5071 = vmatpush1.msra.mxu0 %v1760
    %5072 = vmatprep.subr.mxu0 %v1756
    %5073 = vmatpush1.msra.mxu0 %v1755
    %5074 = vmatprep.subr.mxu0 %v1751
    %5075 = vmatpush1.msra.mxu0 %v1750
    %5076 = vmatprep.subr.mxu0 %v1746
    %5077 = vmatpush1.msra.mxu0 %v1745
    %5078 = vmatprep.subr.mxu0 %v1741
    %5079 = vmatpush1.msra.mxu0 %v1740
    %5080 = vmatprep.subr.mxu0 %v1736
    %5081 = vmatpush1.msra.mxu0 %v1735
    %5082 = vmatprep.subr.mxu0 0.0
    %5083 = vmatpush2.msra.mxu0 0.0
    %5084 = vmatprep.subr.mxu0 0.0
    %5085 = vmatpush2.msra.mxu0 0.0
    %5086 = vmatprep.subr.mxu0 0.0
    %5087 = vmatpush2.msra.mxu0 0.0
    %5088 = vmatprep.subr.mxu0 0.0
    %5089 = vmatpush2.msra.mxu0 0.0
    %5090 = vmatprep.subr.mxu0 0.0
    %5091 = vmatpush2.msra.mxu0 0.0
    %5092 = vmatprep.subr.mxu0 0.0
    %5093 = vmatpush2.msra.mxu0 0.0
    %5094 = vmatprep.subr.mxu0 0.0
    %5095 = vmatpush2.msra.mxu0 0.0
    %5096 = vmatprep.subr.mxu0 0.0
    %5097 = vmatpush2.msra.mxu0 0.0
    %5098 = vmatprep.subr.mxu0 0.0
    %5099 = vmatpush2.msra.mxu0 0.0
    %5100 = vmatprep.subr.mxu0 0.0
    %5101 = vmatpush2.msra.mxu0 0.0
    %5102 = vmatprep.subr.mxu0 0.0
    %5103 = vmatpush2.msra.mxu0 0.0
    %5104 = vmatprep.subr.mxu0 0.0
    %5105 = vmatpush2.msra.mxu0 0.0
    %5106 = vmatprep.subr.mxu0 0.0
    %5107 = vmatpush2.msra.mxu0 0.0
    %5108 = vmatprep.subr.mxu0 0.0
    %5109 = vmatpush2.msra.mxu0 0.0
    %5110 = vmatprep.subr.mxu0 0.0
    %5111 = vmatpush2.msra.mxu0 0.0
    %5112 = vmatprep.subr.mxu0 0.0
    %5113 = vmatpush2.msra.mxu0 0.0
    %5114 = vmatprep.mubr.f32.mxu0 0.0
    %5115 = vmatmul.mubr.f32.gmra.mxu0 %v5048
    %v5116 = vpop.f32.mrf.mxu0
    %v5117 = vadd.f32 0.0, %v5116
    %v5118 = vpop.f32.mrf.mxu0
    %5119 = vdwg.mxu0
    %v5120 = vadd.f32 %v5117, %v1650
    %v5121 = vadd.f32 %v2399, 0.0
    %v5122 = vmul.f32 %v5121, 0.4
    %v5123 = vadd.f32 %v5122, %v24
    %v5124 = vadd.f32 %v5121, %v2682
    %v5125 = vmul.f32 %v5124, 0.4
    %v5126 = vadd.f32 %v5125, %v24
    %v5127 = vadd.f32 %v5124, %v2940
    %v5128 = vmul.f32 %v5127, 0.4
    %v5129 = vadd.f32 %v5128, %v24
    %v5130 = vadd.f32 %v5127, %v3198
    %v5131 = vmul.f32 %v5130, 0.4
    %v5132 = vadd.f32 %v5131, %v24
    %v5133 = vadd.f32 %v5130, %v3456
    %v5134 = vmul.f32 %v5133, 0.4
    %v5135 = vadd.f32 %v5134, %v24
    %v5136 = vadd.f32 %v5133, %v3714
    %v5137 = vmul.f32 %v5136, 0.4
    %v5138 = vadd.f32 %v5137, %v24
    %v5139 = vadd.f32 %v5136, %v3972
    %v5140 = vmul.f32 %v5139, 0.4
    %v5141 = vadd.f32 %v5140, %v24
    %v5142 = vadd.f32 %v5139, %v4230
    %v5143 = vmul.f32 %v5142, 0.4
    %v5144 = vadd.f32 %v5143, %v24
    %v5145 = vadd.f32 %v5142, %v4488
    %v5146 = vmul.f32 %v5145, 0.4
    %v5147 = vadd.f32 %v5146, %v24
    %v5148 = vadd.f32 %v5145, %v4746
    %v5149 = vmul.f32 %v5148, 0.4
    %v5150 = vadd.f32 %v5149, %v24
    %v5151 = vadd.f32 %v5148, %v5004
    %v5152 = vmul.f32 %v5151, 0.4
    %v5153 = vadd.f32 %v5152, %v24
    %v5154 = vadd.f32 %v5151, %v5120
    %v5155 = vmul.f32 %v5154, 0.4
    %v5156 = vadd.f32 %v5155, %v24
    %5158 = vrot.lane.b32.xlu0 %v5126, 40
    %v5159 = vpop.permute.xlu0 %5158
    %5162 = vrot.lane.b32.xlu0 %v5129, 80
    %v5163 = vpop.permute.xlu0 %5162
    %5166 = vrot.lane.b32.xlu0 %v5132, 120
    %v5167 = vpop.permute.xlu0 %5166
    %5170 = vrot.lane.b32.xlu0 %v5135, 32
    %v5171 = vpop.permute.xlu0 %5170
    %5174 = vrot.lane.b32.xlu0 %v5138, 72
    %v5175 = vpop.permute.xlu0 %5174
    %5178 = vrot.lane.b32.xlu0 %v5141, 112
    %v5179 = vpop.permute.xlu0 %5178
    %5182 = vrot.lane.b32.xlu0 %v5144, 24
    %v5183 = vpop.permute.xlu0 %5182
    %5186 = vrot.lane.b32.xlu0 %v5147, 64
    %v5187 = vpop.permute.xlu0 %5186
    %5190 = vrot.lane.b32.xlu0 %v5150, 104
    %v5191 = vpop.permute.xlu0 %5190
    %5194 = vrot.lane.b32.xlu0 %v5153, 16
    %v5195 = vpop.permute.xlu0 %5194
    %5198 = vrot.lane.b32.xlu0 %v5156, 56
    %v5199 = vpop.permute.xlu0 %5198
    %v5201 = vsel %vm2013, %v5123, %v5159
    %vm5202 = vcmask 654336
    %v5203 = vsel %vm5202, %v5201, %v5163
    %vm5204 = vcmask 982016
    %v5205 = vsel %vm5204, %v5203, %v5167
    %vm5206 = vcmask 261120
    %v5207 = vsel %vm5206, %v5167, %v5171
    %vm5208 = vcmask 588800
    %v5209 = vsel %vm5208, %v5207, %v5175
    %vm5210 = vcmask 916480
    %v5211 = vsel %vm5210, %v5209, %v5179
    %vm5212 = vcmask 195584
    %v5213 = vsel %vm5212, %v5179, %v5183
    %v5214 = vsel %vm245, %v5213, %v5187
    %vm5215 = vcmask 850944
    %v5216 = vsel %vm5215, %v5214, %v5191
    %vm5217 = vcmask 130048
    %v5218 = vsel %vm5217, %v5191, %v5195
    %vm5219 = vcmask 457728
    %v5220 = vsel %vm5219, %v5218, %v5199
    %v5225 = vcombine.low %v5205, %v5211
    %v5226 = vcombine.low %v5216, %v5220
    %v5228 = vunpack.c.l.s4 1983009808
    %v5229 = vunpack.c.0.s8 %v5228
    %v5230 = vlaneseq
    %v5231 = vshrl.u32 %v5230, 7
    %v5232 = vsub.s32 %v5229, %v5231
    %v5233 = vrot.slane %v5225, %v5232
    %v5235 = vunpack.c.l.s4 1983009808
    %v5236 = vunpack.c.0.s8 %v5235
    %v5237 = vlaneseq
    %v5238 = vshrl.u32 %v5237, 7
    %v5239 = vsub.s32 %v5236, %v5238
    %v5240 = vrot.slane %v5226, %v5239
    %v5241 = vcombine.low %v5233, %v5240
    %vm5243 = vcmask 1041408
    %vm5244 = vcmask 1043458
    %vm5245 = vmor %vm5244, %vm5243
    %vm5246 = vcmask 1045508
    %vm5247 = vmor %vm5246, %vm5245
    %vm5248 = vcmask 785414
    %vm5249 = vmor %vm5248, %vm5247
    %5250 = vst.msk [vmem:[%s4] sm:$0xff] %vm5249, %v5241
    %v5252 = vcombine.high %v23, %v23
    %v5254 = vunpack.c.l.s4 1983009808
    %v5255 = vunpack.c.0.s8 %v5254
    %v5256 = vlaneseq
    %v5257 = vshrl.u32 %v5256, 7
    %v5258 = vsub.s32 %v5255, %v5257
    %v5259 = vrot.slane %v23, %v5258
    %v5261 = vunpack.c.l.s4 1983009808
    %v5262 = vunpack.c.0.s8 %v5261
    %v5263 = vlaneseq
    %v5264 = vshrl.u32 %v5263, 7
    %v5265 = vsub.s32 %v5262, %v5264
    %v5266 = vrot.slane %v5252, %v5265
    %v5267 = vcombine.high %v5259, %v5259
    %v5268 = vcombine.high %v5266, %v5266
    %v5273 = vsub.f32 %v5205, %v5259
    %v5274 = vsub.f32 %v5211, %v5267
    %v5275 = vsub.f32 %v5216, %v5266
    %v5276 = vsub.f32 %v5220, %v5268
    %v5277 = vmul.f32 %v5273, %v5273
    %v5278 = vmul.f32 %v5274, %v5274
    %v5279 = vmul.f32 %v5275, %v5275
    %v5280 = vmul.f32 %v5276, %v5276
    %5285 = vrot.lane.b32.xlu0 %v5277, 127
    %v5286 = vpop.permute.xlu0 %5285
    %5287 = vrot.lane.b32.xlu0 %v5278, 127
    %v5288 = vpop.permute.xlu0 %5287
    %5289 = vrot.lane.b32.xlu0 %v5279, 127
    %v5290 = vpop.permute.xlu0 %5289
    %5291 = vrot.lane.b32.xlu0 %v5280, 127
    %v5292 = vpop.permute.xlu0 %5291
    %vm5293 = vcmask 1039360
    %v5294 = vsel %vm5293, %v5286, %v5288
    %v5295 = vsel %vm5293, %v5288, %v5290
    %v5296 = vsel %vm5293, %v5290, %v5292
    %vm5301 = vcmask 777216
    %v5302 = vsel %vm5301, %v5292, 0.0
    %v5303 = vadd.f32 %v5277, %v5294
    %v5304 = vadd.f32 %v5278, %v5295
    %v5305 = vadd.f32 %v5279, %v5296
    %v5306 = vadd.f32 %v5280, %v5302
    %v5307 = vadd.f32 %v5303, 1e-20
    %v5308 = vadd.f32 %v5304, 1e-20
    %v5309 = vadd.f32 %v5305, 1e-20
    %v5310 = vadd.f32 %v5306, 1e-20
    %v5311 = vrsqrt.pop %v5307
    %v5312 = vmul.f32 %v5307, %v5311
    %vm5313 = vcmp.eq.f32.partialorder %v5307, inf
    %v5314 = vsel %vm5313, %v5307, %v5312
    %vm5315 = vcmp.eq.f32.partialorder %v5307, 0.0
    %v5316 = vand.u32 %v5307, 2147483648
    %v5317 = vsel %vm5315, %v5316, %v5314
    %v5318 = vrsqrt.pop %v5308
    %v5319 = vmul.f32 %v5308, %v5318
    %vm5320 = vcmp.eq.f32.partialorder %v5308, inf
    %v5321 = vsel %vm5320, %v5308, %v5319
    %vm5322 = vcmp.eq.f32.partialorder %v5308, 0.0
    %v5323 = vand.u32 %v5308, 2147483648
    %v5324 = vsel %vm5322, %v5323, %v5321
    %v5325 = vrsqrt.pop %v5309
    %v5326 = vmul.f32 %v5309, %v5325
    %vm5327 = vcmp.eq.f32.partialorder %v5309, inf
    %v5328 = vsel %vm5327, %v5309, %v5326
    %vm5329 = vcmp.eq.f32.partialorder %v5309, 0.0
    %v5330 = vand.u32 %v5309, 2147483648
    %v5331 = vsel %vm5329, %v5330, %v5328
    %v5332 = vrsqrt.pop %v5310
    %v5333 = vmul.f32 %v5310, %v5332
    %vm5334 = vcmp.eq.f32.partialorder %v5310, inf
    %v5335 = vsel %vm5334, %v5310, %v5333
    %vm5336 = vcmp.eq.f32.partialorder %v5310, 0.0
    %v5337 = vand.u32 %v5310, 2147483648
    %v5338 = vsel %vm5336, %v5337, %v5335
    %v5339 = vlaneseq
    %v5340 = vand.u32 %v5339, 127
    %v5341 = vadd.s32 %v5340, 128
    %v5342 = vadd.s32 %v5340, 256
    %v5343 = vadd.s32 %v5340, 384
    %v5344 = vand.u32 %v5340, 1
    %v5345 = vand.u32 %v5341, 1
    %v5346 = vand.u32 %v5342, 1
    %v5347 = vand.u32 %v5343, 1
    %vm5348 = vcmp.eq.s32.totalorder %v5344, 0
    %vm5349 = vcmp.eq.s32.totalorder %v5345, 0
    %vm5350 = vcmp.eq.s32.totalorder %v5346, 0
    %vm5351 = vcmp.eq.s32.totalorder %v5347, 0
    %v5352 = vsel %vm5348, %v5317, 1e+30
    %v5353 = vsel %vm5349, %v5324, 1e+30
    %v5354 = vsel %vm5350, %v5331, 1e+30
    %v5355 = vsel %vm5351, %v5338, 1e+30
    %vm5356 = vcmask 320512
    %v5357 = vsel %vm5356, %v5352, inf
    %5358 = vmin.xlane.f32.xlu0 %v5357
    %v5359 = vpop.xlane.xlu0 %5358
    %v5360 = vadd.f32 %v5359, 0.0
    %vm5361 = vcmask 648512
    %v5362 = vsel %vm5361, %v5352, inf
    %5363 = vmin.xlane.f32.xlu0 %v5362
    %v5364 = vpop.xlane.xlu0 %5363
    %v5365 = vadd.f32 %v5360, %v5364
    %vm5366 = vcmask 976512
    %v5367 = vsel %vm5366, %v5352, inf
    %5368 = vmin.xlane.f32.xlu0 %v5367
    %v5369 = vpop.xlane.xlu0 %5368
    %v5370 = vadd.f32 %v5365, %v5369
    %vm5371 = vcmask 1042368
    %v5372 = vsel %vm5371, %v5352, inf
    %vm5373 = vcmask 254976
    %v5374 = vsel %vm5373, %v5353, inf
    %v5375 = vmin.f32 %v5372, %v5374
    %5376 = vmin.xlane.f32.xlu0 %v5375
    %v5377 = vpop.xlane.xlu0 %5376
    %v5378 = vadd.f32 %v5370, %v5377
    %vm5379 = vcmask 582912
    %v5380 = vsel %vm5379, %v5353, inf
    %5381 = vmin.xlane.f32.xlu0 %v5380
    %v5382 = vpop.xlane.xlu0 %5381
    %v5383 = vadd.f32 %v5378, %v5382
    %vm5384 = vcmask 910912
    %v5385 = vsel %vm5384, %v5353, inf
    %5386 = vmin.xlane.f32.xlu0 %v5385
    %v5387 = vpop.xlane.xlu0 %5386
    %v5388 = vadd.f32 %v5383, %v5387
    %vm5389 = vcmask 1042304
    %v5390 = vsel %vm5389, %v5353, inf
    %vm5391 = vcmask 189440
    %v5392 = vsel %vm5391, %v5354, inf
    %v5393 = vmin.f32 %v5390, %v5392
    %5394 = vmin.xlane.f32.xlu0 %v5393
    %v5395 = vpop.xlane.xlu0 %5394
    %v5396 = vadd.f32 %v5388, %v5395
    %vm5397 = vcmask 517312
    %v5398 = vsel %vm5397, %v5354, inf
    %5399 = vmin.xlane.f32.xlu0 %v5398
    %v5400 = vpop.xlane.xlu0 %5399
    %v5401 = vadd.f32 %v5396, %v5400
    %vm5402 = vcmask 845312
    %v5403 = vsel %vm5402, %v5354, inf
    %5404 = vmin.xlane.f32.xlu0 %v5403
    %v5405 = vpop.xlane.xlu0 %5404
    %v5406 = vadd.f32 %v5401, %v5405
    %vm5407 = vcmask 1042240
    %v5408 = vsel %vm5407, %v5354, inf
    %vm5409 = vcmask 123904
    %v5410 = vsel %vm5409, %v5355, inf
    %v5411 = vmin.f32 %v5408, %v5410
    %5412 = vmin.xlane.f32.xlu0 %v5411
    %v5413 = vpop.xlane.xlu0 %5412
    %v5414 = vadd.f32 %v5406, %v5413
    %vm5415 = vcmask 451712
    %v5416 = vsel %vm5415, %v5355, inf
    %5417 = vmin.xlane.f32.xlu0 %v5416
    %v5418 = vpop.xlane.xlu0 %5417
    %v5419 = vadd.f32 %v5414, %v5418
    %vm5420 = vcmask 779712
    %v5421 = vsel %vm5420, %v5355, inf
    %5422 = vmin.xlane.f32.xlu0 %v5421
    %v5423 = vpop.xlane.xlu0 %5422
    %v5424 = vadd.f32 %v5419, %v5423
    %v5425 = vsel %vm5243, %v5424, 0.0
    %v5426 = vrot.slane %v5425, 4
    %v5427 = vadd.f32 %v5425, %v5426
    %v5428 = vrot.slane %v5427, 2
    %v5429 = vadd.f32 %v5427, %v5428
    %v5430 = vrot.slane %v5429, 1
    %v5431 = vadd.f32 %v5429, %v5430
    %v5432 = vmul.f32 %v5431, 0.5
    %vm5433 = vcmask 0
    %5434 = vst.msk [vmem:[#allocation2] sm:$0x1] %vm5433, %v5432
    // Predicated region
    $region18: #{forward.1} parent=1 // pred_check
      _
    $region19: #{forward.1} parent=1 // pred_check_branch
      %5436 = sbr.rel (0) target = $region21
    $region20: #{forward.1} parent=1 // pred_region
      _
    $region21: #{forward.1} parent=1 // pred_fallthru
      _
    // Predicated region
    $region22: #{forward.1} parent=1 // pred_check
      _
    $region23: #{forward.1} parent=1 // pred_check_branch
      %5438 = sbr.rel (0) target = $region25
    $region24: #{forward.1} parent=1 // pred_region
      %s5440 = ssub.s32 16, 16
      %5441 = vsyncadd [#allocation3], %s5440
      %s5443 = sshll.u32 [#allocation2], 4
      %s5444 = int_to_ptr.vmem [resolvable:$true] %s5443
      %5446 = dma.vmem_to_hbm [thread:$0]  %s5444, 16, %s5, [#allocation3]
    $region25: #{forward.1} parent=1 // pred_fallthru
      _
    // Predicated region
    $region26: #{forward.1} parent=1 // pred_check
      _
    $region27: #{forward.1} parent=1 // pred_check_branch
      %5448 = sbr.rel (0) target = $region29
    $region28: #{forward.1} parent=1 // pred_region
      _
    $region29: #{forward.1} parent=1 // pred_fallthru
      _
    // Predicated region
    $region30: #{forward.1} parent=1 // pred_check
      _
    $region31: #{forward.1} parent=1 // pred_check_branch
      %5450 = sbr.rel (0) target = $region33
    $region32: #{forward.1} parent=1 // pred_region
      %5451 = dma.done [#allocation3], 16
    $region33: #{forward.1} parent=1 // pred_fallthru
      _
    %5452 = vsyncpa [#allocation3], 1

</llo_original>
